<compile_context>
chip_gen: v7x
topology: tpu7x:2x2x1
jax: 0.10.0
libtpu: 0.0.40
codegen_flags: <defaults>
</compile_context>

<pallas_src>
import jax
import jax.numpy as jnp
from jax.experimental import pallas as pl
from jax.experimental.pallas import tpu as pltpu

# ----------------------------- tiny BERT config ------------------------------
HIDDEN = 32
N_HEADS = 4
HEAD_DIM = HIDDEN // N_HEADS
N_LAYERS = 2
INTERMEDIATE = 64
VOCAB = 50
MAX_LENGTH = 512
MAX_POS = MAX_LENGTH            # position table covers every legal padded length
LN_EPS = 1e-12
PAD_ID = 0
CLS_ID = 1
SEP_ID = 2
BERT_DTYPE = jnp.bfloat16       # analog of `bert.half()` on TPU
NEG_MASK = -30000.0             # finite "-inf": exp underflows to 0 exactly, no NaN hazard
TAG_PAD = 128                   # lane-dense tagger output width (column 0 = real logit)


def _use_bf16_exp() -> bool:
    """bf16 VPU/EUP path exists on v6e/v7x; on v5e (and unknown chips) keep f32."""
    try:
        kind = jax.devices()[0].device_kind.lower()
    except Exception:
        return False
    return ("v6" in kind) or ("v7" in kind)


EXP_BF16 = _use_bf16_exp()


# ------------------------- fused encoder + tagger kernel -----------------------
def _encoder_kernel(emb_ref, kmask_ref,
                    emb_g_ref, emb_b_ref,
                    wqkv_ref, bqkv_ref, wo_ref, bo_ref,
                    ln1_g_ref, ln1_b_ref,
                    w1_ref, b1_ref, w2_ref, b2_ref,
                    ln2_g_ref, ln2_b_ref,
                    tgw_ref, tgb_ref,
                    cls_ref):
    scale = 1.0 / (HEAD_DIM ** 0.5)

    def layernorm(x32, g, b):
        mu = jnp.mean(x32, axis=-1, keepdims=True)
        var = jnp.mean(jnp.square(x32 - mu), axis=-1, keepdims=True)
        y = (x32 - mu) * jax.lax.rsqrt(var + LN_EPS)
        return y * g.astype(jnp.float32) + b.astype(jnp.float32)

    # per-example additive key mask: (1, L) f32, 0.0 on real tokens / -3e4 on padding
    mask = kmask_ref[0]

    # embeddings (word+pos+type already summed outside) -> LayerNorm
    h32 = layernorm(emb_ref[...].astype(jnp.float32), emb_g_ref[...], emb_b_ref[...])
    h = h32.astype(BERT_DTYPE)                               # (L, HIDDEN) bf16

    for l in range(N_LAYERS):
        # -------- multi-head self-attention ----------------------------------------
        # fused QKV projection: single (L, H) @ (H, 3H) bf16 MXU matmul per layer
        qkv = (jnp.dot(h, wqkv_ref[l], preferred_element_type=jnp.float32)
               + bqkv_ref[l].astype(jnp.float32)).astype(BERT_DTYPE)     # (L, 3H)

        ctx_heads = []
        for hd in range(N_HEADS):
            q = qkv[:, hd * HEAD_DIM:(hd + 1) * HEAD_DIM]                      # (L, D)
            k = qkv[:, HIDDEN + hd * HEAD_DIM:HIDDEN + (hd + 1) * HEAD_DIM]
            v = qkv[:, 2 * HIDDEN + hd * HEAD_DIM:2 * HIDDEN + (hd + 1) * HEAD_DIM]
            s = jax.lax.dot_general(q, k, (((1,), (1,)), ((), ())),
                                    preferred_element_type=jnp.float32) * scale + mask
            # no row-max subtraction: scores are bounded, mask is finite -> no overflow
            if EXP_BF16:
                p = jnp.exp(s.astype(jnp.bfloat16))                             # bf16 EUP
                inv = pl.reciprocal(
                    jnp.sum(p.astype(jnp.float32), axis=-1, keepdims=True), approx=True)
                p = p * inv.astype(jnp.bfloat16)
            else:
                p = jnp.exp(s)
                inv = pl.reciprocal(jnp.sum(p, axis=-1, keepdims=True), approx=True)
                p = (p * inv).astype(BERT_DTYPE)
            ctx_heads.append(jnp.dot(p, v, preferred_element_type=jnp.float32)
                             .astype(BERT_DTYPE))                               # (L, D)

        # fused output projection: one (L, H) @ (H, H) matmul per layer
        ctx = jnp.concatenate(ctx_heads, axis=-1)                               # (L, H)
        attn32 = (jnp.dot(ctx, wo_ref[l], preferred_element_type=jnp.float32)
                  + bo_ref[l].astype(jnp.float32))
        h32 = layernorm(attn32 + h.astype(jnp.float32), ln1_g_ref[l], ln1_b_ref[l])
        h = h32.astype(BERT_DTYPE)

        # -------- feed-forward ------------------------------------------------------
        f1 = (jnp.dot(h, w1_ref[l], preferred_element_type=jnp.float32)
              + b1_ref[l].astype(jnp.float32))
        # TODO(synk): HF BERT default "gelu" is the erf-exact variant; tanh-approx used here.
        f1 = jax.nn.gelu(f1, approximate=True).astype(BERT_DTYPE)
        f2 = (jnp.dot(f1, w2_ref[l], preferred_element_type=jnp.float32)
              + b2_ref[l].astype(jnp.float32))
        h32 = layernorm(f2 + h.astype(jnp.float32), ln2_g_ref[l], ln2_b_ref[l])
        h = h32.astype(BERT_DTYPE)

    # -------- relevance tagger: Linear(H, 1) + Sigmoid, padded to 128 lanes ---------
    logits = jnp.dot(h.astype(jnp.float32), tgw_ref[...],
                     preferred_element_type=jnp.float32) + tgb_ref[...]
    cls_ref[...] = jax.nn.sigmoid(logits)                    # (L, 128) f32, col 0 is real


# ------------------------------ parameter init --------------------------------
def init_params(key):
    def normal(k, shape, dtype=BERT_DTYPE):
        return (0.02 * jax.random.normal(k, shape, jnp.float32)).astype(dtype)

    keys = iter(jax.random.split(key, 12))
    p = {
        "word_emb": normal(next(keys), (VOCAB, HIDDEN)),
        "pos_emb": normal(next(keys), (MAX_POS, HIDDEN)),
        "type_emb": normal(next(keys), (2, HIDDEN)),
        "emb_ln_g": jnp.ones((1, HIDDEN), BERT_DTYPE),
        "emb_ln_b": jnp.zeros((1, HIDDEN), BERT_DTYPE),
        # per-layer fused QKV projection: [Wq | Wk | Wv] concatenated along output lanes
        "wqkv": normal(next(keys), (N_LAYERS, HIDDEN, 3 * HIDDEN)),
        "bqkv": jnp.zeros((N_LAYERS, 1, 3 * HIDDEN), BERT_DTYPE),
        "wo": normal(next(keys), (N_LAYERS, HIDDEN, HIDDEN)),
        "bo": jnp.zeros((N_LAYERS, 1, HIDDEN), BERT_DTYPE),
        "ln1_g": jnp.ones((N_LAYERS, 1, HIDDEN), BERT_DTYPE),
        "ln1_b": jnp.zeros((N_LAYERS, 1, HIDDEN), BERT_DTYPE),
        "w1": normal(next(keys), (N_LAYERS, HIDDEN, INTERMEDIATE)),
        "b1": jnp.zeros((N_LAYERS, 1, INTERMEDIATE), BERT_DTYPE),
        "w2": normal(next(keys), (N_LAYERS, INTERMEDIATE, HIDDEN)),
        "b2": jnp.zeros((N_LAYERS, 1, HIDDEN), BERT_DTYPE),
        "ln2_g": jnp.ones((N_LAYERS, 1, HIDDEN), BERT_DTYPE),
        "ln2_b": jnp.zeros((N_LAYERS, 1, HIDDEN), BERT_DTYPE),
    }
    # relevance tagger (float32, NOT halved); zero-padded to a lane-dense 128 columns
    tag_w = 0.02 * jax.random.normal(next(keys), (HIDDEN, 1), jnp.float32)
    p["tag_w_pad"] = jnp.zeros((HIDDEN, TAG_PAD), jnp.float32).at[:, :1].set(tag_w)
    p["tag_b_pad"] = jnp.zeros((1, TAG_PAD), jnp.float32)
    return p


def _const_spec(shape):
    """Whole-array block with a constant index_map -> stays VMEM-resident across grid steps."""
    zeros = (0,) * len(shape)
    return pl.BlockSpec(shape, lambda b: zeros)


# --------------------------------- forward ------------------------------------
@jax.jit
def _bert_and_tag(params, ids, add_mask):
    """ids: (B, L) int32 (L a multiple of 128); add_mask: (B, 1, L) f32 additive key mask.
    Returns (B, L) f32 sigmoid scores."""
    B, L = ids.shape
    emb = (params["word_emb"][ids]
           + params["pos_emb"][:L][None, :, :]
           + params["type_emb"][0][None, None, :]).astype(BERT_DTYPE).reshape(B * L, HIDDEN)

    weights = (params["emb_ln_g"], params["emb_ln_b"],
               params["wqkv"], params["bqkv"], params["wo"], params["bo"],
               params["ln1_g"], params["ln1_b"],
               params["w1"], params["b1"], params["w2"], params["b2"],
               params["ln2_g"], params["ln2_b"],
               params["tag_w_pad"], params["tag_b_pad"])

    out = pl.pallas_call(
        _encoder_kernel,
        grid=(B,),
        out_shape=jax.ShapeDtypeStruct((B * L, TAG_PAD), jnp.float32),
        in_specs=[pl.BlockSpec((L, HIDDEN), lambda b: (b, 0)),       # per-example embedding
                  pl.BlockSpec((1, 1, L), lambda b: (b, 0, 0))]      # per-example key mask
                 + [_const_spec(w.shape) for w in weights],
        out_specs=pl.BlockSpec((L, TAG_PAD), lambda b: (b, 0)),
        compiler_params=pltpu.CompilerParams(
            dimension_semantics=("parallel",)),
    )(emb, add_mask, *weights)
    return out[:, 0].reshape(B, L)


def bert_tagger_forward(params, query, document_batch,
                        pad_token_id=PAD_ID, sep_token_id=SEP_ID, max_length=MAX_LENGTH):
    """query / document_batch: lists of python int lists (token ids). Returns (B, max_doc_len) f32."""
    assert len(query) == len(document_batch)
    input_seqs, query_lengths = [], []
    for q, d in zip(query, document_batch):
        q, d = list(q), list(d)
        if len(q) + len(d) + 1 > max_length:
            d = d[: max_length - len(q) - 1]
        input_seqs.append(q + [sep_token_id] + d)
        query_lengths.append(len(q))

    B = len(input_seqs)
    L_raw = max(len(s) for s in input_seqs)
    # round the padded length up to a multiple of 128 -> lane-dense (L, L) scores and
    # unmasked stores for the (L, 128) output block.  max_length=512 keeps L <= MAX_POS.
    L = ((L_raw + 127) // 128) * 128
    assert L <= MAX_POS
    ids = jnp.array([s + [pad_token_id] * (L - len(s)) for s in input_seqs], jnp.int32)

    # per-example additive key mask built from sequence lengths (like PaddedSequence.mask):
    # 0.0 on real tokens, NEG_MASK on padding.  No cross-example term needed — the
    # kernel is gridded over the batch, so attention never mixes examples.
    lengths = jnp.array([len(s) for s in input_seqs], jnp.int32)
    key_real = jnp.arange(L, dtype=jnp.int32)[None, :] < lengths[:, None]
    add_mask = jnp.where(key_real, 0.0, NEG_MASK).astype(jnp.float32).reshape(B, 1, L)

    classes = _bert_and_tag(params, ids, add_mask)           # (B, L) f32 in (0, 1)

    # per-example document-span extraction, re-pad with 0, squeeze(-1)
    # (uses the ORIGINAL doc length; slicing clamps at L, matching the reference)
    max_doc = max(len(d) for d in document_batch)
    rows = []
    for i, (ql, d) in enumerate(zip(query_lengths, document_batch)):
        start = ql + 1
        end = start + len(d)
        row = classes[i, start:end]
        rows.append(jnp.pad(row, (0, max_doc - row.shape[0])))
    return jnp.stack(rows, axis=0)


# ----------------------------------- main --------------------------------------
if __name__ == "__main__":
    key = jax.random.PRNGKey(0)
    k_params, k_q1, k_q2, k_d1, k_d2 = jax.random.split(key, 5)
    params = init_params(k_params)

    # small deterministic token-id inputs (ids in [3, VOCAB) so they never collide with PAD/CLS/SEP)
    def tok(k, n):
        return [int(t) for t in jax.random.randint(k, (n,), 3, VOCAB)]

    query = [tok(k_q1, 3), tok(k_q2, 4)]            # query lengths 3, 4
    docs = [tok(k_d1, 6), tok(k_d2, 5)]             # doc lengths 6, 5  -> padded seq len 10 -> 128

    out = bert_tagger_forward(params, query, docs)
    out = jax.block_until_ready(out)

    assert out.shape == (2, 6), out.shape
    assert out.dtype == jnp.float32
    assert bool(jnp.all(jnp.isfinite(out)))
    assert bool(jnp.all((out >= 0.0) & (out <= 1.0)))   # sigmoid range (0 padding included)
    print("KERNEL_OK")
</pallas_src>

<mosaic_0001>
module attributes {stable_mosaic.version = 11 : i64} {
  func.func @_encoder_kernel(%arg0: i32, %arg1: memref<128x32xbf16, #tpu.memory_space<vmem>>, %arg2: memref<1x1x128xf32, #tpu.memory_space<vmem>>, %arg3: memref<1x32xbf16, #tpu.memory_space<vmem>>, %arg4: memref<1x32xbf16, #tpu.memory_space<vmem>>, %arg5: memref<2x32x96xbf16, #tpu.memory_space<vmem>>, %arg6: memref<2x1x96xbf16, #tpu.memory_space<vmem>>, %arg7: memref<2x32x32xbf16, #tpu.memory_space<vmem>>, %arg8: memref<2x1x32xbf16, #tpu.memory_space<vmem>>, %arg9: memref<2x1x32xbf16, #tpu.memory_space<vmem>>, %arg10: memref<2x1x32xbf16, #tpu.memory_space<vmem>>, %arg11: memref<2x32x64xbf16, #tpu.memory_space<vmem>>, %arg12: memref<2x1x64xbf16, #tpu.memory_space<vmem>>, %arg13: memref<2x64x32xbf16, #tpu.memory_space<vmem>>, %arg14: memref<2x1x32xbf16, #tpu.memory_space<vmem>>, %arg15: memref<2x1x32xbf16, #tpu.memory_space<vmem>>, %arg16: memref<2x1x32xbf16, #tpu.memory_space<vmem>>, %arg17: memref<32x128xf32, #tpu.memory_space<vmem>>, %arg18: memref<1x128xf32, #tpu.memory_space<vmem>>, %arg19: memref<128x128xf32, #tpu.memory_space<vmem>>) attributes {dimension_semantics = [#tpu.dimension_semantics<parallel>], iteration_bounds = array<i64: 2>, scalar_prefetch = 0 : i64, scratch_operands = 0 : i64, tpu.core_type = #tpu.core_type<tc>, window_params = [{transform_indices = @transform_0, window_bounds = array<i64: 128, 32>}, {transform_indices = @transform_1, window_bounds = array<i64: 1, 1, 128>}, {pipeline_mode = #tpu.pipeline_mode<synchronous>, transform_indices = @transform_2, window_bounds = array<i64: 1, 32>}, {pipeline_mode = #tpu.pipeline_mode<synchronous>, transform_indices = @transform_3, window_bounds = array<i64: 1, 32>}, {pipeline_mode = #tpu.pipeline_mode<synchronous>, transform_indices = @transform_4, window_bounds = array<i64: 2, 32, 96>}, {pipeline_mode = #tpu.pipeline_mode<synchronous>, transform_indices = @transform_5, window_bounds = array<i64: 2, 1, 96>}, {pipeline_mode = #tpu.pipeline_mode<synchronous>, transform_indices = @transform_6, window_bounds = array<i64: 2, 32, 32>}, {pipeline_mode = #tpu.pipeline_mode<synchronous>, transform_indices = @transform_7, window_bounds = array<i64: 2, 1, 32>}, {pipeline_mode = #tpu.pipeline_mode<synchronous>, transform_indices = @transform_8, window_bounds = array<i64: 2, 1, 32>}, {pipeline_mode = #tpu.pipeline_mode<synchronous>, transform_indices = @transform_9, window_bounds = array<i64: 2, 1, 32>}, {pipeline_mode = #tpu.pipeline_mode<synchronous>, transform_indices = @transform_10, window_bounds = array<i64: 2, 32, 64>}, {pipeline_mode = #tpu.pipeline_mode<synchronous>, transform_indices = @transform_11, window_bounds = array<i64: 2, 1, 64>}, {pipeline_mode = #tpu.pipeline_mode<synchronous>, transform_indices = @transform_12, window_bounds = array<i64: 2, 64, 32>}, {pipeline_mode = #tpu.pipeline_mode<synchronous>, transform_indices = @transform_13, window_bounds = array<i64: 2, 1, 32>}, {pipeline_mode = #tpu.pipeline_mode<synchronous>, transform_indices = @transform_14, window_bounds = array<i64: 2, 1, 32>}, {pipeline_mode = #tpu.pipeline_mode<synchronous>, transform_indices = @transform_15, window_bounds = array<i64: 2, 1, 32>}, {pipeline_mode = #tpu.pipeline_mode<synchronous>, transform_indices = @transform_16, window_bounds = array<i64: 32, 128>}, {pipeline_mode = #tpu.pipeline_mode<synchronous>, transform_indices = @transform_17, window_bounds = array<i64: 1, 128>}, {transform_indices = @transform_18, window_bounds = array<i64: 128, 128>}]} {
    %c0 = arith.constant 0 : index
    %c0_0 = arith.constant 0 : index
    %c0_1 = arith.constant 0 : index
    %0 = vector.load %arg2[%c0, %c0_0, %c0_1] : memref<1x1x128xf32, #tpu.memory_space<vmem>>, vector<1x1x128xf32>
    %1 = vector.shape_cast %0 : vector<1x1x128xf32> to vector<1x128xf32>
    %c0_2 = arith.constant 0 : index
    %c0_3 = arith.constant 0 : index
    %2 = vector.load %arg1[%c0_2, %c0_3] : memref<128x32xbf16, #tpu.memory_space<vmem>>, vector<128x32xbf16>
    %3 = arith.extf %2 : vector<128x32xbf16> to vector<128x32xf32>
    %c0_4 = arith.constant 0 : index
    %c0_5 = arith.constant 0 : index
    %4 = vector.load %arg3[%c0_4, %c0_5] : memref<1x32xbf16, #tpu.memory_space<vmem>>, vector<1x32xbf16>
    %c0_6 = arith.constant 0 : index
    %c0_7 = arith.constant 0 : index
    %5 = vector.load %arg4[%c0_6, %c0_7] : memref<1x32xbf16, #tpu.memory_space<vmem>>, vector<1x32xbf16>
    %cst = arith.constant dense<0.000000e+00> : vector<128xf32>
    %6 = vector.multi_reduction <add>, %3, %cst [1] : vector<128x32xf32> to vector<128xf32>
    %7 = vector.shape_cast %6 : vector<128xf32> to vector<128x1xf32>
    %cst_8 = arith.constant 3.200000e+01 : f32
    %8 = vector.broadcast %cst_8 : f32 to vector<128x1xf32>
    %9 = arith.divf %7, %8 : vector<128x1xf32>
    %10 = vector.broadcast %9 : vector<128x1xf32> to vector<128x32xf32>
    %11 = arith.subf %3, %10 : vector<128x32xf32>
    %12 = arith.mulf %11, %11 : vector<128x32xf32>
    %cst_9 = arith.constant dense<0.000000e+00> : vector<128xf32>
    %13 = vector.multi_reduction <add>, %12, %cst_9 [1] : vector<128x32xf32> to vector<128xf32>
    %14 = vector.shape_cast %13 : vector<128xf32> to vector<128x1xf32>
    %cst_10 = arith.constant 3.200000e+01 : f32
    %15 = vector.broadcast %cst_10 : f32 to vector<128x1xf32>
    %16 = arith.divf %14, %15 : vector<128x1xf32>
    %17 = vector.broadcast %9 : vector<128x1xf32> to vector<128x32xf32>
    %18 = arith.subf %3, %17 : vector<128x32xf32>
    %cst_11 = arith.constant 9.99999996E-13 : f32
    %19 = vector.broadcast %cst_11 : f32 to vector<128x1xf32>
    %20 = arith.addf %16, %19 : vector<128x1xf32>
    %21 = math.rsqrt %20 : vector<128x1xf32>
    %22 = vector.broadcast %21 : vector<128x1xf32> to vector<128x32xf32>
    %23 = arith.mulf %18, %22 : vector<128x32xf32>
    %24 = arith.extf %4 : vector<1x32xbf16> to vector<1x32xf32>
    %25 = vector.broadcast %24 : vector<1x32xf32> to vector<128x32xf32>
    %26 = arith.mulf %23, %25 : vector<128x32xf32>
    %27 = arith.extf %5 : vector<1x32xbf16> to vector<1x32xf32>
    %28 = vector.broadcast %27 : vector<1x32xf32> to vector<128x32xf32>
    %29 = arith.addf %26, %28 : vector<128x32xf32>
    %30 = arith.truncf %29 : vector<128x32xf32> to vector<128x32xbf16>
    %c0_12 = arith.constant 0 : index
    %c0_13 = arith.constant 0 : index
    %c0_14 = arith.constant 0 : index
    %31 = vector.load %arg5[%c0_12, %c0_13, %c0_14] : memref<2x32x96xbf16, #tpu.memory_space<vmem>>, vector<1x32x96xbf16>
    %32 = vector.shape_cast %31 : vector<1x32x96xbf16> to vector<32x96xbf16>
    %cst_15 = arith.constant dense<0.000000e+00> : vector<128x96xf32>
    %33 = tpu.matmul %30, %32, %cst_15 {dimension_numbers = #tpu.dot_dimension_numbers<[1], [0], [0], [1], [0, 0, 1, 1], [], []>} : vector<128x32xbf16>, vector<32x96xbf16>, vector<128x96xf32> -> vector<128x96xf32>
    %c0_16 = arith.constant 0 : index
    %c0_17 = arith.constant 0 : index
    %c0_18 = arith.constant 0 : index
    %34 = vector.load %arg6[%c0_16, %c0_17, %c0_18] : memref<2x1x96xbf16, #tpu.memory_space<vmem>>, vector<1x1x96xbf16>
    %35 = vector.shape_cast %34 : vector<1x1x96xbf16> to vector<1x96xbf16>
    %36 = arith.extf %35 : vector<1x96xbf16> to vector<1x96xf32>
    %37 = vector.broadcast %36 : vector<1x96xf32> to vector<128x96xf32>
    %38 = arith.addf %33, %37 : vector<128x96xf32>
    %39 = arith.truncf %38 : vector<128x96xf32> to vector<128x96xbf16>
    %40 = vector.extract_strided_slice %39 {offsets = [0, 0], sizes = [128, 8], strides = [1, 1]} : vector<128x96xbf16> to vector<128x8xbf16>
    %41 = vector.extract_strided_slice %39 {offsets = [0, 32], sizes = [128, 8], strides = [1, 1]} : vector<128x96xbf16> to vector<128x8xbf16>
    %42 = vector.extract_strided_slice %39 {offsets = [0, 64], sizes = [128, 8], strides = [1, 1]} : vector<128x96xbf16> to vector<128x8xbf16>
    %cst_19 = arith.constant dense<0.000000e+00> : vector<128x128xf32>
    %43 = tpu.matmul %40, %41, %cst_19 {dimension_numbers = #tpu.dot_dimension_numbers<[1], [1], [0], [0], [0, 0, 1, 0], [], []>} : vector<128x8xbf16>, vector<128x8xbf16>, vector<128x128xf32> -> vector<128x128xf32>
    %cst_20 = arith.constant 0.353553385 : f32
    %44 = vector.broadcast %cst_20 : f32 to vector<128x128xf32>
    %45 = arith.mulf %43, %44 : vector<128x128xf32>
    %46 = vector.broadcast %1 : vector<1x128xf32> to vector<128x128xf32>
    %47 = arith.addf %45, %46 : vector<128x128xf32>
    %48 = math.exp %47 : vector<128x128xf32>
    %cst_21 = arith.constant dense<0.000000e+00> : vector<128xf32>
    %49 = vector.multi_reduction <add>, %48, %cst_21 [1] : vector<128x128xf32> to vector<128xf32>
    %50 = vector.shape_cast %49 : vector<128xf32> to vector<128x1xf32>
    %51 = tpu.reciprocal %50 {approx = true} : vector<128x1xf32> -> vector<128x1xf32>
    %52 = vector.broadcast %51 : vector<128x1xf32> to vector<128x128xf32>
    %53 = arith.mulf %48, %52 : vector<128x128xf32>
    %54 = arith.truncf %53 : vector<128x128xf32> to vector<128x128xbf16>
    %cst_22 = arith.constant dense<0.000000e+00> : vector<128x8xf32>
    %55 = tpu.matmul %54, %42, %cst_22 {dimension_numbers = #tpu.dot_dimension_numbers<[1], [0], [0], [1], [0, 0, 1, 1], [], []>} : vector<128x128xbf16>, vector<128x8xbf16>, vector<128x8xf32> -> vector<128x8xf32>
    %56 = arith.truncf %55 : vector<128x8xf32> to vector<128x8xbf16>
    %57 = vector.extract_strided_slice %39 {offsets = [0, 8], sizes = [128, 8], strides = [1, 1]} : vector<128x96xbf16> to vector<128x8xbf16>
    %58 = vector.extract_strided_slice %39 {offsets = [0, 40], sizes = [128, 8], strides = [1, 1]} : vector<128x96xbf16> to vector<128x8xbf16>
    %59 = vector.extract_strided_slice %39 {offsets = [0, 72], sizes = [128, 8], strides = [1, 1]} : vector<128x96xbf16> to vector<128x8xbf16>
    %cst_23 = arith.constant dense<0.000000e+00> : vector<128x128xf32>
    %60 = tpu.matmul %57, %58, %cst_23 {dimension_numbers = #tpu.dot_dimension_numbers<[1], [1], [0], [0], [0, 0, 1, 0], [], []>} : vector<128x8xbf16>, vector<128x8xbf16>, vector<128x128xf32> -> vector<128x128xf32>
    %cst_24 = arith.constant 0.353553385 : f32
    %61 = vector.broadcast %cst_24 : f32 to vector<128x128xf32>
    %62 = arith.mulf %60, %61 : vector<128x128xf32>
    %63 = vector.broadcast %1 : vector<1x128xf32> to vector<128x128xf32>
    %64 = arith.addf %62, %63 : vector<128x128xf32>
    %65 = math.exp %64 : vector<128x128xf32>
    %cst_25 = arith.constant dense<0.000000e+00> : vector<128xf32>
    %66 = vector.multi_reduction <add>, %65, %cst_25 [1] : vector<128x128xf32> to vector<128xf32>
    %67 = vector.shape_cast %66 : vector<128xf32> to vector<128x1xf32>
    %68 = tpu.reciprocal %67 {approx = true} : vector<128x1xf32> -> vector<128x1xf32>
    %69 = vector.broadcast %68 : vector<128x1xf32> to vector<128x128xf32>
    %70 = arith.mulf %65, %69 : vector<128x128xf32>
    %71 = arith.truncf %70 : vector<128x128xf32> to vector<128x128xbf16>
    %cst_26 = arith.constant dense<0.000000e+00> : vector<128x8xf32>
    %72 = tpu.matmul %71, %59, %cst_26 {dimension_numbers = #tpu.dot_dimension_numbers<[1], [0], [0], [1], [0, 0, 1, 1], [], []>} : vector<128x128xbf16>, vector<128x8xbf16>, vector<128x8xf32> -> vector<128x8xf32>
    %73 = arith.truncf %72 : vector<128x8xf32> to vector<128x8xbf16>
    %74 = vector.extract_strided_slice %39 {offsets = [0, 16], sizes = [128, 8], strides = [1, 1]} : vector<128x96xbf16> to vector<128x8xbf16>
    %75 = vector.extract_strided_slice %39 {offsets = [0, 48], sizes = [128, 8], strides = [1, 1]} : vector<128x96xbf16> to vector<128x8xbf16>
    %76 = vector.extract_strided_slice %39 {offsets = [0, 80], sizes = [128, 8], strides = [1, 1]} : vector<128x96xbf16> to vector<128x8xbf16>
    %cst_27 = arith.constant dense<0.000000e+00> : vector<128x128xf32>
    %77 = tpu.matmul %74, %75, %cst_27 {dimension_numbers = #tpu.dot_dimension_numbers<[1], [1], [0], [0], [0, 0, 1, 0], [], []>} : vector<128x8xbf16>, vector<128x8xbf16>, vector<128x128xf32> -> vector<128x128xf32>
    %cst_28 = arith.constant 0.353553385 : f32
    %78 = vector.broadcast %cst_28 : f32 to vector<128x128xf32>
    %79 = arith.mulf %77, %78 : vector<128x128xf32>
    %80 = vector.broadcast %1 : vector<1x128xf32> to vector<128x128xf32>
    %81 = arith.addf %79, %80 : vector<128x128xf32>
    %82 = math.exp %81 : vector<128x128xf32>
    %cst_29 = arith.constant dense<0.000000e+00> : vector<128xf32>
    %83 = vector.multi_reduction <add>, %82, %cst_29 [1] : vector<128x128xf32> to vector<128xf32>
    %84 = vector.shape_cast %83 : vector<128xf32> to vector<128x1xf32>
    %85 = tpu.reciprocal %84 {approx = true} : vector<128x1xf32> -> vector<128x1xf32>
    %86 = vector.broadcast %85 : vector<128x1xf32> to vector<128x128xf32>
    %87 = arith.mulf %82, %86 : vector<128x128xf32>
    %88 = arith.truncf %87 : vector<128x128xf32> to vector<128x128xbf16>
    %cst_30 = arith.constant dense<0.000000e+00> : vector<128x8xf32>
    %89 = tpu.matmul %88, %76, %cst_30 {dimension_numbers = #tpu.dot_dimension_numbers<[1], [0], [0], [1], [0, 0, 1, 1], [], []>} : vector<128x128xbf16>, vector<128x8xbf16>, vector<128x8xf32> -> vector<128x8xf32>
    %90 = arith.truncf %89 : vector<128x8xf32> to vector<128x8xbf16>
    %91 = vector.extract_strided_slice %39 {offsets = [0, 24], sizes = [128, 8], strides = [1, 1]} : vector<128x96xbf16> to vector<128x8xbf16>
    %92 = vector.extract_strided_slice %39 {offsets = [0, 56], sizes = [128, 8], strides = [1, 1]} : vector<128x96xbf16> to vector<128x8xbf16>
    %93 = vector.extract_strided_slice %39 {offsets = [0, 88], sizes = [128, 8], strides = [1, 1]} : vector<128x96xbf16> to vector<128x8xbf16>
    %cst_31 = arith.constant dense<0.000000e+00> : vector<128x128xf32>
    %94 = tpu.matmul %91, %92, %cst_31 {dimension_numbers = #tpu.dot_dimension_numbers<[1], [1], [0], [0], [0, 0, 1, 0], [], []>} : vector<128x8xbf16>, vector<128x8xbf16>, vector<128x128xf32> -> vector<128x128xf32>
    %cst_32 = arith.constant 0.353553385 : f32
    %95 = vector.broadcast %cst_32 : f32 to vector<128x128xf32>
    %96 = arith.mulf %94, %95 : vector<128x128xf32>
    %97 = vector.broadcast %1 : vector<1x128xf32> to vector<128x128xf32>
    %98 = arith.addf %96, %97 : vector<128x128xf32>
    %99 = math.exp %98 : vector<128x128xf32>
    %cst_33 = arith.constant dense<0.000000e+00> : vector<128xf32>
    %100 = vector.multi_reduction <add>, %99, %cst_33 [1] : vector<128x128xf32> to vector<128xf32>
    %101 = vector.shape_cast %100 : vector<128xf32> to vector<128x1xf32>
    %102 = tpu.reciprocal %101 {approx = true} : vector<128x1xf32> -> vector<128x1xf32>
    %103 = vector.broadcast %102 : vector<128x1xf32> to vector<128x128xf32>
    %104 = arith.mulf %99, %103 : vector<128x128xf32>
    %105 = arith.truncf %104 : vector<128x128xf32> to vector<128x128xbf16>
    %cst_34 = arith.constant dense<0.000000e+00> : vector<128x8xf32>
    %106 = tpu.matmul %105, %93, %cst_34 {dimension_numbers = #tpu.dot_dimension_numbers<[1], [0], [0], [1], [0, 0, 1, 1], [], []>} : vector<128x128xbf16>, vector<128x8xbf16>, vector<128x8xf32> -> vector<128x8xf32>
    %107 = arith.truncf %106 : vector<128x8xf32> to vector<128x8xbf16>
    %108 = tpu.concatenate %56, %73, %90, %107 in 1 : vector<128x8xbf16>, vector<128x8xbf16>, vector<128x8xbf16>, vector<128x8xbf16> -> vector<128x32xbf16>
    %c0_35 = arith.constant 0 : index
    %c0_36 = arith.constant 0 : index
    %c0_37 = arith.constant 0 : index
    %109 = vector.load %arg7[%c0_35, %c0_36, %c0_37] : memref<2x32x32xbf16, #tpu.memory_space<vmem>>, vector<1x32x32xbf16>
    %110 = vector.shape_cast %109 : vector<1x32x32xbf16> to vector<32x32xbf16>
    %cst_38 = arith.constant dense<0.000000e+00> : vector<128x32xf32>
    %111 = tpu.matmul %108, %110, %cst_38 {dimension_numbers = #tpu.dot_dimension_numbers<[1], [0], [0], [1], [0, 0, 1, 1], [], []>} : vector<128x32xbf16>, vector<32x32xbf16>, vector<128x32xf32> -> vector<128x32xf32>
    %c0_39 = arith.constant 0 : index
    %c0_40 = arith.constant 0 : index
    %c0_41 = arith.constant 0 : index
    %112 = vector.load %arg8[%c0_39, %c0_40, %c0_41] : memref<2x1x32xbf16, #tpu.memory_space<vmem>>, vector<1x1x32xbf16>
    %113 = vector.shape_cast %112 : vector<1x1x32xbf16> to vector<1x32xbf16>
    %114 = arith.extf %113 : vector<1x32xbf16> to vector<1x32xf32>
    %115 = vector.broadcast %114 : vector<1x32xf32> to vector<128x32xf32>
    %116 = arith.addf %111, %115 : vector<128x32xf32>
    %117 = arith.extf %30 : vector<128x32xbf16> to vector<128x32xf32>
    %118 = arith.addf %116, %117 : vector<128x32xf32>
    %c0_42 = arith.constant 0 : index
    %c0_43 = arith.constant 0 : index
    %c0_44 = arith.constant 0 : index
    %119 = vector.load %arg9[%c0_42, %c0_43, %c0_44] : memref<2x1x32xbf16, #tpu.memory_space<vmem>>, vector<1x1x32xbf16>
    %120 = vector.shape_cast %119 : vector<1x1x32xbf16> to vector<1x32xbf16>
    %c0_45 = arith.constant 0 : index
    %c0_46 = arith.constant 0 : index
    %c0_47 = arith.constant 0 : index
    %121 = vector.load %arg10[%c0_45, %c0_46, %c0_47] : memref<2x1x32xbf16, #tpu.memory_space<vmem>>, vector<1x1x32xbf16>
    %122 = vector.shape_cast %121 : vector<1x1x32xbf16> to vector<1x32xbf16>
    %cst_48 = arith.constant dense<0.000000e+00> : vector<128xf32>
    %123 = vector.multi_reduction <add>, %118, %cst_48 [1] : vector<128x32xf32> to vector<128xf32>
    %124 = vector.shape_cast %123 : vector<128xf32> to vector<128x1xf32>
    %cst_49 = arith.constant 3.200000e+01 : f32
    %125 = vector.broadcast %cst_49 : f32 to vector<128x1xf32>
    %126 = arith.divf %124, %125 : vector<128x1xf32>
    %127 = vector.broadcast %126 : vector<128x1xf32> to vector<128x32xf32>
    %128 = arith.subf %118, %127 : vector<128x32xf32>
    %129 = arith.mulf %128, %128 : vector<128x32xf32>
    %cst_50 = arith.constant dense<0.000000e+00> : vector<128xf32>
    %130 = vector.multi_reduction <add>, %129, %cst_50 [1] : vector<128x32xf32> to vector<128xf32>
    %131 = vector.shape_cast %130 : vector<128xf32> to vector<128x1xf32>
    %cst_51 = arith.constant 3.200000e+01 : f32
    %132 = vector.broadcast %cst_51 : f32 to vector<128x1xf32>
    %133 = arith.divf %131, %132 : vector<128x1xf32>
    %134 = vector.broadcast %126 : vector<128x1xf32> to vector<128x32xf32>
    %135 = arith.subf %118, %134 : vector<128x32xf32>
    %cst_52 = arith.constant 9.99999996E-13 : f32
    %136 = vector.broadcast %cst_52 : f32 to vector<128x1xf32>
    %137 = arith.addf %133, %136 : vector<128x1xf32>
    %138 = math.rsqrt %137 : vector<128x1xf32>
    %139 = vector.broadcast %138 : vector<128x1xf32> to vector<128x32xf32>
    %140 = arith.mulf %135, %139 : vector<128x32xf32>
    %141 = arith.extf %120 : vector<1x32xbf16> to vector<1x32xf32>
    %142 = vector.broadcast %141 : vector<1x32xf32> to vector<128x32xf32>
    %143 = arith.mulf %140, %142 : vector<128x32xf32>
    %144 = arith.extf %122 : vector<1x32xbf16> to vector<1x32xf32>
    %145 = vector.broadcast %144 : vector<1x32xf32> to vector<128x32xf32>
    %146 = arith.addf %143, %145 : vector<128x32xf32>
    %147 = arith.truncf %146 : vector<128x32xf32> to vector<128x32xbf16>
    %c0_53 = arith.constant 0 : index
    %c0_54 = arith.constant 0 : index
    %c0_55 = arith.constant 0 : index
    %148 = vector.load %arg11[%c0_53, %c0_54, %c0_55] : memref<2x32x64xbf16, #tpu.memory_space<vmem>>, vector<1x32x64xbf16>
    %149 = vector.shape_cast %148 : vector<1x32x64xbf16> to vector<32x64xbf16>
    %cst_56 = arith.constant dense<0.000000e+00> : vector<128x64xf32>
    %150 = tpu.matmul %147, %149, %cst_56 {dimension_numbers = #tpu.dot_dimension_numbers<[1], [0], [0], [1], [0, 0, 1, 1], [], []>} : vector<128x32xbf16>, vector<32x64xbf16>, vector<128x64xf32> -> vector<128x64xf32>
    %c0_57 = arith.constant 0 : index
    %c0_58 = arith.constant 0 : index
    %c0_59 = arith.constant 0 : index
    %151 = vector.load %arg12[%c0_57, %c0_58, %c0_59] : memref<2x1x64xbf16, #tpu.memory_space<vmem>>, vector<1x1x64xbf16>
    %152 = vector.shape_cast %151 : vector<1x1x64xbf16> to vector<1x64xbf16>
    %153 = arith.extf %152 : vector<1x64xbf16> to vector<1x64xf32>
    %154 = vector.broadcast %153 : vector<1x64xf32> to vector<128x64xf32>
    %155 = arith.addf %150, %154 : vector<128x64xf32>
    %156 = arith.mulf %155, %155 : vector<128x64xf32>
    %157 = arith.mulf %155, %156 : vector<128x64xf32>
    %cst_60 = arith.constant 4.471500e-02 : f32
    %158 = vector.broadcast %cst_60 : f32 to vector<128x64xf32>
    %159 = arith.mulf %158, %157 : vector<128x64xf32>
    %160 = arith.addf %155, %159 : vector<128x64xf32>
    %cst_61 = arith.constant 0.797884583 : f32
    %161 = vector.broadcast %cst_61 : f32 to vector<128x64xf32>
    %162 = arith.mulf %161, %160 : vector<128x64xf32>
    %163 = math.tanh %162 : vector<128x64xf32>
    %cst_62 = arith.constant 1.000000e+00 : f32
    %164 = vector.broadcast %cst_62 : f32 to vector<128x64xf32>
    %165 = arith.addf %164, %163 : vector<128x64xf32>
    %cst_63 = arith.constant 5.000000e-01 : f32
    %166 = vector.broadcast %cst_63 : f32 to vector<128x64xf32>
    %167 = arith.mulf %166, %165 : vector<128x64xf32>
    %168 = arith.mulf %155, %167 : vector<128x64xf32>
    %169 = arith.truncf %168 : vector<128x64xf32> to vector<128x64xbf16>
    %c0_64 = arith.constant 0 : index
    %c0_65 = arith.constant 0 : index
    %c0_66 = arith.constant 0 : index
    %170 = vector.load %arg13[%c0_64, %c0_65, %c0_66] : memref<2x64x32xbf16, #tpu.memory_space<vmem>>, vector<1x64x32xbf16>
    %171 = vector.shape_cast %170 : vector<1x64x32xbf16> to vector<64x32xbf16>
    %cst_67 = arith.constant dense<0.000000e+00> : vector<128x32xf32>
    %172 = tpu.matmul %169, %171, %cst_67 {dimension_numbers = #tpu.dot_dimension_numbers<[1], [0], [0], [1], [0, 0, 1, 1], [], []>} : vector<128x64xbf16>, vector<64x32xbf16>, vector<128x32xf32> -> vector<128x32xf32>
    %c0_68 = arith.constant 0 : index
    %c0_69 = arith.constant 0 : index
    %c0_70 = arith.constant 0 : index
    %173 = vector.load %arg14[%c0_68, %c0_69, %c0_70] : memref<2x1x32xbf16, #tpu.memory_space<vmem>>, vector<1x1x32xbf16>
    %174 = vector.shape_cast %173 : vector<1x1x32xbf16> to vector<1x32xbf16>
    %175 = arith.extf %174 : vector<1x32xbf16> to vector<1x32xf32>
    %176 = vector.broadcast %175 : vector<1x32xf32> to vector<128x32xf32>
    %177 = arith.addf %172, %176 : vector<128x32xf32>
    %178 = arith.extf %147 : vector<128x32xbf16> to vector<128x32xf32>
    %179 = arith.addf %177, %178 : vector<128x32xf32>
    %c0_71 = arith.constant 0 : index
    %c0_72 = arith.constant 0 : index
    %c0_73 = arith.constant 0 : index
    %180 = vector.load %arg15[%c0_71, %c0_72, %c0_73] : memref<2x1x32xbf16, #tpu.memory_space<vmem>>, vector<1x1x32xbf16>
    %181 = vector.shape_cast %180 : vector<1x1x32xbf16> to vector<1x32xbf16>
    %c0_74 = arith.constant 0 : index
    %c0_75 = arith.constant 0 : index
    %c0_76 = arith.constant 0 : index
    %182 = vector.load %arg16[%c0_74, %c0_75, %c0_76] : memref<2x1x32xbf16, #tpu.memory_space<vmem>>, vector<1x1x32xbf16>
    %183 = vector.shape_cast %182 : vector<1x1x32xbf16> to vector<1x32xbf16>
    %cst_77 = arith.constant dense<0.000000e+00> : vector<128xf32>
    %184 = vector.multi_reduction <add>, %179, %cst_77 [1] : vector<128x32xf32> to vector<128xf32>
    %185 = vector.shape_cast %184 : vector<128xf32> to vector<128x1xf32>
    %cst_78 = arith.constant 3.200000e+01 : f32
    %186 = vector.broadcast %cst_78 : f32 to vector<128x1xf32>
    %187 = arith.divf %185, %186 : vector<128x1xf32>
    %188 = vector.broadcast %187 : vector<128x1xf32> to vector<128x32xf32>
    %189 = arith.subf %179, %188 : vector<128x32xf32>
    %190 = arith.mulf %189, %189 : vector<128x32xf32>
    %cst_79 = arith.constant dense<0.000000e+00> : vector<128xf32>
    %191 = vector.multi_reduction <add>, %190, %cst_79 [1] : vector<128x32xf32> to vector<128xf32>
    %192 = vector.shape_cast %191 : vector<128xf32> to vector<128x1xf32>
    %cst_80 = arith.constant 3.200000e+01 : f32
    %193 = vector.broadcast %cst_80 : f32 to vector<128x1xf32>
    %194 = arith.divf %192, %193 : vector<128x1xf32>
    %195 = vector.broadcast %187 : vector<128x1xf32> to vector<128x32xf32>
    %196 = arith.subf %179, %195 : vector<128x32xf32>
    %cst_81 = arith.constant 9.99999996E-13 : f32
    %197 = vector.broadcast %cst_81 : f32 to vector<128x1xf32>
    %198 = arith.addf %194, %197 : vector<128x1xf32>
    %199 = math.rsqrt %198 : vector<128x1xf32>
    %200 = vector.broadcast %199 : vector<128x1xf32> to vector<128x32xf32>
    %201 = arith.mulf %196, %200 : vector<128x32xf32>
    %202 = arith.extf %181 : vector<1x32xbf16> to vector<1x32xf32>
    %203 = vector.broadcast %202 : vector<1x32xf32> to vector<128x32xf32>
    %204 = arith.mulf %201, %203 : vector<128x32xf32>
    %205 = arith.extf %183 : vector<1x32xbf16> to vector<1x32xf32>
    %206 = vector.broadcast %205 : vector<1x32xf32> to vector<128x32xf32>
    %207 = arith.addf %204, %206 : vector<128x32xf32>
    %208 = arith.truncf %207 : vector<128x32xf32> to vector<128x32xbf16>
    %c1 = arith.constant 1 : index
    %c0_82 = arith.constant 0 : index
    %c0_83 = arith.constant 0 : index
    %209 = vector.load %arg5[%c1, %c0_82, %c0_83] : memref<2x32x96xbf16, #tpu.memory_space<vmem>>, vector<1x32x96xbf16>
    %210 = vector.shape_cast %209 : vector<1x32x96xbf16> to vector<32x96xbf16>
    %cst_84 = arith.constant dense<0.000000e+00> : vector<128x96xf32>
    %211 = tpu.matmul %208, %210, %cst_84 {dimension_numbers = #tpu.dot_dimension_numbers<[1], [0], [0], [1], [0, 0, 1, 1], [], []>} : vector<128x32xbf16>, vector<32x96xbf16>, vector<128x96xf32> -> vector<128x96xf32>
    %c1_85 = arith.constant 1 : index
    %c0_86 = arith.constant 0 : index
    %c0_87 = arith.constant 0 : index
    %212 = vector.load %arg6[%c1_85, %c0_86, %c0_87] : memref<2x1x96xbf16, #tpu.memory_space<vmem>>, vector<1x1x96xbf16>
    %213 = vector.shape_cast %212 : vector<1x1x96xbf16> to vector<1x96xbf16>
    %214 = arith.extf %213 : vector<1x96xbf16> to vector<1x96xf32>
    %215 = vector.broadcast %214 : vector<1x96xf32> to vector<128x96xf32>
    %216 = arith.addf %211, %215 : vector<128x96xf32>
    %217 = arith.truncf %216 : vector<128x96xf32> to vector<128x96xbf16>
    %218 = vector.extract_strided_slice %217 {offsets = [0, 0], sizes = [128, 8], strides = [1, 1]} : vector<128x96xbf16> to vector<128x8xbf16>
    %219 = vector.extract_strided_slice %217 {offsets = [0, 32], sizes = [128, 8], strides = [1, 1]} : vector<128x96xbf16> to vector<128x8xbf16>
    %220 = vector.extract_strided_slice %217 {offsets = [0, 64], sizes = [128, 8], strides = [1, 1]} : vector<128x96xbf16> to vector<128x8xbf16>
    %cst_88 = arith.constant dense<0.000000e+00> : vector<128x128xf32>
    %221 = tpu.matmul %218, %219, %cst_88 {dimension_numbers = #tpu.dot_dimension_numbers<[1], [1], [0], [0], [0, 0, 1, 0], [], []>} : vector<128x8xbf16>, vector<128x8xbf16>, vector<128x128xf32> -> vector<128x128xf32>
    %cst_89 = arith.constant 0.353553385 : f32
    %222 = vector.broadcast %cst_89 : f32 to vector<128x128xf32>
    %223 = arith.mulf %221, %222 : vector<128x128xf32>
    %224 = vector.broadcast %1 : vector<1x128xf32> to vector<128x128xf32>
    %225 = arith.addf %223, %224 : vector<128x128xf32>
    %226 = math.exp %225 : vector<128x128xf32>
    %cst_90 = arith.constant dense<0.000000e+00> : vector<128xf32>
    %227 = vector.multi_reduction <add>, %226, %cst_90 [1] : vector<128x128xf32> to vector<128xf32>
    %228 = vector.shape_cast %227 : vector<128xf32> to vector<128x1xf32>
    %229 = tpu.reciprocal %228 {approx = true} : vector<128x1xf32> -> vector<128x1xf32>
    %230 = vector.broadcast %229 : vector<128x1xf32> to vector<128x128xf32>
    %231 = arith.mulf %226, %230 : vector<128x128xf32>
    %232 = arith.truncf %231 : vector<128x128xf32> to vector<128x128xbf16>
    %cst_91 = arith.constant dense<0.000000e+00> : vector<128x8xf32>
    %233 = tpu.matmul %232, %220, %cst_91 {dimension_numbers = #tpu.dot_dimension_numbers<[1], [0], [0], [1], [0, 0, 1, 1], [], []>} : vector<128x128xbf16>, vector<128x8xbf16>, vector<128x8xf32> -> vector<128x8xf32>
    %234 = arith.truncf %233 : vector<128x8xf32> to vector<128x8xbf16>
    %235 = vector.extract_strided_slice %217 {offsets = [0, 8], sizes = [128, 8], strides = [1, 1]} : vector<128x96xbf16> to vector<128x8xbf16>
    %236 = vector.extract_strided_slice %217 {offsets = [0, 40], sizes = [128, 8], strides = [1, 1]} : vector<128x96xbf16> to vector<128x8xbf16>
    %237 = vector.extract_strided_slice %217 {offsets = [0, 72], sizes = [128, 8], strides = [1, 1]} : vector<128x96xbf16> to vector<128x8xbf16>
    %cst_92 = arith.constant dense<0.000000e+00> : vector<128x128xf32>
    %238 = tpu.matmul %235, %236, %cst_92 {dimension_numbers = #tpu.dot_dimension_numbers<[1], [1], [0], [0], [0, 0, 1, 0], [], []>} : vector<128x8xbf16>, vector<128x8xbf16>, vector<128x128xf32> -> vector<128x128xf32>
    %cst_93 = arith.constant 0.353553385 : f32
    %239 = vector.broadcast %cst_93 : f32 to vector<128x128xf32>
    %240 = arith.mulf %238, %239 : vector<128x128xf32>
    %241 = vector.broadcast %1 : vector<1x128xf32> to vector<128x128xf32>
    %242 = arith.addf %240, %241 : vector<128x128xf32>
    %243 = math.exp %242 : vector<128x128xf32>
    %cst_94 = arith.constant dense<0.000000e+00> : vector<128xf32>
    %244 = vector.multi_reduction <add>, %243, %cst_94 [1] : vector<128x128xf32> to vector<128xf32>
    %245 = vector.shape_cast %244 : vector<128xf32> to vector<128x1xf32>
    %246 = tpu.reciprocal %245 {approx = true} : vector<128x1xf32> -> vector<128x1xf32>
    %247 = vector.broadcast %246 : vector<128x1xf32> to vector<128x128xf32>
    %248 = arith.mulf %243, %247 : vector<128x128xf32>
    %249 = arith.truncf %248 : vector<128x128xf32> to vector<128x128xbf16>
    %cst_95 = arith.constant dense<0.000000e+00> : vector<128x8xf32>
    %250 = tpu.matmul %249, %237, %cst_95 {dimension_numbers = #tpu.dot_dimension_numbers<[1], [0], [0], [1], [0, 0, 1, 1], [], []>} : vector<128x128xbf16>, vector<128x8xbf16>, vector<128x8xf32> -> vector<128x8xf32>
    %251 = arith.truncf %250 : vector<128x8xf32> to vector<128x8xbf16>
    %252 = vector.extract_strided_slice %217 {offsets = [0, 16], sizes = [128, 8], strides = [1, 1]} : vector<128x96xbf16> to vector<128x8xbf16>
    %253 = vector.extract_strided_slice %217 {offsets = [0, 48], sizes = [128, 8], strides = [1, 1]} : vector<128x96xbf16> to vector<128x8xbf16>
    %254 = vector.extract_strided_slice %217 {offsets = [0, 80], sizes = [128, 8], strides = [1, 1]} : vector<128x96xbf16> to vector<128x8xbf16>
    %cst_96 = arith.constant dense<0.000000e+00> : vector<128x128xf32>
    %255 = tpu.matmul %252, %253, %cst_96 {dimension_numbers = #tpu.dot_dimension_numbers<[1], [1], [0], [0], [0, 0, 1, 0], [], []>} : vector<128x8xbf16>, vector<128x8xbf16>, vector<128x128xf32> -> vector<128x128xf32>
    %cst_97 = arith.constant 0.353553385 : f32
    %256 = vector.broadcast %cst_97 : f32 to vector<128x128xf32>
    %257 = arith.mulf %255, %256 : vector<128x128xf32>
    %258 = vector.broadcast %1 : vector<1x128xf32> to vector<128x128xf32>
    %259 = arith.addf %257, %258 : vector<128x128xf32>
    %260 = math.exp %259 : vector<128x128xf32>
    %cst_98 = arith.constant dense<0.000000e+00> : vector<128xf32>
    %261 = vector.multi_reduction <add>, %260, %cst_98 [1] : vector<128x128xf32> to vector<128xf32>
    %262 = vector.shape_cast %261 : vector<128xf32> to vector<128x1xf32>
    %263 = tpu.reciprocal %262 {approx = true} : vector<128x1xf32> -> vector<128x1xf32>
    %264 = vector.broadcast %263 : vector<128x1xf32> to vector<128x128xf32>
    %265 = arith.mulf %260, %264 : vector<128x128xf32>
    %266 = arith.truncf %265 : vector<128x128xf32> to vector<128x128xbf16>
    %cst_99 = arith.constant dense<0.000000e+00> : vector<128x8xf32>
    %267 = tpu.matmul %266, %254, %cst_99 {dimension_numbers = #tpu.dot_dimension_numbers<[1], [0], [0], [1], [0, 0, 1, 1], [], []>} : vector<128x128xbf16>, vector<128x8xbf16>, vector<128x8xf32> -> vector<128x8xf32>
    %268 = arith.truncf %267 : vector<128x8xf32> to vector<128x8xbf16>
    %269 = vector.extract_strided_slice %217 {offsets = [0, 24], sizes = [128, 8], strides = [1, 1]} : vector<128x96xbf16> to vector<128x8xbf16>
    %270 = vector.extract_strided_slice %217 {offsets = [0, 56], sizes = [128, 8], strides = [1, 1]} : vector<128x96xbf16> to vector<128x8xbf16>
    %271 = vector.extract_strided_slice %217 {offsets = [0, 88], sizes = [128, 8], strides = [1, 1]} : vector<128x96xbf16> to vector<128x8xbf16>
    %cst_100 = arith.constant dense<0.000000e+00> : vector<128x128xf32>
    %272 = tpu.matmul %269, %270, %cst_100 {dimension_numbers = #tpu.dot_dimension_numbers<[1], [1], [0], [0], [0, 0, 1, 0], [], []>} : vector<128x8xbf16>, vector<128x8xbf16>, vector<128x128xf32> -> vector<128x128xf32>
    %cst_101 = arith.constant 0.353553385 : f32
    %273 = vector.broadcast %cst_101 : f32 to vector<128x128xf32>
    %274 = arith.mulf %272, %273 : vector<128x128xf32>
    %275 = vector.broadcast %1 : vector<1x128xf32> to vector<128x128xf32>
    %276 = arith.addf %274, %275 : vector<128x128xf32>
    %277 = math.exp %276 : vector<128x128xf32>
    %cst_102 = arith.constant dense<0.000000e+00> : vector<128xf32>
    %278 = vector.multi_reduction <add>, %277, %cst_102 [1] : vector<128x128xf32> to vector<128xf32>
    %279 = vector.shape_cast %278 : vector<128xf32> to vector<128x1xf32>
    %280 = tpu.reciprocal %279 {approx = true} : vector<128x1xf32> -> vector<128x1xf32>
    %281 = vector.broadcast %280 : vector<128x1xf32> to vector<128x128xf32>
    %282 = arith.mulf %277, %281 : vector<128x128xf32>
    %283 = arith.truncf %282 : vector<128x128xf32> to vector<128x128xbf16>
    %cst_103 = arith.constant dense<0.000000e+00> : vector<128x8xf32>
    %284 = tpu.matmul %283, %271, %cst_103 {dimension_numbers = #tpu.dot_dimension_numbers<[1], [0], [0], [1], [0, 0, 1, 1], [], []>} : vector<128x128xbf16>, vector<128x8xbf16>, vector<128x8xf32> -> vector<128x8xf32>
    %285 = arith.truncf %284 : vector<128x8xf32> to vector<128x8xbf16>
    %286 = tpu.concatenate %234, %251, %268, %285 in 1 : vector<128x8xbf16>, vector<128x8xbf16>, vector<128x8xbf16>, vector<128x8xbf16> -> vector<128x32xbf16>
    %c1_104 = arith.constant 1 : index
    %c0_105 = arith.constant 0 : index
    %c0_106 = arith.constant 0 : index
    %287 = vector.load %arg7[%c1_104, %c0_105, %c0_106] : memref<2x32x32xbf16, #tpu.memory_space<vmem>>, vector<1x32x32xbf16>
    %288 = vector.shape_cast %287 : vector<1x32x32xbf16> to vector<32x32xbf16>
    %cst_107 = arith.constant dense<0.000000e+00> : vector<128x32xf32>
    %289 = tpu.matmul %286, %288, %cst_107 {dimension_numbers = #tpu.dot_dimension_numbers<[1], [0], [0], [1], [0, 0, 1, 1], [], []>} : vector<128x32xbf16>, vector<32x32xbf16>, vector<128x32xf32> -> vector<128x32xf32>
    %c1_108 = arith.constant 1 : index
    %c0_109 = arith.constant 0 : index
    %c0_110 = arith.constant 0 : index
    %290 = vector.load %arg8[%c1_108, %c0_109, %c0_110] : memref<2x1x32xbf16, #tpu.memory_space<vmem>>, vector<1x1x32xbf16>
    %291 = vector.shape_cast %290 : vector<1x1x32xbf16> to vector<1x32xbf16>
    %292 = arith.extf %291 : vector<1x32xbf16> to vector<1x32xf32>
    %293 = vector.broadcast %292 : vector<1x32xf32> to vector<128x32xf32>
    %294 = arith.addf %289, %293 : vector<128x32xf32>
    %295 = arith.extf %208 : vector<128x32xbf16> to vector<128x32xf32>
    %296 = arith.addf %294, %295 : vector<128x32xf32>
    %c1_111 = arith.constant 1 : index
    %c0_112 = arith.constant 0 : index
    %c0_113 = arith.constant 0 : index
    %297 = vector.load %arg9[%c1_111, %c0_112, %c0_113] : memref<2x1x32xbf16, #tpu.memory_space<vmem>>, vector<1x1x32xbf16>
    %298 = vector.shape_cast %297 : vector<1x1x32xbf16> to vector<1x32xbf16>
    %c1_114 = arith.constant 1 : index
    %c0_115 = arith.constant 0 : index
    %c0_116 = arith.constant 0 : index
    %299 = vector.load %arg10[%c1_114, %c0_115, %c0_116] : memref<2x1x32xbf16, #tpu.memory_space<vmem>>, vector<1x1x32xbf16>
    %300 = vector.shape_cast %299 : vector<1x1x32xbf16> to vector<1x32xbf16>
    %cst_117 = arith.constant dense<0.000000e+00> : vector<128xf32>
    %301 = vector.multi_reduction <add>, %296, %cst_117 [1] : vector<128x32xf32> to vector<128xf32>
    %302 = vector.shape_cast %301 : vector<128xf32> to vector<128x1xf32>
    %cst_118 = arith.constant 3.200000e+01 : f32
    %303 = vector.broadcast %cst_118 : f32 to vector<128x1xf32>
    %304 = arith.divf %302, %303 : vector<128x1xf32>
    %305 = vector.broadcast %304 : vector<128x1xf32> to vector<128x32xf32>
    %306 = arith.subf %296, %305 : vector<128x32xf32>
    %307 = arith.mulf %306, %306 : vector<128x32xf32>
    %cst_119 = arith.constant dense<0.000000e+00> : vector<128xf32>
    %308 = vector.multi_reduction <add>, %307, %cst_119 [1] : vector<128x32xf32> to vector<128xf32>
    %309 = vector.shape_cast %308 : vector<128xf32> to vector<128x1xf32>
    %cst_120 = arith.constant 3.200000e+01 : f32
    %310 = vector.broadcast %cst_120 : f32 to vector<128x1xf32>
    %311 = arith.divf %309, %310 : vector<128x1xf32>
    %312 = vector.broadcast %304 : vector<128x1xf32> to vector<128x32xf32>
    %313 = arith.subf %296, %312 : vector<128x32xf32>
    %cst_121 = arith.constant 9.99999996E-13 : f32
    %314 = vector.broadcast %cst_121 : f32 to vector<128x1xf32>
    %315 = arith.addf %311, %314 : vector<128x1xf32>
    %316 = math.rsqrt %315 : vector<128x1xf32>
    %317 = vector.broadcast %316 : vector<128x1xf32> to vector<128x32xf32>
    %318 = arith.mulf %313, %317 : vector<128x32xf32>
    %319 = arith.extf %298 : vector<1x32xbf16> to vector<1x32xf32>
    %320 = vector.broadcast %319 : vector<1x32xf32> to vector<128x32xf32>
    %321 = arith.mulf %318, %320 : vector<128x32xf32>
    %322 = arith.extf %300 : vector<1x32xbf16> to vector<1x32xf32>
    %323 = vector.broadcast %322 : vector<1x32xf32> to vector<128x32xf32>
    %324 = arith.addf %321, %323 : vector<128x32xf32>
    %325 = arith.truncf %324 : vector<128x32xf32> to vector<128x32xbf16>
    %c1_122 = arith.constant 1 : index
    %c0_123 = arith.constant 0 : index
    %c0_124 = arith.constant 0 : index
    %326 = vector.load %arg11[%c1_122, %c0_123, %c0_124] : memref<2x32x64xbf16, #tpu.memory_space<vmem>>, vector<1x32x64xbf16>
    %327 = vector.shape_cast %326 : vector<1x32x64xbf16> to vector<32x64xbf16>
    %cst_125 = arith.constant dense<0.000000e+00> : vector<128x64xf32>
    %328 = tpu.matmul %325, %327, %cst_125 {dimension_numbers = #tpu.dot_dimension_numbers<[1], [0], [0], [1], [0, 0, 1, 1], [], []>} : vector<128x32xbf16>, vector<32x64xbf16>, vector<128x64xf32> -> vector<128x64xf32>
    %c1_126 = arith.constant 1 : index
    %c0_127 = arith.constant 0 : index
    %c0_128 = arith.constant 0 : index
    %329 = vector.load %arg12[%c1_126, %c0_127, %c0_128] : memref<2x1x64xbf16, #tpu.memory_space<vmem>>, vector<1x1x64xbf16>
    %330 = vector.shape_cast %329 : vector<1x1x64xbf16> to vector<1x64xbf16>
    %331 = arith.extf %330 : vector<1x64xbf16> to vector<1x64xf32>
    %332 = vector.broadcast %331 : vector<1x64xf32> to vector<128x64xf32>
    %333 = arith.addf %328, %332 : vector<128x64xf32>
    %334 = arith.mulf %333, %333 : vector<128x64xf32>
    %335 = arith.mulf %333, %334 : vector<128x64xf32>
    %cst_129 = arith.constant 4.471500e-02 : f32
    %336 = vector.broadcast %cst_129 : f32 to vector<128x64xf32>
    %337 = arith.mulf %336, %335 : vector<128x64xf32>
    %338 = arith.addf %333, %337 : vector<128x64xf32>
    %cst_130 = arith.constant 0.797884583 : f32
    %339 = vector.broadcast %cst_130 : f32 to vector<128x64xf32>
    %340 = arith.mulf %339, %338 : vector<128x64xf32>
    %341 = math.tanh %340 : vector<128x64xf32>
    %cst_131 = arith.constant 1.000000e+00 : f32
    %342 = vector.broadcast %cst_131 : f32 to vector<128x64xf32>
    %343 = arith.addf %342, %341 : vector<128x64xf32>
    %cst_132 = arith.constant 5.000000e-01 : f32
    %344 = vector.broadcast %cst_132 : f32 to vector<128x64xf32>
    %345 = arith.mulf %344, %343 : vector<128x64xf32>
    %346 = arith.mulf %333, %345 : vector<128x64xf32>
    %347 = arith.truncf %346 : vector<128x64xf32> to vector<128x64xbf16>
    %c1_133 = arith.constant 1 : index
    %c0_134 = arith.constant 0 : index
    %c0_135 = arith.constant 0 : index
    %348 = vector.load %arg13[%c1_133, %c0_134, %c0_135] : memref<2x64x32xbf16, #tpu.memory_space<vmem>>, vector<1x64x32xbf16>
    %349 = vector.shape_cast %348 : vector<1x64x32xbf16> to vector<64x32xbf16>
    %cst_136 = arith.constant dense<0.000000e+00> : vector<128x32xf32>
    %350 = tpu.matmul %347, %349, %cst_136 {dimension_numbers = #tpu.dot_dimension_numbers<[1], [0], [0], [1], [0, 0, 1, 1], [], []>} : vector<128x64xbf16>, vector<64x32xbf16>, vector<128x32xf32> -> vector<128x32xf32>
    %c1_137 = arith.constant 1 : index
    %c0_138 = arith.constant 0 : index
    %c0_139 = arith.constant 0 : index
    %351 = vector.load %arg14[%c1_137, %c0_138, %c0_139] : memref<2x1x32xbf16, #tpu.memory_space<vmem>>, vector<1x1x32xbf16>
    %352 = vector.shape_cast %351 : vector<1x1x32xbf16> to vector<1x32xbf16>
    %353 = arith.extf %352 : vector<1x32xbf16> to vector<1x32xf32>
    %354 = vector.broadcast %353 : vector<1x32xf32> to vector<128x32xf32>
    %355 = arith.addf %350, %354 : vector<128x32xf32>
    %356 = arith.extf %325 : vector<128x32xbf16> to vector<128x32xf32>
    %357 = arith.addf %355, %356 : vector<128x32xf32>
    %c1_140 = arith.constant 1 : index
    %c0_141 = arith.constant 0 : index
    %c0_142 = arith.constant 0 : index
    %358 = vector.load %arg15[%c1_140, %c0_141, %c0_142] : memref<2x1x32xbf16, #tpu.memory_space<vmem>>, vector<1x1x32xbf16>
    %359 = vector.shape_cast %358 : vector<1x1x32xbf16> to vector<1x32xbf16>
    %c1_143 = arith.constant 1 : index
    %c0_144 = arith.constant 0 : index
    %c0_145 = arith.constant 0 : index
    %360 = vector.load %arg16[%c1_143, %c0_144, %c0_145] : memref<2x1x32xbf16, #tpu.memory_space<vmem>>, vector<1x1x32xbf16>
    %361 = vector.shape_cast %360 : vector<1x1x32xbf16> to vector<1x32xbf16>
    %cst_146 = arith.constant dense<0.000000e+00> : vector<128xf32>
    %362 = vector.multi_reduction <add>, %357, %cst_146 [1] : vector<128x32xf32> to vector<128xf32>
    %363 = vector.shape_cast %362 : vector<128xf32> to vector<128x1xf32>
    %cst_147 = arith.constant 3.200000e+01 : f32
    %364 = vector.broadcast %cst_147 : f32 to vector<128x1xf32>
    %365 = arith.divf %363, %364 : vector<128x1xf32>
    %366 = vector.broadcast %365 : vector<128x1xf32> to vector<128x32xf32>
    %367 = arith.subf %357, %366 : vector<128x32xf32>
    %368 = arith.mulf %367, %367 : vector<128x32xf32>
    %cst_148 = arith.constant dense<0.000000e+00> : vector<128xf32>
    %369 = vector.multi_reduction <add>, %368, %cst_148 [1] : vector<128x32xf32> to vector<128xf32>
    %370 = vector.shape_cast %369 : vector<128xf32> to vector<128x1xf32>
    %cst_149 = arith.constant 3.200000e+01 : f32
    %371 = vector.broadcast %cst_149 : f32 to vector<128x1xf32>
    %372 = arith.divf %370, %371 : vector<128x1xf32>
    %373 = vector.broadcast %365 : vector<128x1xf32> to vector<128x32xf32>
    %374 = arith.subf %357, %373 : vector<128x32xf32>
    %cst_150 = arith.constant 9.99999996E-13 : f32
    %375 = vector.broadcast %cst_150 : f32 to vector<128x1xf32>
    %376 = arith.addf %372, %375 : vector<128x1xf32>
    %377 = math.rsqrt %376 : vector<128x1xf32>
    %378 = vector.broadcast %377 : vector<128x1xf32> to vector<128x32xf32>
    %379 = arith.mulf %374, %378 : vector<128x32xf32>
    %380 = arith.extf %359 : vector<1x32xbf16> to vector<1x32xf32>
    %381 = vector.broadcast %380 : vector<1x32xf32> to vector<128x32xf32>
    %382 = arith.mulf %379, %381 : vector<128x32xf32>
    %383 = arith.extf %361 : vector<1x32xbf16> to vector<1x32xf32>
    %384 = vector.broadcast %383 : vector<1x32xf32> to vector<128x32xf32>
    %385 = arith.addf %382, %384 : vector<128x32xf32>
    %386 = arith.truncf %385 : vector<128x32xf32> to vector<128x32xbf16>
    %387 = arith.extf %386 : vector<128x32xbf16> to vector<128x32xf32>
    %c0_151 = arith.constant 0 : index
    %c0_152 = arith.constant 0 : index
    %388 = vector.load %arg17[%c0_151, %c0_152] : memref<32x128xf32, #tpu.memory_space<vmem>>, vector<32x128xf32>
    %cst_153 = arith.constant dense<0.000000e+00> : vector<128x128xf32>
    %389 = tpu.matmul %387, %388, %cst_153 {dimension_numbers = #tpu.dot_dimension_numbers<[1], [0], [0], [1], [0, 0, 1, 1], [], []>} : vector<128x32xf32>, vector<32x128xf32>, vector<128x128xf32> -> vector<128x128xf32>
    %c0_154 = arith.constant 0 : index
    %c0_155 = arith.constant 0 : index
    %390 = vector.load %arg18[%c0_154, %c0_155] : memref<1x128xf32, #tpu.memory_space<vmem>>, vector<1x128xf32>
    %391 = vector.broadcast %390 : vector<1x128xf32> to vector<128x128xf32>
    %392 = arith.addf %389, %391 : vector<128x128xf32>
    %393 = arith.negf %392 : vector<128x128xf32>
    %394 = math.exp %393 : vector<128x128xf32>
    %cst_156 = arith.constant 1.000000e+00 : f32
    %395 = vector.broadcast %cst_156 : f32 to vector<128x128xf32>
    %396 = arith.addf %395, %394 : vector<128x128xf32>
    %397 = arith.divf %395, %396 : vector<128x128xf32>
    %c0_157 = arith.constant 0 : index
    %c0_158 = arith.constant 0 : index
    %398 = vector.load %arg19[%c0_157, %c0_158] : memref<128x128xf32, #tpu.memory_space<vmem>>, vector<128x128xf32>
    tpu.vector_store %arg19[%c0_157, %c0_158], %397 {strides = array<i32>} : memref<128x128xf32, #tpu.memory_space<vmem>>, vector<128x128xf32>,
    return
  }
  func.func @transform_0(%arg0: i32) -> (i32, i32) {
    %c0_i32 = arith.constant 0 : i32
    %c0_i32_0 = arith.constant 0 : i32
    return %arg0, %c0_i32 : i32, i32
  }
  func.func @transform_1(%arg0: i32) -> (i32, i32, i32) {
    %c0_i32 = arith.constant 0 : i32
    %c0_i32_0 = arith.constant 0 : i32
    %c0_i32_1 = arith.constant 0 : i32
    return %arg0, %c0_i32, %c0_i32_0 : i32, i32, i32
  }
  func.func @transform_2(%arg0: i32) -> (i32, i32) {
    %c0_i32 = arith.constant 0 : i32
    %c0_i32_0 = arith.constant 0 : i32
    %c0_i32_1 = arith.constant 0 : i32
    return %c0_i32, %c0_i32_0 : i32, i32
  }
  func.func @transform_3(%arg0: i32) -> (i32, i32) {
    %c0_i32 = arith.constant 0 : i32
    %c0_i32_0 = arith.constant 0 : i32
    %c0_i32_1 = arith.constant 0 : i32
    return %c0_i32, %c0_i32_0 : i32, i32
  }
  func.func @transform_4(%arg0: i32) -> (i32, i32, i32) {
    %c0_i32 = arith.constant 0 : i32
    %c0_i32_0 = arith.constant 0 : i32
    %c0_i32_1 = arith.constant 0 : i32
    %c0_i32_2 = arith.constant 0 : i32
    return %c0_i32, %c0_i32_0, %c0_i32_1 : i32, i32, i32
  }
  func.func @transform_5(%arg0: i32) -> (i32, i32, i32) {
    %c0_i32 = arith.constant 0 : i32
    %c0_i32_0 = arith.constant 0 : i32
    %c0_i32_1 = arith.constant 0 : i32
    %c0_i32_2 = arith.constant 0 : i32
    return %c0_i32, %c0_i32_0, %c0_i32_1 : i32, i32, i32
  }
  func.func @transform_6(%arg0: i32) -> (i32, i32, i32) {
    %c0_i32 = arith.constant 0 : i32
    %c0_i32_0 = arith.constant 0 : i32
    %c0_i32_1 = arith.constant 0 : i32
    %c0_i32_2 = arith.constant 0 : i32
    return %c0_i32, %c0_i32_0, %c0_i32_1 : i32, i32, i32
  }
  func.func @transform_7(%arg0: i32) -> (i32, i32, i32) {
    %c0_i32 = arith.constant 0 : i32
    %c0_i32_0 = arith.constant 0 : i32
    %c0_i32_1 = arith.constant 0 : i32
    %c0_i32_2 = arith.constant 0 : i32
    return %c0_i32, %c0_i32_0, %c0_i32_1 : i32, i32, i32
  }
  func.func @transform_8(%arg0: i32) -> (i32, i32, i32) {
    %c0_i32 = arith.constant 0 : i32
    %c0_i32_0 = arith.constant 0 : i32
    %c0_i32_1 = arith.constant 0 : i32
    %c0_i32_2 = arith.constant 0 : i32
    return %c0_i32, %c0_i32_0, %c0_i32_1 : i32, i32, i32
  }
  func.func @transform_9(%arg0: i32) -> (i32, i32, i32) {
    %c0_i32 = arith.constant 0 : i32
    %c0_i32_0 = arith.constant 0 : i32
    %c0_i32_1 = arith.constant 0 : i32
    %c0_i32_2 = arith.constant 0 : i32
    return %c0_i32, %c0_i32_0, %c0_i32_1 : i32, i32, i32
  }
  func.func @transform_10(%arg0: i32) -> (i32, i32, i32) {
    %c0_i32 = arith.constant 0 : i32
    %c0_i32_0 = arith.constant 0 : i32
    %c0_i32_1 = arith.constant 0 : i32
    %c0_i32_2 = arith.constant 0 : i32
    return %c0_i32, %c0_i32_0, %c0_i32_1 : i32, i32, i32
  }
  func.func @transform_11(%arg0: i32) -> (i32, i32, i32) {
    %c0_i32 = arith.constant 0 : i32
    %c0_i32_0 = arith.constant 0 : i32
    %c0_i32_1 = arith.constant 0 : i32
    %c0_i32_2 = arith.constant 0 : i32
    return %c0_i32, %c0_i32_0, %c0_i32_1 : i32, i32, i32
  }
  func.func @transform_12(%arg0: i32) -> (i32, i32, i32) {
    %c0_i32 = arith.constant 0 : i32
    %c0_i32_0 = arith.constant 0 : i32
    %c0_i32_1 = arith.constant 0 : i32
    %c0_i32_2 = arith.constant 0 : i32
    return %c0_i32, %c0_i32_0, %c0_i32_1 : i32, i32, i32
  }
  func.func @transform_13(%arg0: i32) -> (i32, i32, i32) {
    %c0_i32 = arith.constant 0 : i32
    %c0_i32_0 = arith.constant 0 : i32
    %c0_i32_1 = arith.constant 0 : i32
    %c0_i32_2 = arith.constant 0 : i32
    return %c0_i32, %c0_i32_0, %c0_i32_1 : i32, i32, i32
  }
  func.func @transform_14(%arg0: i32) -> (i32, i32, i32) {
    %c0_i32 = arith.constant 0 : i32
    %c0_i32_0 = arith.constant 0 : i32
    %c0_i32_1 = arith.constant 0 : i32
    %c0_i32_2 = arith.constant 0 : i32
    return %c0_i32, %c0_i32_0, %c0_i32_1 : i32, i32, i32
  }
  func.func @transform_15(%arg0: i32) -> (i32, i32, i32) {
    %c0_i32 = arith.constant 0 : i32
    %c0_i32_0 = arith.constant 0 : i32
    %c0_i32_1 = arith.constant 0 : i32
    %c0_i32_2 = arith.constant 0 : i32
    return %c0_i32, %c0_i32_0, %c0_i32_1 : i32, i32, i32
  }
  func.func @transform_16(%arg0: i32) -> (i32, i32) {
    %c0_i32 = arith.constant 0 : i32
    %c0_i32_0 = arith.constant 0 : i32
    %c0_i32_1 = arith.constant 0 : i32
    return %c0_i32, %c0_i32_0 : i32, i32
  }
  func.func @transform_17(%arg0: i32) -> (i32, i32) {
    %c0_i32 = arith.constant 0 : i32
    %c0_i32_0 = arith.constant 0 : i32
    %c0_i32_1 = arith.constant 0 : i32
    return %c0_i32, %c0_i32_0 : i32, i32
  }
  func.func @transform_18(%arg0: i32) -> (i32, i32) {
    %c0_i32 = arith.constant 0 : i32
    %c0_i32_0 = arith.constant 0 : i32
    return %arg0, %c0_i32 : i32, i32
  }
}

</mosaic_0001>

<llo_original>
// kernel: _bert_and_tag.1
$region0: #{_bert_and_tag.1}
  #allocation0 [shape = 'u32[]', space=smem, size = 0x4, offset = 0x4, fixed_abs, tag = 'smem constant byte address 0x4 - core index']
  #allocation1 [shape = 'u32[144,128]{1,0:T(1,128)}', space=vmem, size = 0x12000, scoped, tag = 'internal scratch']
  %s0 = inlined_call_operand.vmem [shape: bf16[256,32], index: 0, kind: input, shape index: {}]
  %s1 = inlined_call_operand.vmem [shape: f32[2,1,128], index: 1, kind: input, shape index: {}]
  %s2 = inlined_call_operand.vmem [shape: bf16[1,32], index: 2, kind: input, shape index: {}]
  %s3 = inlined_call_operand.vmem [shape: bf16[1,32], index: 3, kind: input, shape index: {}]
  %s4 = inlined_call_operand.vmem [shape: bf16[2,32,96], index: 4, kind: input, shape index: {}]
  %s5 = inlined_call_operand.vmem [shape: bf16[2,1,96], index: 5, kind: input, shape index: {}]
  %s6 = inlined_call_operand.vmem [shape: bf16[2,32,32], index: 6, kind: input, shape index: {}]
  %s7 = inlined_call_operand.vmem [shape: bf16[2,1,32], index: 7, kind: input, shape index: {}]
  %s8 = inlined_call_operand.vmem [shape: bf16[2,1,32], index: 8, kind: input, shape index: {}]
  %s9 = inlined_call_operand.vmem [shape: bf16[2,1,32], index: 9, kind: input, shape index: {}]
  %s10 = inlined_call_operand.vmem [shape: bf16[2,32,64], index: 10, kind: input, shape index: {}]
  %s11 = inlined_call_operand.vmem [shape: bf16[2,1,64], index: 11, kind: input, shape index: {}]
  %s12 = inlined_call_operand.vmem [shape: bf16[2,64,32], index: 12, kind: input, shape index: {}]
  %s13 = inlined_call_operand.vmem [shape: bf16[2,1,32], index: 13, kind: input, shape index: {}]
  %s14 = inlined_call_operand.vmem [shape: bf16[2,1,32], index: 14, kind: input, shape index: {}]
  %s15 = inlined_call_operand.vmem [shape: bf16[2,1,32], index: 15, kind: input, shape index: {}]
  %s16 = inlined_call_operand.vmem [shape: f32[32,128], index: 16, kind: input, shape index: {}]
  %s17 = inlined_call_operand.vmem [shape: f32[1,128], index: 17, kind: input, shape index: {}]
  %s18 = inlined_call_operand.vmem [shape: f32[256,128], index: 18, kind: output, shape index: {}]
  %s19 = sld [smem:[#allocation0]]
  $region105: #{_bert_and_tag.1} parent=0
    _
  %s21 = ssub.s32 1, %s19
  %s22 = scalar_select 0, %s21, %s19
  loop: start=0, step=1, limit=4
  $region2: #{_bert_and_tag.1} parent=0 // loop_pre_header
    _
  $region3: #{_bert_and_tag.1} parent=0 // loop_header
    %s24 = sphi 0, %s28
    %p25 = scmp.ge.s32.totalorder %s24, 4
    %s34 = sphi 0, %s36
    %s37 = sphi 0, %s34
    %s38 = sphi 0, %s37
    %s54 = sphi 0, %s38
    %s60 = sphi 0, %s62
    %s63 = sphi 0, %s60
    %s64 = sphi 0, %s63
    %s80 = sphi 0, %s64
    %s84 = sphi 0, %s84
    %s86 = sphi 0, %s84
    %s87 = sphi 0, %s86
    %s101 = sphi 0, %s87
    %s105 = sphi 0, %s105
    %s107 = sphi 0, %s105
    %s108 = sphi 0, %s107
    %s122 = sphi 0, %s108
    %s126 = sphi 0, %s126
    %s128 = sphi 0, %s126
    %s129 = sphi 0, %s128
    %s143 = sphi 0, %s129
    %s147 = sphi 0, %s147
    %s149 = sphi 0, %s147
    %s150 = sphi 0, %s149
    %s164 = sphi 0, %s150
    %s168 = sphi 0, %s168
    %s170 = sphi 0, %s168
    %s171 = sphi 0, %s170
    %s185 = sphi 0, %s171
    %s189 = sphi 0, %s189
    %s191 = sphi 0, %s189
    %s192 = sphi 0, %s191
    %s206 = sphi 0, %s192
    %s210 = sphi 0, %s210
    %s212 = sphi 0, %s210
    %s213 = sphi 0, %s212
    %s227 = sphi 0, %s213
    %s231 = sphi 0, %s231
    %s233 = sphi 0, %s231
    %s234 = sphi 0, %s233
    %s248 = sphi 0, %s234
    %s252 = sphi 0, %s252
    %s254 = sphi 0, %s252
    %s255 = sphi 0, %s254
    %s269 = sphi 0, %s255
    %s273 = sphi 0, %s273
    %s275 = sphi 0, %s273
    %s276 = sphi 0, %s275
    %s290 = sphi 0, %s276
    %s294 = sphi 0, %s294
    %s296 = sphi 0, %s294
    %s297 = sphi 0, %s296
    %s311 = sphi 0, %s297
    %s315 = sphi 0, %s315
    %s317 = sphi 0, %s315
    %s318 = sphi 0, %s317
    %s332 = sphi 0, %s318
    %s336 = sphi 0, %s336
    %s338 = sphi 0, %s336
    %s339 = sphi 0, %s338
    %s353 = sphi 0, %s339
    %s357 = sphi 0, %s357
    %s359 = sphi 0, %s357
    %s360 = sphi 0, %s359
    %s374 = sphi 0, %s360
    %s378 = sphi 0, %s378
    %s380 = sphi 0, %s378
    %s381 = sphi 0, %s380
    %s395 = sphi 0, %s381
    %s399 = sphi 0, %s399
    %s401 = sphi 0, %s399
    %s402 = sphi 0, %s401
    %s416 = sphi 0, %s402
    %s422 = sphi 0, %s424
    %s425 = sphi 0, %s422
    %s426 = sphi 0, %s425
    %s442 = sphi 0, %s426
  $region4: #{_bert_and_tag.1} parent=0 // loop_header_branch
    %27 = sbr.rel (%p25) target = $region8
  $region5: #{_bert_and_tag.1} parent=0 // loop_body
    %s29 = ssub.s32 %s24, 1
    %s30 = ssub.s32 %s24, 2
    %s31 = sadd.s32 %s24, 1
    %s32 = ssub.s32 %s24, %s31
    %p33 = scmp.eq.s32.totalorder %s32, 0
    %s35 = sadd.s32 %s34, 1
    %s36 = scalar_select %p33, %s34, %s35
    %p39 = pneg %p33
    %p40 = scmp.eq.s32.totalorder %s24, 1
    %p41 = por %p39, %p40
    %p42 = scmp.ne.s32.totalorder %s34, %s37
    %p43 = scmp.eq.s32.totalorder %s24, 0
    %p44 = por %p42, %p43
    %p45 = scmp.ne.s32.totalorder %s34, %s37
    %p46 = scmp.eq.s32.totalorder %s29, 1
    %p47 = por %p45, %p46
    %p48 = scmp.ne.s32.totalorder %s37, %s38
    %p49 = scmp.eq.s32.totalorder %s29, 0
    %p50 = por %p48, %p49
    %p51 = scmp.ne.s32.totalorder %s37, %s38
    %p52 = scmp.eq.s32.totalorder %s30, 1
    %p53 = por %p51, %p52
    %p55 = scmp.ne.s32.totalorder %s38, %s54
    %p56 = scmp.eq.s32.totalorder %s30, 0
    %p57 = por %p55, %p56
    %s58 = ssub.s32 %s24, %s31
    %p59 = scmp.eq.s32.totalorder %s58, 0
    %s61 = sadd.s32 %s60, 1
    %s62 = scalar_select %p59, %s60, %s61
    %p65 = pneg %p59
    %p66 = scmp.eq.s32.totalorder %s24, 1
    %p67 = por %p65, %p66
    %p68 = scmp.ne.s32.totalorder %s60, %s63
    %p69 = scmp.eq.s32.totalorder %s24, 0
    %p70 = por %p68, %p69
    %p71 = scmp.ne.s32.totalorder %s60, %s63
    %p72 = scmp.eq.s32.totalorder %s29, 1
    %p73 = por %p71, %p72
    %p74 = scmp.ne.s32.totalorder %s63, %s64
    %p75 = scmp.eq.s32.totalorder %s29, 0
    %p76 = por %p74, %p75
    %p77 = scmp.ne.s32.totalorder %s63, %s64
    %p78 = scmp.eq.s32.totalorder %s30, 1
    %p79 = por %p77, %p78
    %p81 = scmp.ne.s32.totalorder %s64, %s80
    %p82 = scmp.eq.s32.totalorder %s30, 0
    %p83 = por %p81, %p82
    %s85 = sadd.s32 %s84, 1
    %p88 = scmp.eq.s32.totalorder %s24, 1
    %p89 = scmp.ne.s32.totalorder %s84, %s86
    %p90 = scmp.eq.s32.totalorder %s24, 0
    %p91 = por %p89, %p90
    %p92 = scmp.ne.s32.totalorder %s84, %s86
    %p93 = scmp.eq.s32.totalorder %s29, 1
    %p94 = por %p92, %p93
    %p95 = scmp.ne.s32.totalorder %s86, %s87
    %p96 = scmp.eq.s32.totalorder %s29, 0
    %p97 = por %p95, %p96
    %p98 = scmp.ne.s32.totalorder %s86, %s87
    %p99 = scmp.eq.s32.totalorder %s30, 1
    %p100 = por %p98, %p99
    %p102 = scmp.ne.s32.totalorder %s87, %s101
    %p103 = scmp.eq.s32.totalorder %s30, 0
    %p104 = por %p102, %p103
    %s106 = sadd.s32 %s105, 1
    %p109 = scmp.eq.s32.totalorder %s24, 1
    %p110 = scmp.ne.s32.totalorder %s105, %s107
    %p111 = scmp.eq.s32.totalorder %s24, 0
    %p112 = por %p110, %p111
    %p113 = scmp.ne.s32.totalorder %s105, %s107
    %p114 = scmp.eq.s32.totalorder %s29, 1
    %p115 = por %p113, %p114
    %p116 = scmp.ne.s32.totalorder %s107, %s108
    %p117 = scmp.eq.s32.totalorder %s29, 0
    %p118 = por %p116, %p117
    %p119 = scmp.ne.s32.totalorder %s107, %s108
    %p120 = scmp.eq.s32.totalorder %s30, 1
    %p121 = por %p119, %p120
    %p123 = scmp.ne.s32.totalorder %s108, %s122
    %p124 = scmp.eq.s32.totalorder %s30, 0
    %p125 = por %p123, %p124
    %s127 = sadd.s32 %s126, 1
    %p130 = scmp.eq.s32.totalorder %s24, 1
    %p131 = scmp.ne.s32.totalorder %s126, %s128
    %p132 = scmp.eq.s32.totalorder %s24, 0
    %p133 = por %p131, %p132
    %p134 = scmp.ne.s32.totalorder %s126, %s128
    %p135 = scmp.eq.s32.totalorder %s29, 1
    %p136 = por %p134, %p135
    %p137 = scmp.ne.s32.totalorder %s128, %s129
    %p138 = scmp.eq.s32.totalorder %s29, 0
    %p139 = por %p137, %p138
    %p140 = scmp.ne.s32.totalorder %s128, %s129
    %p141 = scmp.eq.s32.totalorder %s30, 1
    %p142 = por %p140, %p141
    %p144 = scmp.ne.s32.totalorder %s129, %s143
    %p145 = scmp.eq.s32.totalorder %s30, 0
    %p146 = por %p144, %p145
    %s148 = sadd.s32 %s147, 1
    %p151 = scmp.eq.s32.totalorder %s24, 1
    %p152 = scmp.ne.s32.totalorder %s147, %s149
    %p153 = scmp.eq.s32.totalorder %s24, 0
    %p154 = por %p152, %p153
    %p155 = scmp.ne.s32.totalorder %s147, %s149
    %p156 = scmp.eq.s32.totalorder %s29, 1
    %p157 = por %p155, %p156
    %p158 = scmp.ne.s32.totalorder %s149, %s150
    %p159 = scmp.eq.s32.totalorder %s29, 0
    %p160 = por %p158, %p159
    %p161 = scmp.ne.s32.totalorder %s149, %s150
    %p162 = scmp.eq.s32.totalorder %s30, 1
    %p163 = por %p161, %p162
    %p165 = scmp.ne.s32.totalorder %s150, %s164
    %p166 = scmp.eq.s32.totalorder %s30, 0
    %p167 = por %p165, %p166
    %s169 = sadd.s32 %s168, 1
    %p172 = scmp.eq.s32.totalorder %s24, 1
    %p173 = scmp.ne.s32.totalorder %s168, %s170
    %p174 = scmp.eq.s32.totalorder %s24, 0
    %p175 = por %p173, %p174
    %p176 = scmp.ne.s32.totalorder %s168, %s170
    %p177 = scmp.eq.s32.totalorder %s29, 1
    %p178 = por %p176, %p177
    %p179 = scmp.ne.s32.totalorder %s170, %s171
    %p180 = scmp.eq.s32.totalorder %s29, 0
    %p181 = por %p179, %p180
    %p182 = scmp.ne.s32.totalorder %s170, %s171
    %p183 = scmp.eq.s32.totalorder %s30, 1
    %p184 = por %p182, %p183
    %p186 = scmp.ne.s32.totalorder %s171, %s185
    %p187 = scmp.eq.s32.totalorder %s30, 0
    %p188 = por %p186, %p187
    %s190 = sadd.s32 %s189, 1
    %p193 = scmp.eq.s32.totalorder %s24, 1
    %p194 = scmp.ne.s32.totalorder %s189, %s191
    %p195 = scmp.eq.s32.totalorder %s24, 0
    %p196 = por %p194, %p195
    %p197 = scmp.ne.s32.totalorder %s189, %s191
    %p198 = scmp.eq.s32.totalorder %s29, 1
    %p199 = por %p197, %p198
    %p200 = scmp.ne.s32.totalorder %s191, %s192
    %p201 = scmp.eq.s32.totalorder %s29, 0
    %p202 = por %p200, %p201
    %p203 = scmp.ne.s32.totalorder %s191, %s192
    %p204 = scmp.eq.s32.totalorder %s30, 1
    %p205 = por %p203, %p204
    %p207 = scmp.ne.s32.totalorder %s192, %s206
    %p208 = scmp.eq.s32.totalorder %s30, 0
    %p209 = por %p207, %p208
    %s211 = sadd.s32 %s210, 1
    %p214 = scmp.eq.s32.totalorder %s24, 1
    %p215 = scmp.ne.s32.totalorder %s210, %s212
    %p216 = scmp.eq.s32.totalorder %s24, 0
    %p217 = por %p215, %p216
    %p218 = scmp.ne.s32.totalorder %s210, %s212
    %p219 = scmp.eq.s32.totalorder %s29, 1
    %p220 = por %p218, %p219
    %p221 = scmp.ne.s32.totalorder %s212, %s213
    %p222 = scmp.eq.s32.totalorder %s29, 0
    %p223 = por %p221, %p222
    %p224 = scmp.ne.s32.totalorder %s212, %s213
    %p225 = scmp.eq.s32.totalorder %s30, 1
    %p226 = por %p224, %p225
    %p228 = scmp.ne.s32.totalorder %s213, %s227
    %p229 = scmp.eq.s32.totalorder %s30, 0
    %p230 = por %p228, %p229
    %s232 = sadd.s32 %s231, 1
    %p235 = scmp.eq.s32.totalorder %s24, 1
    %p236 = scmp.ne.s32.totalorder %s231, %s233
    %p237 = scmp.eq.s32.totalorder %s24, 0
    %p238 = por %p236, %p237
    %p239 = scmp.ne.s32.totalorder %s231, %s233
    %p240 = scmp.eq.s32.totalorder %s29, 1
    %p241 = por %p239, %p240
    %p242 = scmp.ne.s32.totalorder %s233, %s234
    %p243 = scmp.eq.s32.totalorder %s29, 0
    %p244 = por %p242, %p243
    %p245 = scmp.ne.s32.totalorder %s233, %s234
    %p246 = scmp.eq.s32.totalorder %s30, 1
    %p247 = por %p245, %p246
    %p249 = scmp.ne.s32.totalorder %s234, %s248
    %p250 = scmp.eq.s32.totalorder %s30, 0
    %p251 = por %p249, %p250
    %s253 = sadd.s32 %s252, 1
    %p256 = scmp.eq.s32.totalorder %s24, 1
    %p257 = scmp.ne.s32.totalorder %s252, %s254
    %p258 = scmp.eq.s32.totalorder %s24, 0
    %p259 = por %p257, %p258
    %p260 = scmp.ne.s32.totalorder %s252, %s254
    %p261 = scmp.eq.s32.totalorder %s29, 1
    %p262 = por %p260, %p261
    %p263 = scmp.ne.s32.totalorder %s254, %s255
    %p264 = scmp.eq.s32.totalorder %s29, 0
    %p265 = por %p263, %p264
    %p266 = scmp.ne.s32.totalorder %s254, %s255
    %p267 = scmp.eq.s32.totalorder %s30, 1
    %p268 = por %p266, %p267
    %p270 = scmp.ne.s32.totalorder %s255, %s269
    %p271 = scmp.eq.s32.totalorder %s30, 0
    %p272 = por %p270, %p271
    %s274 = sadd.s32 %s273, 1
    %p277 = scmp.eq.s32.totalorder %s24, 1
    %p278 = scmp.ne.s32.totalorder %s273, %s275
    %p279 = scmp.eq.s32.totalorder %s24, 0
    %p280 = por %p278, %p279
    %p281 = scmp.ne.s32.totalorder %s273, %s275
    %p282 = scmp.eq.s32.totalorder %s29, 1
    %p283 = por %p281, %p282
    %p284 = scmp.ne.s32.totalorder %s275, %s276
    %p285 = scmp.eq.s32.totalorder %s29, 0
    %p286 = por %p284, %p285
    %p287 = scmp.ne.s32.totalorder %s275, %s276
    %p288 = scmp.eq.s32.totalorder %s30, 1
    %p289 = por %p287, %p288
    %p291 = scmp.ne.s32.totalorder %s276, %s290
    %p292 = scmp.eq.s32.totalorder %s30, 0
    %p293 = por %p291, %p292
    %s295 = sadd.s32 %s294, 1
    %p298 = scmp.eq.s32.totalorder %s24, 1
    %p299 = scmp.ne.s32.totalorder %s294, %s296
    %p300 = scmp.eq.s32.totalorder %s24, 0
    %p301 = por %p299, %p300
    %p302 = scmp.ne.s32.totalorder %s294, %s296
    %p303 = scmp.eq.s32.totalorder %s29, 1
    %p304 = por %p302, %p303
    %p305 = scmp.ne.s32.totalorder %s296, %s297
    %p306 = scmp.eq.s32.totalorder %s29, 0
    %p307 = por %p305, %p306
    %p308 = scmp.ne.s32.totalorder %s296, %s297
    %p309 = scmp.eq.s32.totalorder %s30, 1
    %p310 = por %p308, %p309
    %p312 = scmp.ne.s32.totalorder %s297, %s311
    %p313 = scmp.eq.s32.totalorder %s30, 0
    %p314 = por %p312, %p313
    %s316 = sadd.s32 %s315, 1
    %p319 = scmp.eq.s32.totalorder %s24, 1
    %p320 = scmp.ne.s32.totalorder %s315, %s317
    %p321 = scmp.eq.s32.totalorder %s24, 0
    %p322 = por %p320, %p321
    %p323 = scmp.ne.s32.totalorder %s315, %s317
    %p324 = scmp.eq.s32.totalorder %s29, 1
    %p325 = por %p323, %p324
    %p326 = scmp.ne.s32.totalorder %s317, %s318
    %p327 = scmp.eq.s32.totalorder %s29, 0
    %p328 = por %p326, %p327
    %p329 = scmp.ne.s32.totalorder %s317, %s318
    %p330 = scmp.eq.s32.totalorder %s30, 1
    %p331 = por %p329, %p330
    %p333 = scmp.ne.s32.totalorder %s318, %s332
    %p334 = scmp.eq.s32.totalorder %s30, 0
    %p335 = por %p333, %p334
    %s337 = sadd.s32 %s336, 1
    %p340 = scmp.eq.s32.totalorder %s24, 1
    %p341 = scmp.ne.s32.totalorder %s336, %s338
    %p342 = scmp.eq.s32.totalorder %s24, 0
    %p343 = por %p341, %p342
    %p344 = scmp.ne.s32.totalorder %s336, %s338
    %p345 = scmp.eq.s32.totalorder %s29, 1
    %p346 = por %p344, %p345
    %p347 = scmp.ne.s32.totalorder %s338, %s339
    %p348 = scmp.eq.s32.totalorder %s29, 0
    %p349 = por %p347, %p348
    %p350 = scmp.ne.s32.totalorder %s338, %s339
    %p351 = scmp.eq.s32.totalorder %s30, 1
    %p352 = por %p350, %p351
    %p354 = scmp.ne.s32.totalorder %s339, %s353
    %p355 = scmp.eq.s32.totalorder %s30, 0
    %p356 = por %p354, %p355
    %s358 = sadd.s32 %s357, 1
    %p361 = scmp.eq.s32.totalorder %s24, 1
    %p362 = scmp.ne.s32.totalorder %s357, %s359
    %p363 = scmp.eq.s32.totalorder %s24, 0
    %p364 = por %p362, %p363
    %p365 = scmp.ne.s32.totalorder %s357, %s359
    %p366 = scmp.eq.s32.totalorder %s29, 1
    %p367 = por %p365, %p366
    %p368 = scmp.ne.s32.totalorder %s359, %s360
    %p369 = scmp.eq.s32.totalorder %s29, 0
    %p370 = por %p368, %p369
    %p371 = scmp.ne.s32.totalorder %s359, %s360
    %p372 = scmp.eq.s32.totalorder %s30, 1
    %p373 = por %p371, %p372
    %p375 = scmp.ne.s32.totalorder %s360, %s374
    %p376 = scmp.eq.s32.totalorder %s30, 0
    %p377 = por %p375, %p376
    %s379 = sadd.s32 %s378, 1
    %p382 = scmp.eq.s32.totalorder %s24, 1
    %p383 = scmp.ne.s32.totalorder %s378, %s380
    %p384 = scmp.eq.s32.totalorder %s24, 0
    %p385 = por %p383, %p384
    %p386 = scmp.ne.s32.totalorder %s378, %s380
    %p387 = scmp.eq.s32.totalorder %s29, 1
    %p388 = por %p386, %p387
    %p389 = scmp.ne.s32.totalorder %s380, %s381
    %p390 = scmp.eq.s32.totalorder %s29, 0
    %p391 = por %p389, %p390
    %p392 = scmp.ne.s32.totalorder %s380, %s381
    %p393 = scmp.eq.s32.totalorder %s30, 1
    %p394 = por %p392, %p393
    %p396 = scmp.ne.s32.totalorder %s381, %s395
    %p397 = scmp.eq.s32.totalorder %s30, 0
    %p398 = por %p396, %p397
    %s400 = sadd.s32 %s399, 1
    %p403 = scmp.eq.s32.totalorder %s24, 1
    %p404 = scmp.ne.s32.totalorder %s399, %s401
    %p405 = scmp.eq.s32.totalorder %s24, 0
    %p406 = por %p404, %p405
    %p407 = scmp.ne.s32.totalorder %s399, %s401
    %p408 = scmp.eq.s32.totalorder %s29, 1
    %p409 = por %p407, %p408
    %p410 = scmp.ne.s32.totalorder %s401, %s402
    %p411 = scmp.eq.s32.totalorder %s29, 0
    %p412 = por %p410, %p411
    %p413 = scmp.ne.s32.totalorder %s401, %s402
    %p414 = scmp.eq.s32.totalorder %s30, 1
    %p415 = por %p413, %p414
    %p417 = scmp.ne.s32.totalorder %s402, %s416
    %p418 = scmp.eq.s32.totalorder %s30, 0
    %p419 = por %p417, %p418
    %s420 = ssub.s32 %s24, %s31
    %p421 = scmp.eq.s32.totalorder %s420, 0
    %s423 = sadd.s32 %s422, 1
    %s424 = scalar_select %p421, %s422, %s423
    %p427 = pneg %p421
    %p428 = scmp.eq.s32.totalorder %s24, 1
    %p429 = por %p427, %p428
    %p430 = scmp.ne.s32.totalorder %s422, %s425
    %p431 = scmp.eq.s32.totalorder %s24, 0
    %p432 = por %p430, %p431
    %p433 = scmp.ne.s32.totalorder %s422, %s425
    %p434 = scmp.eq.s32.totalorder %s29, 1
    %p435 = por %p433, %p434
    %p436 = scmp.ne.s32.totalorder %s425, %s426
    %p437 = scmp.eq.s32.totalorder %s29, 0
    %p438 = por %p436, %p437
    %p439 = scmp.ne.s32.totalorder %s425, %s426
    %p440 = scmp.eq.s32.totalorder %s30, 1
    %p441 = por %p439, %p440
    %p443 = scmp.ne.s32.totalorder %s426, %s442
    %p444 = scmp.eq.s32.totalorder %s30, 0
    %p445 = por %p443, %p444
    %p446 = scmp.le.s32.totalorder 1, %s24
    %p447 = scmp.lt.s32.totalorder %s24, 3
    %p448 = pnand %p446, %p447
    %p449 = pneg %p448
    // Predicated region
    $region9: #{_bert_and_tag.1} parent=5 // pred_check
      _
    $region10: #{_bert_and_tag.1} parent=5 // pred_check_branch
      %451 = sbr.rel (%p448) target = $region12
    $region11: #{_bert_and_tag.1} parent=5 // pred_region
      %s452 = ssub.s32 %s24, 1
      // Predicated region
      $region13: #{_bert_and_tag.1} parent=11 // pred_check
        %p453 = pneg %p97
      $region14: #{_bert_and_tag.1} parent=11 // pred_check_branch
        %455 = sbr.rel (%p453) target = $region16
      $region15: #{_bert_and_tag.1} parent=11 // pred_region
        _
      $region16: #{_bert_and_tag.1} parent=11 // pred_fallthru
        _
      // Predicated region
      $region17: #{_bert_and_tag.1} parent=11 // pred_check
        %p456 = pneg %p118
      $region18: #{_bert_and_tag.1} parent=11 // pred_check_branch
        %458 = sbr.rel (%p456) target = $region20
      $region19: #{_bert_and_tag.1} parent=11 // pred_region
        _
      $region20: #{_bert_and_tag.1} parent=11 // pred_fallthru
        _
      // Predicated region
      $region21: #{_bert_and_tag.1} parent=11 // pred_check
        %p459 = pneg %p139
      $region22: #{_bert_and_tag.1} parent=11 // pred_check_branch
        %461 = sbr.rel (%p459) target = $region24
      $region23: #{_bert_and_tag.1} parent=11 // pred_region
        _
      $region24: #{_bert_and_tag.1} parent=11 // pred_fallthru
        _
      // Predicated region
      $region25: #{_bert_and_tag.1} parent=11 // pred_check
        %p462 = pneg %p160
      $region26: #{_bert_and_tag.1} parent=11 // pred_check_branch
        %464 = sbr.rel (%p462) target = $region28
      $region27: #{_bert_and_tag.1} parent=11 // pred_region
        _
      $region28: #{_bert_and_tag.1} parent=11 // pred_fallthru
        _
      // Predicated region
      $region29: #{_bert_and_tag.1} parent=11 // pred_check
        %p465 = pneg %p181
      $region30: #{_bert_and_tag.1} parent=11 // pred_check_branch
        %467 = sbr.rel (%p465) target = $region32
      $region31: #{_bert_and_tag.1} parent=11 // pred_region
        _
      $region32: #{_bert_and_tag.1} parent=11 // pred_fallthru
        _
      // Predicated region
      $region33: #{_bert_and_tag.1} parent=11 // pred_check
        %p468 = pneg %p202
      $region34: #{_bert_and_tag.1} parent=11 // pred_check_branch
        %470 = sbr.rel (%p468) target = $region36
      $region35: #{_bert_and_tag.1} parent=11 // pred_region
        _
      $region36: #{_bert_and_tag.1} parent=11 // pred_fallthru
        _
      // Predicated region
      $region37: #{_bert_and_tag.1} parent=11 // pred_check
        %p471 = pneg %p223
      $region38: #{_bert_and_tag.1} parent=11 // pred_check_branch
        %473 = sbr.rel (%p471) target = $region40
      $region39: #{_bert_and_tag.1} parent=11 // pred_region
        _
      $region40: #{_bert_and_tag.1} parent=11 // pred_fallthru
        _
      // Predicated region
      $region41: #{_bert_and_tag.1} parent=11 // pred_check
        %p474 = pneg %p244
      $region42: #{_bert_and_tag.1} parent=11 // pred_check_branch
        %476 = sbr.rel (%p474) target = $region44
      $region43: #{_bert_and_tag.1} parent=11 // pred_region
        _
      $region44: #{_bert_and_tag.1} parent=11 // pred_fallthru
        _
      // Predicated region
      $region45: #{_bert_and_tag.1} parent=11 // pred_check
        %p477 = pneg %p265
      $region46: #{_bert_and_tag.1} parent=11 // pred_check_branch
        %479 = sbr.rel (%p477) target = $region48
      $region47: #{_bert_and_tag.1} parent=11 // pred_region
        _
      $region48: #{_bert_and_tag.1} parent=11 // pred_fallthru
        _
      // Predicated region
      $region49: #{_bert_and_tag.1} parent=11 // pred_check
        %p480 = pneg %p286
      $region50: #{_bert_and_tag.1} parent=11 // pred_check_branch
        %482 = sbr.rel (%p480) target = $region52
      $region51: #{_bert_and_tag.1} parent=11 // pred_region
        _
      $region52: #{_bert_and_tag.1} parent=11 // pred_fallthru
        _
      // Predicated region
      $region53: #{_bert_and_tag.1} parent=11 // pred_check
        %p483 = pneg %p307
      $region54: #{_bert_and_tag.1} parent=11 // pred_check_branch
        %485 = sbr.rel (%p483) target = $region56
      $region55: #{_bert_and_tag.1} parent=11 // pred_region
        _
      $region56: #{_bert_and_tag.1} parent=11 // pred_fallthru
        _
      // Predicated region
      $region57: #{_bert_and_tag.1} parent=11 // pred_check
        %p486 = pneg %p328
      $region58: #{_bert_and_tag.1} parent=11 // pred_check_branch
        %488 = sbr.rel (%p486) target = $region60
      $region59: #{_bert_and_tag.1} parent=11 // pred_region
        _
      $region60: #{_bert_and_tag.1} parent=11 // pred_fallthru
        _
      // Predicated region
      $region61: #{_bert_and_tag.1} parent=11 // pred_check
        %p489 = pneg %p349
      $region62: #{_bert_and_tag.1} parent=11 // pred_check_branch
        %491 = sbr.rel (%p489) target = $region64
      $region63: #{_bert_and_tag.1} parent=11 // pred_region
        _
      $region64: #{_bert_and_tag.1} parent=11 // pred_fallthru
        _
      // Predicated region
      $region65: #{_bert_and_tag.1} parent=11 // pred_check
        %p492 = pneg %p370
      $region66: #{_bert_and_tag.1} parent=11 // pred_check_branch
        %494 = sbr.rel (%p492) target = $region68
      $region67: #{_bert_and_tag.1} parent=11 // pred_region
        _
      $region68: #{_bert_and_tag.1} parent=11 // pred_fallthru
        _
      // Predicated region
      $region69: #{_bert_and_tag.1} parent=11 // pred_check
        %p495 = pneg %p391
      $region70: #{_bert_and_tag.1} parent=11 // pred_check_branch
        %497 = sbr.rel (%p495) target = $region72
      $region71: #{_bert_and_tag.1} parent=11 // pred_region
        _
      $region72: #{_bert_and_tag.1} parent=11 // pred_fallthru
        _
      // Predicated region
      $region73: #{_bert_and_tag.1} parent=11 // pred_check
        %p498 = pneg %p412
      $region74: #{_bert_and_tag.1} parent=11 // pred_check_branch
        %500 = sbr.rel (%p498) target = $region76
      $region75: #{_bert_and_tag.1} parent=11 // pred_region
        _
      $region76: #{_bert_and_tag.1} parent=11 // pred_fallthru
        _
    $region12: #{_bert_and_tag.1} parent=5 // pred_fallthru
      _
    %p501 = scmp.lt.s32.totalorder %s24, 2
    // Predicated region
    $region77: #{_bert_and_tag.1} parent=5 // pred_check
      %p502 = pneg %p501
    $region78: #{_bert_and_tag.1} parent=5 // pred_check_branch
      %504 = sbr.rel (%p502) target = $region80
    $region79: #{_bert_and_tag.1} parent=5 // pred_region
      // Predicated region
      $region81: #{_bert_and_tag.1} parent=79 // pred_check
        %p505 = pneg %p44
      $region82: #{_bert_and_tag.1} parent=79 // pred_check_branch
        %507 = sbr.rel (%p505) target = $region84
      $region83: #{_bert_and_tag.1} parent=79 // pred_region
        %s508 = smul.u32 16, %s24
        %p509 = scmp.lt.s32.totalorder %s508, 31
        %s510 = scalar_select %p509, %s508, 31
        %s511 = smul.addr %s510, 4
        %s512 = scalar_lea.vmem %s0, %s511
        %s513 = smul.u32 16, %s24
      $region84: #{_bert_and_tag.1} parent=79 // pred_fallthru
        _
      // Predicated region
      $region85: #{_bert_and_tag.1} parent=79 // pred_check
        %p514 = pneg %p70
      $region86: #{_bert_and_tag.1} parent=79 // pred_check_branch
        %516 = sbr.rel (%p514) target = $region88
      $region87: #{_bert_and_tag.1} parent=79 // pred_region
        %p517 = scmp.lt.s32.totalorder %s24, 1
        %s518 = scalar_select %p517, %s24, 1
        %s519 = scalar_lea.vmem %s1, %s518
      $region88: #{_bert_and_tag.1} parent=79 // pred_fallthru
        _
    $region80: #{_bert_and_tag.1} parent=5 // pred_fallthru
      _
    %p520 = scmp.le.s32.totalorder 1, %s24
    %p521 = scmp.lt.s32.totalorder %s24, 3
    %p522 = pnand %p520, %p521
    %p523 = pneg %p522
    // Predicated region
    $region89: #{_bert_and_tag.1} parent=5 // pred_check
      _
    $region90: #{_bert_and_tag.1} parent=5 // pred_check_branch
      %525 = sbr.rel (%p522) target = $region92
    $region91: #{_bert_and_tag.1} parent=5 // pred_region
      %s526 = ssub.s32 %s24, 1
      %s527 = smul.u32 16, %s29
      %p528 = scmp.lt.s32.totalorder %s527, 31
      %s529 = scalar_select %p528, %s527, 31
      %s530 = smul.addr %s529, 4
      %s531 = scalar_lea.vmem %s0, %s530
      %p532 = pneg %p50
      %p533 = pneg %p47
      %p534 = scmp.lt.s32.totalorder %s29, 1
      %s535 = scalar_select %p534, %s29, 1
      %s536 = scalar_lea.vmem %s1, %s535
      %p537 = pneg %p76
      %p538 = pneg %p73
      %p539 = pneg %p97
      %p540 = pneg %p94
      %p541 = pneg %p118
      %p542 = pneg %p115
      %p543 = pneg %p139
      %p544 = pneg %p136
      %p545 = pneg %p160
      %p546 = pneg %p157
      %p547 = pneg %p181
      %p548 = pneg %p178
      %p549 = pneg %p202
      %p550 = pneg %p199
      %p551 = pneg %p223
      %p552 = pneg %p220
      %p553 = pneg %p244
      %p554 = pneg %p241
      %p555 = pneg %p265
      %p556 = pneg %p262
      %p557 = pneg %p286
      %p558 = pneg %p283
      %p559 = pneg %p307
      %p560 = pneg %p304
      %p561 = pneg %p328
      %p562 = pneg %p325
      %p563 = pneg %p349
      %p564 = pneg %p346
      %p565 = pneg %p370
      %p566 = pneg %p367
      %p567 = pneg %p391
      %p568 = pneg %p388
      %p569 = pneg %p412
      %p570 = pneg %p409
      %p571 = pneg %p438
      %p572 = pneg %p435
      %s573 = smul.u32 16, %s29
      %p574 = scmp.lt.s32.totalorder %s573, 31
      %s575 = scalar_select %p574, %s573, 31
      %s576 = smul.addr %s575, 8
      %s577 = scalar_lea.vmem %s18, %s576
      %s578 = smul.u32 16, %s29
      %p579 = scmp.lt.s32.totalorder %s578, 31
      %s580 = scalar_select %p579, %s578, 31
      %s581 = smul.addr %s580, 4
      %s582 = scalar_lea.vmem %s0, %s581
      %s583 = smul.u32 16, %s29
      %p584 = scmp.lt.s32.totalorder %s29, 1
      %s585 = scalar_select %p584, %s29, 1
      %s586 = scalar_lea.vmem %s1, %s585
      %s587 = smul.u32 16, %s29
      %p588 = scmp.lt.s32.totalorder %s587, 31
      %s589 = scalar_select %p588, %s587, 31
      %s590 = smul.addr %s589, 8
      %s591 = scalar_lea.vmem %s18, %s590
      %s592 = smul.u32 16, %s29
      %v594 = vld [vmem:[%s586] sm:$0x1]
      %v595 = vld [vmem:[%s582] sm:$0xf]
      %v596 = vld [vmem:[%s582 + $0x4] sm:$0xf]
      %v597 = vld [vmem:[%s582 + $0x8] sm:$0xf]
      %v598 = vld [vmem:[%s582 + $0xc] sm:$0xf]
      %v599 = vld [vmem:[%s582 + $0x10] sm:$0xf]
      %v600 = vld [vmem:[%s582 + $0x14] sm:$0xf]
      %v601 = vld [vmem:[%s582 + $0x18] sm:$0xf]
      %v602 = vld [vmem:[%s582 + $0x1c] sm:$0xf]
      %v603 = vld [vmem:[%s582 + $0x20] sm:$0xf]
      %v604 = vld [vmem:[%s582 + $0x24] sm:$0xf]
      %v605 = vld [vmem:[%s582 + $0x28] sm:$0xf]
      %v606 = vld [vmem:[%s582 + $0x2c] sm:$0xf]
      %v607 = vld [vmem:[%s582 + $0x30] sm:$0xf]
      %v608 = vld [vmem:[%s582 + $0x34] sm:$0xf]
      %v609 = vld [vmem:[%s582 + $0x38] sm:$0xf]
      %v610 = vld [vmem:[%s582 + $0x3c] sm:$0xf]
      %v611 = vunpack.c.l.bf16 %v595
      %v612 = vunpack.c.l.bf16 %v596
      %v613 = vunpack.c.l.bf16 %v597
      %v614 = vunpack.c.l.bf16 %v598
      %v615 = vunpack.c.l.bf16 %v599
      %v616 = vunpack.c.l.bf16 %v600
      %v617 = vunpack.c.l.bf16 %v601
      %v618 = vunpack.c.l.bf16 %v602
      %v619 = vunpack.c.l.bf16 %v603
      %v620 = vunpack.c.l.bf16 %v604
      %v621 = vunpack.c.l.bf16 %v605
      %v622 = vunpack.c.l.bf16 %v606
      %v623 = vunpack.c.l.bf16 %v607
      %v624 = vunpack.c.l.bf16 %v608
      %v625 = vunpack.c.l.bf16 %v609
      %v626 = vunpack.c.l.bf16 %v610
      %v627 = vld [vmem:[%s2] sm:$0x1]
      %v628 = vld [vmem:[%s3] sm:$0x1]
      %vm629 = vcmask 261120
      %v630 = vsel %vm629, %v611, 0.0
      %631 = vadd.xlane.f32.xlu0 %v630
      %v632 = vpop.xlane.xlu0 %631
      %v633 = vsel %vm629, %v612, 0.0
      %634 = vadd.xlane.f32.xlu0 %v633
      %v635 = vpop.xlane.xlu0 %634
      %v636 = vsel %vm629, %v613, 0.0
      %637 = vadd.xlane.f32.xlu0 %v636
      %v638 = vpop.xlane.xlu0 %637
      %v639 = vsel %vm629, %v614, 0.0
      %640 = vadd.xlane.f32.xlu0 %v639
      %v641 = vpop.xlane.xlu0 %640
      %v642 = vsel %vm629, %v615, 0.0
      %643 = vadd.xlane.f32.xlu0 %v642
      %v644 = vpop.xlane.xlu0 %643
      %v645 = vsel %vm629, %v616, 0.0
      %646 = vadd.xlane.f32.xlu0 %v645
      %v647 = vpop.xlane.xlu0 %646
      %v648 = vsel %vm629, %v617, 0.0
      %649 = vadd.xlane.f32.xlu0 %v648
      %v650 = vpop.xlane.xlu0 %649
      %v651 = vsel %vm629, %v618, 0.0
      %652 = vadd.xlane.f32.xlu0 %v651
      %v653 = vpop.xlane.xlu0 %652
      %v654 = vsel %vm629, %v619, 0.0
      %655 = vadd.xlane.f32.xlu0 %v654
      %v656 = vpop.xlane.xlu0 %655
      %v657 = vsel %vm629, %v620, 0.0
      %658 = vadd.xlane.f32.xlu0 %v657
      %v659 = vpop.xlane.xlu0 %658
      %v660 = vsel %vm629, %v621, 0.0
      %661 = vadd.xlane.f32.xlu0 %v660
      %v662 = vpop.xlane.xlu0 %661
      %v663 = vsel %vm629, %v622, 0.0
      %664 = vadd.xlane.f32.xlu0 %v663
      %v665 = vpop.xlane.xlu0 %664
      %v666 = vsel %vm629, %v623, 0.0
      %667 = vadd.xlane.f32.xlu0 %v666
      %v668 = vpop.xlane.xlu0 %667
      %v669 = vsel %vm629, %v624, 0.0
      %670 = vadd.xlane.f32.xlu0 %v669
      %v671 = vpop.xlane.xlu0 %670
      %v672 = vsel %vm629, %v625, 0.0
      %673 = vadd.xlane.f32.xlu0 %v672
      %v674 = vpop.xlane.xlu0 %673
      %v675 = vsel %vm629, %v626, 0.0
      %676 = vadd.xlane.f32.xlu0 %v675
      %v677 = vpop.xlane.xlu0 %676
      %v678 = vrcp.pop 32.0
      %v679 = vmul.f32 %v632, %v678
      %v680 = vmul.f32 %v635, %v678
      %v681 = vmul.f32 %v638, %v678
      %v682 = vmul.f32 %v641, %v678
      %v683 = vmul.f32 %v644, %v678
      %v684 = vmul.f32 %v647, %v678
      %v685 = vmul.f32 %v650, %v678
      %v686 = vmul.f32 %v653, %v678
      %v687 = vmul.f32 %v656, %v678
      %v688 = vmul.f32 %v659, %v678
      %v689 = vmul.f32 %v662, %v678
      %v690 = vmul.f32 %v665, %v678
      %v691 = vmul.f32 %v668, %v678
      %v692 = vmul.f32 %v671, %v678
      %v693 = vmul.f32 %v674, %v678
      %v694 = vmul.f32 %v677, %v678
      %v695 = vsub.f32 %v611, %v679
      %v696 = vsub.f32 %v612, %v680
      %v697 = vsub.f32 %v613, %v681
      %v698 = vsub.f32 %v614, %v682
      %v699 = vsub.f32 %v615, %v683
      %v700 = vsub.f32 %v616, %v684
      %v701 = vsub.f32 %v617, %v685
      %v702 = vsub.f32 %v618, %v686
      %v703 = vsub.f32 %v619, %v687
      %v704 = vsub.f32 %v620, %v688
      %v705 = vsub.f32 %v621, %v689
      %v706 = vsub.f32 %v622, %v690
      %v707 = vsub.f32 %v623, %v691
      %v708 = vsub.f32 %v624, %v692
      %v709 = vsub.f32 %v625, %v693
      %v710 = vsub.f32 %v626, %v694
      %v711 = vmul.f32 %v695, %v695
      %v712 = vmul.f32 %v696, %v696
      %v713 = vmul.f32 %v697, %v697
      %v714 = vmul.f32 %v698, %v698
      %v715 = vmul.f32 %v699, %v699
      %v716 = vmul.f32 %v700, %v700
      %v717 = vmul.f32 %v701, %v701
      %v718 = vmul.f32 %v702, %v702
      %v719 = vmul.f32 %v703, %v703
      %v720 = vmul.f32 %v704, %v704
      %v721 = vmul.f32 %v705, %v705
      %v722 = vmul.f32 %v706, %v706
      %v723 = vmul.f32 %v707, %v707
      %v724 = vmul.f32 %v708, %v708
      %v725 = vmul.f32 %v709, %v709
      %v726 = vmul.f32 %v710, %v710
      %v727 = vsel %vm629, %v711, 0.0
      %728 = vadd.xlane.f32.xlu0 %v727
      %v729 = vpop.xlane.xlu0 %728
      %v730 = vsel %vm629, %v712, 0.0
      %731 = vadd.xlane.f32.xlu0 %v730
      %v732 = vpop.xlane.xlu0 %731
      %v733 = vsel %vm629, %v713, 0.0
      %734 = vadd.xlane.f32.xlu0 %v733
      %v735 = vpop.xlane.xlu0 %734
      %v736 = vsel %vm629, %v714, 0.0
      %737 = vadd.xlane.f32.xlu0 %v736
      %v738 = vpop.xlane.xlu0 %737
      %v739 = vsel %vm629, %v715, 0.0
      %740 = vadd.xlane.f32.xlu0 %v739
      %v741 = vpop.xlane.xlu0 %740
      %v742 = vsel %vm629, %v716, 0.0
      %743 = vadd.xlane.f32.xlu0 %v742
      %v744 = vpop.xlane.xlu0 %743
      %v745 = vsel %vm629, %v717, 0.0
      %746 = vadd.xlane.f32.xlu0 %v745
      %v747 = vpop.xlane.xlu0 %746
      %v748 = vsel %vm629, %v718, 0.0
      %749 = vadd.xlane.f32.xlu0 %v748
      %v750 = vpop.xlane.xlu0 %749
      %v751 = vsel %vm629, %v719, 0.0
      %752 = vadd.xlane.f32.xlu0 %v751
      %v753 = vpop.xlane.xlu0 %752
      %v754 = vsel %vm629, %v720, 0.0
      %755 = vadd.xlane.f32.xlu0 %v754
      %v756 = vpop.xlane.xlu0 %755
      %v757 = vsel %vm629, %v721, 0.0
      %758 = vadd.xlane.f32.xlu0 %v757
      %v759 = vpop.xlane.xlu0 %758
      %v760 = vsel %vm629, %v722, 0.0
      %761 = vadd.xlane.f32.xlu0 %v760
      %v762 = vpop.xlane.xlu0 %761
      %v763 = vsel %vm629, %v723, 0.0
      %764 = vadd.xlane.f32.xlu0 %v763
      %v765 = vpop.xlane.xlu0 %764
      %v766 = vsel %vm629, %v724, 0.0
      %767 = vadd.xlane.f32.xlu0 %v766
      %v768 = vpop.xlane.xlu0 %767
      %v769 = vsel %vm629, %v725, 0.0
      %770 = vadd.xlane.f32.xlu0 %v769
      %v771 = vpop.xlane.xlu0 %770
      %v772 = vsel %vm629, %v726, 0.0
      %773 = vadd.xlane.f32.xlu0 %v772
      %v774 = vpop.xlane.xlu0 %773
      %v775 = vmul.f32 %v729, %v678
      %v776 = vmul.f32 %v732, %v678
      %v777 = vmul.f32 %v735, %v678
      %v778 = vmul.f32 %v738, %v678
      %v779 = vmul.f32 %v741, %v678
      %v780 = vmul.f32 %v744, %v678
      %v781 = vmul.f32 %v747, %v678
      %v782 = vmul.f32 %v750, %v678
      %v783 = vmul.f32 %v753, %v678
      %v784 = vmul.f32 %v756, %v678
      %v785 = vmul.f32 %v759, %v678
      %v786 = vmul.f32 %v762, %v678
      %v787 = vmul.f32 %v765, %v678
      %v788 = vmul.f32 %v768, %v678
      %v789 = vmul.f32 %v771, %v678
      %v790 = vmul.f32 %v774, %v678
      %v791 = vadd.f32 %v775, 1e-12
      %v792 = vadd.f32 %v776, 1e-12
      %v793 = vadd.f32 %v777, 1e-12
      %v794 = vadd.f32 %v778, 1e-12
      %v795 = vadd.f32 %v779, 1e-12
      %v796 = vadd.f32 %v780, 1e-12
      %v797 = vadd.f32 %v781, 1e-12
      %v798 = vadd.f32 %v782, 1e-12
      %v799 = vadd.f32 %v783, 1e-12
      %v800 = vadd.f32 %v784, 1e-12
      %v801 = vadd.f32 %v785, 1e-12
      %v802 = vadd.f32 %v786, 1e-12
      %v803 = vadd.f32 %v787, 1e-12
      %v804 = vadd.f32 %v788, 1e-12
      %v805 = vadd.f32 %v789, 1e-12
      %v806 = vadd.f32 %v790, 1e-12
      %v807 = vrsqrt.pop %v791
      %v808 = vrsqrt.pop %v792
      %v809 = vrsqrt.pop %v793
      %v810 = vrsqrt.pop %v794
      %v811 = vrsqrt.pop %v795
      %v812 = vrsqrt.pop %v796
      %v813 = vrsqrt.pop %v797
      %v814 = vrsqrt.pop %v798
      %v815 = vrsqrt.pop %v799
      %v816 = vrsqrt.pop %v800
      %v817 = vrsqrt.pop %v801
      %v818 = vrsqrt.pop %v802
      %v819 = vrsqrt.pop %v803
      %v820 = vrsqrt.pop %v804
      %v821 = vrsqrt.pop %v805
      %v822 = vrsqrt.pop %v806
      %v823 = vmul.f32 %v695, %v807
      %v824 = vmul.f32 %v696, %v808
      %v825 = vmul.f32 %v697, %v809
      %v826 = vmul.f32 %v698, %v810
      %v827 = vmul.f32 %v699, %v811
      %v828 = vmul.f32 %v700, %v812
      %v829 = vmul.f32 %v701, %v813
      %v830 = vmul.f32 %v702, %v814
      %v831 = vmul.f32 %v703, %v815
      %v832 = vmul.f32 %v704, %v816
      %v833 = vmul.f32 %v705, %v817
      %v834 = vmul.f32 %v706, %v818
      %v835 = vmul.f32 %v707, %v819
      %v836 = vmul.f32 %v708, %v820
      %v837 = vmul.f32 %v709, %v821
      %v838 = vmul.f32 %v710, %v822
      %v839 = vunpack.c.l.bf16 %v627
      %v840 = vlaneseq
      %v841 = vshrl.u32 %v840, 7
      %v842 = vsub.s32 0, %v841
      %v843 = vrot.slane %v839, %v842
      %v844 = vmul.f32 %v823, %v843
      %v845 = vmul.f32 %v824, %v843
      %v846 = vmul.f32 %v825, %v843
      %v847 = vmul.f32 %v826, %v843
      %v848 = vmul.f32 %v827, %v843
      %v849 = vmul.f32 %v828, %v843
      %v850 = vmul.f32 %v829, %v843
      %v851 = vmul.f32 %v830, %v843
      %v852 = vmul.f32 %v831, %v843
      %v853 = vmul.f32 %v832, %v843
      %v854 = vmul.f32 %v833, %v843
      %v855 = vmul.f32 %v834, %v843
      %v856 = vmul.f32 %v835, %v843
      %v857 = vmul.f32 %v836, %v843
      %v858 = vmul.f32 %v837, %v843
      %v859 = vmul.f32 %v838, %v843
      %v860 = vunpack.c.l.bf16 %v628
      %v861 = vlaneseq
      %v862 = vshrl.u32 %v861, 7
      %v863 = vsub.s32 0, %v862
      %v864 = vrot.slane %v860, %v863
      %v865 = vadd.f32 %v844, %v864
      %v866 = vadd.f32 %v845, %v864
      %v867 = vadd.f32 %v846, %v864
      %v868 = vadd.f32 %v847, %v864
      %v869 = vadd.f32 %v848, %v864
      %v870 = vadd.f32 %v849, %v864
      %v871 = vadd.f32 %v850, %v864
      %v872 = vadd.f32 %v851, %v864
      %v873 = vadd.f32 %v852, %v864
      %v874 = vadd.f32 %v853, %v864
      %v875 = vadd.f32 %v854, %v864
      %v876 = vadd.f32 %v855, %v864
      %v877 = vadd.f32 %v856, %v864
      %v878 = vadd.f32 %v857, %v864
      %v879 = vadd.f32 %v858, %v864
      %v880 = vadd.f32 %v859, %v864
      %v881 = vpack.c.bf16 %v866, %v865
      %v882 = vpack.c.bf16 %v868, %v867
      %v883 = vpack.c.bf16 %v870, %v869
      %v884 = vpack.c.bf16 %v872, %v871
      %v885 = vpack.c.bf16 %v874, %v873
      %v886 = vpack.c.bf16 %v876, %v875
      %v887 = vpack.c.bf16 %v878, %v877
      %v888 = vpack.c.bf16 %v880, %v879
      %v889 = vld [vmem:[%s4] sm:$0xf]
      %v890 = vld [vmem:[%s4 + $0x4] sm:$0xf]
      %v891 = vld [vmem:[%s4 + $0x8] sm:$0xf]
      %v892 = vld [vmem:[%s4 + $0xc] sm:$0xf]
      %v893 = vld [vmem:[%s5] sm:$0x1]
      %v894 = vunpack.c.l.bf16 %v893
      %v895 = vlaneseq
      %v896 = vshrl.u32 %v895, 7
      %v897 = vsub.s32 0, %v896
      %v898 = vrot.slane %v894, %v897
      %v903 = vunpack.c.l.b16 %v889
      %v904 = vunpack.c.l.b16 %v890
      %v905 = vunpack.c.l.b16 %v891
      %v906 = vunpack.c.l.b16 %v892
      %v907 = vpack.c.b16 %v904, %v903
      %v908 = vpack.c.b16 %v906, %v905
      %v912 = vsel %vm629, %v881, 0
      %v915 = vsel %vm629, %v882, 0
      %v918 = vsel %vm629, %v883, 0
      %v921 = vsel %vm629, %v884, 0
      %v924 = vsel %vm629, %v885, 0
      %v927 = vsel %vm629, %v886, 0
      %v930 = vsel %vm629, %v887, 0
      %v933 = vsel %vm629, %v888, 0
      %935 = vmatprep.subr.bf16.mxu0 0
      %936 = vmatpush1.bf16.msra.mxu0 %v907
      %937 = vmatprep.subr.bf16.mxu0 0
      %938 = vmatpush1.bf16.msra.mxu0 %v908
      %939 = vmatprep.subr.bf16.mxu0 0
      %940 = vmatpush1.bf16.msra.mxu0 0
      %941 = vmatprep.subr.bf16.mxu0 0
      %942 = vmatpush1.bf16.msra.mxu0 0
      %943 = vmatprep.subr.bf16.mxu0 0
      %944 = vmatpush1.bf16.msra.mxu0 0
      %945 = vmatprep.subr.bf16.mxu0 0
      %946 = vmatpush1.bf16.msra.mxu0 0
      %947 = vmatprep.subr.bf16.mxu0 0
      %948 = vmatpush1.bf16.msra.mxu0 0
      %949 = vmatprep.subr.bf16.mxu0 0
      %950 = vmatpush1.bf16.msra.mxu0 0
      %951 = vmatprep.subr.bf16.mxu0 0
      %952 = vmatpush1.bf16.msra.mxu0 0
      %953 = vmatprep.subr.bf16.mxu0 0
      %954 = vmatpush1.bf16.msra.mxu0 0
      %955 = vmatprep.subr.bf16.mxu0 0
      %956 = vmatpush1.bf16.msra.mxu0 0
      %957 = vmatprep.subr.bf16.mxu0 0
      %958 = vmatpush1.bf16.msra.mxu0 0
      %959 = vmatprep.subr.bf16.mxu0 0
      %960 = vmatpush1.bf16.msra.mxu0 0
      %961 = vmatprep.subr.bf16.mxu0 0
      %962 = vmatpush1.bf16.msra.mxu0 0
      %963 = vmatprep.subr.bf16.mxu0 0
      %964 = vmatpush1.bf16.msra.mxu0 0
      %965 = vmatprep.subr.bf16.mxu0 0
      %966 = vmatpush1.bf16.msra.mxu0 0
      %967 = vmatprep.mubr.bf16.mxu0 0
      %968 = vmatmul.mubr.bf16.gmra.mrb[0].mxu0 %v912
      %v969 = vpop.f32.mrb[0].mxu0
      %v970 = vadd.f32 %v898, %v969
      %v971 = vpop.f32.mrb[0].mxu0
      %v972 = vpop.f32.mrb[0].mxu0
      %v973 = vadd.f32 %v898, %v972
      %v974 = vpop.f32.mrb[0].mxu0
      %975 = vmatprep.mubr.bf16.mxu0 0
      %976 = vmatmul.mubr.bf16.gmra.mrb[0].mxu0 %v915
      %v977 = vpop.f32.mrb[0].mxu0
      %v978 = vadd.f32 %v898, %v977
      %v979 = vpop.f32.mrb[0].mxu0
      %v980 = vpop.f32.mrb[0].mxu0
      %v981 = vadd.f32 %v898, %v980
      %v982 = vpop.f32.mrb[0].mxu0
      %983 = vmatprep.mubr.bf16.mxu0 0
      %984 = vmatmul.mubr.bf16.gmra.mrb[0].mxu0 %v918
      %v985 = vpop.f32.mrb[0].mxu0
      %v986 = vadd.f32 %v898, %v985
      %v987 = vpop.f32.mrb[0].mxu0
      %v988 = vpop.f32.mrb[0].mxu0
      %v989 = vadd.f32 %v898, %v988
      %v990 = vpop.f32.mrb[0].mxu0
      %991 = vmatprep.mubr.bf16.mxu0 0
      %992 = vmatmul.mubr.bf16.gmra.mrb[0].mxu0 %v921
      %v993 = vpop.f32.mrb[0].mxu0
      %v994 = vadd.f32 %v898, %v993
      %v995 = vpop.f32.mrb[0].mxu0
      %v996 = vpop.f32.mrb[0].mxu0
      %v997 = vadd.f32 %v898, %v996
      %v998 = vpop.f32.mrb[0].mxu0
      %999 = vmatprep.mubr.bf16.mxu0 0
      %1000 = vmatmul.mubr.bf16.gmra.mrb[0].mxu0 %v924
      %v1001 = vpop.f32.mrb[0].mxu0
      %v1002 = vadd.f32 %v898, %v1001
      %v1003 = vpop.f32.mrb[0].mxu0
      %v1004 = vpop.f32.mrb[0].mxu0
      %v1005 = vadd.f32 %v898, %v1004
      %v1006 = vpop.f32.mrb[0].mxu0
      %1007 = vmatprep.mubr.bf16.mxu0 0
      %1008 = vmatmul.mubr.bf16.gmra.mrb[0].mxu0 %v927
      %v1009 = vpop.f32.mrb[0].mxu0
      %v1010 = vadd.f32 %v898, %v1009
      %v1011 = vpop.f32.mrb[0].mxu0
      %v1012 = vpop.f32.mrb[0].mxu0
      %v1013 = vadd.f32 %v898, %v1012
      %v1014 = vpop.f32.mrb[0].mxu0
      %1015 = vmatprep.mubr.bf16.mxu0 0
      %1016 = vmatmul.mubr.bf16.gmra.mrb[0].mxu0 %v930
      %v1017 = vpop.f32.mrb[0].mxu0
      %v1018 = vadd.f32 %v898, %v1017
      %v1019 = vpop.f32.mrb[0].mxu0
      %v1020 = vpop.f32.mrb[0].mxu0
      %v1021 = vadd.f32 %v898, %v1020
      %v1022 = vpop.f32.mrb[0].mxu0
      %1023 = vmatprep.mubr.bf16.mxu0 0
      %1024 = vmatmul.mubr.bf16.gmra.mrb[0].mxu0 %v933
      %v1025 = vpop.f32.mrb[0].mxu0
      %v1026 = vadd.f32 %v898, %v1025
      %v1027 = vpop.f32.mrb[0].mxu0
      %v1028 = vpop.f32.mrb[0].mxu0
      %v1029 = vadd.f32 %v898, %v1028
      %v1030 = vpop.f32.mrb[0].mxu0
      %1031 = vdwg.mxu0
      %v1032 = vpack.c.bf16 %v973, %v970
      %v1033 = vpack.c.bf16 %v981, %v978
      %v1034 = vpack.c.bf16 %v989, %v986
      %v1035 = vpack.c.bf16 %v997, %v994
      %v1036 = vpack.c.bf16 %v1005, %v1002
      %v1037 = vpack.c.bf16 %v1013, %v1010
      %v1038 = vpack.c.bf16 %v1021, %v1018
      %v1039 = vpack.c.bf16 %v1029, %v1026
      %1048 = vrot.lane.b32.xlu0 %v1032, 96
      %v1049 = vpop.permute.xlu0 %1048
      %1050 = vrot.lane.b32.xlu0 %v1033, 96
      %v1051 = vpop.permute.xlu0 %1050
      %1052 = vrot.lane.b32.xlu0 %v1034, 96
      %v1053 = vpop.permute.xlu0 %1052
      %1054 = vrot.lane.b32.xlu0 %v1035, 96
      %v1055 = vpop.permute.xlu0 %1054
      %1056 = vrot.lane.b32.xlu0 %v1036, 96
      %v1057 = vpop.permute.xlu0 %1056
      %1058 = vrot.lane.b32.xlu0 %v1037, 96
      %v1059 = vpop.permute.xlu0 %1058
      %1060 = vrot.lane.b32.xlu0 %v1038, 96
      %v1061 = vpop.permute.xlu0 %1060
      %1062 = vrot.lane.b32.xlu0 %v1039, 96
      %v1063 = vpop.permute.xlu0 %1062
      %vm1064 = vcmask 64512
      %v1066 = vsel %vm1064, %v1032, 0
      %v1069 = vsel %vm1064, %v1033, 0
      %v1072 = vsel %vm1064, %v1034, 0
      %v1075 = vsel %vm1064, %v1035, 0
      %v1078 = vsel %vm1064, %v1036, 0
      %v1081 = vsel %vm1064, %v1037, 0
      %v1084 = vsel %vm1064, %v1038, 0
      %v1087 = vsel %vm1064, %v1039, 0
      %v1090 = vsel %vm1064, %v1049, 0
      %v1093 = vsel %vm1064, %v1051, 0
      %v1096 = vsel %vm1064, %v1053, 0
      %v1099 = vsel %vm1064, %v1055, 0
      %v1102 = vsel %vm1064, %v1057, 0
      %v1105 = vsel %vm1064, %v1059, 0
      %v1108 = vsel %vm1064, %v1061, 0
      %v1111 = vsel %vm1064, %v1063, 0
      %1113 = vmatprep.subr.bf16.mxu0 0
      %1114 = vmatpush1.bf16.xpose.msra.mxu0 %v1090
      %1115 = vmatprep.subr.bf16.mxu0 0
      %1116 = vmatpush1.bf16.xpose.msra.mxu0 %v1093
      %1117 = vmatprep.subr.bf16.mxu0 0
      %1118 = vmatpush1.bf16.xpose.msra.mxu0 %v1096
      %1119 = vmatprep.subr.bf16.mxu0 0
      %1120 = vmatpush1.bf16.xpose.msra.mxu0 %v1099
      %1121 = vmatprep.subr.bf16.mxu0 0
      %1122 = vmatpush1.bf16.xpose.msra.mxu0 %v1102
      %1123 = vmatprep.subr.bf16.mxu0 0
      %1124 = vmatpush1.bf16.xpose.msra.mxu0 %v1105
      %1125 = vmatprep.subr.bf16.mxu0 0
      %1126 = vmatpush1.bf16.xpose.msra.mxu0 %v1108
      %1127 = vmatprep.subr.bf16.mxu0 0
      %1128 = vmatpush1.bf16.xpose.msra.mxu0 %v1111
      %1129 = vmatprep.subr.bf16.mxu0 0
      %1130 = vmatpush1.bf16.xpose.msra.mxu0 0
      %1131 = vmatprep.subr.bf16.mxu0 0
      %1132 = vmatpush1.bf16.xpose.msra.mxu0 0
      %1133 = vmatprep.subr.bf16.mxu0 0
      %1134 = vmatpush1.bf16.xpose.msra.mxu0 0
      %1135 = vmatprep.subr.bf16.mxu0 0
      %1136 = vmatpush1.bf16.xpose.msra.mxu0 0
      %1137 = vmatprep.subr.bf16.mxu0 0
      %1138 = vmatpush1.bf16.xpose.msra.mxu0 0
      %1139 = vmatprep.subr.bf16.mxu0 0
      %1140 = vmatpush1.bf16.xpose.msra.mxu0 0
      %1141 = vmatprep.subr.bf16.mxu0 0
      %1142 = vmatpush1.bf16.xpose.msra.mxu0 0
      %1143 = vmatprep.subr.bf16.mxu0 0
      %1144 = vmatpush1.bf16.xpose.msra.mxu0 0
      %1145 = vmatprep.mubr.bf16.mxu0 0
      %1146 = vmatmul.mubr.bf16.gmra.mrb[0].mxu0 %v1066
      %v1147 = vpop.f32.mrb[0].mxu0
      %v1148 = vadd.f32 0.0, %v1147
      %v1149 = vpop.f32.mrb[0].mxu0
      %v1150 = vpop.f32.mrb[0].mxu0
      %v1151 = vadd.f32 0.0, %v1150
      %v1152 = vpop.f32.mrb[0].mxu0
      %1153 = vmatprep.mubr.bf16.mxu0 0
      %1154 = vmatmul.mubr.bf16.gmra.mrb[0].mxu0 %v1069
      %v1155 = vpop.f32.mrb[0].mxu0
      %v1156 = vadd.f32 0.0, %v1155
      %v1157 = vpop.f32.mrb[0].mxu0
      %v1158 = vpop.f32.mrb[0].mxu0
      %v1159 = vadd.f32 0.0, %v1158
      %v1160 = vpop.f32.mrb[0].mxu0
      %1161 = vmatprep.mubr.bf16.mxu0 0
      %1162 = vmatmul.mubr.bf16.gmra.mrb[0].mxu0 %v1072
      %v1163 = vpop.f32.mrb[0].mxu0
      %v1164 = vadd.f32 0.0, %v1163
      %v1165 = vpop.f32.mrb[0].mxu0
      %v1166 = vpop.f32.mrb[0].mxu0
      %v1167 = vadd.f32 0.0, %v1166
      %v1168 = vpop.f32.mrb[0].mxu0
      %1169 = vmatprep.mubr.bf16.mxu0 0
      %1170 = vmatmul.mubr.bf16.gmra.mrb[0].mxu0 %v1075
      %v1171 = vpop.f32.mrb[0].mxu0
      %v1172 = vadd.f32 0.0, %v1171
      %v1173 = vpop.f32.mrb[0].mxu0
      %v1174 = vpop.f32.mrb[0].mxu0
      %v1175 = vadd.f32 0.0, %v1174
      %v1176 = vpop.f32.mrb[0].mxu0
      %1177 = vmatprep.mubr.bf16.mxu0 0
      %1178 = vmatmul.mubr.bf16.gmra.mrb[0].mxu0 %v1078
      %v1179 = vpop.f32.mrb[0].mxu0
      %v1180 = vadd.f32 0.0, %v1179
      %v1181 = vpop.f32.mrb[0].mxu0
      %v1182 = vpop.f32.mrb[0].mxu0
      %v1183 = vadd.f32 0.0, %v1182
      %v1184 = vpop.f32.mrb[0].mxu0
      %1185 = vmatprep.mubr.bf16.mxu0 0
      %1186 = vmatmul.mubr.bf16.gmra.mrb[0].mxu0 %v1081
      %v1187 = vpop.f32.mrb[0].mxu0
      %v1188 = vadd.f32 0.0, %v1187
      %v1189 = vpop.f32.mrb[0].mxu0
      %v1190 = vpop.f32.mrb[0].mxu0
      %v1191 = vadd.f32 0.0, %v1190
      %v1192 = vpop.f32.mrb[0].mxu0
      %1193 = vmatprep.mubr.bf16.mxu0 0
      %1194 = vmatmul.mubr.bf16.gmra.mrb[0].mxu0 %v1084
      %v1195 = vpop.f32.mrb[0].mxu0
      %v1196 = vadd.f32 0.0, %v1195
      %v1197 = vpop.f32.mrb[0].mxu0
      %v1198 = vpop.f32.mrb[0].mxu0
      %v1199 = vadd.f32 0.0, %v1198
      %v1200 = vpop.f32.mrb[0].mxu0
      %1201 = vmatprep.mubr.bf16.mxu0 0
      %1202 = vmatmul.mubr.bf16.gmra.mrb[0].mxu0 %v1087
      %v1203 = vpop.f32.mrb[0].mxu0
      %v1204 = vadd.f32 0.0, %v1203
      %v1205 = vpop.f32.mrb[0].mxu0
      %v1206 = vpop.f32.mrb[0].mxu0
      %v1207 = vadd.f32 0.0, %v1206
      %v1208 = vpop.f32.mrb[0].mxu0
      %1209 = vdwg.mxu0
      %v1210 = vmul.f32 %v1148, 0.35355338
      %v1211 = vmul.f32 %v1151, 0.35355338
      %v1212 = vmul.f32 %v1156, 0.35355338
      %v1213 = vmul.f32 %v1159, 0.35355338
      %v1214 = vmul.f32 %v1164, 0.35355338
      %v1215 = vmul.f32 %v1167, 0.35355338
      %v1216 = vmul.f32 %v1172, 0.35355338
      %v1217 = vmul.f32 %v1175, 0.35355338
      %v1218 = vmul.f32 %v1180, 0.35355338
      %v1219 = vmul.f32 %v1183, 0.35355338
      %v1220 = vmul.f32 %v1188, 0.35355338
      %v1221 = vmul.f32 %v1191, 0.35355338
      %v1222 = vmul.f32 %v1196, 0.35355338
      %v1223 = vmul.f32 %v1199, 0.35355338
      %v1224 = vmul.f32 %v1204, 0.35355338
      %v1225 = vmul.f32 %v1207, 0.35355338
      %v1227 = vlaneseq
      %v1228 = vshrl.u32 %v1227, 7
      %v1229 = vsub.s32 0, %v1228
      %v1230 = vrot.slane %v594, %v1229
      %v1232 = vadd.f32 %v1210, %v1230
      %v1233 = vadd.f32 %v1211, %v1230
      %v1234 = vadd.f32 %v1212, %v1230
      %v1235 = vadd.f32 %v1213, %v1230
      %v1236 = vadd.f32 %v1214, %v1230
      %v1237 = vadd.f32 %v1215, %v1230
      %v1238 = vadd.f32 %v1216, %v1230
      %v1239 = vadd.f32 %v1217, %v1230
      %v1240 = vadd.f32 %v1218, %v1230
      %v1241 = vadd.f32 %v1219, %v1230
      %v1242 = vadd.f32 %v1220, %v1230
      %v1243 = vadd.f32 %v1221, %v1230
      %v1244 = vadd.f32 %v1222, %v1230
      %v1245 = vadd.f32 %v1223, %v1230
      %v1246 = vadd.f32 %v1224, %v1230
      %v1247 = vadd.f32 %v1225, %v1230
      %v1248 = vmul.f32 %v1232, 1.442695
      %v1249 = vpow.pop %v1248
      %v1250 = vmul.f32 %v1233, 1.442695
      %v1251 = vpow.pop %v1250
      %v1252 = vmul.f32 %v1234, 1.442695
      %v1253 = vpow.pop %v1252
      %v1254 = vmul.f32 %v1235, 1.442695
      %v1255 = vpow.pop %v1254
      %v1256 = vmul.f32 %v1236, 1.442695
      %v1257 = vpow.pop %v1256
      %v1258 = vmul.f32 %v1237, 1.442695
      %v1259 = vpow.pop %v1258
      %v1260 = vmul.f32 %v1238, 1.442695
      %v1261 = vpow.pop %v1260
      %v1262 = vmul.f32 %v1239, 1.442695
      %v1263 = vpow.pop %v1262
      %v1264 = vmul.f32 %v1240, 1.442695
      %v1265 = vpow.pop %v1264
      %v1266 = vmul.f32 %v1241, 1.442695
      %v1267 = vpow.pop %v1266
      %v1268 = vmul.f32 %v1242, 1.442695
      %v1269 = vpow.pop %v1268
      %v1270 = vmul.f32 %v1243, 1.442695
      %v1271 = vpow.pop %v1270
      %v1272 = vmul.f32 %v1244, 1.442695
      %v1273 = vpow.pop %v1272
      %v1274 = vmul.f32 %v1245, 1.442695
      %v1275 = vpow.pop %v1274
      %v1276 = vmul.f32 %v1246, 1.442695
      %v1277 = vpow.pop %v1276
      %v1278 = vmul.f32 %v1247, 1.442695
      %v1279 = vpow.pop %v1278
      %1280 = vadd.xlane.f32.xlu0 %v1249
      %v1281 = vpop.xlane.xlu0 %1280
      %1282 = vadd.xlane.f32.xlu0 %v1251
      %v1283 = vpop.xlane.xlu0 %1282
      %1284 = vadd.xlane.f32.xlu0 %v1253
      %v1285 = vpop.xlane.xlu0 %1284
      %1286 = vadd.xlane.f32.xlu0 %v1255
      %v1287 = vpop.xlane.xlu0 %1286
      %1288 = vadd.xlane.f32.xlu0 %v1257
      %v1289 = vpop.xlane.xlu0 %1288
      %1290 = vadd.xlane.f32.xlu0 %v1259
      %v1291 = vpop.xlane.xlu0 %1290
      %1292 = vadd.xlane.f32.xlu0 %v1261
      %v1293 = vpop.xlane.xlu0 %1292
      %1294 = vadd.xlane.f32.xlu0 %v1263
      %v1295 = vpop.xlane.xlu0 %1294
      %1296 = vadd.xlane.f32.xlu0 %v1265
      %v1297 = vpop.xlane.xlu0 %1296
      %1298 = vadd.xlane.f32.xlu0 %v1267
      %v1299 = vpop.xlane.xlu0 %1298
      %1300 = vadd.xlane.f32.xlu0 %v1269
      %v1301 = vpop.xlane.xlu0 %1300
      %1302 = vadd.xlane.f32.xlu0 %v1271
      %v1303 = vpop.xlane.xlu0 %1302
      %1304 = vadd.xlane.f32.xlu0 %v1273
      %v1305 = vpop.xlane.xlu0 %1304
      %1306 = vadd.xlane.f32.xlu0 %v1275
      %v1307 = vpop.xlane.xlu0 %1306
      %1308 = vadd.xlane.f32.xlu0 %v1277
      %v1309 = vpop.xlane.xlu0 %1308
      %1310 = vadd.xlane.f32.xlu0 %v1279
      %v1311 = vpop.xlane.xlu0 %1310
      %v1312 = vrcp.pop %v1281
      %v1313 = vrcp.pop %v1283
      %v1314 = vrcp.pop %v1285
      %v1315 = vrcp.pop %v1287
      %v1316 = vrcp.pop %v1289
      %v1317 = vrcp.pop %v1291
      %v1318 = vrcp.pop %v1293
      %v1319 = vrcp.pop %v1295
      %v1320 = vrcp.pop %v1297
      %v1321 = vrcp.pop %v1299
      %v1322 = vrcp.pop %v1301
      %v1323 = vrcp.pop %v1303
      %v1324 = vrcp.pop %v1305
      %v1325 = vrcp.pop %v1307
      %v1326 = vrcp.pop %v1309
      %v1327 = vrcp.pop %v1311
      %v1328 = vmul.f32 %v1249, %v1312
      %v1329 = vmul.f32 %v1251, %v1313
      %v1330 = vmul.f32 %v1253, %v1314
      %v1331 = vmul.f32 %v1255, %v1315
      %v1332 = vmul.f32 %v1257, %v1316
      %v1333 = vmul.f32 %v1259, %v1317
      %v1334 = vmul.f32 %v1261, %v1318
      %v1335 = vmul.f32 %v1263, %v1319
      %v1336 = vmul.f32 %v1265, %v1320
      %v1337 = vmul.f32 %v1267, %v1321
      %v1338 = vmul.f32 %v1269, %v1322
      %v1339 = vmul.f32 %v1271, %v1323
      %v1340 = vmul.f32 %v1273, %v1324
      %v1341 = vmul.f32 %v1275, %v1325
      %v1342 = vmul.f32 %v1277, %v1326
      %v1343 = vmul.f32 %v1279, %v1327
      %v1344 = vpack.c.bf16 %v1329, %v1328
      %v1345 = vpack.c.bf16 %v1331, %v1330
      %v1346 = vpack.c.bf16 %v1333, %v1332
      %v1347 = vpack.c.bf16 %v1335, %v1334
      %v1348 = vpack.c.bf16 %v1337, %v1336
      %v1349 = vpack.c.bf16 %v1339, %v1338
      %v1350 = vpack.c.bf16 %v1341, %v1340
      %v1351 = vpack.c.bf16 %v1343, %v1342
      %1352 = vrot.lane.b32.xlu0 %v1032, 64
      %v1353 = vpop.permute.xlu0 %1352
      %1354 = vrot.lane.b32.xlu0 %v1033, 64
      %v1355 = vpop.permute.xlu0 %1354
      %1356 = vrot.lane.b32.xlu0 %v1034, 64
      %v1357 = vpop.permute.xlu0 %1356
      %1358 = vrot.lane.b32.xlu0 %v1035, 64
      %v1359 = vpop.permute.xlu0 %1358
      %1360 = vrot.lane.b32.xlu0 %v1036, 64
      %v1361 = vpop.permute.xlu0 %1360
      %1362 = vrot.lane.b32.xlu0 %v1037, 64
      %v1363 = vpop.permute.xlu0 %1362
      %1364 = vrot.lane.b32.xlu0 %v1038, 64
      %v1365 = vpop.permute.xlu0 %1364
      %1366 = vrot.lane.b32.xlu0 %v1039, 64
      %v1367 = vpop.permute.xlu0 %1366
      %1376 = vmatprep.subr.bf16.mxu0 0
      %1377 = vmatpush1.bf16.msra.mxu0 %v1353
      %1378 = vmatprep.subr.bf16.mxu0 0
      %1379 = vmatpush1.bf16.msra.mxu0 %v1355
      %1380 = vmatprep.subr.bf16.mxu0 0
      %1381 = vmatpush1.bf16.msra.mxu0 %v1357
      %1382 = vmatprep.subr.bf16.mxu0 0
      %1383 = vmatpush1.bf16.msra.mxu0 %v1359
      %1384 = vmatprep.subr.bf16.mxu0 0
      %1385 = vmatpush1.bf16.msra.mxu0 %v1361
      %1386 = vmatprep.subr.bf16.mxu0 0
      %1387 = vmatpush1.bf16.msra.mxu0 %v1363
      %1388 = vmatprep.subr.bf16.mxu0 0
      %1389 = vmatpush1.bf16.msra.mxu0 %v1365
      %1390 = vmatprep.subr.bf16.mxu0 0
      %1391 = vmatpush1.bf16.msra.mxu0 %v1367
      %1392 = vmatprep.subr.bf16.mxu0 0
      %1393 = vmatpush1.bf16.msra.mxu0 0
      %1394 = vmatprep.subr.bf16.mxu0 0
      %1395 = vmatpush1.bf16.msra.mxu0 0
      %1396 = vmatprep.subr.bf16.mxu0 0
      %1397 = vmatpush1.bf16.msra.mxu0 0
      %1398 = vmatprep.subr.bf16.mxu0 0
      %1399 = vmatpush1.bf16.msra.mxu0 0
      %1400 = vmatprep.subr.bf16.mxu0 0
      %1401 = vmatpush1.bf16.msra.mxu0 0
      %1402 = vmatprep.subr.bf16.mxu0 0
      %1403 = vmatpush1.bf16.msra.mxu0 0
      %1404 = vmatprep.subr.bf16.mxu0 0
      %1405 = vmatpush1.bf16.msra.mxu0 0
      %1406 = vmatprep.subr.bf16.mxu0 0
      %1407 = vmatpush1.bf16.msra.mxu0 0
      %1408 = vmatprep.mubr.bf16.mxu0 0
      %1409 = vmatmul.mubr.bf16.gmra.mrb[0].mxu0 %v1344
      %v1410 = vpop.f32.mrb[0].mxu0
      %v1411 = vadd.f32 0.0, %v1410
      %v1412 = vpop.f32.mrb[0].mxu0
      %v1413 = vpop.f32.mrb[0].mxu0
      %v1414 = vadd.f32 0.0, %v1413
      %v1415 = vpop.f32.mrb[0].mxu0
      %1416 = vmatprep.mubr.bf16.mxu0 0
      %1417 = vmatmul.mubr.bf16.gmra.mrb[0].mxu0 %v1345
      %v1418 = vpop.f32.mrb[0].mxu0
      %v1419 = vadd.f32 0.0, %v1418
      %v1420 = vpop.f32.mrb[0].mxu0
      %v1421 = vpop.f32.mrb[0].mxu0
      %v1422 = vadd.f32 0.0, %v1421
      %v1423 = vpop.f32.mrb[0].mxu0
      %1424 = vmatprep.mubr.bf16.mxu0 0
      %1425 = vmatmul.mubr.bf16.gmra.mrb[0].mxu0 %v1346
      %v1426 = vpop.f32.mrb[0].mxu0
      %v1427 = vadd.f32 0.0, %v1426
      %v1428 = vpop.f32.mrb[0].mxu0
      %v1429 = vpop.f32.mrb[0].mxu0
      %v1430 = vadd.f32 0.0, %v1429
      %v1431 = vpop.f32.mrb[0].mxu0
      %1432 = vmatprep.mubr.bf16.mxu0 0
      %1433 = vmatmul.mubr.bf16.gmra.mrb[0].mxu0 %v1347
      %v1434 = vpop.f32.mrb[0].mxu0
      %v1435 = vadd.f32 0.0, %v1434
      %v1436 = vpop.f32.mrb[0].mxu0
      %v1437 = vpop.f32.mrb[0].mxu0
      %v1438 = vadd.f32 0.0, %v1437
      %v1439 = vpop.f32.mrb[0].mxu0
      %1440 = vmatprep.mubr.bf16.mxu0 0
      %1441 = vmatmul.mubr.bf16.gmra.mrb[0].mxu0 %v1348
      %v1442 = vpop.f32.mrb[0].mxu0
      %v1443 = vadd.f32 0.0, %v1442
      %v1444 = vpop.f32.mrb[0].mxu0
      %v1445 = vpop.f32.mrb[0].mxu0
      %v1446 = vadd.f32 0.0, %v1445
      %v1447 = vpop.f32.mrb[0].mxu0
      %1448 = vmatprep.mubr.bf16.mxu0 0
      %1449 = vmatmul.mubr.bf16.gmra.mrb[0].mxu0 %v1349
      %v1450 = vpop.f32.mrb[0].mxu0
      %v1451 = vadd.f32 0.0, %v1450
      %v1452 = vpop.f32.mrb[0].mxu0
      %v1453 = vpop.f32.mrb[0].mxu0
      %v1454 = vadd.f32 0.0, %v1453
      %v1455 = vpop.f32.mrb[0].mxu0
      %1456 = vmatprep.mubr.bf16.mxu0 0
      %1457 = vmatmul.mubr.bf16.gmra.mrb[0].mxu0 %v1350
      %v1458 = vpop.f32.mrb[0].mxu0
      %v1459 = vadd.f32 0.0, %v1458
      %v1460 = vpop.f32.mrb[0].mxu0
      %v1461 = vpop.f32.mrb[0].mxu0
      %v1462 = vadd.f32 0.0, %v1461
      %v1463 = vpop.f32.mrb[0].mxu0
      %1464 = vmatprep.mubr.bf16.mxu0 0
      %1465 = vmatmul.mubr.bf16.gmra.mrb[0].mxu0 %v1351
      %v1466 = vpop.f32.mrb[0].mxu0
      %v1467 = vadd.f32 0.0, %v1466
      %v1468 = vpop.f32.mrb[0].mxu0
      %v1469 = vpop.f32.mrb[0].mxu0
      %v1470 = vadd.f32 0.0, %v1469
      %v1471 = vpop.f32.mrb[0].mxu0
      %1472 = vdwg.mxu0
      %v1473 = vpack.c.bf16 %v1414, %v1411
      %v1474 = vpack.c.bf16 %v1422, %v1419
      %v1475 = vpack.c.bf16 %v1430, %v1427
      %v1476 = vpack.c.bf16 %v1438, %v1435
      %v1477 = vpack.c.bf16 %v1446, %v1443
      %v1478 = vpack.c.bf16 %v1454, %v1451
      %v1479 = vpack.c.bf16 %v1462, %v1459
      %v1480 = vpack.c.bf16 %v1470, %v1467
      %1481 = vrot.lane.b32.xlu0 %v1032, 120
      %v1482 = vpop.permute.xlu0 %1481
      %1483 = vrot.lane.b32.xlu0 %v1033, 120
      %v1484 = vpop.permute.xlu0 %1483
      %1485 = vrot.lane.b32.xlu0 %v1034, 120
      %v1486 = vpop.permute.xlu0 %1485
      %1487 = vrot.lane.b32.xlu0 %v1035, 120
      %v1488 = vpop.permute.xlu0 %1487
      %1489 = vrot.lane.b32.xlu0 %v1036, 120
      %v1490 = vpop.permute.xlu0 %1489
      %1491 = vrot.lane.b32.xlu0 %v1037, 120
      %v1492 = vpop.permute.xlu0 %1491
      %1493 = vrot.lane.b32.xlu0 %v1038, 120
      %v1494 = vpop.permute.xlu0 %1493
      %1495 = vrot.lane.b32.xlu0 %v1039, 120
      %v1496 = vpop.permute.xlu0 %1495
      %1497 = vrot.lane.b32.xlu0 %v1032, 88
      %v1498 = vpop.permute.xlu0 %1497
      %1499 = vrot.lane.b32.xlu0 %v1033, 88
      %v1500 = vpop.permute.xlu0 %1499
      %1501 = vrot.lane.b32.xlu0 %v1034, 88
      %v1502 = vpop.permute.xlu0 %1501
      %1503 = vrot.lane.b32.xlu0 %v1035, 88
      %v1504 = vpop.permute.xlu0 %1503
      %1505 = vrot.lane.b32.xlu0 %v1036, 88
      %v1506 = vpop.permute.xlu0 %1505
      %1507 = vrot.lane.b32.xlu0 %v1037, 88
      %v1508 = vpop.permute.xlu0 %1507
      %1509 = vrot.lane.b32.xlu0 %v1038, 88
      %v1510 = vpop.permute.xlu0 %1509
      %1511 = vrot.lane.b32.xlu0 %v1039, 88
      %v1512 = vpop.permute.xlu0 %1511
      %v1514 = vsel %vm1064, %v1482, 0
      %v1517 = vsel %vm1064, %v1484, 0
      %v1520 = vsel %vm1064, %v1486, 0
      %v1523 = vsel %vm1064, %v1488, 0
      %v1526 = vsel %vm1064, %v1490, 0
      %v1529 = vsel %vm1064, %v1492, 0
      %v1532 = vsel %vm1064, %v1494, 0
      %v1535 = vsel %vm1064, %v1496, 0
      %v1538 = vsel %vm1064, %v1498, 0
      %v1541 = vsel %vm1064, %v1500, 0
      %v1544 = vsel %vm1064, %v1502, 0
      %v1547 = vsel %vm1064, %v1504, 0
      %v1550 = vsel %vm1064, %v1506, 0
      %v1553 = vsel %vm1064, %v1508, 0
      %v1556 = vsel %vm1064, %v1510, 0
      %v1559 = vsel %vm1064, %v1512, 0
      %1561 = vmatprep.subr.bf16.mxu0 0
      %1562 = vmatpush1.bf16.xpose.msra.mxu0 %v1538
      %1563 = vmatprep.subr.bf16.mxu0 0
      %1564 = vmatpush1.bf16.xpose.msra.mxu0 %v1541
      %1565 = vmatprep.subr.bf16.mxu0 0
      %1566 = vmatpush1.bf16.xpose.msra.mxu0 %v1544
      %1567 = vmatprep.subr.bf16.mxu0 0
      %1568 = vmatpush1.bf16.xpose.msra.mxu0 %v1547
      %1569 = vmatprep.subr.bf16.mxu0 0
      %1570 = vmatpush1.bf16.xpose.msra.mxu0 %v1550
      %1571 = vmatprep.subr.bf16.mxu0 0
      %1572 = vmatpush1.bf16.xpose.msra.mxu0 %v1553
      %1573 = vmatprep.subr.bf16.mxu0 0
      %1574 = vmatpush1.bf16.xpose.msra.mxu0 %v1556
      %1575 = vmatprep.subr.bf16.mxu0 0
      %1576 = vmatpush1.bf16.xpose.msra.mxu0 %v1559
      %1577 = vmatprep.subr.bf16.mxu0 0
      %1578 = vmatpush1.bf16.xpose.msra.mxu0 0
      %1579 = vmatprep.subr.bf16.mxu0 0
      %1580 = vmatpush1.bf16.xpose.msra.mxu0 0
      %1581 = vmatprep.subr.bf16.mxu0 0
      %1582 = vmatpush1.bf16.xpose.msra.mxu0 0
      %1583 = vmatprep.subr.bf16.mxu0 0
      %1584 = vmatpush1.bf16.xpose.msra.mxu0 0
      %1585 = vmatprep.subr.bf16.mxu0 0
      %1586 = vmatpush1.bf16.xpose.msra.mxu0 0
      %1587 = vmatprep.subr.bf16.mxu0 0
      %1588 = vmatpush1.bf16.xpose.msra.mxu0 0
      %1589 = vmatprep.subr.bf16.mxu0 0
      %1590 = vmatpush1.bf16.xpose.msra.mxu0 0
      %1591 = vmatprep.subr.bf16.mxu0 0
      %1592 = vmatpush1.bf16.xpose.msra.mxu0 0
      %1593 = vmatprep.mubr.bf16.mxu0 0
      %1594 = vmatmul.mubr.bf16.gmra.mrb[0].mxu0 %v1514
      %v1595 = vpop.f32.mrb[0].mxu0
      %v1596 = vadd.f32 0.0, %v1595
      %v1597 = vpop.f32.mrb[0].mxu0
      %v1598 = vpop.f32.mrb[0].mxu0
      %v1599 = vadd.f32 0.0, %v1598
      %v1600 = vpop.f32.mrb[0].mxu0
      %1601 = vmatprep.mubr.bf16.mxu0 0
      %1602 = vmatmul.mubr.bf16.gmra.mrb[0].mxu0 %v1517
      %v1603 = vpop.f32.mrb[0].mxu0
      %v1604 = vadd.f32 0.0, %v1603
      %v1605 = vpop.f32.mrb[0].mxu0
      %v1606 = vpop.f32.mrb[0].mxu0
      %v1607 = vadd.f32 0.0, %v1606
      %v1608 = vpop.f32.mrb[0].mxu0
      %1609 = vmatprep.mubr.bf16.mxu0 0
      %1610 = vmatmul.mubr.bf16.gmra.mrb[0].mxu0 %v1520
      %v1611 = vpop.f32.mrb[0].mxu0
      %v1612 = vadd.f32 0.0, %v1611
      %v1613 = vpop.f32.mrb[0].mxu0
      %v1614 = vpop.f32.mrb[0].mxu0
      %v1615 = vadd.f32 0.0, %v1614
      %v1616 = vpop.f32.mrb[0].mxu0
      %1617 = vmatprep.mubr.bf16.mxu0 0
      %1618 = vmatmul.mubr.bf16.gmra.mrb[0].mxu0 %v1523
      %v1619 = vpop.f32.mrb[0].mxu0
      %v1620 = vadd.f32 0.0, %v1619
      %v1621 = vpop.f32.mrb[0].mxu0
      %v1622 = vpop.f32.mrb[0].mxu0
      %v1623 = vadd.f32 0.0, %v1622
      %v1624 = vpop.f32.mrb[0].mxu0
      %1625 = vmatprep.mubr.bf16.mxu0 0
      %1626 = vmatmul.mubr.bf16.gmra.mrb[0].mxu0 %v1526
      %v1627 = vpop.f32.mrb[0].mxu0
      %v1628 = vadd.f32 0.0, %v1627
      %v1629 = vpop.f32.mrb[0].mxu0
      %v1630 = vpop.f32.mrb[0].mxu0
      %v1631 = vadd.f32 0.0, %v1630
      %v1632 = vpop.f32.mrb[0].mxu0
      %1633 = vmatprep.mubr.bf16.mxu0 0
      %1634 = vmatmul.mubr.bf16.gmra.mrb[0].mxu0 %v1529
      %v1635 = vpop.f32.mrb[0].mxu0
      %v1636 = vadd.f32 0.0, %v1635
      %v1637 = vpop.f32.mrb[0].mxu0
      %v1638 = vpop.f32.mrb[0].mxu0
      %v1639 = vadd.f32 0.0, %v1638
      %v1640 = vpop.f32.mrb[0].mxu0
      %1641 = vmatprep.mubr.bf16.mxu0 0
      %1642 = vmatmul.mubr.bf16.gmra.mrb[0].mxu0 %v1532
      %v1643 = vpop.f32.mrb[0].mxu0
      %v1644 = vadd.f32 0.0, %v1643
      %v1645 = vpop.f32.mrb[0].mxu0
      %v1646 = vpop.f32.mrb[0].mxu0
      %v1647 = vadd.f32 0.0, %v1646
      %v1648 = vpop.f32.mrb[0].mxu0
      %1649 = vmatprep.mubr.bf16.mxu0 0
      %1650 = vmatmul.mubr.bf16.gmra.mrb[0].mxu0 %v1535
      %v1651 = vpop.f32.mrb[0].mxu0
      %v1652 = vadd.f32 0.0, %v1651
      %v1653 = vpop.f32.mrb[0].mxu0
      %v1654 = vpop.f32.mrb[0].mxu0
      %v1655 = vadd.f32 0.0, %v1654
      %v1656 = vpop.f32.mrb[0].mxu0
      %1657 = vdwg.mxu0
      %v1658 = vmul.f32 %v1596, 0.35355338
      %v1659 = vmul.f32 %v1599, 0.35355338
      %v1660 = vmul.f32 %v1604, 0.35355338
      %v1661 = vmul.f32 %v1607, 0.35355338
      %v1662 = vmul.f32 %v1612, 0.35355338
      %v1663 = vmul.f32 %v1615, 0.35355338
      %v1664 = vmul.f32 %v1620, 0.35355338
      %v1665 = vmul.f32 %v1623, 0.35355338
      %v1666 = vmul.f32 %v1628, 0.35355338
      %v1667 = vmul.f32 %v1631, 0.35355338
      %v1668 = vmul.f32 %v1636, 0.35355338
      %v1669 = vmul.f32 %v1639, 0.35355338
      %v1670 = vmul.f32 %v1644, 0.35355338
      %v1671 = vmul.f32 %v1647, 0.35355338
      %v1672 = vmul.f32 %v1652, 0.35355338
      %v1673 = vmul.f32 %v1655, 0.35355338
      %v1674 = vadd.f32 %v1658, %v1230
      %v1675 = vadd.f32 %v1659, %v1230
      %v1676 = vadd.f32 %v1660, %v1230
      %v1677 = vadd.f32 %v1661, %v1230
      %v1678 = vadd.f32 %v1662, %v1230
      %v1679 = vadd.f32 %v1663, %v1230
      %v1680 = vadd.f32 %v1664, %v1230
      %v1681 = vadd.f32 %v1665, %v1230
      %v1682 = vadd.f32 %v1666, %v1230
      %v1683 = vadd.f32 %v1667, %v1230
      %v1684 = vadd.f32 %v1668, %v1230
      %v1685 = vadd.f32 %v1669, %v1230
      %v1686 = vadd.f32 %v1670, %v1230
      %v1687 = vadd.f32 %v1671, %v1230
      %v1688 = vadd.f32 %v1672, %v1230
      %v1689 = vadd.f32 %v1673, %v1230
      %v1690 = vmul.f32 %v1674, 1.442695
      %v1691 = vpow.pop %v1690
      %v1692 = vmul.f32 %v1675, 1.442695
      %v1693 = vpow.pop %v1692
      %v1694 = vmul.f32 %v1676, 1.442695
      %v1695 = vpow.pop %v1694
      %v1696 = vmul.f32 %v1677, 1.442695
      %v1697 = vpow.pop %v1696
      %v1698 = vmul.f32 %v1678, 1.442695
      %v1699 = vpow.pop %v1698
      %v1700 = vmul.f32 %v1679, 1.442695
      %v1701 = vpow.pop %v1700
      %v1702 = vmul.f32 %v1680, 1.442695
      %v1703 = vpow.pop %v1702
      %v1704 = vmul.f32 %v1681, 1.442695
      %v1705 = vpow.pop %v1704
      %v1706 = vmul.f32 %v1682, 1.442695
      %v1707 = vpow.pop %v1706
      %v1708 = vmul.f32 %v1683, 1.442695
      %v1709 = vpow.pop %v1708
      %v1710 = vmul.f32 %v1684, 1.442695
      %v1711 = vpow.pop %v1710
      %v1712 = vmul.f32 %v1685, 1.442695
      %v1713 = vpow.pop %v1712
      %v1714 = vmul.f32 %v1686, 1.442695
      %v1715 = vpow.pop %v1714
      %v1716 = vmul.f32 %v1687, 1.442695
      %v1717 = vpow.pop %v1716
      %v1718 = vmul.f32 %v1688, 1.442695
      %v1719 = vpow.pop %v1718
      %v1720 = vmul.f32 %v1689, 1.442695
      %v1721 = vpow.pop %v1720
      %1722 = vadd.xlane.f32.xlu0 %v1691
      %v1723 = vpop.xlane.xlu0 %1722
      %1724 = vadd.xlane.f32.xlu0 %v1693
      %v1725 = vpop.xlane.xlu0 %1724
      %1726 = vadd.xlane.f32.xlu0 %v1695
      %v1727 = vpop.xlane.xlu0 %1726
      %1728 = vadd.xlane.f32.xlu0 %v1697
      %v1729 = vpop.xlane.xlu0 %1728
      %1730 = vadd.xlane.f32.xlu0 %v1699
      %v1731 = vpop.xlane.xlu0 %1730
      %1732 = vadd.xlane.f32.xlu0 %v1701
      %v1733 = vpop.xlane.xlu0 %1732
      %1734 = vadd.xlane.f32.xlu0 %v1703
      %v1735 = vpop.xlane.xlu0 %1734
      %1736 = vadd.xlane.f32.xlu0 %v1705
      %v1737 = vpop.xlane.xlu0 %1736
      %1738 = vadd.xlane.f32.xlu0 %v1707
      %v1739 = vpop.xlane.xlu0 %1738
      %1740 = vadd.xlane.f32.xlu0 %v1709
      %v1741 = vpop.xlane.xlu0 %1740
      %1742 = vadd.xlane.f32.xlu0 %v1711
      %v1743 = vpop.xlane.xlu0 %1742
      %1744 = vadd.xlane.f32.xlu0 %v1713
      %v1745 = vpop.xlane.xlu0 %1744
      %1746 = vadd.xlane.f32.xlu0 %v1715
      %v1747 = vpop.xlane.xlu0 %1746
      %1748 = vadd.xlane.f32.xlu0 %v1717
      %v1749 = vpop.xlane.xlu0 %1748
      %1750 = vadd.xlane.f32.xlu0 %v1719
      %v1751 = vpop.xlane.xlu0 %1750
      %1752 = vadd.xlane.f32.xlu0 %v1721
      %v1753 = vpop.xlane.xlu0 %1752
      %v1754 = vrcp.pop %v1723
      %v1755 = vrcp.pop %v1725
      %v1756 = vrcp.pop %v1727
      %v1757 = vrcp.pop %v1729
      %v1758 = vrcp.pop %v1731
      %v1759 = vrcp.pop %v1733
      %v1760 = vrcp.pop %v1735
      %v1761 = vrcp.pop %v1737
      %v1762 = vrcp.pop %v1739
      %v1763 = vrcp.pop %v1741
      %v1764 = vrcp.pop %v1743
      %v1765 = vrcp.pop %v1745
      %v1766 = vrcp.pop %v1747
      %v1767 = vrcp.pop %v1749
      %v1768 = vrcp.pop %v1751
      %v1769 = vrcp.pop %v1753
      %v1770 = vmul.f32 %v1691, %v1754
      %v1771 = vmul.f32 %v1693, %v1755
      %v1772 = vmul.f32 %v1695, %v1756
      %v1773 = vmul.f32 %v1697, %v1757
      %v1774 = vmul.f32 %v1699, %v1758
      %v1775 = vmul.f32 %v1701, %v1759
      %v1776 = vmul.f32 %v1703, %v1760
      %v1777 = vmul.f32 %v1705, %v1761
      %v1778 = vmul.f32 %v1707, %v1762
      %v1779 = vmul.f32 %v1709, %v1763
      %v1780 = vmul.f32 %v1711, %v1764
      %v1781 = vmul.f32 %v1713, %v1765
      %v1782 = vmul.f32 %v1715, %v1766
      %v1783 = vmul.f32 %v1717, %v1767
      %v1784 = vmul.f32 %v1719, %v1768
      %v1785 = vmul.f32 %v1721, %v1769
      %v1786 = vpack.c.bf16 %v1771, %v1770
      %v1787 = vpack.c.bf16 %v1773, %v1772
      %v1788 = vpack.c.bf16 %v1775, %v1774
      %v1789 = vpack.c.bf16 %v1777, %v1776
      %v1790 = vpack.c.bf16 %v1779, %v1778
      %v1791 = vpack.c.bf16 %v1781, %v1780
      %v1792 = vpack.c.bf16 %v1783, %v1782
      %v1793 = vpack.c.bf16 %v1785, %v1784
      %1794 = vrot.lane.b32.xlu0 %v1032, 56
      %v1795 = vpop.permute.xlu0 %1794
      %1796 = vrot.lane.b32.xlu0 %v1033, 56
      %v1797 = vpop.permute.xlu0 %1796
      %1798 = vrot.lane.b32.xlu0 %v1034, 56
      %v1799 = vpop.permute.xlu0 %1798
      %1800 = vrot.lane.b32.xlu0 %v1035, 56
      %v1801 = vpop.permute.xlu0 %1800
      %1802 = vrot.lane.b32.xlu0 %v1036, 56
      %v1803 = vpop.permute.xlu0 %1802
      %1804 = vrot.lane.b32.xlu0 %v1037, 56
      %v1805 = vpop.permute.xlu0 %1804
      %1806 = vrot.lane.b32.xlu0 %v1038, 56
      %v1807 = vpop.permute.xlu0 %1806
      %1808 = vrot.lane.b32.xlu0 %v1039, 56
      %v1809 = vpop.permute.xlu0 %1808
      %1818 = vmatprep.subr.bf16.mxu0 0
      %1819 = vmatpush1.bf16.msra.mxu0 %v1795
      %1820 = vmatprep.subr.bf16.mxu0 0
      %1821 = vmatpush1.bf16.msra.mxu0 %v1797
      %1822 = vmatprep.subr.bf16.mxu0 0
      %1823 = vmatpush1.bf16.msra.mxu0 %v1799
      %1824 = vmatprep.subr.bf16.mxu0 0
      %1825 = vmatpush1.bf16.msra.mxu0 %v1801
      %1826 = vmatprep.subr.bf16.mxu0 0
      %1827 = vmatpush1.bf16.msra.mxu0 %v1803
      %1828 = vmatprep.subr.bf16.mxu0 0
      %1829 = vmatpush1.bf16.msra.mxu0 %v1805
      %1830 = vmatprep.subr.bf16.mxu0 0
      %1831 = vmatpush1.bf16.msra.mxu0 %v1807
      %1832 = vmatprep.subr.bf16.mxu0 0
      %1833 = vmatpush1.bf16.msra.mxu0 %v1809
      %1834 = vmatprep.subr.bf16.mxu0 0
      %1835 = vmatpush1.bf16.msra.mxu0 0
      %1836 = vmatprep.subr.bf16.mxu0 0
      %1837 = vmatpush1.bf16.msra.mxu0 0
      %1838 = vmatprep.subr.bf16.mxu0 0
      %1839 = vmatpush1.bf16.msra.mxu0 0
      %1840 = vmatprep.subr.bf16.mxu0 0
      %1841 = vmatpush1.bf16.msra.mxu0 0
      %1842 = vmatprep.subr.bf16.mxu0 0
      %1843 = vmatpush1.bf16.msra.mxu0 0
      %1844 = vmatprep.subr.bf16.mxu0 0
      %1845 = vmatpush1.bf16.msra.mxu0 0
      %1846 = vmatprep.subr.bf16.mxu0 0
      %1847 = vmatpush1.bf16.msra.mxu0 0
      %1848 = vmatprep.subr.bf16.mxu0 0
      %1849 = vmatpush1.bf16.msra.mxu0 0
      %1850 = vmatprep.mubr.bf16.mxu0 0
      %1851 = vmatmul.mubr.bf16.gmra.mrb[0].mxu0 %v1786
      %v1852 = vpop.f32.mrb[0].mxu0
      %v1853 = vadd.f32 0.0, %v1852
      %v1854 = vpop.f32.mrb[0].mxu0
      %v1855 = vpop.f32.mrb[0].mxu0
      %v1856 = vadd.f32 0.0, %v1855
      %v1857 = vpop.f32.mrb[0].mxu0
      %1858 = vmatprep.mubr.bf16.mxu0 0
      %1859 = vmatmul.mubr.bf16.gmra.mrb[0].mxu0 %v1787
      %v1860 = vpop.f32.mrb[0].mxu0
      %v1861 = vadd.f32 0.0, %v1860
      %v1862 = vpop.f32.mrb[0].mxu0
      %v1863 = vpop.f32.mrb[0].mxu0
      %v1864 = vadd.f32 0.0, %v1863
      %v1865 = vpop.f32.mrb[0].mxu0
      %1866 = vmatprep.mubr.bf16.mxu0 0
      %1867 = vmatmul.mubr.bf16.gmra.mrb[0].mxu0 %v1788
      %v1868 = vpop.f32.mrb[0].mxu0
      %v1869 = vadd.f32 0.0, %v1868
      %v1870 = vpop.f32.mrb[0].mxu0
      %v1871 = vpop.f32.mrb[0].mxu0
      %v1872 = vadd.f32 0.0, %v1871
      %v1873 = vpop.f32.mrb[0].mxu0
      %1874 = vmatprep.mubr.bf16.mxu0 0
      %1875 = vmatmul.mubr.bf16.gmra.mrb[0].mxu0 %v1789
      %v1876 = vpop.f32.mrb[0].mxu0
      %v1877 = vadd.f32 0.0, %v1876
      %v1878 = vpop.f32.mrb[0].mxu0
      %v1879 = vpop.f32.mrb[0].mxu0
      %v1880 = vadd.f32 0.0, %v1879
      %v1881 = vpop.f32.mrb[0].mxu0
      %1882 = vmatprep.mubr.bf16.mxu0 0
      %1883 = vmatmul.mubr.bf16.gmra.mrb[0].mxu0 %v1790
      %v1884 = vpop.f32.mrb[0].mxu0
      %v1885 = vadd.f32 0.0, %v1884
      %v1886 = vpop.f32.mrb[0].mxu0
      %v1887 = vpop.f32.mrb[0].mxu0
      %v1888 = vadd.f32 0.0, %v1887
      %v1889 = vpop.f32.mrb[0].mxu0
      %1890 = vmatprep.mubr.bf16.mxu0 0
      %1891 = vmatmul.mubr.bf16.gmra.mrb[0].mxu0 %v1791
      %v1892 = vpop.f32.mrb[0].mxu0
      %v1893 = vadd.f32 0.0, %v1892
      %v1894 = vpop.f32.mrb[0].mxu0
      %v1895 = vpop.f32.mrb[0].mxu0
      %v1896 = vadd.f32 0.0, %v1895
      %v1897 = vpop.f32.mrb[0].mxu0
      %1898 = vmatprep.mubr.bf16.mxu0 0
      %1899 = vmatmul.mubr.bf16.gmra.mrb[0].mxu0 %v1792
      %v1900 = vpop.f32.mrb[0].mxu0
      %v1901 = vadd.f32 0.0, %v1900
      %v1902 = vpop.f32.mrb[0].mxu0
      %v1903 = vpop.f32.mrb[0].mxu0
      %v1904 = vadd.f32 0.0, %v1903
      %v1905 = vpop.f32.mrb[0].mxu0
      %1906 = vmatprep.mubr.bf16.mxu0 0
      %1907 = vmatmul.mubr.bf16.gmra.mrb[0].mxu0 %v1793
      %v1908 = vpop.f32.mrb[0].mxu0
      %v1909 = vadd.f32 0.0, %v1908
      %v1910 = vpop.f32.mrb[0].mxu0
      %v1911 = vpop.f32.mrb[0].mxu0
      %v1912 = vadd.f32 0.0, %v1911
      %v1913 = vpop.f32.mrb[0].mxu0
      %1914 = vdwg.mxu0
      %v1915 = vpack.c.bf16 %v1856, %v1853
      %v1916 = vpack.c.bf16 %v1864, %v1861
      %v1917 = vpack.c.bf16 %v1872, %v1869
      %v1918 = vpack.c.bf16 %v1880, %v1877
      %v1919 = vpack.c.bf16 %v1888, %v1885
      %v1920 = vpack.c.bf16 %v1896, %v1893
      %v1921 = vpack.c.bf16 %v1904, %v1901
      %v1922 = vpack.c.bf16 %v1912, %v1909
      %1923 = vrot.lane.b32.xlu0 %v1032, 112
      %v1924 = vpop.permute.xlu0 %1923
      %1925 = vrot.lane.b32.xlu0 %v1033, 112
      %v1926 = vpop.permute.xlu0 %1925
      %1927 = vrot.lane.b32.xlu0 %v1034, 112
      %v1928 = vpop.permute.xlu0 %1927
      %1929 = vrot.lane.b32.xlu0 %v1035, 112
      %v1930 = vpop.permute.xlu0 %1929
      %1931 = vrot.lane.b32.xlu0 %v1036, 112
      %v1932 = vpop.permute.xlu0 %1931
      %1933 = vrot.lane.b32.xlu0 %v1037, 112
      %v1934 = vpop.permute.xlu0 %1933
      %1935 = vrot.lane.b32.xlu0 %v1038, 112
      %v1936 = vpop.permute.xlu0 %1935
      %1937 = vrot.lane.b32.xlu0 %v1039, 112
      %v1938 = vpop.permute.xlu0 %1937
      %1939 = vrot.lane.b32.xlu0 %v1032, 80
      %v1940 = vpop.permute.xlu0 %1939
      %1941 = vrot.lane.b32.xlu0 %v1033, 80
      %v1942 = vpop.permute.xlu0 %1941
      %1943 = vrot.lane.b32.xlu0 %v1034, 80
      %v1944 = vpop.permute.xlu0 %1943
      %1945 = vrot.lane.b32.xlu0 %v1035, 80
      %v1946 = vpop.permute.xlu0 %1945
      %1947 = vrot.lane.b32.xlu0 %v1036, 80
      %v1948 = vpop.permute.xlu0 %1947
      %1949 = vrot.lane.b32.xlu0 %v1037, 80
      %v1950 = vpop.permute.xlu0 %1949
      %1951 = vrot.lane.b32.xlu0 %v1038, 80
      %v1952 = vpop.permute.xlu0 %1951
      %1953 = vrot.lane.b32.xlu0 %v1039, 80
      %v1954 = vpop.permute.xlu0 %1953
      %v1956 = vsel %vm1064, %v1924, 0
      %v1959 = vsel %vm1064, %v1926, 0
      %v1962 = vsel %vm1064, %v1928, 0
      %v1965 = vsel %vm1064, %v1930, 0
      %v1968 = vsel %vm1064, %v1932, 0
      %v1971 = vsel %vm1064, %v1934, 0
      %v1974 = vsel %vm1064, %v1936, 0
      %v1977 = vsel %vm1064, %v1938, 0
      %v1980 = vsel %vm1064, %v1940, 0
      %v1983 = vsel %vm1064, %v1942, 0
      %v1986 = vsel %vm1064, %v1944, 0
      %v1989 = vsel %vm1064, %v1946, 0
      %v1992 = vsel %vm1064, %v1948, 0
      %v1995 = vsel %vm1064, %v1950, 0
      %v1998 = vsel %vm1064, %v1952, 0
      %v2001 = vsel %vm1064, %v1954, 0
      %2003 = vmatprep.subr.bf16.mxu0 0
      %2004 = vmatpush1.bf16.xpose.msra.mxu0 %v1980
      %2005 = vmatprep.subr.bf16.mxu0 0
      %2006 = vmatpush1.bf16.xpose.msra.mxu0 %v1983
      %2007 = vmatprep.subr.bf16.mxu0 0
      %2008 = vmatpush1.bf16.xpose.msra.mxu0 %v1986
      %2009 = vmatprep.subr.bf16.mxu0 0
      %2010 = vmatpush1.bf16.xpose.msra.mxu0 %v1989
      %2011 = vmatprep.subr.bf16.mxu0 0
      %2012 = vmatpush1.bf16.xpose.msra.mxu0 %v1992
      %2013 = vmatprep.subr.bf16.mxu0 0
      %2014 = vmatpush1.bf16.xpose.msra.mxu0 %v1995
      %2015 = vmatprep.subr.bf16.mxu0 0
      %2016 = vmatpush1.bf16.xpose.msra.mxu0 %v1998
      %2017 = vmatprep.subr.bf16.mxu0 0
      %2018 = vmatpush1.bf16.xpose.msra.mxu0 %v2001
      %2019 = vmatprep.subr.bf16.mxu0 0
      %2020 = vmatpush1.bf16.xpose.msra.mxu0 0
      %2021 = vmatprep.subr.bf16.mxu0 0
      %2022 = vmatpush1.bf16.xpose.msra.mxu0 0
      %2023 = vmatprep.subr.bf16.mxu0 0
      %2024 = vmatpush1.bf16.xpose.msra.mxu0 0
      %2025 = vmatprep.subr.bf16.mxu0 0
      %2026 = vmatpush1.bf16.xpose.msra.mxu0 0
      %2027 = vmatprep.subr.bf16.mxu0 0
      %2028 = vmatpush1.bf16.xpose.msra.mxu0 0
      %2029 = vmatprep.subr.bf16.mxu0 0
      %2030 = vmatpush1.bf16.xpose.msra.mxu0 0
      %2031 = vmatprep.subr.bf16.mxu0 0
      %2032 = vmatpush1.bf16.xpose.msra.mxu0 0
      %2033 = vmatprep.subr.bf16.mxu0 0
      %2034 = vmatpush1.bf16.xpose.msra.mxu0 0
      %2035 = vmatprep.mubr.bf16.mxu0 0
      %2036 = vmatmul.mubr.bf16.gmra.mrb[0].mxu0 %v1956
      %v2037 = vpop.f32.mrb[0].mxu0
      %v2038 = vadd.f32 0.0, %v2037
      %v2039 = vpop.f32.mrb[0].mxu0
      %v2040 = vpop.f32.mrb[0].mxu0
      %v2041 = vadd.f32 0.0, %v2040
      %v2042 = vpop.f32.mrb[0].mxu0
      %2043 = vmatprep.mubr.bf16.mxu0 0
      %2044 = vmatmul.mubr.bf16.gmra.mrb[0].mxu0 %v1959
      %v2045 = vpop.f32.mrb[0].mxu0
      %v2046 = vadd.f32 0.0, %v2045
      %v2047 = vpop.f32.mrb[0].mxu0
      %v2048 = vpop.f32.mrb[0].mxu0
      %v2049 = vadd.f32 0.0, %v2048
      %v2050 = vpop.f32.mrb[0].mxu0
      %2051 = vmatprep.mubr.bf16.mxu0 0
      %2052 = vmatmul.mubr.bf16.gmra.mrb[0].mxu0 %v1962
      %v2053 = vpop.f32.mrb[0].mxu0
      %v2054 = vadd.f32 0.0, %v2053
      %v2055 = vpop.f32.mrb[0].mxu0
      %v2056 = vpop.f32.mrb[0].mxu0
      %v2057 = vadd.f32 0.0, %v2056
      %v2058 = vpop.f32.mrb[0].mxu0
      %2059 = vmatprep.mubr.bf16.mxu0 0
      %2060 = vmatmul.mubr.bf16.gmra.mrb[0].mxu0 %v1965
      %v2061 = vpop.f32.mrb[0].mxu0
      %v2062 = vadd.f32 0.0, %v2061
      %v2063 = vpop.f32.mrb[0].mxu0
      %v2064 = vpop.f32.mrb[0].mxu0
      %v2065 = vadd.f32 0.0, %v2064
      %v2066 = vpop.f32.mrb[0].mxu0
      %2067 = vmatprep.mubr.bf16.mxu0 0
      %2068 = vmatmul.mubr.bf16.gmra.mrb[0].mxu0 %v1968
      %v2069 = vpop.f32.mrb[0].mxu0
      %v2070 = vadd.f32 0.0, %v2069
      %v2071 = vpop.f32.mrb[0].mxu0
      %v2072 = vpop.f32.mrb[0].mxu0
      %v2073 = vadd.f32 0.0, %v2072
      %v2074 = vpop.f32.mrb[0].mxu0
      %2075 = vmatprep.mubr.bf16.mxu0 0
      %2076 = vmatmul.mubr.bf16.gmra.mrb[0].mxu0 %v1971
      %v2077 = vpop.f32.mrb[0].mxu0
      %v2078 = vadd.f32 0.0, %v2077
      %v2079 = vpop.f32.mrb[0].mxu0
      %v2080 = vpop.f32.mrb[0].mxu0
      %v2081 = vadd.f32 0.0, %v2080
      %v2082 = vpop.f32.mrb[0].mxu0
      %2083 = vmatprep.mubr.bf16.mxu0 0
      %2084 = vmatmul.mubr.bf16.gmra.mrb[0].mxu0 %v1974
      %v2085 = vpop.f32.mrb[0].mxu0
      %v2086 = vadd.f32 0.0, %v2085
      %v2087 = vpop.f32.mrb[0].mxu0
      %v2088 = vpop.f32.mrb[0].mxu0
      %v2089 = vadd.f32 0.0, %v2088
      %v2090 = vpop.f32.mrb[0].mxu0
      %2091 = vmatprep.mubr.bf16.mxu0 0
      %2092 = vmatmul.mubr.bf16.gmra.mrb[0].mxu0 %v1977
      %v2093 = vpop.f32.mrb[0].mxu0
      %v2094 = vadd.f32 0.0, %v2093
      %v2095 = vpop.f32.mrb[0].mxu0
      %v2096 = vpop.f32.mrb[0].mxu0
      %v2097 = vadd.f32 0.0, %v2096
      %v2098 = vpop.f32.mrb[0].mxu0
      %2099 = vdwg.mxu0
      %v2100 = vmul.f32 %v2038, 0.35355338
      %v2101 = vmul.f32 %v2041, 0.35355338
      %v2102 = vmul.f32 %v2046, 0.35355338
      %v2103 = vmul.f32 %v2049, 0.35355338
      %v2104 = vmul.f32 %v2054, 0.35355338
      %v2105 = vmul.f32 %v2057, 0.35355338
      %v2106 = vmul.f32 %v2062, 0.35355338
      %v2107 = vmul.f32 %v2065, 0.35355338
      %v2108 = vmul.f32 %v2070, 0.35355338
      %v2109 = vmul.f32 %v2073, 0.35355338
      %v2110 = vmul.f32 %v2078, 0.35355338
      %v2111 = vmul.f32 %v2081, 0.35355338
      %v2112 = vmul.f32 %v2086, 0.35355338
      %v2113 = vmul.f32 %v2089, 0.35355338
      %v2114 = vmul.f32 %v2094, 0.35355338
      %v2115 = vmul.f32 %v2097, 0.35355338
      %v2116 = vadd.f32 %v2100, %v1230
      %v2117 = vadd.f32 %v2101, %v1230
      %v2118 = vadd.f32 %v2102, %v1230
      %v2119 = vadd.f32 %v2103, %v1230
      %v2120 = vadd.f32 %v2104, %v1230
      %v2121 = vadd.f32 %v2105, %v1230
      %v2122 = vadd.f32 %v2106, %v1230
      %v2123 = vadd.f32 %v2107, %v1230
      %v2124 = vadd.f32 %v2108, %v1230
      %v2125 = vadd.f32 %v2109, %v1230
      %v2126 = vadd.f32 %v2110, %v1230
      %v2127 = vadd.f32 %v2111, %v1230
      %v2128 = vadd.f32 %v2112, %v1230
      %v2129 = vadd.f32 %v2113, %v1230
      %v2130 = vadd.f32 %v2114, %v1230
      %v2131 = vadd.f32 %v2115, %v1230
      %v2132 = vmul.f32 %v2116, 1.442695
      %v2133 = vpow.pop %v2132
      %v2134 = vmul.f32 %v2117, 1.442695
      %v2135 = vpow.pop %v2134
      %v2136 = vmul.f32 %v2118, 1.442695
      %v2137 = vpow.pop %v2136
      %v2138 = vmul.f32 %v2119, 1.442695
      %v2139 = vpow.pop %v2138
      %v2140 = vmul.f32 %v2120, 1.442695
      %v2141 = vpow.pop %v2140
      %v2142 = vmul.f32 %v2121, 1.442695
      %v2143 = vpow.pop %v2142
      %v2144 = vmul.f32 %v2122, 1.442695
      %v2145 = vpow.pop %v2144
      %v2146 = vmul.f32 %v2123, 1.442695
      %v2147 = vpow.pop %v2146
      %v2148 = vmul.f32 %v2124, 1.442695
      %v2149 = vpow.pop %v2148
      %v2150 = vmul.f32 %v2125, 1.442695
      %v2151 = vpow.pop %v2150
      %v2152 = vmul.f32 %v2126, 1.442695
      %v2153 = vpow.pop %v2152
      %v2154 = vmul.f32 %v2127, 1.442695
      %v2155 = vpow.pop %v2154
      %v2156 = vmul.f32 %v2128, 1.442695
      %v2157 = vpow.pop %v2156
      %v2158 = vmul.f32 %v2129, 1.442695
      %v2159 = vpow.pop %v2158
      %v2160 = vmul.f32 %v2130, 1.442695
      %v2161 = vpow.pop %v2160
      %v2162 = vmul.f32 %v2131, 1.442695
      %v2163 = vpow.pop %v2162
      %2164 = vadd.xlane.f32.xlu0 %v2133
      %v2165 = vpop.xlane.xlu0 %2164
      %2166 = vadd.xlane.f32.xlu0 %v2135
      %v2167 = vpop.xlane.xlu0 %2166
      %2168 = vadd.xlane.f32.xlu0 %v2137
      %v2169 = vpop.xlane.xlu0 %2168
      %2170 = vadd.xlane.f32.xlu0 %v2139
      %v2171 = vpop.xlane.xlu0 %2170
      %2172 = vadd.xlane.f32.xlu0 %v2141
      %v2173 = vpop.xlane.xlu0 %2172
      %2174 = vadd.xlane.f32.xlu0 %v2143
      %v2175 = vpop.xlane.xlu0 %2174
      %2176 = vadd.xlane.f32.xlu0 %v2145
      %v2177 = vpop.xlane.xlu0 %2176
      %2178 = vadd.xlane.f32.xlu0 %v2147
      %v2179 = vpop.xlane.xlu0 %2178
      %2180 = vadd.xlane.f32.xlu0 %v2149
      %v2181 = vpop.xlane.xlu0 %2180
      %2182 = vadd.xlane.f32.xlu0 %v2151
      %v2183 = vpop.xlane.xlu0 %2182
      %2184 = vadd.xlane.f32.xlu0 %v2153
      %v2185 = vpop.xlane.xlu0 %2184
      %2186 = vadd.xlane.f32.xlu0 %v2155
      %v2187 = vpop.xlane.xlu0 %2186
      %2188 = vadd.xlane.f32.xlu0 %v2157
      %v2189 = vpop.xlane.xlu0 %2188
      %2190 = vadd.xlane.f32.xlu0 %v2159
      %v2191 = vpop.xlane.xlu0 %2190
      %2192 = vadd.xlane.f32.xlu0 %v2161
      %v2193 = vpop.xlane.xlu0 %2192
      %2194 = vadd.xlane.f32.xlu0 %v2163
      %v2195 = vpop.xlane.xlu0 %2194
      %v2196 = vrcp.pop %v2165
      %v2197 = vrcp.pop %v2167
      %v2198 = vrcp.pop %v2169
      %v2199 = vrcp.pop %v2171
      %v2200 = vrcp.pop %v2173
      %v2201 = vrcp.pop %v2175
      %v2202 = vrcp.pop %v2177
      %v2203 = vrcp.pop %v2179
      %v2204 = vrcp.pop %v2181
      %v2205 = vrcp.pop %v2183
      %v2206 = vrcp.pop %v2185
      %v2207 = vrcp.pop %v2187
      %v2208 = vrcp.pop %v2189
      %v2209 = vrcp.pop %v2191
      %v2210 = vrcp.pop %v2193
      %v2211 = vrcp.pop %v2195
      %v2212 = vmul.f32 %v2133, %v2196
      %v2213 = vmul.f32 %v2135, %v2197
      %v2214 = vmul.f32 %v2137, %v2198
      %v2215 = vmul.f32 %v2139, %v2199
      %v2216 = vmul.f32 %v2141, %v2200
      %v2217 = vmul.f32 %v2143, %v2201
      %v2218 = vmul.f32 %v2145, %v2202
      %v2219 = vmul.f32 %v2147, %v2203
      %v2220 = vmul.f32 %v2149, %v2204
      %v2221 = vmul.f32 %v2151, %v2205
      %v2222 = vmul.f32 %v2153, %v2206
      %v2223 = vmul.f32 %v2155, %v2207
      %v2224 = vmul.f32 %v2157, %v2208
      %v2225 = vmul.f32 %v2159, %v2209
      %v2226 = vmul.f32 %v2161, %v2210
      %v2227 = vmul.f32 %v2163, %v2211
      %v2228 = vpack.c.bf16 %v2213, %v2212
      %v2229 = vpack.c.bf16 %v2215, %v2214
      %v2230 = vpack.c.bf16 %v2217, %v2216
      %v2231 = vpack.c.bf16 %v2219, %v2218
      %v2232 = vpack.c.bf16 %v2221, %v2220
      %v2233 = vpack.c.bf16 %v2223, %v2222
      %v2234 = vpack.c.bf16 %v2225, %v2224
      %v2235 = vpack.c.bf16 %v2227, %v2226
      %2236 = vrot.lane.b32.xlu0 %v1032, 48
      %v2237 = vpop.permute.xlu0 %2236
      %2238 = vrot.lane.b32.xlu0 %v1033, 48
      %v2239 = vpop.permute.xlu0 %2238
      %2240 = vrot.lane.b32.xlu0 %v1034, 48
      %v2241 = vpop.permute.xlu0 %2240
      %2242 = vrot.lane.b32.xlu0 %v1035, 48
      %v2243 = vpop.permute.xlu0 %2242
      %2244 = vrot.lane.b32.xlu0 %v1036, 48
      %v2245 = vpop.permute.xlu0 %2244
      %2246 = vrot.lane.b32.xlu0 %v1037, 48
      %v2247 = vpop.permute.xlu0 %2246
      %2248 = vrot.lane.b32.xlu0 %v1038, 48
      %v2249 = vpop.permute.xlu0 %2248
      %2250 = vrot.lane.b32.xlu0 %v1039, 48
      %v2251 = vpop.permute.xlu0 %2250
      %2260 = vmatprep.subr.bf16.mxu0 0
      %2261 = vmatpush1.bf16.msra.mxu0 %v2237
      %2262 = vmatprep.subr.bf16.mxu0 0
      %2263 = vmatpush1.bf16.msra.mxu0 %v2239
      %2264 = vmatprep.subr.bf16.mxu0 0
      %2265 = vmatpush1.bf16.msra.mxu0 %v2241
      %2266 = vmatprep.subr.bf16.mxu0 0
      %2267 = vmatpush1.bf16.msra.mxu0 %v2243
      %2268 = vmatprep.subr.bf16.mxu0 0
      %2269 = vmatpush1.bf16.msra.mxu0 %v2245
      %2270 = vmatprep.subr.bf16.mxu0 0
      %2271 = vmatpush1.bf16.msra.mxu0 %v2247
      %2272 = vmatprep.subr.bf16.mxu0 0
      %2273 = vmatpush1.bf16.msra.mxu0 %v2249
      %2274 = vmatprep.subr.bf16.mxu0 0
      %2275 = vmatpush1.bf16.msra.mxu0 %v2251
      %2276 = vmatprep.subr.bf16.mxu0 0
      %2277 = vmatpush1.bf16.msra.mxu0 0
      %2278 = vmatprep.subr.bf16.mxu0 0
      %2279 = vmatpush1.bf16.msra.mxu0 0
      %2280 = vmatprep.subr.bf16.mxu0 0
      %2281 = vmatpush1.bf16.msra.mxu0 0
      %2282 = vmatprep.subr.bf16.mxu0 0
      %2283 = vmatpush1.bf16.msra.mxu0 0
      %2284 = vmatprep.subr.bf16.mxu0 0
      %2285 = vmatpush1.bf16.msra.mxu0 0
      %2286 = vmatprep.subr.bf16.mxu0 0
      %2287 = vmatpush1.bf16.msra.mxu0 0
      %2288 = vmatprep.subr.bf16.mxu0 0
      %2289 = vmatpush1.bf16.msra.mxu0 0
      %2290 = vmatprep.subr.bf16.mxu0 0
      %2291 = vmatpush1.bf16.msra.mxu0 0
      %2292 = vmatprep.mubr.bf16.mxu0 0
      %2293 = vmatmul.mubr.bf16.gmra.mrb[0].mxu0 %v2228
      %v2294 = vpop.f32.mrb[0].mxu0
      %v2295 = vadd.f32 0.0, %v2294
      %v2296 = vpop.f32.mrb[0].mxu0
      %v2297 = vpop.f32.mrb[0].mxu0
      %v2298 = vadd.f32 0.0, %v2297
      %v2299 = vpop.f32.mrb[0].mxu0
      %2300 = vmatprep.mubr.bf16.mxu0 0
      %2301 = vmatmul.mubr.bf16.gmra.mrb[0].mxu0 %v2229
      %v2302 = vpop.f32.mrb[0].mxu0
      %v2303 = vadd.f32 0.0, %v2302
      %v2304 = vpop.f32.mrb[0].mxu0
      %v2305 = vpop.f32.mrb[0].mxu0
      %v2306 = vadd.f32 0.0, %v2305
      %v2307 = vpop.f32.mrb[0].mxu0
      %2308 = vmatprep.mubr.bf16.mxu0 0
      %2309 = vmatmul.mubr.bf16.gmra.mrb[0].mxu0 %v2230
      %v2310 = vpop.f32.mrb[0].mxu0
      %v2311 = vadd.f32 0.0, %v2310
      %v2312 = vpop.f32.mrb[0].mxu0
      %v2313 = vpop.f32.mrb[0].mxu0
      %v2314 = vadd.f32 0.0, %v2313
      %v2315 = vpop.f32.mrb[0].mxu0
      %2316 = vmatprep.mubr.bf16.mxu0 0
      %2317 = vmatmul.mubr.bf16.gmra.mrb[0].mxu0 %v2231
      %v2318 = vpop.f32.mrb[0].mxu0
      %v2319 = vadd.f32 0.0, %v2318
      %v2320 = vpop.f32.mrb[0].mxu0
      %v2321 = vpop.f32.mrb[0].mxu0
      %v2322 = vadd.f32 0.0, %v2321
      %v2323 = vpop.f32.mrb[0].mxu0
      %2324 = vmatprep.mubr.bf16.mxu0 0
      %2325 = vmatmul.mubr.bf16.gmra.mrb[0].mxu0 %v2232
      %v2326 = vpop.f32.mrb[0].mxu0
      %v2327 = vadd.f32 0.0, %v2326
      %v2328 = vpop.f32.mrb[0].mxu0
      %v2329 = vpop.f32.mrb[0].mxu0
      %v2330 = vadd.f32 0.0, %v2329
      %v2331 = vpop.f32.mrb[0].mxu0
      %2332 = vmatprep.mubr.bf16.mxu0 0
      %2333 = vmatmul.mubr.bf16.gmra.mrb[0].mxu0 %v2233
      %v2334 = vpop.f32.mrb[0].mxu0
      %v2335 = vadd.f32 0.0, %v2334
      %v2336 = vpop.f32.mrb[0].mxu0
      %v2337 = vpop.f32.mrb[0].mxu0
      %v2338 = vadd.f32 0.0, %v2337
      %v2339 = vpop.f32.mrb[0].mxu0
      %2340 = vmatprep.mubr.bf16.mxu0 0
      %2341 = vmatmul.mubr.bf16.gmra.mrb[0].mxu0 %v2234
      %v2342 = vpop.f32.mrb[0].mxu0
      %v2343 = vadd.f32 0.0, %v2342
      %v2344 = vpop.f32.mrb[0].mxu0
      %v2345 = vpop.f32.mrb[0].mxu0
      %v2346 = vadd.f32 0.0, %v2345
      %v2347 = vpop.f32.mrb[0].mxu0
      %2348 = vmatprep.mubr.bf16.mxu0 0
      %2349 = vmatmul.mubr.bf16.gmra.mrb[0].mxu0 %v2235
      %v2350 = vpop.f32.mrb[0].mxu0
      %v2351 = vadd.f32 0.0, %v2350
      %v2352 = vpop.f32.mrb[0].mxu0
      %v2353 = vpop.f32.mrb[0].mxu0
      %v2354 = vadd.f32 0.0, %v2353
      %v2355 = vpop.f32.mrb[0].mxu0
      %2356 = vdwg.mxu0
      %v2357 = vpack.c.bf16 %v2298, %v2295
      %v2358 = vpack.c.bf16 %v2306, %v2303
      %v2359 = vpack.c.bf16 %v2314, %v2311
      %v2360 = vpack.c.bf16 %v2322, %v2319
      %v2361 = vpack.c.bf16 %v2330, %v2327
      %v2362 = vpack.c.bf16 %v2338, %v2335
      %v2363 = vpack.c.bf16 %v2346, %v2343
      %v2364 = vpack.c.bf16 %v2354, %v2351
      %2365 = vrot.lane.b32.xlu0 %v1032, 104
      %v2366 = vpop.permute.xlu0 %2365
      %2367 = vrot.lane.b32.xlu0 %v1033, 104
      %v2368 = vpop.permute.xlu0 %2367
      %2369 = vrot.lane.b32.xlu0 %v1034, 104
      %v2370 = vpop.permute.xlu0 %2369
      %2371 = vrot.lane.b32.xlu0 %v1035, 104
      %v2372 = vpop.permute.xlu0 %2371
      %2373 = vrot.lane.b32.xlu0 %v1036, 104
      %v2374 = vpop.permute.xlu0 %2373
      %2375 = vrot.lane.b32.xlu0 %v1037, 104
      %v2376 = vpop.permute.xlu0 %2375
      %2377 = vrot.lane.b32.xlu0 %v1038, 104
      %v2378 = vpop.permute.xlu0 %2377
      %2379 = vrot.lane.b32.xlu0 %v1039, 104
      %v2380 = vpop.permute.xlu0 %2379
      %2381 = vrot.lane.b32.xlu0 %v1032, 72
      %v2382 = vpop.permute.xlu0 %2381
      %2383 = vrot.lane.b32.xlu0 %v1033, 72
      %v2384 = vpop.permute.xlu0 %2383
      %2385 = vrot.lane.b32.xlu0 %v1034, 72
      %v2386 = vpop.permute.xlu0 %2385
      %2387 = vrot.lane.b32.xlu0 %v1035, 72
      %v2388 = vpop.permute.xlu0 %2387
      %2389 = vrot.lane.b32.xlu0 %v1036, 72
      %v2390 = vpop.permute.xlu0 %2389
      %2391 = vrot.lane.b32.xlu0 %v1037, 72
      %v2392 = vpop.permute.xlu0 %2391
      %2393 = vrot.lane.b32.xlu0 %v1038, 72
      %v2394 = vpop.permute.xlu0 %2393
      %2395 = vrot.lane.b32.xlu0 %v1039, 72
      %v2396 = vpop.permute.xlu0 %2395
      %v2398 = vsel %vm1064, %v2366, 0
      %v2401 = vsel %vm1064, %v2368, 0
      %v2404 = vsel %vm1064, %v2370, 0
      %v2407 = vsel %vm1064, %v2372, 0
      %v2410 = vsel %vm1064, %v2374, 0
      %v2413 = vsel %vm1064, %v2376, 0
      %v2416 = vsel %vm1064, %v2378, 0
      %v2419 = vsel %vm1064, %v2380, 0
      %v2422 = vsel %vm1064, %v2382, 0
      %v2425 = vsel %vm1064, %v2384, 0
      %v2428 = vsel %vm1064, %v2386, 0
      %v2431 = vsel %vm1064, %v2388, 0
      %v2434 = vsel %vm1064, %v2390, 0
      %v2437 = vsel %vm1064, %v2392, 0
      %v2440 = vsel %vm1064, %v2394, 0
      %v2443 = vsel %vm1064, %v2396, 0
      %2445 = vmatprep.subr.bf16.mxu0 0
      %2446 = vmatpush1.bf16.xpose.msra.mxu0 %v2422
      %2447 = vmatprep.subr.bf16.mxu0 0
      %2448 = vmatpush1.bf16.xpose.msra.mxu0 %v2425
      %2449 = vmatprep.subr.bf16.mxu0 0
      %2450 = vmatpush1.bf16.xpose.msra.mxu0 %v2428
      %2451 = vmatprep.subr.bf16.mxu0 0
      %2452 = vmatpush1.bf16.xpose.msra.mxu0 %v2431
      %2453 = vmatprep.subr.bf16.mxu0 0
      %2454 = vmatpush1.bf16.xpose.msra.mxu0 %v2434
      %2455 = vmatprep.subr.bf16.mxu0 0
      %2456 = vmatpush1.bf16.xpose.msra.mxu0 %v2437
      %2457 = vmatprep.subr.bf16.mxu0 0
      %2458 = vmatpush1.bf16.xpose.msra.mxu0 %v2440
      %2459 = vmatprep.subr.bf16.mxu0 0
      %2460 = vmatpush1.bf16.xpose.msra.mxu0 %v2443
      %2461 = vmatprep.subr.bf16.mxu0 0
      %2462 = vmatpush1.bf16.xpose.msra.mxu0 0
      %2463 = vmatprep.subr.bf16.mxu0 0
      %2464 = vmatpush1.bf16.xpose.msra.mxu0 0
      %2465 = vmatprep.subr.bf16.mxu0 0
      %2466 = vmatpush1.bf16.xpose.msra.mxu0 0
      %2467 = vmatprep.subr.bf16.mxu0 0
      %2468 = vmatpush1.bf16.xpose.msra.mxu0 0
      %2469 = vmatprep.subr.bf16.mxu0 0
      %2470 = vmatpush1.bf16.xpose.msra.mxu0 0
      %2471 = vmatprep.subr.bf16.mxu0 0
      %2472 = vmatpush1.bf16.xpose.msra.mxu0 0
      %2473 = vmatprep.subr.bf16.mxu0 0
      %2474 = vmatpush1.bf16.xpose.msra.mxu0 0
      %2475 = vmatprep.subr.bf16.mxu0 0
      %2476 = vmatpush1.bf16.xpose.msra.mxu0 0
      %2477 = vmatprep.mubr.bf16.mxu0 0
      %2478 = vmatmul.mubr.bf16.gmra.mrb[0].mxu0 %v2398
      %v2479 = vpop.f32.mrb[0].mxu0
      %v2480 = vadd.f32 0.0, %v2479
      %v2481 = vpop.f32.mrb[0].mxu0
      %v2482 = vpop.f32.mrb[0].mxu0
      %v2483 = vadd.f32 0.0, %v2482
      %v2484 = vpop.f32.mrb[0].mxu0
      %2485 = vmatprep.mubr.bf16.mxu0 0
      %2486 = vmatmul.mubr.bf16.gmra.mrb[0].mxu0 %v2401
      %v2487 = vpop.f32.mrb[0].mxu0
      %v2488 = vadd.f32 0.0, %v2487
      %v2489 = vpop.f32.mrb[0].mxu0
      %v2490 = vpop.f32.mrb[0].mxu0
      %v2491 = vadd.f32 0.0, %v2490
      %v2492 = vpop.f32.mrb[0].mxu0
      %2493 = vmatprep.mubr.bf16.mxu0 0
      %2494 = vmatmul.mubr.bf16.gmra.mrb[0].mxu0 %v2404
      %v2495 = vpop.f32.mrb[0].mxu0
      %v2496 = vadd.f32 0.0, %v2495
      %v2497 = vpop.f32.mrb[0].mxu0
      %v2498 = vpop.f32.mrb[0].mxu0
      %v2499 = vadd.f32 0.0, %v2498
      %v2500 = vpop.f32.mrb[0].mxu0
      %2501 = vmatprep.mubr.bf16.mxu0 0
      %2502 = vmatmul.mubr.bf16.gmra.mrb[0].mxu0 %v2407
      %v2503 = vpop.f32.mrb[0].mxu0
      %v2504 = vadd.f32 0.0, %v2503
      %v2505 = vpop.f32.mrb[0].mxu0
      %v2506 = vpop.f32.mrb[0].mxu0
      %v2507 = vadd.f32 0.0, %v2506
      %v2508 = vpop.f32.mrb[0].mxu0
      %2509 = vmatprep.mubr.bf16.mxu0 0
      %2510 = vmatmul.mubr.bf16.gmra.mrb[0].mxu0 %v2410
      %v2511 = vpop.f32.mrb[0].mxu0
      %v2512 = vadd.f32 0.0, %v2511
      %v2513 = vpop.f32.mrb[0].mxu0
      %v2514 = vpop.f32.mrb[0].mxu0
      %v2515 = vadd.f32 0.0, %v2514
      %v2516 = vpop.f32.mrb[0].mxu0
      %2517 = vmatprep.mubr.bf16.mxu0 0
      %2518 = vmatmul.mubr.bf16.gmra.mrb[0].mxu0 %v2413
      %v2519 = vpop.f32.mrb[0].mxu0
      %v2520 = vadd.f32 0.0, %v2519
      %v2521 = vpop.f32.mrb[0].mxu0
      %v2522 = vpop.f32.mrb[0].mxu0
      %v2523 = vadd.f32 0.0, %v2522
      %v2524 = vpop.f32.mrb[0].mxu0
      %2525 = vmatprep.mubr.bf16.mxu0 0
      %2526 = vmatmul.mubr.bf16.gmra.mrb[0].mxu0 %v2416
      %v2527 = vpop.f32.mrb[0].mxu0
      %v2528 = vadd.f32 0.0, %v2527
      %v2529 = vpop.f32.mrb[0].mxu0
      %v2530 = vpop.f32.mrb[0].mxu0
      %v2531 = vadd.f32 0.0, %v2530
      %v2532 = vpop.f32.mrb[0].mxu0
      %2533 = vmatprep.mubr.bf16.mxu0 0
      %2534 = vmatmul.mubr.bf16.gmra.mrb[0].mxu0 %v2419
      %v2535 = vpop.f32.mrb[0].mxu0
      %v2536 = vadd.f32 0.0, %v2535
      %v2537 = vpop.f32.mrb[0].mxu0
      %v2538 = vpop.f32.mrb[0].mxu0
      %v2539 = vadd.f32 0.0, %v2538
      %v2540 = vpop.f32.mrb[0].mxu0
      %2541 = vdwg.mxu0
      %v2542 = vmul.f32 %v2480, 0.35355338
      %v2543 = vmul.f32 %v2483, 0.35355338
      %v2544 = vmul.f32 %v2488, 0.35355338
      %v2545 = vmul.f32 %v2491, 0.35355338
      %v2546 = vmul.f32 %v2496, 0.35355338
      %v2547 = vmul.f32 %v2499, 0.35355338
      %v2548 = vmul.f32 %v2504, 0.35355338
      %v2549 = vmul.f32 %v2507, 0.35355338
      %v2550 = vmul.f32 %v2512, 0.35355338
      %v2551 = vmul.f32 %v2515, 0.35355338
      %v2552 = vmul.f32 %v2520, 0.35355338
      %v2553 = vmul.f32 %v2523, 0.35355338
      %v2554 = vmul.f32 %v2528, 0.35355338
      %v2555 = vmul.f32 %v2531, 0.35355338
      %v2556 = vmul.f32 %v2536, 0.35355338
      %v2557 = vmul.f32 %v2539, 0.35355338
      %v2558 = vadd.f32 %v2542, %v1230
      %v2559 = vadd.f32 %v2543, %v1230
      %v2560 = vadd.f32 %v2544, %v1230
      %v2561 = vadd.f32 %v2545, %v1230
      %v2562 = vadd.f32 %v2546, %v1230
      %v2563 = vadd.f32 %v2547, %v1230
      %v2564 = vadd.f32 %v2548, %v1230
      %v2565 = vadd.f32 %v2549, %v1230
      %v2566 = vadd.f32 %v2550, %v1230
      %v2567 = vadd.f32 %v2551, %v1230
      %v2568 = vadd.f32 %v2552, %v1230
      %v2569 = vadd.f32 %v2553, %v1230
      %v2570 = vadd.f32 %v2554, %v1230
      %v2571 = vadd.f32 %v2555, %v1230
      %v2572 = vadd.f32 %v2556, %v1230
      %v2573 = vadd.f32 %v2557, %v1230
      %v2574 = vmul.f32 %v2558, 1.442695
      %v2575 = vpow.pop %v2574
      %v2576 = vmul.f32 %v2559, 1.442695
      %v2577 = vpow.pop %v2576
      %v2578 = vmul.f32 %v2560, 1.442695
      %v2579 = vpow.pop %v2578
      %v2580 = vmul.f32 %v2561, 1.442695
      %v2581 = vpow.pop %v2580
      %v2582 = vmul.f32 %v2562, 1.442695
      %v2583 = vpow.pop %v2582
      %v2584 = vmul.f32 %v2563, 1.442695
      %v2585 = vpow.pop %v2584
      %v2586 = vmul.f32 %v2564, 1.442695
      %v2587 = vpow.pop %v2586
      %v2588 = vmul.f32 %v2565, 1.442695
      %v2589 = vpow.pop %v2588
      %v2590 = vmul.f32 %v2566, 1.442695
      %v2591 = vpow.pop %v2590
      %v2592 = vmul.f32 %v2567, 1.442695
      %v2593 = vpow.pop %v2592
      %v2594 = vmul.f32 %v2568, 1.442695
      %v2595 = vpow.pop %v2594
      %v2596 = vmul.f32 %v2569, 1.442695
      %v2597 = vpow.pop %v2596
      %v2598 = vmul.f32 %v2570, 1.442695
      %v2599 = vpow.pop %v2598
      %v2600 = vmul.f32 %v2571, 1.442695
      %v2601 = vpow.pop %v2600
      %v2602 = vmul.f32 %v2572, 1.442695
      %v2603 = vpow.pop %v2602
      %v2604 = vmul.f32 %v2573, 1.442695
      %v2605 = vpow.pop %v2604
      %2606 = vadd.xlane.f32.xlu0 %v2575
      %v2607 = vpop.xlane.xlu0 %2606
      %2608 = vadd.xlane.f32.xlu0 %v2577
      %v2609 = vpop.xlane.xlu0 %2608
      %2610 = vadd.xlane.f32.xlu0 %v2579
      %v2611 = vpop.xlane.xlu0 %2610
      %2612 = vadd.xlane.f32.xlu0 %v2581
      %v2613 = vpop.xlane.xlu0 %2612
      %2614 = vadd.xlane.f32.xlu0 %v2583
      %v2615 = vpop.xlane.xlu0 %2614
      %2616 = vadd.xlane.f32.xlu0 %v2585
      %v2617 = vpop.xlane.xlu0 %2616
      %2618 = vadd.xlane.f32.xlu0 %v2587
      %v2619 = vpop.xlane.xlu0 %2618
      %2620 = vadd.xlane.f32.xlu0 %v2589
      %v2621 = vpop.xlane.xlu0 %2620
      %2622 = vadd.xlane.f32.xlu0 %v2591
      %v2623 = vpop.xlane.xlu0 %2622
      %2624 = vadd.xlane.f32.xlu0 %v2593
      %v2625 = vpop.xlane.xlu0 %2624
      %2626 = vadd.xlane.f32.xlu0 %v2595
      %v2627 = vpop.xlane.xlu0 %2626
      %2628 = vadd.xlane.f32.xlu0 %v2597
      %v2629 = vpop.xlane.xlu0 %2628
      %2630 = vadd.xlane.f32.xlu0 %v2599
      %v2631 = vpop.xlane.xlu0 %2630
      %2632 = vadd.xlane.f32.xlu0 %v2601
      %v2633 = vpop.xlane.xlu0 %2632
      %2634 = vadd.xlane.f32.xlu0 %v2603
      %v2635 = vpop.xlane.xlu0 %2634
      %2636 = vadd.xlane.f32.xlu0 %v2605
      %v2637 = vpop.xlane.xlu0 %2636
      %v2638 = vrcp.pop %v2607
      %v2639 = vrcp.pop %v2609
      %v2640 = vrcp.pop %v2611
      %v2641 = vrcp.pop %v2613
      %v2642 = vrcp.pop %v2615
      %v2643 = vrcp.pop %v2617
      %v2644 = vrcp.pop %v2619
      %v2645 = vrcp.pop %v2621
      %v2646 = vrcp.pop %v2623
      %v2647 = vrcp.pop %v2625
      %v2648 = vrcp.pop %v2627
      %v2649 = vrcp.pop %v2629
      %v2650 = vrcp.pop %v2631
      %v2651 = vrcp.pop %v2633
      %v2652 = vrcp.pop %v2635
      %v2653 = vrcp.pop %v2637
      %v2654 = vmul.f32 %v2575, %v2638
      %v2655 = vmul.f32 %v2577, %v2639
      %v2656 = vmul.f32 %v2579, %v2640
      %v2657 = vmul.f32 %v2581, %v2641
      %v2658 = vmul.f32 %v2583, %v2642
      %v2659 = vmul.f32 %v2585, %v2643
      %v2660 = vmul.f32 %v2587, %v2644
      %v2661 = vmul.f32 %v2589, %v2645
      %v2662 = vmul.f32 %v2591, %v2646
      %v2663 = vmul.f32 %v2593, %v2647
      %v2664 = vmul.f32 %v2595, %v2648
      %v2665 = vmul.f32 %v2597, %v2649
      %v2666 = vmul.f32 %v2599, %v2650
      %v2667 = vmul.f32 %v2601, %v2651
      %v2668 = vmul.f32 %v2603, %v2652
      %v2669 = vmul.f32 %v2605, %v2653
      %v2670 = vpack.c.bf16 %v2655, %v2654
      %v2671 = vpack.c.bf16 %v2657, %v2656
      %v2672 = vpack.c.bf16 %v2659, %v2658
      %v2673 = vpack.c.bf16 %v2661, %v2660
      %v2674 = vpack.c.bf16 %v2663, %v2662
      %v2675 = vpack.c.bf16 %v2665, %v2664
      %v2676 = vpack.c.bf16 %v2667, %v2666
      %v2677 = vpack.c.bf16 %v2669, %v2668
      %2678 = vrot.lane.b32.xlu0 %v1032, 40
      %v2679 = vpop.permute.xlu0 %2678
      %2680 = vrot.lane.b32.xlu0 %v1033, 40
      %v2681 = vpop.permute.xlu0 %2680
      %2682 = vrot.lane.b32.xlu0 %v1034, 40
      %v2683 = vpop.permute.xlu0 %2682
      %2684 = vrot.lane.b32.xlu0 %v1035, 40
      %v2685 = vpop.permute.xlu0 %2684
      %2686 = vrot.lane.b32.xlu0 %v1036, 40
      %v2687 = vpop.permute.xlu0 %2686
      %2688 = vrot.lane.b32.xlu0 %v1037, 40
      %v2689 = vpop.permute.xlu0 %2688
      %2690 = vrot.lane.b32.xlu0 %v1038, 40
      %v2691 = vpop.permute.xlu0 %2690
      %2692 = vrot.lane.b32.xlu0 %v1039, 40
      %v2693 = vpop.permute.xlu0 %2692
      %2702 = vmatprep.subr.bf16.mxu0 0
      %2703 = vmatpush1.bf16.msra.mxu0 %v2679
      %2704 = vmatprep.subr.bf16.mxu0 0
      %2705 = vmatpush1.bf16.msra.mxu0 %v2681
      %2706 = vmatprep.subr.bf16.mxu0 0
      %2707 = vmatpush1.bf16.msra.mxu0 %v2683
      %2708 = vmatprep.subr.bf16.mxu0 0
      %2709 = vmatpush1.bf16.msra.mxu0 %v2685
      %2710 = vmatprep.subr.bf16.mxu0 0
      %2711 = vmatpush1.bf16.msra.mxu0 %v2687
      %2712 = vmatprep.subr.bf16.mxu0 0
      %2713 = vmatpush1.bf16.msra.mxu0 %v2689
      %2714 = vmatprep.subr.bf16.mxu0 0
      %2715 = vmatpush1.bf16.msra.mxu0 %v2691
      %2716 = vmatprep.subr.bf16.mxu0 0
      %2717 = vmatpush1.bf16.msra.mxu0 %v2693
      %2718 = vmatprep.subr.bf16.mxu0 0
      %2719 = vmatpush1.bf16.msra.mxu0 0
      %2720 = vmatprep.subr.bf16.mxu0 0
      %2721 = vmatpush1.bf16.msra.mxu0 0
      %2722 = vmatprep.subr.bf16.mxu0 0
      %2723 = vmatpush1.bf16.msra.mxu0 0
      %2724 = vmatprep.subr.bf16.mxu0 0
      %2725 = vmatpush1.bf16.msra.mxu0 0
      %2726 = vmatprep.subr.bf16.mxu0 0
      %2727 = vmatpush1.bf16.msra.mxu0 0
      %2728 = vmatprep.subr.bf16.mxu0 0
      %2729 = vmatpush1.bf16.msra.mxu0 0
      %2730 = vmatprep.subr.bf16.mxu0 0
      %2731 = vmatpush1.bf16.msra.mxu0 0
      %2732 = vmatprep.subr.bf16.mxu0 0
      %2733 = vmatpush1.bf16.msra.mxu0 0
      %2734 = vmatprep.mubr.bf16.mxu0 0
      %2735 = vmatmul.mubr.bf16.gmra.mrb[0].mxu0 %v2670
      %v2736 = vpop.f32.mrb[0].mxu0
      %v2737 = vadd.f32 0.0, %v2736
      %v2738 = vpop.f32.mrb[0].mxu0
      %v2739 = vpop.f32.mrb[0].mxu0
      %v2740 = vadd.f32 0.0, %v2739
      %v2741 = vpop.f32.mrb[0].mxu0
      %2742 = vmatprep.mubr.bf16.mxu0 0
      %2743 = vmatmul.mubr.bf16.gmra.mrb[0].mxu0 %v2671
      %v2744 = vpop.f32.mrb[0].mxu0
      %v2745 = vadd.f32 0.0, %v2744
      %v2746 = vpop.f32.mrb[0].mxu0
      %v2747 = vpop.f32.mrb[0].mxu0
      %v2748 = vadd.f32 0.0, %v2747
      %v2749 = vpop.f32.mrb[0].mxu0
      %2750 = vmatprep.mubr.bf16.mxu0 0
      %2751 = vmatmul.mubr.bf16.gmra.mrb[0].mxu0 %v2672
      %v2752 = vpop.f32.mrb[0].mxu0
      %v2753 = vadd.f32 0.0, %v2752
      %v2754 = vpop.f32.mrb[0].mxu0
      %v2755 = vpop.f32.mrb[0].mxu0
      %v2756 = vadd.f32 0.0, %v2755
      %v2757 = vpop.f32.mrb[0].mxu0
      %2758 = vmatprep.mubr.bf16.mxu0 0
      %2759 = vmatmul.mubr.bf16.gmra.mrb[0].mxu0 %v2673
      %v2760 = vpop.f32.mrb[0].mxu0
      %v2761 = vadd.f32 0.0, %v2760
      %v2762 = vpop.f32.mrb[0].mxu0
      %v2763 = vpop.f32.mrb[0].mxu0
      %v2764 = vadd.f32 0.0, %v2763
      %v2765 = vpop.f32.mrb[0].mxu0
      %2766 = vmatprep.mubr.bf16.mxu0 0
      %2767 = vmatmul.mubr.bf16.gmra.mrb[0].mxu0 %v2674
      %v2768 = vpop.f32.mrb[0].mxu0
      %v2769 = vadd.f32 0.0, %v2768
      %v2770 = vpop.f32.mrb[0].mxu0
      %v2771 = vpop.f32.mrb[0].mxu0
      %v2772 = vadd.f32 0.0, %v2771
      %v2773 = vpop.f32.mrb[0].mxu0
      %2774 = vmatprep.mubr.bf16.mxu0 0
      %2775 = vmatmul.mubr.bf16.gmra.mrb[0].mxu0 %v2675
      %v2776 = vpop.f32.mrb[0].mxu0
      %v2777 = vadd.f32 0.0, %v2776
      %v2778 = vpop.f32.mrb[0].mxu0
      %v2779 = vpop.f32.mrb[0].mxu0
      %v2780 = vadd.f32 0.0, %v2779
      %v2781 = vpop.f32.mrb[0].mxu0
      %2782 = vmatprep.mubr.bf16.mxu0 0
      %2783 = vmatmul.mubr.bf16.gmra.mrb[0].mxu0 %v2676
      %v2784 = vpop.f32.mrb[0].mxu0
      %v2785 = vadd.f32 0.0, %v2784
      %v2786 = vpop.f32.mrb[0].mxu0
      %v2787 = vpop.f32.mrb[0].mxu0
      %v2788 = vadd.f32 0.0, %v2787
      %v2789 = vpop.f32.mrb[0].mxu0
      %2790 = vmatprep.mubr.bf16.mxu0 0
      %2791 = vmatmul.mubr.bf16.gmra.mrb[0].mxu0 %v2677
      %v2792 = vpop.f32.mrb[0].mxu0
      %v2793 = vadd.f32 0.0, %v2792
      %v2794 = vpop.f32.mrb[0].mxu0
      %v2795 = vpop.f32.mrb[0].mxu0
      %v2796 = vadd.f32 0.0, %v2795
      %v2797 = vpop.f32.mrb[0].mxu0
      %2798 = vdwg.mxu0
      %v2799 = vpack.c.bf16 %v2740, %v2737
      %v2800 = vpack.c.bf16 %v2748, %v2745
      %v2801 = vpack.c.bf16 %v2756, %v2753
      %v2802 = vpack.c.bf16 %v2764, %v2761
      %v2803 = vpack.c.bf16 %v2772, %v2769
      %v2804 = vpack.c.bf16 %v2780, %v2777
      %v2805 = vpack.c.bf16 %v2788, %v2785
      %v2806 = vpack.c.bf16 %v2796, %v2793
      %2815 = vrot.lane.b32.xlu0 %v1915, 8
      %v2816 = vpop.permute.xlu0 %2815
      %2817 = vrot.lane.b32.xlu0 %v1916, 8
      %v2818 = vpop.permute.xlu0 %2817
      %2819 = vrot.lane.b32.xlu0 %v1917, 8
      %v2820 = vpop.permute.xlu0 %2819
      %2821 = vrot.lane.b32.xlu0 %v1918, 8
      %v2822 = vpop.permute.xlu0 %2821
      %2823 = vrot.lane.b32.xlu0 %v1919, 8
      %v2824 = vpop.permute.xlu0 %2823
      %2825 = vrot.lane.b32.xlu0 %v1920, 8
      %v2826 = vpop.permute.xlu0 %2825
      %2827 = vrot.lane.b32.xlu0 %v1921, 8
      %v2828 = vpop.permute.xlu0 %2827
      %2829 = vrot.lane.b32.xlu0 %v1922, 8
      %v2830 = vpop.permute.xlu0 %2829
      %2839 = vrot.lane.b32.xlu0 %v2357, 16
      %v2840 = vpop.permute.xlu0 %2839
      %2841 = vrot.lane.b32.xlu0 %v2358, 16
      %v2842 = vpop.permute.xlu0 %2841
      %2843 = vrot.lane.b32.xlu0 %v2359, 16
      %v2844 = vpop.permute.xlu0 %2843
      %2845 = vrot.lane.b32.xlu0 %v2360, 16
      %v2846 = vpop.permute.xlu0 %2845
      %2847 = vrot.lane.b32.xlu0 %v2361, 16
      %v2848 = vpop.permute.xlu0 %2847
      %2849 = vrot.lane.b32.xlu0 %v2362, 16
      %v2850 = vpop.permute.xlu0 %2849
      %2851 = vrot.lane.b32.xlu0 %v2363, 16
      %v2852 = vpop.permute.xlu0 %2851
      %2853 = vrot.lane.b32.xlu0 %v2364, 16
      %v2854 = vpop.permute.xlu0 %2853
      %2863 = vrot.lane.b32.xlu0 %v2799, 24
      %v2864 = vpop.permute.xlu0 %2863
      %2865 = vrot.lane.b32.xlu0 %v2800, 24
      %v2866 = vpop.permute.xlu0 %2865
      %2867 = vrot.lane.b32.xlu0 %v2801, 24
      %v2868 = vpop.permute.xlu0 %2867
      %2869 = vrot.lane.b32.xlu0 %v2802, 24
      %v2870 = vpop.permute.xlu0 %2869
      %2871 = vrot.lane.b32.xlu0 %v2803, 24
      %v2872 = vpop.permute.xlu0 %2871
      %2873 = vrot.lane.b32.xlu0 %v2804, 24
      %v2874 = vpop.permute.xlu0 %2873
      %2875 = vrot.lane.b32.xlu0 %v2805, 24
      %v2876 = vpop.permute.xlu0 %2875
      %2877 = vrot.lane.b32.xlu0 %v2806, 24
      %v2878 = vpop.permute.xlu0 %2877
      %v2881 = vsel %vm1064, %v1473, %v2816
      %v2884 = vsel %vm1064, %v1474, %v2818
      %v2887 = vsel %vm1064, %v1475, %v2820
      %v2890 = vsel %vm1064, %v1476, %v2822
      %v2893 = vsel %vm1064, %v1477, %v2824
      %v2896 = vsel %vm1064, %v1478, %v2826
      %v2899 = vsel %vm1064, %v1479, %v2828
      %v2902 = vsel %vm1064, %v1480, %v2830
      %vm2903 = vcmask 130048
      %v2905 = vsel %vm2903, %v2881, %v2840
      %v2907 = vsel %vm2903, %v2884, %v2842
      %v2909 = vsel %vm2903, %v2887, %v2844
      %v2911 = vsel %vm2903, %v2890, %v2846
      %v2913 = vsel %vm2903, %v2893, %v2848
      %v2915 = vsel %vm2903, %v2896, %v2850
      %v2917 = vsel %vm2903, %v2899, %v2852
      %v2919 = vsel %vm2903, %v2902, %v2854
      %vm2920 = vcmask 195584
      %v2922 = vsel %vm2920, %v2905, %v2864
      %v2924 = vsel %vm2920, %v2907, %v2866
      %v2926 = vsel %vm2920, %v2909, %v2868
      %v2928 = vsel %vm2920, %v2911, %v2870
      %v2930 = vsel %vm2920, %v2913, %v2872
      %v2932 = vsel %vm2920, %v2915, %v2874
      %v2934 = vsel %vm2920, %v2917, %v2876
      %v2936 = vsel %vm2920, %v2919, %v2878
      %v2937 = vld [vmem:[%s6] sm:$0xf]
      %v2938 = vld [vmem:[%s6 + $0x4] sm:$0xf]
      %v2939 = vld [vmem:[%s6 + $0x8] sm:$0xf]
      %v2940 = vld [vmem:[%s6 + $0xc] sm:$0xf]
      %v2941 = vld [vmem:[%s7] sm:$0x1]
      %v2942 = vunpack.c.l.bf16 %v2941
      %v2943 = vlaneseq
      %v2944 = vshrl.u32 %v2943, 7
      %v2945 = vsub.s32 0, %v2944
      %v2946 = vrot.slane %v2942, %v2945
      %v2951 = vunpack.c.l.b16 %v2937
      %v2952 = vunpack.c.l.b16 %v2938
      %v2953 = vunpack.c.l.b16 %v2939
      %v2954 = vunpack.c.l.b16 %v2940
      %v2955 = vpack.c.b16 %v2952, %v2951
      %v2956 = vpack.c.b16 %v2954, %v2953
      %v2959 = vsel %vm629, %v2922, 0
      %v2961 = vsel %vm629, %v2924, 0
      %v2963 = vsel %vm629, %v2926, 0
      %v2965 = vsel %vm629, %v2928, 0
      %v2967 = vsel %vm629, %v2930, 0
      %v2969 = vsel %vm629, %v2932, 0
      %v2971 = vsel %vm629, %v2934, 0
      %v2973 = vsel %vm629, %v2936, 0
      %2975 = vmatprep.subr.bf16.mxu0 0
      %2976 = vmatpush1.bf16.msra.mxu0 %v2955
      %2977 = vmatprep.subr.bf16.mxu0 0
      %2978 = vmatpush1.bf16.msra.mxu0 %v2956
      %2979 = vmatprep.subr.bf16.mxu0 0
      %2980 = vmatpush1.bf16.msra.mxu0 0
      %2981 = vmatprep.subr.bf16.mxu0 0
      %2982 = vmatpush1.bf16.msra.mxu0 0
      %2983 = vmatprep.subr.bf16.mxu0 0
      %2984 = vmatpush1.bf16.msra.mxu0 0
      %2985 = vmatprep.subr.bf16.mxu0 0
      %2986 = vmatpush1.bf16.msra.mxu0 0
      %2987 = vmatprep.subr.bf16.mxu0 0
      %2988 = vmatpush1.bf16.msra.mxu0 0
      %2989 = vmatprep.subr.bf16.mxu0 0
      %2990 = vmatpush1.bf16.msra.mxu0 0
      %2991 = vmatprep.subr.bf16.mxu0 0
      %2992 = vmatpush1.bf16.msra.mxu0 0
      %2993 = vmatprep.subr.bf16.mxu0 0
      %2994 = vmatpush1.bf16.msra.mxu0 0
      %2995 = vmatprep.subr.bf16.mxu0 0
      %2996 = vmatpush1.bf16.msra.mxu0 0
      %2997 = vmatprep.subr.bf16.mxu0 0
      %2998 = vmatpush1.bf16.msra.mxu0 0
      %2999 = vmatprep.subr.bf16.mxu0 0
      %3000 = vmatpush1.bf16.msra.mxu0 0
      %3001 = vmatprep.subr.bf16.mxu0 0
      %3002 = vmatpush1.bf16.msra.mxu0 0
      %3003 = vmatprep.subr.bf16.mxu0 0
      %3004 = vmatpush1.bf16.msra.mxu0 0
      %3005 = vmatprep.subr.bf16.mxu0 0
      %3006 = vmatpush1.bf16.msra.mxu0 0
      %3007 = vmatprep.mubr.bf16.mxu0 0
      %3008 = vmatmul.mubr.bf16.gmra.mrb[0].mxu0 %v2959
      %v3009 = vpop.f32.mrb[0].mxu0
      %v3010 = vadd.f32 %v2946, %v3009
      %v3011 = vpop.f32.mrb[0].mxu0
      %v3012 = vpop.f32.mrb[0].mxu0
      %v3013 = vadd.f32 %v2946, %v3012
      %v3014 = vpop.f32.mrb[0].mxu0
      %3015 = vmatprep.mubr.bf16.mxu0 0
      %3016 = vmatmul.mubr.bf16.gmra.mrb[0].mxu0 %v2961
      %v3017 = vpop.f32.mrb[0].mxu0
      %v3018 = vadd.f32 %v2946, %v3017
      %v3019 = vpop.f32.mrb[0].mxu0
      %v3020 = vpop.f32.mrb[0].mxu0
      %v3021 = vadd.f32 %v2946, %v3020
      %v3022 = vpop.f32.mrb[0].mxu0
      %3023 = vmatprep.mubr.bf16.mxu0 0
      %3024 = vmatmul.mubr.bf16.gmra.mrb[0].mxu0 %v2963
      %v3025 = vpop.f32.mrb[0].mxu0
      %v3026 = vadd.f32 %v2946, %v3025
      %v3027 = vpop.f32.mrb[0].mxu0
      %v3028 = vpop.f32.mrb[0].mxu0
      %v3029 = vadd.f32 %v2946, %v3028
      %v3030 = vpop.f32.mrb[0].mxu0
      %3031 = vmatprep.mubr.bf16.mxu0 0
      %3032 = vmatmul.mubr.bf16.gmra.mrb[0].mxu0 %v2965
      %v3033 = vpop.f32.mrb[0].mxu0
      %v3034 = vadd.f32 %v2946, %v3033
      %v3035 = vpop.f32.mrb[0].mxu0
      %v3036 = vpop.f32.mrb[0].mxu0
      %v3037 = vadd.f32 %v2946, %v3036
      %v3038 = vpop.f32.mrb[0].mxu0
      %3039 = vmatprep.mubr.bf16.mxu0 0
      %3040 = vmatmul.mubr.bf16.gmra.mrb[0].mxu0 %v2967
      %v3041 = vpop.f32.mrb[0].mxu0
      %v3042 = vadd.f32 %v2946, %v3041
      %v3043 = vpop.f32.mrb[0].mxu0
      %v3044 = vpop.f32.mrb[0].mxu0
      %v3045 = vadd.f32 %v2946, %v3044
      %v3046 = vpop.f32.mrb[0].mxu0
      %3047 = vmatprep.mubr.bf16.mxu0 0
      %3048 = vmatmul.mubr.bf16.gmra.mrb[0].mxu0 %v2969
      %v3049 = vpop.f32.mrb[0].mxu0
      %v3050 = vadd.f32 %v2946, %v3049
      %v3051 = vpop.f32.mrb[0].mxu0
      %v3052 = vpop.f32.mrb[0].mxu0
      %v3053 = vadd.f32 %v2946, %v3052
      %v3054 = vpop.f32.mrb[0].mxu0
      %3055 = vmatprep.mubr.bf16.mxu0 0
      %3056 = vmatmul.mubr.bf16.gmra.mrb[0].mxu0 %v2971
      %v3057 = vpop.f32.mrb[0].mxu0
      %v3058 = vadd.f32 %v2946, %v3057
      %v3059 = vpop.f32.mrb[0].mxu0
      %v3060 = vpop.f32.mrb[0].mxu0
      %v3061 = vadd.f32 %v2946, %v3060
      %v3062 = vpop.f32.mrb[0].mxu0
      %3063 = vmatprep.mubr.bf16.mxu0 0
      %3064 = vmatmul.mubr.bf16.gmra.mrb[0].mxu0 %v2973
      %v3065 = vpop.f32.mrb[0].mxu0
      %v3066 = vadd.f32 %v2946, %v3065
      %v3067 = vpop.f32.mrb[0].mxu0
      %v3068 = vpop.f32.mrb[0].mxu0
      %v3069 = vadd.f32 %v2946, %v3068
      %v3070 = vpop.f32.mrb[0].mxu0
      %3071 = vdwg.mxu0
      %v3072 = vunpack.c.l.bf16 %v881
      %v3073 = vunpack.c.h.bf16 %v881
      %v3074 = vunpack.c.l.bf16 %v882
      %v3075 = vunpack.c.h.bf16 %v882
      %v3076 = vunpack.c.l.bf16 %v883
      %v3077 = vunpack.c.h.bf16 %v883
      %v3078 = vunpack.c.l.bf16 %v884
      %v3079 = vunpack.c.h.bf16 %v884
      %v3080 = vunpack.c.l.bf16 %v885
      %v3081 = vunpack.c.h.bf16 %v885
      %v3082 = vunpack.c.l.bf16 %v886
      %v3083 = vunpack.c.h.bf16 %v886
      %v3084 = vunpack.c.l.bf16 %v887
      %v3085 = vunpack.c.h.bf16 %v887
      %v3086 = vunpack.c.l.bf16 %v888
      %v3087 = vunpack.c.h.bf16 %v888
      %v3088 = vadd.f32 %v3010, %v3072
      %v3089 = vadd.f32 %v3013, %v3073
      %v3090 = vadd.f32 %v3018, %v3074
      %v3091 = vadd.f32 %v3021, %v3075
      %v3092 = vadd.f32 %v3026, %v3076
      %v3093 = vadd.f32 %v3029, %v3077
      %v3094 = vadd.f32 %v3034, %v3078
      %v3095 = vadd.f32 %v3037, %v3079
      %v3096 = vadd.f32 %v3042, %v3080
      %v3097 = vadd.f32 %v3045, %v3081
      %v3098 = vadd.f32 %v3050, %v3082
      %v3099 = vadd.f32 %v3053, %v3083
      %v3100 = vadd.f32 %v3058, %v3084
      %v3101 = vadd.f32 %v3061, %v3085
      %v3102 = vadd.f32 %v3066, %v3086
      %v3103 = vadd.f32 %v3069, %v3087
      %v3104 = vld [vmem:[%s8] sm:$0x1]
      %v3105 = vld [vmem:[%s9] sm:$0x1]
      %v3106 = vsel %vm629, %v3088, 0.0
      %3107 = vadd.xlane.f32.xlu0 %v3106
      %v3108 = vpop.xlane.xlu0 %3107
      %v3109 = vsel %vm629, %v3089, 0.0
      %3110 = vadd.xlane.f32.xlu0 %v3109
      %v3111 = vpop.xlane.xlu0 %3110
      %v3112 = vsel %vm629, %v3090, 0.0
      %3113 = vadd.xlane.f32.xlu0 %v3112
      %v3114 = vpop.xlane.xlu0 %3113
      %v3115 = vsel %vm629, %v3091, 0.0
      %3116 = vadd.xlane.f32.xlu0 %v3115
      %v3117 = vpop.xlane.xlu0 %3116
      %v3118 = vsel %vm629, %v3092, 0.0
      %3119 = vadd.xlane.f32.xlu0 %v3118
      %v3120 = vpop.xlane.xlu0 %3119
      %v3121 = vsel %vm629, %v3093, 0.0
      %3122 = vadd.xlane.f32.xlu0 %v3121
      %v3123 = vpop.xlane.xlu0 %3122
      %v3124 = vsel %vm629, %v3094, 0.0
      %3125 = vadd.xlane.f32.xlu0 %v3124
      %v3126 = vpop.xlane.xlu0 %3125
      %v3127 = vsel %vm629, %v3095, 0.0
      %3128 = vadd.xlane.f32.xlu0 %v3127
      %v3129 = vpop.xlane.xlu0 %3128
      %v3130 = vsel %vm629, %v3096, 0.0
      %3131 = vadd.xlane.f32.xlu0 %v3130
      %v3132 = vpop.xlane.xlu0 %3131
      %v3133 = vsel %vm629, %v3097, 0.0
      %3134 = vadd.xlane.f32.xlu0 %v3133
      %v3135 = vpop.xlane.xlu0 %3134
      %v3136 = vsel %vm629, %v3098, 0.0
      %3137 = vadd.xlane.f32.xlu0 %v3136
      %v3138 = vpop.xlane.xlu0 %3137
      %v3139 = vsel %vm629, %v3099, 0.0
      %3140 = vadd.xlane.f32.xlu0 %v3139
      %v3141 = vpop.xlane.xlu0 %3140
      %v3142 = vsel %vm629, %v3100, 0.0
      %3143 = vadd.xlane.f32.xlu0 %v3142
      %v3144 = vpop.xlane.xlu0 %3143
      %v3145 = vsel %vm629, %v3101, 0.0
      %3146 = vadd.xlane.f32.xlu0 %v3145
      %v3147 = vpop.xlane.xlu0 %3146
      %v3148 = vsel %vm629, %v3102, 0.0
      %3149 = vadd.xlane.f32.xlu0 %v3148
      %v3150 = vpop.xlane.xlu0 %3149
      %v3151 = vsel %vm629, %v3103, 0.0
      %3152 = vadd.xlane.f32.xlu0 %v3151
      %v3153 = vpop.xlane.xlu0 %3152
      %v3154 = vmul.f32 %v3108, %v678
      %v3155 = vmul.f32 %v3111, %v678
      %v3156 = vmul.f32 %v3114, %v678
      %v3157 = vmul.f32 %v3117, %v678
      %v3158 = vmul.f32 %v3120, %v678
      %v3159 = vmul.f32 %v3123, %v678
      %v3160 = vmul.f32 %v3126, %v678
      %v3161 = vmul.f32 %v3129, %v678
      %v3162 = vmul.f32 %v3132, %v678
      %v3163 = vmul.f32 %v3135, %v678
      %v3164 = vmul.f32 %v3138, %v678
      %v3165 = vmul.f32 %v3141, %v678
      %v3166 = vmul.f32 %v3144, %v678
      %v3167 = vmul.f32 %v3147, %v678
      %v3168 = vmul.f32 %v3150, %v678
      %v3169 = vmul.f32 %v3153, %v678
      %v3170 = vsub.f32 %v3088, %v3154
      %v3171 = vsub.f32 %v3089, %v3155
      %v3172 = vsub.f32 %v3090, %v3156
      %v3173 = vsub.f32 %v3091, %v3157
      %v3174 = vsub.f32 %v3092, %v3158
      %v3175 = vsub.f32 %v3093, %v3159
      %v3176 = vsub.f32 %v3094, %v3160
      %v3177 = vsub.f32 %v3095, %v3161
      %v3178 = vsub.f32 %v3096, %v3162
      %v3179 = vsub.f32 %v3097, %v3163
      %v3180 = vsub.f32 %v3098, %v3164
      %v3181 = vsub.f32 %v3099, %v3165
      %v3182 = vsub.f32 %v3100, %v3166
      %v3183 = vsub.f32 %v3101, %v3167
      %v3184 = vsub.f32 %v3102, %v3168
      %v3185 = vsub.f32 %v3103, %v3169
      %v3186 = vmul.f32 %v3170, %v3170
      %v3187 = vmul.f32 %v3171, %v3171
      %v3188 = vmul.f32 %v3172, %v3172
      %v3189 = vmul.f32 %v3173, %v3173
      %v3190 = vmul.f32 %v3174, %v3174
      %v3191 = vmul.f32 %v3175, %v3175
      %v3192 = vmul.f32 %v3176, %v3176
      %v3193 = vmul.f32 %v3177, %v3177
      %v3194 = vmul.f32 %v3178, %v3178
      %v3195 = vmul.f32 %v3179, %v3179
      %v3196 = vmul.f32 %v3180, %v3180
      %v3197 = vmul.f32 %v3181, %v3181
      %v3198 = vmul.f32 %v3182, %v3182
      %v3199 = vmul.f32 %v3183, %v3183
      %v3200 = vmul.f32 %v3184, %v3184
      %v3201 = vmul.f32 %v3185, %v3185
      %v3202 = vsel %vm629, %v3186, 0.0
      %3203 = vadd.xlane.f32.xlu0 %v3202
      %v3204 = vpop.xlane.xlu0 %3203
      %v3205 = vsel %vm629, %v3187, 0.0
      %3206 = vadd.xlane.f32.xlu0 %v3205
      %v3207 = vpop.xlane.xlu0 %3206
      %v3208 = vsel %vm629, %v3188, 0.0
      %3209 = vadd.xlane.f32.xlu0 %v3208
      %v3210 = vpop.xlane.xlu0 %3209
      %v3211 = vsel %vm629, %v3189, 0.0
      %3212 = vadd.xlane.f32.xlu0 %v3211
      %v3213 = vpop.xlane.xlu0 %3212
      %v3214 = vsel %vm629, %v3190, 0.0
      %3215 = vadd.xlane.f32.xlu0 %v3214
      %v3216 = vpop.xlane.xlu0 %3215
      %v3217 = vsel %vm629, %v3191, 0.0
      %3218 = vadd.xlane.f32.xlu0 %v3217
      %v3219 = vpop.xlane.xlu0 %3218
      %v3220 = vsel %vm629, %v3192, 0.0
      %3221 = vadd.xlane.f32.xlu0 %v3220
      %v3222 = vpop.xlane.xlu0 %3221
      %v3223 = vsel %vm629, %v3193, 0.0
      %3224 = vadd.xlane.f32.xlu0 %v3223
      %v3225 = vpop.xlane.xlu0 %3224
      %v3226 = vsel %vm629, %v3194, 0.0
      %3227 = vadd.xlane.f32.xlu0 %v3226
      %v3228 = vpop.xlane.xlu0 %3227
      %v3229 = vsel %vm629, %v3195, 0.0
      %3230 = vadd.xlane.f32.xlu0 %v3229
      %v3231 = vpop.xlane.xlu0 %3230
      %v3232 = vsel %vm629, %v3196, 0.0
      %3233 = vadd.xlane.f32.xlu0 %v3232
      %v3234 = vpop.xlane.xlu0 %3233
      %v3235 = vsel %vm629, %v3197, 0.0
      %3236 = vadd.xlane.f32.xlu0 %v3235
      %v3237 = vpop.xlane.xlu0 %3236
      %v3238 = vsel %vm629, %v3198, 0.0
      %3239 = vadd.xlane.f32.xlu0 %v3238
      %v3240 = vpop.xlane.xlu0 %3239
      %v3241 = vsel %vm629, %v3199, 0.0
      %3242 = vadd.xlane.f32.xlu0 %v3241
      %v3243 = vpop.xlane.xlu0 %3242
      %v3244 = vsel %vm629, %v3200, 0.0
      %3245 = vadd.xlane.f32.xlu0 %v3244
      %v3246 = vpop.xlane.xlu0 %3245
      %v3247 = vsel %vm629, %v3201, 0.0
      %3248 = vadd.xlane.f32.xlu0 %v3247
      %v3249 = vpop.xlane.xlu0 %3248
      %v3250 = vmul.f32 %v3204, %v678
      %v3251 = vmul.f32 %v3207, %v678
      %v3252 = vmul.f32 %v3210, %v678
      %v3253 = vmul.f32 %v3213, %v678
      %v3254 = vmul.f32 %v3216, %v678
      %v3255 = vmul.f32 %v3219, %v678
      %v3256 = vmul.f32 %v3222, %v678
      %v3257 = vmul.f32 %v3225, %v678
      %v3258 = vmul.f32 %v3228, %v678
      %v3259 = vmul.f32 %v3231, %v678
      %v3260 = vmul.f32 %v3234, %v678
      %v3261 = vmul.f32 %v3237, %v678
      %v3262 = vmul.f32 %v3240, %v678
      %v3263 = vmul.f32 %v3243, %v678
      %v3264 = vmul.f32 %v3246, %v678
      %v3265 = vmul.f32 %v3249, %v678
      %v3266 = vadd.f32 %v3250, 1e-12
      %v3267 = vadd.f32 %v3251, 1e-12
      %v3268 = vadd.f32 %v3252, 1e-12
      %v3269 = vadd.f32 %v3253, 1e-12
      %v3270 = vadd.f32 %v3254, 1e-12
      %v3271 = vadd.f32 %v3255, 1e-12
      %v3272 = vadd.f32 %v3256, 1e-12
      %v3273 = vadd.f32 %v3257, 1e-12
      %v3274 = vadd.f32 %v3258, 1e-12
      %v3275 = vadd.f32 %v3259, 1e-12
      %v3276 = vadd.f32 %v3260, 1e-12
      %v3277 = vadd.f32 %v3261, 1e-12
      %v3278 = vadd.f32 %v3262, 1e-12
      %v3279 = vadd.f32 %v3263, 1e-12
      %v3280 = vadd.f32 %v3264, 1e-12
      %v3281 = vadd.f32 %v3265, 1e-12
      %v3282 = vrsqrt.pop %v3266
      %v3283 = vrsqrt.pop %v3267
      %v3284 = vrsqrt.pop %v3268
      %v3285 = vrsqrt.pop %v3269
      %v3286 = vrsqrt.pop %v3270
      %v3287 = vrsqrt.pop %v3271
      %v3288 = vrsqrt.pop %v3272
      %v3289 = vrsqrt.pop %v3273
      %v3290 = vrsqrt.pop %v3274
      %v3291 = vrsqrt.pop %v3275
      %v3292 = vrsqrt.pop %v3276
      %v3293 = vrsqrt.pop %v3277
      %v3294 = vrsqrt.pop %v3278
      %v3295 = vrsqrt.pop %v3279
      %v3296 = vrsqrt.pop %v3280
      %v3297 = vrsqrt.pop %v3281
      %v3298 = vmul.f32 %v3170, %v3282
      %v3299 = vmul.f32 %v3171, %v3283
      %v3300 = vmul.f32 %v3172, %v3284
      %v3301 = vmul.f32 %v3173, %v3285
      %v3302 = vmul.f32 %v3174, %v3286
      %v3303 = vmul.f32 %v3175, %v3287
      %v3304 = vmul.f32 %v3176, %v3288
      %v3305 = vmul.f32 %v3177, %v3289
      %v3306 = vmul.f32 %v3178, %v3290
      %v3307 = vmul.f32 %v3179, %v3291
      %v3308 = vmul.f32 %v3180, %v3292
      %v3309 = vmul.f32 %v3181, %v3293
      %v3310 = vmul.f32 %v3182, %v3294
      %v3311 = vmul.f32 %v3183, %v3295
      %v3312 = vmul.f32 %v3184, %v3296
      %v3313 = vmul.f32 %v3185, %v3297
      %v3314 = vunpack.c.l.bf16 %v3104
      %v3315 = vlaneseq
      %v3316 = vshrl.u32 %v3315, 7
      %v3317 = vsub.s32 0, %v3316
      %v3318 = vrot.slane %v3314, %v3317
      %v3319 = vmul.f32 %v3298, %v3318
      %v3320 = vmul.f32 %v3299, %v3318
      %v3321 = vmul.f32 %v3300, %v3318
      %v3322 = vmul.f32 %v3301, %v3318
      %v3323 = vmul.f32 %v3302, %v3318
      %v3324 = vmul.f32 %v3303, %v3318
      %v3325 = vmul.f32 %v3304, %v3318
      %v3326 = vmul.f32 %v3305, %v3318
      %v3327 = vmul.f32 %v3306, %v3318
      %v3328 = vmul.f32 %v3307, %v3318
      %v3329 = vmul.f32 %v3308, %v3318
      %v3330 = vmul.f32 %v3309, %v3318
      %v3331 = vmul.f32 %v3310, %v3318
      %v3332 = vmul.f32 %v3311, %v3318
      %v3333 = vmul.f32 %v3312, %v3318
      %v3334 = vmul.f32 %v3313, %v3318
      %v3335 = vunpack.c.l.bf16 %v3105
      %v3336 = vlaneseq
      %v3337 = vshrl.u32 %v3336, 7
      %v3338 = vsub.s32 0, %v3337
      %v3339 = vrot.slane %v3335, %v3338
      %v3340 = vadd.f32 %v3319, %v3339
      %v3341 = vadd.f32 %v3320, %v3339
      %v3342 = vadd.f32 %v3321, %v3339
      %v3343 = vadd.f32 %v3322, %v3339
      %v3344 = vadd.f32 %v3323, %v3339
      %v3345 = vadd.f32 %v3324, %v3339
      %v3346 = vadd.f32 %v3325, %v3339
      %v3347 = vadd.f32 %v3326, %v3339
      %v3348 = vadd.f32 %v3327, %v3339
      %v3349 = vadd.f32 %v3328, %v3339
      %v3350 = vadd.f32 %v3329, %v3339
      %v3351 = vadd.f32 %v3330, %v3339
      %v3352 = vadd.f32 %v3331, %v3339
      %v3353 = vadd.f32 %v3332, %v3339
      %v3354 = vadd.f32 %v3333, %v3339
      %v3355 = vadd.f32 %v3334, %v3339
      %v3356 = vpack.c.bf16 %v3341, %v3340
      %v3357 = vpack.c.bf16 %v3343, %v3342
      %v3358 = vpack.c.bf16 %v3345, %v3344
      %v3359 = vpack.c.bf16 %v3347, %v3346
      %v3360 = vpack.c.bf16 %v3349, %v3348
      %v3361 = vpack.c.bf16 %v3351, %v3350
      %v3362 = vpack.c.bf16 %v3353, %v3352
      %v3363 = vpack.c.bf16 %v3355, %v3354
      %v3364 = vld [vmem:[%s10] sm:$0xf]
      %v3365 = vld [vmem:[%s10 + $0x4] sm:$0xf]
      %v3366 = vld [vmem:[%s10 + $0x8] sm:$0xf]
      %v3367 = vld [vmem:[%s10 + $0xc] sm:$0xf]
      %v3368 = vld [vmem:[%s11] sm:$0x1]
      %v3369 = vunpack.c.l.bf16 %v3368
      %v3370 = vlaneseq
      %v3371 = vshrl.u32 %v3370, 7
      %v3372 = vsub.s32 0, %v3371
      %v3373 = vrot.slane %v3369, %v3372
      %v3378 = vunpack.c.l.b16 %v3364
      %v3379 = vunpack.c.l.b16 %v3365
      %v3380 = vunpack.c.l.b16 %v3366
      %v3381 = vunpack.c.l.b16 %v3367
      %v3382 = vpack.c.b16 %v3379, %v3378
      %v3383 = vpack.c.b16 %v3381, %v3380
      %v3387 = vsel %vm629, %v3356, 0
      %v3390 = vsel %vm629, %v3357, 0
      %v3393 = vsel %vm629, %v3358, 0
      %v3396 = vsel %vm629, %v3359, 0
      %v3399 = vsel %vm629, %v3360, 0
      %v3402 = vsel %vm629, %v3361, 0
      %v3405 = vsel %vm629, %v3362, 0
      %v3408 = vsel %vm629, %v3363, 0
      %3410 = vmatprep.subr.bf16.mxu0 0
      %3411 = vmatpush1.bf16.msra.mxu0 %v3382
      %3412 = vmatprep.subr.bf16.mxu0 0
      %3413 = vmatpush1.bf16.msra.mxu0 %v3383
      %3414 = vmatprep.subr.bf16.mxu0 0
      %3415 = vmatpush1.bf16.msra.mxu0 0
      %3416 = vmatprep.subr.bf16.mxu0 0
      %3417 = vmatpush1.bf16.msra.mxu0 0
      %3418 = vmatprep.subr.bf16.mxu0 0
      %3419 = vmatpush1.bf16.msra.mxu0 0
      %3420 = vmatprep.subr.bf16.mxu0 0
      %3421 = vmatpush1.bf16.msra.mxu0 0
      %3422 = vmatprep.subr.bf16.mxu0 0
      %3423 = vmatpush1.bf16.msra.mxu0 0
      %3424 = vmatprep.subr.bf16.mxu0 0
      %3425 = vmatpush1.bf16.msra.mxu0 0
      %3426 = vmatprep.subr.bf16.mxu0 0
      %3427 = vmatpush1.bf16.msra.mxu0 0
      %3428 = vmatprep.subr.bf16.mxu0 0
      %3429 = vmatpush1.bf16.msra.mxu0 0
      %3430 = vmatprep.subr.bf16.mxu0 0
      %3431 = vmatpush1.bf16.msra.mxu0 0
      %3432 = vmatprep.subr.bf16.mxu0 0
      %3433 = vmatpush1.bf16.msra.mxu0 0
      %3434 = vmatprep.subr.bf16.mxu0 0
      %3435 = vmatpush1.bf16.msra.mxu0 0
      %3436 = vmatprep.subr.bf16.mxu0 0
      %3437 = vmatpush1.bf16.msra.mxu0 0
      %3438 = vmatprep.subr.bf16.mxu0 0
      %3439 = vmatpush1.bf16.msra.mxu0 0
      %3440 = vmatprep.subr.bf16.mxu0 0
      %3441 = vmatpush1.bf16.msra.mxu0 0
      %3442 = vmatprep.mubr.bf16.mxu0 0
      %3443 = vmatmul.mubr.bf16.gmra.mrb[0].mxu0 %v3387
      %v3444 = vpop.f32.mrb[0].mxu0
      %v3445 = vadd.f32 %v3373, %v3444
      %v3446 = vpop.f32.mrb[0].mxu0
      %v3447 = vpop.f32.mrb[0].mxu0
      %v3448 = vadd.f32 %v3373, %v3447
      %v3449 = vpop.f32.mrb[0].mxu0
      %3450 = vmatprep.mubr.bf16.mxu0 0
      %3451 = vmatmul.mubr.bf16.gmra.mrb[0].mxu0 %v3390
      %v3452 = vpop.f32.mrb[0].mxu0
      %v3453 = vadd.f32 %v3373, %v3452
      %v3454 = vpop.f32.mrb[0].mxu0
      %v3455 = vpop.f32.mrb[0].mxu0
      %v3456 = vadd.f32 %v3373, %v3455
      %v3457 = vpop.f32.mrb[0].mxu0
      %3458 = vmatprep.mubr.bf16.mxu0 0
      %3459 = vmatmul.mubr.bf16.gmra.mrb[0].mxu0 %v3393
      %v3460 = vpop.f32.mrb[0].mxu0
      %v3461 = vadd.f32 %v3373, %v3460
      %v3462 = vpop.f32.mrb[0].mxu0
      %v3463 = vpop.f32.mrb[0].mxu0
      %v3464 = vadd.f32 %v3373, %v3463
      %v3465 = vpop.f32.mrb[0].mxu0
      %3466 = vmatprep.mubr.bf16.mxu0 0
      %3467 = vmatmul.mubr.bf16.gmra.mrb[0].mxu0 %v3396
      %v3468 = vpop.f32.mrb[0].mxu0
      %v3469 = vadd.f32 %v3373, %v3468
      %v3470 = vpop.f32.mrb[0].mxu0
      %v3471 = vpop.f32.mrb[0].mxu0
      %v3472 = vadd.f32 %v3373, %v3471
      %v3473 = vpop.f32.mrb[0].mxu0
      %3474 = vmatprep.mubr.bf16.mxu0 0
      %3475 = vmatmul.mubr.bf16.gmra.mrb[0].mxu0 %v3399
      %v3476 = vpop.f32.mrb[0].mxu0
      %v3477 = vadd.f32 %v3373, %v3476
      %v3478 = vpop.f32.mrb[0].mxu0
      %v3479 = vpop.f32.mrb[0].mxu0
      %v3480 = vadd.f32 %v3373, %v3479
      %v3481 = vpop.f32.mrb[0].mxu0
      %3482 = vmatprep.mubr.bf16.mxu0 0
      %3483 = vmatmul.mubr.bf16.gmra.mrb[0].mxu0 %v3402
      %v3484 = vpop.f32.mrb[0].mxu0
      %v3485 = vadd.f32 %v3373, %v3484
      %v3486 = vpop.f32.mrb[0].mxu0
      %v3487 = vpop.f32.mrb[0].mxu0
      %v3488 = vadd.f32 %v3373, %v3487
      %v3489 = vpop.f32.mrb[0].mxu0
      %3490 = vmatprep.mubr.bf16.mxu0 0
      %3491 = vmatmul.mubr.bf16.gmra.mrb[0].mxu0 %v3405
      %v3492 = vpop.f32.mrb[0].mxu0
      %v3493 = vadd.f32 %v3373, %v3492
      %v3494 = vpop.f32.mrb[0].mxu0
      %v3495 = vpop.f32.mrb[0].mxu0
      %v3496 = vadd.f32 %v3373, %v3495
      %v3497 = vpop.f32.mrb[0].mxu0
      %3498 = vmatprep.mubr.bf16.mxu0 0
      %3499 = vmatmul.mubr.bf16.gmra.mrb[0].mxu0 %v3408
      %v3500 = vpop.f32.mrb[0].mxu0
      %v3501 = vadd.f32 %v3373, %v3500
      %v3502 = vpop.f32.mrb[0].mxu0
      %v3503 = vpop.f32.mrb[0].mxu0
      %v3504 = vadd.f32 %v3373, %v3503
      %v3505 = vpop.f32.mrb[0].mxu0
      %3506 = vdwg.mxu0
      %v3507 = vmul.f32 %v3445, %v3445
      %v3508 = vmul.f32 %v3448, %v3448
      %v3509 = vmul.f32 %v3453, %v3453
      %v3510 = vmul.f32 %v3456, %v3456
      %v3511 = vmul.f32 %v3461, %v3461
      %v3512 = vmul.f32 %v3464, %v3464
      %v3513 = vmul.f32 %v3469, %v3469
      %v3514 = vmul.f32 %v3472, %v3472
      %v3515 = vmul.f32 %v3477, %v3477
      %v3516 = vmul.f32 %v3480, %v3480
      %v3517 = vmul.f32 %v3485, %v3485
      %v3518 = vmul.f32 %v3488, %v3488
      %v3519 = vmul.f32 %v3493, %v3493
      %v3520 = vmul.f32 %v3496, %v3496
      %v3521 = vmul.f32 %v3501, %v3501
      %v3522 = vmul.f32 %v3504, %v3504
      %v3523 = vmul.f32 %v3445, %v3507
      %v3524 = vmul.f32 %v3448, %v3508
      %v3525 = vmul.f32 %v3453, %v3509
      %v3526 = vmul.f32 %v3456, %v3510
      %v3527 = vmul.f32 %v3461, %v3511
      %v3528 = vmul.f32 %v3464, %v3512
      %v3529 = vmul.f32 %v3469, %v3513
      %v3530 = vmul.f32 %v3472, %v3514
      %v3531 = vmul.f32 %v3477, %v3515
      %v3532 = vmul.f32 %v3480, %v3516
      %v3533 = vmul.f32 %v3485, %v3517
      %v3534 = vmul.f32 %v3488, %v3518
      %v3535 = vmul.f32 %v3493, %v3519
      %v3536 = vmul.f32 %v3496, %v3520
      %v3537 = vmul.f32 %v3501, %v3521
      %v3538 = vmul.f32 %v3504, %v3522
      %v3539 = vmul.f32 %v3523, 0.044715
      %v3540 = vmul.f32 %v3524, 0.044715
      %v3541 = vmul.f32 %v3525, 0.044715
      %v3542 = vmul.f32 %v3526, 0.044715
      %v3543 = vmul.f32 %v3527, 0.044715
      %v3544 = vmul.f32 %v3528, 0.044715
      %v3545 = vmul.f32 %v3529, 0.044715
      %v3546 = vmul.f32 %v3530, 0.044715
      %v3547 = vmul.f32 %v3531, 0.044715
      %v3548 = vmul.f32 %v3532, 0.044715
      %v3549 = vmul.f32 %v3533, 0.044715
      %v3550 = vmul.f32 %v3534, 0.044715
      %v3551 = vmul.f32 %v3535, 0.044715
      %v3552 = vmul.f32 %v3536, 0.044715
      %v3553 = vmul.f32 %v3537, 0.044715
      %v3554 = vmul.f32 %v3538, 0.044715
      %v3555 = vadd.f32 %v3445, %v3539
      %v3556 = vadd.f32 %v3448, %v3540
      %v3557 = vadd.f32 %v3453, %v3541
      %v3558 = vadd.f32 %v3456, %v3542
      %v3559 = vadd.f32 %v3461, %v3543
      %v3560 = vadd.f32 %v3464, %v3544
      %v3561 = vadd.f32 %v3469, %v3545
      %v3562 = vadd.f32 %v3472, %v3546
      %v3563 = vadd.f32 %v3477, %v3547
      %v3564 = vadd.f32 %v3480, %v3548
      %v3565 = vadd.f32 %v3485, %v3549
      %v3566 = vadd.f32 %v3488, %v3550
      %v3567 = vadd.f32 %v3493, %v3551
      %v3568 = vadd.f32 %v3496, %v3552
      %v3569 = vadd.f32 %v3501, %v3553
      %v3570 = vadd.f32 %v3504, %v3554
      %v3571 = vmul.f32 %v3555, 0.7978846
      %v3572 = vmul.f32 %v3556, 0.7978846
      %v3573 = vmul.f32 %v3557, 0.7978846
      %v3574 = vmul.f32 %v3558, 0.7978846
      %v3575 = vmul.f32 %v3559, 0.7978846
      %v3576 = vmul.f32 %v3560, 0.7978846
      %v3577 = vmul.f32 %v3561, 0.7978846
      %v3578 = vmul.f32 %v3562, 0.7978846
      %v3579 = vmul.f32 %v3563, 0.7978846
      %v3580 = vmul.f32 %v3564, 0.7978846
      %v3581 = vmul.f32 %v3565, 0.7978846
      %v3582 = vmul.f32 %v3566, 0.7978846
      %v3583 = vmul.f32 %v3567, 0.7978846
      %v3584 = vmul.f32 %v3568, 0.7978846
      %v3585 = vmul.f32 %v3569, 0.7978846
      %v3586 = vmul.f32 %v3570, 0.7978846
      %v3587 = vtanh.pop %v3571
      %v3588 = vtanh.pop %v3572
      %v3589 = vtanh.pop %v3573
      %v3590 = vtanh.pop %v3574
      %v3591 = vtanh.pop %v3575
      %v3592 = vtanh.pop %v3576
      %v3593 = vtanh.pop %v3577
      %v3594 = vtanh.pop %v3578
      %v3595 = vtanh.pop %v3579
      %v3596 = vtanh.pop %v3580
      %v3597 = vtanh.pop %v3581
      %v3598 = vtanh.pop %v3582
      %v3599 = vtanh.pop %v3583
      %v3600 = vtanh.pop %v3584
      %v3601 = vtanh.pop %v3585
      %v3602 = vtanh.pop %v3586
      %v3603 = vadd.f32 %v3587, 1.0
      %v3604 = vadd.f32 %v3588, 1.0
      %v3605 = vadd.f32 %v3589, 1.0
      %v3606 = vadd.f32 %v3590, 1.0
      %v3607 = vadd.f32 %v3591, 1.0
      %v3608 = vadd.f32 %v3592, 1.0
      %v3609 = vadd.f32 %v3593, 1.0
      %v3610 = vadd.f32 %v3594, 1.0
      %v3611 = vadd.f32 %v3595, 1.0
      %v3612 = vadd.f32 %v3596, 1.0
      %v3613 = vadd.f32 %v3597, 1.0
      %v3614 = vadd.f32 %v3598, 1.0
      %v3615 = vadd.f32 %v3599, 1.0
      %v3616 = vadd.f32 %v3600, 1.0
      %v3617 = vadd.f32 %v3601, 1.0
      %v3618 = vadd.f32 %v3602, 1.0
      %v3619 = vmul.f32 %v3603, 0.5
      %v3620 = vmul.f32 %v3604, 0.5
      %v3621 = vmul.f32 %v3605, 0.5
      %v3622 = vmul.f32 %v3606, 0.5
      %v3623 = vmul.f32 %v3607, 0.5
      %v3624 = vmul.f32 %v3608, 0.5
      %v3625 = vmul.f32 %v3609, 0.5
      %v3626 = vmul.f32 %v3610, 0.5
      %v3627 = vmul.f32 %v3611, 0.5
      %v3628 = vmul.f32 %v3612, 0.5
      %v3629 = vmul.f32 %v3613, 0.5
      %v3630 = vmul.f32 %v3614, 0.5
      %v3631 = vmul.f32 %v3615, 0.5
      %v3632 = vmul.f32 %v3616, 0.5
      %v3633 = vmul.f32 %v3617, 0.5
      %v3634 = vmul.f32 %v3618, 0.5
      %v3635 = vmul.f32 %v3445, %v3619
      %v3636 = vmul.f32 %v3448, %v3620
      %v3637 = vmul.f32 %v3453, %v3621
      %v3638 = vmul.f32 %v3456, %v3622
      %v3639 = vmul.f32 %v3461, %v3623
      %v3640 = vmul.f32 %v3464, %v3624
      %v3641 = vmul.f32 %v3469, %v3625
      %v3642 = vmul.f32 %v3472, %v3626
      %v3643 = vmul.f32 %v3477, %v3627
      %v3644 = vmul.f32 %v3480, %v3628
      %v3645 = vmul.f32 %v3485, %v3629
      %v3646 = vmul.f32 %v3488, %v3630
      %v3647 = vmul.f32 %v3493, %v3631
      %v3648 = vmul.f32 %v3496, %v3632
      %v3649 = vmul.f32 %v3501, %v3633
      %v3650 = vmul.f32 %v3504, %v3634
      %v3651 = vpack.c.bf16 %v3636, %v3635
      %v3652 = vpack.c.bf16 %v3638, %v3637
      %v3653 = vpack.c.bf16 %v3640, %v3639
      %v3654 = vpack.c.bf16 %v3642, %v3641
      %v3655 = vpack.c.bf16 %v3644, %v3643
      %v3656 = vpack.c.bf16 %v3646, %v3645
      %v3657 = vpack.c.bf16 %v3648, %v3647
      %v3658 = vpack.c.bf16 %v3650, %v3649
      %v3659 = vld [vmem:[%s12] sm:$0xf]
      %v3660 = vld [vmem:[%s12 + $0x4] sm:$0xf]
      %v3661 = vld [vmem:[%s12 + $0x8] sm:$0xf]
      %v3662 = vld [vmem:[%s12 + $0xc] sm:$0xf]
      %v3663 = vld [vmem:[%s12 + $0x10] sm:$0xf]
      %v3664 = vld [vmem:[%s12 + $0x14] sm:$0xf]
      %v3665 = vld [vmem:[%s12 + $0x18] sm:$0xf]
      %v3666 = vld [vmem:[%s12 + $0x1c] sm:$0xf]
      %v3667 = vld [vmem:[%s13] sm:$0x1]
      %v3668 = vunpack.c.l.bf16 %v3667
      %v3669 = vlaneseq
      %v3670 = vshrl.u32 %v3669, 7
      %v3671 = vsub.s32 0, %v3670
      %v3672 = vrot.slane %v3668, %v3671
      %v3681 = vunpack.c.l.b16 %v3659
      %v3682 = vunpack.c.l.b16 %v3660
      %v3683 = vunpack.c.l.b16 %v3661
      %v3684 = vunpack.c.l.b16 %v3662
      %v3685 = vunpack.c.l.b16 %v3663
      %v3686 = vunpack.c.l.b16 %v3664
      %v3687 = vunpack.c.l.b16 %v3665
      %v3688 = vunpack.c.l.b16 %v3666
      %v3689 = vpack.c.b16 %v3682, %v3681
      %v3690 = vpack.c.b16 %v3684, %v3683
      %v3691 = vpack.c.b16 %v3686, %v3685
      %v3692 = vpack.c.b16 %v3688, %v3687
      %vm3697 = vcmask 523264
      %v3699 = vsel %vm3697, %v3651, 0
      %v3702 = vsel %vm3697, %v3652, 0
      %v3705 = vsel %vm3697, %v3653, 0
      %v3708 = vsel %vm3697, %v3654, 0
      %v3711 = vsel %vm3697, %v3655, 0
      %v3714 = vsel %vm3697, %v3656, 0
      %v3717 = vsel %vm3697, %v3657, 0
      %v3720 = vsel %vm3697, %v3658, 0
      %3722 = vmatprep.subr.bf16.mxu0 0
      %3723 = vmatpush1.bf16.msra.mxu0 %v3689
      %3724 = vmatprep.subr.bf16.mxu0 0
      %3725 = vmatpush1.bf16.msra.mxu0 %v3690
      %3726 = vmatprep.subr.bf16.mxu0 0
      %3727 = vmatpush1.bf16.msra.mxu0 %v3691
      %3728 = vmatprep.subr.bf16.mxu0 0
      %3729 = vmatpush1.bf16.msra.mxu0 %v3692
      %3730 = vmatprep.subr.bf16.mxu0 0
      %3731 = vmatpush1.bf16.msra.mxu0 0
      %3732 = vmatprep.subr.bf16.mxu0 0
      %3733 = vmatpush1.bf16.msra.mxu0 0
      %3734 = vmatprep.subr.bf16.mxu0 0
      %3735 = vmatpush1.bf16.msra.mxu0 0
      %3736 = vmatprep.subr.bf16.mxu0 0
      %3737 = vmatpush1.bf16.msra.mxu0 0
      %3738 = vmatprep.subr.bf16.mxu0 0
      %3739 = vmatpush1.bf16.msra.mxu0 0
      %3740 = vmatprep.subr.bf16.mxu0 0
      %3741 = vmatpush1.bf16.msra.mxu0 0
      %3742 = vmatprep.subr.bf16.mxu0 0
      %3743 = vmatpush1.bf16.msra.mxu0 0
      %3744 = vmatprep.subr.bf16.mxu0 0
      %3745 = vmatpush1.bf16.msra.mxu0 0
      %3746 = vmatprep.subr.bf16.mxu0 0
      %3747 = vmatpush1.bf16.msra.mxu0 0
      %3748 = vmatprep.subr.bf16.mxu0 0
      %3749 = vmatpush1.bf16.msra.mxu0 0
      %3750 = vmatprep.subr.bf16.mxu0 0
      %3751 = vmatpush1.bf16.msra.mxu0 0
      %3752 = vmatprep.subr.bf16.mxu0 0
      %3753 = vmatpush1.bf16.msra.mxu0 0
      %3754 = vmatprep.mubr.bf16.mxu0 0
      %3755 = vmatmul.mubr.bf16.gmra.mrb[0].mxu0 %v3699
      %v3756 = vpop.f32.mrb[0].mxu0
      %v3757 = vadd.f32 %v3672, %v3756
      %v3758 = vpop.f32.mrb[0].mxu0
      %v3759 = vpop.f32.mrb[0].mxu0
      %v3760 = vadd.f32 %v3672, %v3759
      %v3761 = vpop.f32.mrb[0].mxu0
      %3762 = vmatprep.mubr.bf16.mxu0 0
      %3763 = vmatmul.mubr.bf16.gmra.mrb[0].mxu0 %v3702
      %v3764 = vpop.f32.mrb[0].mxu0
      %v3765 = vadd.f32 %v3672, %v3764
      %v3766 = vpop.f32.mrb[0].mxu0
      %v3767 = vpop.f32.mrb[0].mxu0
      %v3768 = vadd.f32 %v3672, %v3767
      %v3769 = vpop.f32.mrb[0].mxu0
      %3770 = vmatprep.mubr.bf16.mxu0 0
      %3771 = vmatmul.mubr.bf16.gmra.mrb[0].mxu0 %v3705
      %v3772 = vpop.f32.mrb[0].mxu0
      %v3773 = vadd.f32 %v3672, %v3772
      %v3774 = vpop.f32.mrb[0].mxu0
      %v3775 = vpop.f32.mrb[0].mxu0
      %v3776 = vadd.f32 %v3672, %v3775
      %v3777 = vpop.f32.mrb[0].mxu0
      %3778 = vmatprep.mubr.bf16.mxu0 0
      %3779 = vmatmul.mubr.bf16.gmra.mrb[0].mxu0 %v3708
      %v3780 = vpop.f32.mrb[0].mxu0
      %v3781 = vadd.f32 %v3672, %v3780
      %v3782 = vpop.f32.mrb[0].mxu0
      %v3783 = vpop.f32.mrb[0].mxu0
      %v3784 = vadd.f32 %v3672, %v3783
      %v3785 = vpop.f32.mrb[0].mxu0
      %3786 = vmatprep.mubr.bf16.mxu0 0
      %3787 = vmatmul.mubr.bf16.gmra.mrb[0].mxu0 %v3711
      %v3788 = vpop.f32.mrb[0].mxu0
      %v3789 = vadd.f32 %v3672, %v3788
      %v3790 = vpop.f32.mrb[0].mxu0
      %v3791 = vpop.f32.mrb[0].mxu0
      %v3792 = vadd.f32 %v3672, %v3791
      %v3793 = vpop.f32.mrb[0].mxu0
      %3794 = vmatprep.mubr.bf16.mxu0 0
      %3795 = vmatmul.mubr.bf16.gmra.mrb[0].mxu0 %v3714
      %v3796 = vpop.f32.mrb[0].mxu0
      %v3797 = vadd.f32 %v3672, %v3796
      %v3798 = vpop.f32.mrb[0].mxu0
      %v3799 = vpop.f32.mrb[0].mxu0
      %v3800 = vadd.f32 %v3672, %v3799
      %v3801 = vpop.f32.mrb[0].mxu0
      %3802 = vmatprep.mubr.bf16.mxu0 0
      %3803 = vmatmul.mubr.bf16.gmra.mrb[0].mxu0 %v3717
      %v3804 = vpop.f32.mrb[0].mxu0
      %v3805 = vadd.f32 %v3672, %v3804
      %v3806 = vpop.f32.mrb[0].mxu0
      %v3807 = vpop.f32.mrb[0].mxu0
      %v3808 = vadd.f32 %v3672, %v3807
      %v3809 = vpop.f32.mrb[0].mxu0
      %3810 = vmatprep.mubr.bf16.mxu0 0
      %3811 = vmatmul.mubr.bf16.gmra.mrb[0].mxu0 %v3720
      %v3812 = vpop.f32.mrb[0].mxu0
      %v3813 = vadd.f32 %v3672, %v3812
      %v3814 = vpop.f32.mrb[0].mxu0
      %v3815 = vpop.f32.mrb[0].mxu0
      %v3816 = vadd.f32 %v3672, %v3815
      %v3817 = vpop.f32.mrb[0].mxu0
      %3818 = vdwg.mxu0
      %v3819 = vunpack.c.l.bf16 %v3356
      %v3820 = vunpack.c.h.bf16 %v3356
      %v3821 = vunpack.c.l.bf16 %v3357
      %v3822 = vunpack.c.h.bf16 %v3357
      %v3823 = vunpack.c.l.bf16 %v3358
      %v3824 = vunpack.c.h.bf16 %v3358
      %v3825 = vunpack.c.l.bf16 %v3359
      %v3826 = vunpack.c.h.bf16 %v3359
      %v3827 = vunpack.c.l.bf16 %v3360
      %v3828 = vunpack.c.h.bf16 %v3360
      %v3829 = vunpack.c.l.bf16 %v3361
      %v3830 = vunpack.c.h.bf16 %v3361
      %v3831 = vunpack.c.l.bf16 %v3362
      %v3832 = vunpack.c.h.bf16 %v3362
      %v3833 = vunpack.c.l.bf16 %v3363
      %v3834 = vunpack.c.h.bf16 %v3363
      %v3835 = vadd.f32 %v3757, %v3819
      %v3836 = vadd.f32 %v3760, %v3820
      %v3837 = vadd.f32 %v3765, %v3821
      %v3838 = vadd.f32 %v3768, %v3822
      %v3839 = vadd.f32 %v3773, %v3823
      %v3840 = vadd.f32 %v3776, %v3824
      %v3841 = vadd.f32 %v3781, %v3825
      %v3842 = vadd.f32 %v3784, %v3826
      %v3843 = vadd.f32 %v3789, %v3827
      %v3844 = vadd.f32 %v3792, %v3828
      %v3845 = vadd.f32 %v3797, %v3829
      %v3846 = vadd.f32 %v3800, %v3830
      %v3847 = vadd.f32 %v3805, %v3831
      %v3848 = vadd.f32 %v3808, %v3832
      %v3849 = vadd.f32 %v3813, %v3833
      %v3850 = vadd.f32 %v3816, %v3834
      %v3851 = vld [vmem:[%s14] sm:$0x1]
      %v3852 = vld [vmem:[%s15] sm:$0x1]
      %v3853 = vsel %vm629, %v3835, 0.0
      %3854 = vadd.xlane.f32.xlu0 %v3853
      %v3855 = vpop.xlane.xlu0 %3854
      %v3856 = vsel %vm629, %v3836, 0.0
      %3857 = vadd.xlane.f32.xlu0 %v3856
      %v3858 = vpop.xlane.xlu0 %3857
      %v3859 = vsel %vm629, %v3837, 0.0
      %3860 = vadd.xlane.f32.xlu0 %v3859
      %v3861 = vpop.xlane.xlu0 %3860
      %v3862 = vsel %vm629, %v3838, 0.0
      %3863 = vadd.xlane.f32.xlu0 %v3862
      %v3864 = vpop.xlane.xlu0 %3863
      %v3865 = vsel %vm629, %v3839, 0.0
      %3866 = vadd.xlane.f32.xlu0 %v3865
      %v3867 = vpop.xlane.xlu0 %3866
      %v3868 = vsel %vm629, %v3840, 0.0
      %3869 = vadd.xlane.f32.xlu0 %v3868
      %v3870 = vpop.xlane.xlu0 %3869
      %v3871 = vsel %vm629, %v3841, 0.0
      %3872 = vadd.xlane.f32.xlu0 %v3871
      %v3873 = vpop.xlane.xlu0 %3872
      %v3874 = vsel %vm629, %v3842, 0.0
      %3875 = vadd.xlane.f32.xlu0 %v3874
      %v3876 = vpop.xlane.xlu0 %3875
      %v3877 = vsel %vm629, %v3843, 0.0
      %3878 = vadd.xlane.f32.xlu0 %v3877
      %v3879 = vpop.xlane.xlu0 %3878
      %v3880 = vsel %vm629, %v3844, 0.0
      %3881 = vadd.xlane.f32.xlu0 %v3880
      %v3882 = vpop.xlane.xlu0 %3881
      %v3883 = vsel %vm629, %v3845, 0.0
      %3884 = vadd.xlane.f32.xlu0 %v3883
      %v3885 = vpop.xlane.xlu0 %3884
      %v3886 = vsel %vm629, %v3846, 0.0
      %3887 = vadd.xlane.f32.xlu0 %v3886
      %v3888 = vpop.xlane.xlu0 %3887
      %v3889 = vsel %vm629, %v3847, 0.0
      %3890 = vadd.xlane.f32.xlu0 %v3889
      %v3891 = vpop.xlane.xlu0 %3890
      %v3892 = vsel %vm629, %v3848, 0.0
      %3893 = vadd.xlane.f32.xlu0 %v3892
      %v3894 = vpop.xlane.xlu0 %3893
      %v3895 = vsel %vm629, %v3849, 0.0
      %3896 = vadd.xlane.f32.xlu0 %v3895
      %v3897 = vpop.xlane.xlu0 %3896
      %v3898 = vsel %vm629, %v3850, 0.0
      %3899 = vadd.xlane.f32.xlu0 %v3898
      %v3900 = vpop.xlane.xlu0 %3899
      %v3901 = vmul.f32 %v3855, %v678
      %v3902 = vmul.f32 %v3858, %v678
      %v3903 = vmul.f32 %v3861, %v678
      %v3904 = vmul.f32 %v3864, %v678
      %v3905 = vmul.f32 %v3867, %v678
      %v3906 = vmul.f32 %v3870, %v678
      %v3907 = vmul.f32 %v3873, %v678
      %v3908 = vmul.f32 %v3876, %v678
      %v3909 = vmul.f32 %v3879, %v678
      %v3910 = vmul.f32 %v3882, %v678
      %v3911 = vmul.f32 %v3885, %v678
      %v3912 = vmul.f32 %v3888, %v678
      %v3913 = vmul.f32 %v3891, %v678
      %v3914 = vmul.f32 %v3894, %v678
      %v3915 = vmul.f32 %v3897, %v678
      %v3916 = vmul.f32 %v3900, %v678
      %v3917 = vsub.f32 %v3835, %v3901
      %v3918 = vsub.f32 %v3836, %v3902
      %v3919 = vsub.f32 %v3837, %v3903
      %v3920 = vsub.f32 %v3838, %v3904
      %v3921 = vsub.f32 %v3839, %v3905
      %v3922 = vsub.f32 %v3840, %v3906
      %v3923 = vsub.f32 %v3841, %v3907
      %v3924 = vsub.f32 %v3842, %v3908
      %v3925 = vsub.f32 %v3843, %v3909
      %v3926 = vsub.f32 %v3844, %v3910
      %v3927 = vsub.f32 %v3845, %v3911
      %v3928 = vsub.f32 %v3846, %v3912
      %v3929 = vsub.f32 %v3847, %v3913
      %v3930 = vsub.f32 %v3848, %v3914
      %v3931 = vsub.f32 %v3849, %v3915
      %v3932 = vsub.f32 %v3850, %v3916
      %v3933 = vmul.f32 %v3917, %v3917
      %v3934 = vmul.f32 %v3918, %v3918
      %v3935 = vmul.f32 %v3919, %v3919
      %v3936 = vmul.f32 %v3920, %v3920
      %v3937 = vmul.f32 %v3921, %v3921
      %v3938 = vmul.f32 %v3922, %v3922
      %v3939 = vmul.f32 %v3923, %v3923
      %v3940 = vmul.f32 %v3924, %v3924
      %v3941 = vmul.f32 %v3925, %v3925
      %v3942 = vmul.f32 %v3926, %v3926
      %v3943 = vmul.f32 %v3927, %v3927
      %v3944 = vmul.f32 %v3928, %v3928
      %v3945 = vmul.f32 %v3929, %v3929
      %v3946 = vmul.f32 %v3930, %v3930
      %v3947 = vmul.f32 %v3931, %v3931
      %v3948 = vmul.f32 %v3932, %v3932
      %v3949 = vsel %vm629, %v3933, 0.0
      %3950 = vadd.xlane.f32.xlu0 %v3949
      %v3951 = vpop.xlane.xlu0 %3950
      %v3952 = vsel %vm629, %v3934, 0.0
      %3953 = vadd.xlane.f32.xlu0 %v3952
      %v3954 = vpop.xlane.xlu0 %3953
      %v3955 = vsel %vm629, %v3935, 0.0
      %3956 = vadd.xlane.f32.xlu0 %v3955
      %v3957 = vpop.xlane.xlu0 %3956
      %v3958 = vsel %vm629, %v3936, 0.0
      %3959 = vadd.xlane.f32.xlu0 %v3958
      %v3960 = vpop.xlane.xlu0 %3959
      %v3961 = vsel %vm629, %v3937, 0.0
      %3962 = vadd.xlane.f32.xlu0 %v3961
      %v3963 = vpop.xlane.xlu0 %3962
      %v3964 = vsel %vm629, %v3938, 0.0
      %3965 = vadd.xlane.f32.xlu0 %v3964
      %v3966 = vpop.xlane.xlu0 %3965
      %v3967 = vsel %vm629, %v3939, 0.0
      %3968 = vadd.xlane.f32.xlu0 %v3967
      %v3969 = vpop.xlane.xlu0 %3968
      %v3970 = vsel %vm629, %v3940, 0.0
      %3971 = vadd.xlane.f32.xlu0 %v3970
      %v3972 = vpop.xlane.xlu0 %3971
      %v3973 = vsel %vm629, %v3941, 0.0
      %3974 = vadd.xlane.f32.xlu0 %v3973
      %v3975 = vpop.xlane.xlu0 %3974
      %v3976 = vsel %vm629, %v3942, 0.0
      %3977 = vadd.xlane.f32.xlu0 %v3976
      %v3978 = vpop.xlane.xlu0 %3977
      %v3979 = vsel %vm629, %v3943, 0.0
      %3980 = vadd.xlane.f32.xlu0 %v3979
      %v3981 = vpop.xlane.xlu0 %3980
      %v3982 = vsel %vm629, %v3944, 0.0
      %3983 = vadd.xlane.f32.xlu0 %v3982
      %v3984 = vpop.xlane.xlu0 %3983
      %v3985 = vsel %vm629, %v3945, 0.0
      %3986 = vadd.xlane.f32.xlu0 %v3985
      %v3987 = vpop.xlane.xlu0 %3986
      %v3988 = vsel %vm629, %v3946, 0.0
      %3989 = vadd.xlane.f32.xlu0 %v3988
      %v3990 = vpop.xlane.xlu0 %3989
      %v3991 = vsel %vm629, %v3947, 0.0
      %3992 = vadd.xlane.f32.xlu0 %v3991
      %v3993 = vpop.xlane.xlu0 %3992
      %v3994 = vsel %vm629, %v3948, 0.0
      %3995 = vadd.xlane.f32.xlu0 %v3994
      %v3996 = vpop.xlane.xlu0 %3995
      %v3997 = vmul.f32 %v3951, %v678
      %v3998 = vmul.f32 %v3954, %v678
      %v3999 = vmul.f32 %v3957, %v678
      %v4000 = vmul.f32 %v3960, %v678
      %v4001 = vmul.f32 %v3963, %v678
      %v4002 = vmul.f32 %v3966, %v678
      %v4003 = vmul.f32 %v3969, %v678
      %v4004 = vmul.f32 %v3972, %v678
      %v4005 = vmul.f32 %v3975, %v678
      %v4006 = vmul.f32 %v3978, %v678
      %v4007 = vmul.f32 %v3981, %v678
      %v4008 = vmul.f32 %v3984, %v678
      %v4009 = vmul.f32 %v3987, %v678
      %v4010 = vmul.f32 %v3990, %v678
      %v4011 = vmul.f32 %v3993, %v678
      %v4012 = vmul.f32 %v3996, %v678
      %v4013 = vadd.f32 %v3997, 1e-12
      %v4014 = vadd.f32 %v3998, 1e-12
      %v4015 = vadd.f32 %v3999, 1e-12
      %v4016 = vadd.f32 %v4000, 1e-12
      %v4017 = vadd.f32 %v4001, 1e-12
      %v4018 = vadd.f32 %v4002, 1e-12
      %v4019 = vadd.f32 %v4003, 1e-12
      %v4020 = vadd.f32 %v4004, 1e-12
      %v4021 = vadd.f32 %v4005, 1e-12
      %v4022 = vadd.f32 %v4006, 1e-12
      %v4023 = vadd.f32 %v4007, 1e-12
      %v4024 = vadd.f32 %v4008, 1e-12
      %v4025 = vadd.f32 %v4009, 1e-12
      %v4026 = vadd.f32 %v4010, 1e-12
      %v4027 = vadd.f32 %v4011, 1e-12
      %v4028 = vadd.f32 %v4012, 1e-12
      %v4029 = vrsqrt.pop %v4013
      %v4030 = vrsqrt.pop %v4014
      %v4031 = vrsqrt.pop %v4015
      %v4032 = vrsqrt.pop %v4016
      %v4033 = vrsqrt.pop %v4017
      %v4034 = vrsqrt.pop %v4018
      %v4035 = vrsqrt.pop %v4019
      %v4036 = vrsqrt.pop %v4020
      %v4037 = vrsqrt.pop %v4021
      %v4038 = vrsqrt.pop %v4022
      %v4039 = vrsqrt.pop %v4023
      %v4040 = vrsqrt.pop %v4024
      %v4041 = vrsqrt.pop %v4025
      %v4042 = vrsqrt.pop %v4026
      %v4043 = vrsqrt.pop %v4027
      %v4044 = vrsqrt.pop %v4028
      %v4045 = vmul.f32 %v3917, %v4029
      %v4046 = vmul.f32 %v3918, %v4030
      %v4047 = vmul.f32 %v3919, %v4031
      %v4048 = vmul.f32 %v3920, %v4032
      %v4049 = vmul.f32 %v3921, %v4033
      %v4050 = vmul.f32 %v3922, %v4034
      %v4051 = vmul.f32 %v3923, %v4035
      %v4052 = vmul.f32 %v3924, %v4036
      %v4053 = vmul.f32 %v3925, %v4037
      %v4054 = vmul.f32 %v3926, %v4038
      %v4055 = vmul.f32 %v3927, %v4039
      %v4056 = vmul.f32 %v3928, %v4040
      %v4057 = vmul.f32 %v3929, %v4041
      %v4058 = vmul.f32 %v3930, %v4042
      %v4059 = vmul.f32 %v3931, %v4043
      %v4060 = vmul.f32 %v3932, %v4044
      %v4061 = vunpack.c.l.bf16 %v3851
      %v4062 = vlaneseq
      %v4063 = vshrl.u32 %v4062, 7
      %v4064 = vsub.s32 0, %v4063
      %v4065 = vrot.slane %v4061, %v4064
      %v4066 = vmul.f32 %v4045, %v4065
      %v4067 = vmul.f32 %v4046, %v4065
      %v4068 = vmul.f32 %v4047, %v4065
      %v4069 = vmul.f32 %v4048, %v4065
      %v4070 = vmul.f32 %v4049, %v4065
      %v4071 = vmul.f32 %v4050, %v4065
      %v4072 = vmul.f32 %v4051, %v4065
      %v4073 = vmul.f32 %v4052, %v4065
      %v4074 = vmul.f32 %v4053, %v4065
      %v4075 = vmul.f32 %v4054, %v4065
      %v4076 = vmul.f32 %v4055, %v4065
      %v4077 = vmul.f32 %v4056, %v4065
      %v4078 = vmul.f32 %v4057, %v4065
      %v4079 = vmul.f32 %v4058, %v4065
      %v4080 = vmul.f32 %v4059, %v4065
      %v4081 = vmul.f32 %v4060, %v4065
      %v4082 = vunpack.c.l.bf16 %v3852
      %v4083 = vlaneseq
      %v4084 = vshrl.u32 %v4083, 7
      %v4085 = vsub.s32 0, %v4084
      %v4086 = vrot.slane %v4082, %v4085
      %v4087 = vadd.f32 %v4066, %v4086
      %v4088 = vadd.f32 %v4067, %v4086
      %v4089 = vadd.f32 %v4068, %v4086
      %v4090 = vadd.f32 %v4069, %v4086
      %v4091 = vadd.f32 %v4070, %v4086
      %v4092 = vadd.f32 %v4071, %v4086
      %v4093 = vadd.f32 %v4072, %v4086
      %v4094 = vadd.f32 %v4073, %v4086
      %v4095 = vadd.f32 %v4074, %v4086
      %v4096 = vadd.f32 %v4075, %v4086
      %v4097 = vadd.f32 %v4076, %v4086
      %v4098 = vadd.f32 %v4077, %v4086
      %v4099 = vadd.f32 %v4078, %v4086
      %v4100 = vadd.f32 %v4079, %v4086
      %v4101 = vadd.f32 %v4080, %v4086
      %v4102 = vadd.f32 %v4081, %v4086
      %v4103 = vpack.c.bf16 %v4088, %v4087
      %v4104 = vpack.c.bf16 %v4090, %v4089
      %v4105 = vpack.c.bf16 %v4092, %v4091
      %v4106 = vpack.c.bf16 %v4094, %v4093
      %v4107 = vpack.c.bf16 %v4096, %v4095
      %v4108 = vpack.c.bf16 %v4098, %v4097
      %v4109 = vpack.c.bf16 %v4100, %v4099
      %v4110 = vpack.c.bf16 %v4102, %v4101
      %s4111 = scalar_lea.vmem %s4, 16
      %v4112 = vld [vmem:[%s4111] sm:$0xf]
      %v4113 = vld [vmem:[%s4111 + $0x4] sm:$0xf]
      %v4114 = vld [vmem:[%s4111 + $0x8] sm:$0xf]
      %v4115 = vld [vmem:[%s4111 + $0xc] sm:$0xf]
      %s4116 = scalar_lea.vmem %s5, 1
      %v4117 = vld [vmem:[%s4116] sm:$0x1]
      %v4118 = vunpack.c.l.bf16 %v4117
      %v4119 = vlaneseq
      %v4120 = vshrl.u32 %v4119, 7
      %v4121 = vsub.s32 0, %v4120
      %v4122 = vrot.slane %v4118, %v4121
      %v4127 = vunpack.c.l.b16 %v4112
      %v4128 = vunpack.c.l.b16 %v4113
      %v4129 = vunpack.c.l.b16 %v4114
      %v4130 = vunpack.c.l.b16 %v4115
      %v4131 = vpack.c.b16 %v4128, %v4127
      %v4132 = vpack.c.b16 %v4130, %v4129
      %v4136 = vsel %vm629, %v4103, 0
      %v4139 = vsel %vm629, %v4104, 0
      %v4142 = vsel %vm629, %v4105, 0
      %v4145 = vsel %vm629, %v4106, 0
      %v4148 = vsel %vm629, %v4107, 0
      %v4151 = vsel %vm629, %v4108, 0
      %v4154 = vsel %vm629, %v4109, 0
      %v4157 = vsel %vm629, %v4110, 0
      %4159 = vmatprep.subr.bf16.mxu0 0
      %4160 = vmatpush1.bf16.msra.mxu0 %v4131
      %4161 = vmatprep.subr.bf16.mxu0 0
      %4162 = vmatpush1.bf16.msra.mxu0 %v4132
      %4163 = vmatprep.subr.bf16.mxu0 0
      %4164 = vmatpush1.bf16.msra.mxu0 0
      %4165 = vmatprep.subr.bf16.mxu0 0
      %4166 = vmatpush1.bf16.msra.mxu0 0
      %4167 = vmatprep.subr.bf16.mxu0 0
      %4168 = vmatpush1.bf16.msra.mxu0 0
      %4169 = vmatprep.subr.bf16.mxu0 0
      %4170 = vmatpush1.bf16.msra.mxu0 0
      %4171 = vmatprep.subr.bf16.mxu0 0
      %4172 = vmatpush1.bf16.msra.mxu0 0
      %4173 = vmatprep.subr.bf16.mxu0 0
      %4174 = vmatpush1.bf16.msra.mxu0 0
      %4175 = vmatprep.subr.bf16.mxu0 0
      %4176 = vmatpush1.bf16.msra.mxu0 0
      %4177 = vmatprep.subr.bf16.mxu0 0
      %4178 = vmatpush1.bf16.msra.mxu0 0
      %4179 = vmatprep.subr.bf16.mxu0 0
      %4180 = vmatpush1.bf16.msra.mxu0 0
      %4181 = vmatprep.subr.bf16.mxu0 0
      %4182 = vmatpush1.bf16.msra.mxu0 0
      %4183 = vmatprep.subr.bf16.mxu0 0
      %4184 = vmatpush1.bf16.msra.mxu0 0
      %4185 = vmatprep.subr.bf16.mxu0 0
      %4186 = vmatpush1.bf16.msra.mxu0 0
      %4187 = vmatprep.subr.bf16.mxu0 0
      %4188 = vmatpush1.bf16.msra.mxu0 0
      %4189 = vmatprep.subr.bf16.mxu0 0
      %4190 = vmatpush1.bf16.msra.mxu0 0
      %4191 = vmatprep.mubr.bf16.mxu0 0
      %4192 = vmatmul.mubr.bf16.gmra.mrb[0].mxu0 %v4136
      %v4193 = vpop.f32.mrb[0].mxu0
      %v4194 = vadd.f32 %v4122, %v4193
      %v4195 = vpop.f32.mrb[0].mxu0
      %v4196 = vpop.f32.mrb[0].mxu0
      %v4197 = vadd.f32 %v4122, %v4196
      %v4198 = vpop.f32.mrb[0].mxu0
      %4199 = vmatprep.mubr.bf16.mxu0 0
      %4200 = vmatmul.mubr.bf16.gmra.mrb[0].mxu0 %v4139
      %v4201 = vpop.f32.mrb[0].mxu0
      %v4202 = vadd.f32 %v4122, %v4201
      %v4203 = vpop.f32.mrb[0].mxu0
      %v4204 = vpop.f32.mrb[0].mxu0
      %v4205 = vadd.f32 %v4122, %v4204
      %v4206 = vpop.f32.mrb[0].mxu0
      %4207 = vmatprep.mubr.bf16.mxu0 0
      %4208 = vmatmul.mubr.bf16.gmra.mrb[0].mxu0 %v4142
      %v4209 = vpop.f32.mrb[0].mxu0
      %v4210 = vadd.f32 %v4122, %v4209
      %v4211 = vpop.f32.mrb[0].mxu0
      %v4212 = vpop.f32.mrb[0].mxu0
      %v4213 = vadd.f32 %v4122, %v4212
      %v4214 = vpop.f32.mrb[0].mxu0
      %4215 = vmatprep.mubr.bf16.mxu0 0
      %4216 = vmatmul.mubr.bf16.gmra.mrb[0].mxu0 %v4145
      %v4217 = vpop.f32.mrb[0].mxu0
      %v4218 = vadd.f32 %v4122, %v4217
      %v4219 = vpop.f32.mrb[0].mxu0
      %v4220 = vpop.f32.mrb[0].mxu0
      %v4221 = vadd.f32 %v4122, %v4220
      %v4222 = vpop.f32.mrb[0].mxu0
      %4223 = vmatprep.mubr.bf16.mxu0 0
      %4224 = vmatmul.mubr.bf16.gmra.mrb[0].mxu0 %v4148
      %v4225 = vpop.f32.mrb[0].mxu0
      %v4226 = vadd.f32 %v4122, %v4225
      %v4227 = vpop.f32.mrb[0].mxu0
      %v4228 = vpop.f32.mrb[0].mxu0
      %v4229 = vadd.f32 %v4122, %v4228
      %v4230 = vpop.f32.mrb[0].mxu0
      %4231 = vmatprep.mubr.bf16.mxu0 0
      %4232 = vmatmul.mubr.bf16.gmra.mrb[0].mxu0 %v4151
      %v4233 = vpop.f32.mrb[0].mxu0
      %v4234 = vadd.f32 %v4122, %v4233
      %v4235 = vpop.f32.mrb[0].mxu0
      %v4236 = vpop.f32.mrb[0].mxu0
      %v4237 = vadd.f32 %v4122, %v4236
      %v4238 = vpop.f32.mrb[0].mxu0
      %4239 = vmatprep.mubr.bf16.mxu0 0
      %4240 = vmatmul.mubr.bf16.gmra.mrb[0].mxu0 %v4154
      %v4241 = vpop.f32.mrb[0].mxu0
      %v4242 = vadd.f32 %v4122, %v4241
      %v4243 = vpop.f32.mrb[0].mxu0
      %v4244 = vpop.f32.mrb[0].mxu0
      %v4245 = vadd.f32 %v4122, %v4244
      %v4246 = vpop.f32.mrb[0].mxu0
      %4247 = vmatprep.mubr.bf16.mxu0 0
      %4248 = vmatmul.mubr.bf16.gmra.mrb[0].mxu0 %v4157
      %v4249 = vpop.f32.mrb[0].mxu0
      %v4250 = vadd.f32 %v4122, %v4249
      %v4251 = vpop.f32.mrb[0].mxu0
      %v4252 = vpop.f32.mrb[0].mxu0
      %v4253 = vadd.f32 %v4122, %v4252
      %v4254 = vpop.f32.mrb[0].mxu0
      %4255 = vdwg.mxu0
      %v4256 = vpack.c.bf16 %v4197, %v4194
      %v4257 = vpack.c.bf16 %v4205, %v4202
      %v4258 = vpack.c.bf16 %v4213, %v4210
      %v4259 = vpack.c.bf16 %v4221, %v4218
      %v4260 = vpack.c.bf16 %v4229, %v4226
      %v4261 = vpack.c.bf16 %v4237, %v4234
      %v4262 = vpack.c.bf16 %v4245, %v4242
      %v4263 = vpack.c.bf16 %v4253, %v4250
      %4272 = vrot.lane.b32.xlu0 %v4256, 96
      %v4273 = vpop.permute.xlu0 %4272
      %4274 = vrot.lane.b32.xlu0 %v4257, 96
      %v4275 = vpop.permute.xlu0 %4274
      %4276 = vrot.lane.b32.xlu0 %v4258, 96
      %v4277 = vpop.permute.xlu0 %4276
      %4278 = vrot.lane.b32.xlu0 %v4259, 96
      %v4279 = vpop.permute.xlu0 %4278
      %4280 = vrot.lane.b32.xlu0 %v4260, 96
      %v4281 = vpop.permute.xlu0 %4280
      %4282 = vrot.lane.b32.xlu0 %v4261, 96
      %v4283 = vpop.permute.xlu0 %4282
      %4284 = vrot.lane.b32.xlu0 %v4262, 96
      %v4285 = vpop.permute.xlu0 %4284
      %4286 = vrot.lane.b32.xlu0 %v4263, 96
      %v4287 = vpop.permute.xlu0 %4286
      %v4289 = vsel %vm1064, %v4256, 0
      %v4292 = vsel %vm1064, %v4257, 0
      %v4295 = vsel %vm1064, %v4258, 0
      %v4298 = vsel %vm1064, %v4259, 0
      %v4301 = vsel %vm1064, %v4260, 0
      %v4304 = vsel %vm1064, %v4261, 0
      %v4307 = vsel %vm1064, %v4262, 0
      %v4310 = vsel %vm1064, %v4263, 0
      %v4313 = vsel %vm1064, %v4273, 0
      %v4316 = vsel %vm1064, %v4275, 0
      %v4319 = vsel %vm1064, %v4277, 0
      %v4322 = vsel %vm1064, %v4279, 0
      %v4325 = vsel %vm1064, %v4281, 0
      %v4328 = vsel %vm1064, %v4283, 0
      %v4331 = vsel %vm1064, %v4285, 0
      %v4334 = vsel %vm1064, %v4287, 0
      %4336 = vmatprep.subr.bf16.mxu0 0
      %4337 = vmatpush1.bf16.xpose.msra.mxu0 %v4313
      %4338 = vmatprep.subr.bf16.mxu0 0
      %4339 = vmatpush1.bf16.xpose.msra.mxu0 %v4316
      %4340 = vmatprep.subr.bf16.mxu0 0
      %4341 = vmatpush1.bf16.xpose.msra.mxu0 %v4319
      %4342 = vmatprep.subr.bf16.mxu0 0
      %4343 = vmatpush1.bf16.xpose.msra.mxu0 %v4322
      %4344 = vmatprep.subr.bf16.mxu0 0
      %4345 = vmatpush1.bf16.xpose.msra.mxu0 %v4325
      %4346 = vmatprep.subr.bf16.mxu0 0
      %4347 = vmatpush1.bf16.xpose.msra.mxu0 %v4328
      %4348 = vmatprep.subr.bf16.mxu0 0
      %4349 = vmatpush1.bf16.xpose.msra.mxu0 %v4331
      %4350 = vmatprep.subr.bf16.mxu0 0
      %4351 = vmatpush1.bf16.xpose.msra.mxu0 %v4334
      %4352 = vmatprep.subr.bf16.mxu0 0
      %4353 = vmatpush1.bf16.xpose.msra.mxu0 0
      %4354 = vmatprep.subr.bf16.mxu0 0
      %4355 = vmatpush1.bf16.xpose.msra.mxu0 0
      %4356 = vmatprep.subr.bf16.mxu0 0
      %4357 = vmatpush1.bf16.xpose.msra.mxu0 0
      %4358 = vmatprep.subr.bf16.mxu0 0
      %4359 = vmatpush1.bf16.xpose.msra.mxu0 0
      %4360 = vmatprep.subr.bf16.mxu0 0
      %4361 = vmatpush1.bf16.xpose.msra.mxu0 0
      %4362 = vmatprep.subr.bf16.mxu0 0
      %4363 = vmatpush1.bf16.xpose.msra.mxu0 0
      %4364 = vmatprep.subr.bf16.mxu0 0
      %4365 = vmatpush1.bf16.xpose.msra.mxu0 0
      %4366 = vmatprep.subr.bf16.mxu0 0
      %4367 = vmatpush1.bf16.xpose.msra.mxu0 0
      %4368 = vmatprep.mubr.bf16.mxu0 0
      %4369 = vmatmul.mubr.bf16.gmra.mrb[0].mxu0 %v4289
      %v4370 = vpop.f32.mrb[0].mxu0
      %v4371 = vadd.f32 0.0, %v4370
      %v4372 = vpop.f32.mrb[0].mxu0
      %v4373 = vpop.f32.mrb[0].mxu0
      %v4374 = vadd.f32 0.0, %v4373
      %v4375 = vpop.f32.mrb[0].mxu0
      %4376 = vmatprep.mubr.bf16.mxu0 0
      %4377 = vmatmul.mubr.bf16.gmra.mrb[0].mxu0 %v4292
      %v4378 = vpop.f32.mrb[0].mxu0
      %v4379 = vadd.f32 0.0, %v4378
      %v4380 = vpop.f32.mrb[0].mxu0
      %v4381 = vpop.f32.mrb[0].mxu0
      %v4382 = vadd.f32 0.0, %v4381
      %v4383 = vpop.f32.mrb[0].mxu0
      %4384 = vmatprep.mubr.bf16.mxu0 0
      %4385 = vmatmul.mubr.bf16.gmra.mrb[0].mxu0 %v4295
      %v4386 = vpop.f32.mrb[0].mxu0
      %v4387 = vadd.f32 0.0, %v4386
      %v4388 = vpop.f32.mrb[0].mxu0
      %v4389 = vpop.f32.mrb[0].mxu0
      %v4390 = vadd.f32 0.0, %v4389
      %v4391 = vpop.f32.mrb[0].mxu0
      %4392 = vmatprep.mubr.bf16.mxu0 0
      %4393 = vmatmul.mubr.bf16.gmra.mrb[0].mxu0 %v4298
      %v4394 = vpop.f32.mrb[0].mxu0
      %v4395 = vadd.f32 0.0, %v4394
      %v4396 = vpop.f32.mrb[0].mxu0
      %v4397 = vpop.f32.mrb[0].mxu0
      %v4398 = vadd.f32 0.0, %v4397
      %v4399 = vpop.f32.mrb[0].mxu0
      %4400 = vmatprep.mubr.bf16.mxu0 0
      %4401 = vmatmul.mubr.bf16.gmra.mrb[0].mxu0 %v4301
      %v4402 = vpop.f32.mrb[0].mxu0
      %v4403 = vadd.f32 0.0, %v4402
      %v4404 = vpop.f32.mrb[0].mxu0
      %v4405 = vpop.f32.mrb[0].mxu0
      %v4406 = vadd.f32 0.0, %v4405
      %v4407 = vpop.f32.mrb[0].mxu0
      %4408 = vmatprep.mubr.bf16.mxu0 0
      %4409 = vmatmul.mubr.bf16.gmra.mrb[0].mxu0 %v4304
      %v4410 = vpop.f32.mrb[0].mxu0
      %v4411 = vadd.f32 0.0, %v4410
      %v4412 = vpop.f32.mrb[0].mxu0
      %v4413 = vpop.f32.mrb[0].mxu0
      %v4414 = vadd.f32 0.0, %v4413
      %v4415 = vpop.f32.mrb[0].mxu0
      %4416 = vmatprep.mubr.bf16.mxu0 0
      %4417 = vmatmul.mubr.bf16.gmra.mrb[0].mxu0 %v4307
      %v4418 = vpop.f32.mrb[0].mxu0
      %v4419 = vadd.f32 0.0, %v4418
      %v4420 = vpop.f32.mrb[0].mxu0
      %v4421 = vpop.f32.mrb[0].mxu0
      %v4422 = vadd.f32 0.0, %v4421
      %v4423 = vpop.f32.mrb[0].mxu0
      %4424 = vmatprep.mubr.bf16.mxu0 0
      %4425 = vmatmul.mubr.bf16.gmra.mrb[0].mxu0 %v4310
      %v4426 = vpop.f32.mrb[0].mxu0
      %v4427 = vadd.f32 0.0, %v4426
      %v4428 = vpop.f32.mrb[0].mxu0
      %v4429 = vpop.f32.mrb[0].mxu0
      %v4430 = vadd.f32 0.0, %v4429
      %v4431 = vpop.f32.mrb[0].mxu0
      %4432 = vdwg.mxu0
      %v4433 = vmul.f32 %v4371, 0.35355338
      %v4434 = vmul.f32 %v4374, 0.35355338
      %v4435 = vmul.f32 %v4379, 0.35355338
      %v4436 = vmul.f32 %v4382, 0.35355338
      %v4437 = vmul.f32 %v4387, 0.35355338
      %v4438 = vmul.f32 %v4390, 0.35355338
      %v4439 = vmul.f32 %v4395, 0.35355338
      %v4440 = vmul.f32 %v4398, 0.35355338
      %v4441 = vmul.f32 %v4403, 0.35355338
      %v4442 = vmul.f32 %v4406, 0.35355338
      %v4443 = vmul.f32 %v4411, 0.35355338
      %v4444 = vmul.f32 %v4414, 0.35355338
      %v4445 = vmul.f32 %v4419, 0.35355338
      %v4446 = vmul.f32 %v4422, 0.35355338
      %v4447 = vmul.f32 %v4427, 0.35355338
      %v4448 = vmul.f32 %v4430, 0.35355338
      %v4449 = vadd.f32 %v4433, %v1230
      %v4450 = vadd.f32 %v4434, %v1230
      %v4451 = vadd.f32 %v4435, %v1230
      %v4452 = vadd.f32 %v4436, %v1230
      %v4453 = vadd.f32 %v4437, %v1230
      %v4454 = vadd.f32 %v4438, %v1230
      %v4455 = vadd.f32 %v4439, %v1230
      %v4456 = vadd.f32 %v4440, %v1230
      %v4457 = vadd.f32 %v4441, %v1230
      %v4458 = vadd.f32 %v4442, %v1230
      %v4459 = vadd.f32 %v4443, %v1230
      %v4460 = vadd.f32 %v4444, %v1230
      %v4461 = vadd.f32 %v4445, %v1230
      %v4462 = vadd.f32 %v4446, %v1230
      %v4463 = vadd.f32 %v4447, %v1230
      %v4464 = vadd.f32 %v4448, %v1230
      %v4465 = vmul.f32 %v4449, 1.442695
      %v4466 = vpow.pop %v4465
      %v4467 = vmul.f32 %v4450, 1.442695
      %v4468 = vpow.pop %v4467
      %v4469 = vmul.f32 %v4451, 1.442695
      %v4470 = vpow.pop %v4469
      %v4471 = vmul.f32 %v4452, 1.442695
      %v4472 = vpow.pop %v4471
      %v4473 = vmul.f32 %v4453, 1.442695
      %v4474 = vpow.pop %v4473
      %v4475 = vmul.f32 %v4454, 1.442695
      %v4476 = vpow.pop %v4475
      %v4477 = vmul.f32 %v4455, 1.442695
      %v4478 = vpow.pop %v4477
      %v4479 = vmul.f32 %v4456, 1.442695
      %v4480 = vpow.pop %v4479
      %v4481 = vmul.f32 %v4457, 1.442695
      %v4482 = vpow.pop %v4481
      %v4483 = vmul.f32 %v4458, 1.442695
      %v4484 = vpow.pop %v4483
      %v4485 = vmul.f32 %v4459, 1.442695
      %v4486 = vpow.pop %v4485
      %v4487 = vmul.f32 %v4460, 1.442695
      %v4488 = vpow.pop %v4487
      %v4489 = vmul.f32 %v4461, 1.442695
      %v4490 = vpow.pop %v4489
      %v4491 = vmul.f32 %v4462, 1.442695
      %v4492 = vpow.pop %v4491
      %v4493 = vmul.f32 %v4463, 1.442695
      %v4494 = vpow.pop %v4493
      %v4495 = vmul.f32 %v4464, 1.442695
      %v4496 = vpow.pop %v4495
      %4497 = vadd.xlane.f32.xlu0 %v4466
      %v4498 = vpop.xlane.xlu0 %4497
      %4499 = vadd.xlane.f32.xlu0 %v4468
      %v4500 = vpop.xlane.xlu0 %4499
      %4501 = vadd.xlane.f32.xlu0 %v4470
      %v4502 = vpop.xlane.xlu0 %4501
      %4503 = vadd.xlane.f32.xlu0 %v4472
      %v4504 = vpop.xlane.xlu0 %4503
      %4505 = vadd.xlane.f32.xlu0 %v4474
      %v4506 = vpop.xlane.xlu0 %4505
      %4507 = vadd.xlane.f32.xlu0 %v4476
      %v4508 = vpop.xlane.xlu0 %4507
      %4509 = vadd.xlane.f32.xlu0 %v4478
      %v4510 = vpop.xlane.xlu0 %4509
      %4511 = vadd.xlane.f32.xlu0 %v4480
      %v4512 = vpop.xlane.xlu0 %4511
      %4513 = vadd.xlane.f32.xlu0 %v4482
      %v4514 = vpop.xlane.xlu0 %4513
      %4515 = vadd.xlane.f32.xlu0 %v4484
      %v4516 = vpop.xlane.xlu0 %4515
      %4517 = vadd.xlane.f32.xlu0 %v4486
      %v4518 = vpop.xlane.xlu0 %4517
      %4519 = vadd.xlane.f32.xlu0 %v4488
      %v4520 = vpop.xlane.xlu0 %4519
      %4521 = vadd.xlane.f32.xlu0 %v4490
      %v4522 = vpop.xlane.xlu0 %4521
      %4523 = vadd.xlane.f32.xlu0 %v4492
      %v4524 = vpop.xlane.xlu0 %4523
      %4525 = vadd.xlane.f32.xlu0 %v4494
      %v4526 = vpop.xlane.xlu0 %4525
      %4527 = vadd.xlane.f32.xlu0 %v4496
      %v4528 = vpop.xlane.xlu0 %4527
      %v4529 = vrcp.pop %v4498
      %v4530 = vrcp.pop %v4500
      %v4531 = vrcp.pop %v4502
      %v4532 = vrcp.pop %v4504
      %v4533 = vrcp.pop %v4506
      %v4534 = vrcp.pop %v4508
      %v4535 = vrcp.pop %v4510
      %v4536 = vrcp.pop %v4512
      %v4537 = vrcp.pop %v4514
      %v4538 = vrcp.pop %v4516
      %v4539 = vrcp.pop %v4518
      %v4540 = vrcp.pop %v4520
      %v4541 = vrcp.pop %v4522
      %v4542 = vrcp.pop %v4524
      %v4543 = vrcp.pop %v4526
      %v4544 = vrcp.pop %v4528
      %v4545 = vmul.f32 %v4466, %v4529
      %v4546 = vmul.f32 %v4468, %v4530
      %v4547 = vmul.f32 %v4470, %v4531
      %v4548 = vmul.f32 %v4472, %v4532
      %v4549 = vmul.f32 %v4474, %v4533
      %v4550 = vmul.f32 %v4476, %v4534
      %v4551 = vmul.f32 %v4478, %v4535
      %v4552 = vmul.f32 %v4480, %v4536
      %v4553 = vmul.f32 %v4482, %v4537
      %v4554 = vmul.f32 %v4484, %v4538
      %v4555 = vmul.f32 %v4486, %v4539
      %v4556 = vmul.f32 %v4488, %v4540
      %v4557 = vmul.f32 %v4490, %v4541
      %v4558 = vmul.f32 %v4492, %v4542
      %v4559 = vmul.f32 %v4494, %v4543
      %v4560 = vmul.f32 %v4496, %v4544
      %v4561 = vpack.c.bf16 %v4546, %v4545
      %v4562 = vpack.c.bf16 %v4548, %v4547
      %v4563 = vpack.c.bf16 %v4550, %v4549
      %v4564 = vpack.c.bf16 %v4552, %v4551
      %v4565 = vpack.c.bf16 %v4554, %v4553
      %v4566 = vpack.c.bf16 %v4556, %v4555
      %v4567 = vpack.c.bf16 %v4558, %v4557
      %v4568 = vpack.c.bf16 %v4560, %v4559
      %4569 = vrot.lane.b32.xlu0 %v4256, 64
      %v4570 = vpop.permute.xlu0 %4569
      %4571 = vrot.lane.b32.xlu0 %v4257, 64
      %v4572 = vpop.permute.xlu0 %4571
      %4573 = vrot.lane.b32.xlu0 %v4258, 64
      %v4574 = vpop.permute.xlu0 %4573
      %4575 = vrot.lane.b32.xlu0 %v4259, 64
      %v4576 = vpop.permute.xlu0 %4575
      %4577 = vrot.lane.b32.xlu0 %v4260, 64
      %v4578 = vpop.permute.xlu0 %4577
      %4579 = vrot.lane.b32.xlu0 %v4261, 64
      %v4580 = vpop.permute.xlu0 %4579
      %4581 = vrot.lane.b32.xlu0 %v4262, 64
      %v4582 = vpop.permute.xlu0 %4581
      %4583 = vrot.lane.b32.xlu0 %v4263, 64
      %v4584 = vpop.permute.xlu0 %4583
      %4593 = vmatprep.subr.bf16.mxu0 0
      %4594 = vmatpush1.bf16.msra.mxu0 %v4570
      %4595 = vmatprep.subr.bf16.mxu0 0
      %4596 = vmatpush1.bf16.msra.mxu0 %v4572
      %4597 = vmatprep.subr.bf16.mxu0 0
      %4598 = vmatpush1.bf16.msra.mxu0 %v4574
      %4599 = vmatprep.subr.bf16.mxu0 0
      %4600 = vmatpush1.bf16.msra.mxu0 %v4576
      %4601 = vmatprep.subr.bf16.mxu0 0
      %4602 = vmatpush1.bf16.msra.mxu0 %v4578
      %4603 = vmatprep.subr.bf16.mxu0 0
      %4604 = vmatpush1.bf16.msra.mxu0 %v4580
      %4605 = vmatprep.subr.bf16.mxu0 0
      %4606 = vmatpush1.bf16.msra.mxu0 %v4582
      %4607 = vmatprep.subr.bf16.mxu0 0
      %4608 = vmatpush1.bf16.msra.mxu0 %v4584
      %4609 = vmatprep.subr.bf16.mxu0 0
      %4610 = vmatpush1.bf16.msra.mxu0 0
      %4611 = vmatprep.subr.bf16.mxu0 0
      %4612 = vmatpush1.bf16.msra.mxu0 0
      %4613 = vmatprep.subr.bf16.mxu0 0
      %4614 = vmatpush1.bf16.msra.mxu0 0
      %4615 = vmatprep.subr.bf16.mxu0 0
      %4616 = vmatpush1.bf16.msra.mxu0 0
      %4617 = vmatprep.subr.bf16.mxu0 0
      %4618 = vmatpush1.bf16.msra.mxu0 0
      %4619 = vmatprep.subr.bf16.mxu0 0
      %4620 = vmatpush1.bf16.msra.mxu0 0
      %4621 = vmatprep.subr.bf16.mxu0 0
      %4622 = vmatpush1.bf16.msra.mxu0 0
      %4623 = vmatprep.subr.bf16.mxu0 0
      %4624 = vmatpush1.bf16.msra.mxu0 0
      %4625 = vmatprep.mubr.bf16.mxu0 0
      %4626 = vmatmul.mubr.bf16.gmra.mrb[0].mxu0 %v4561
      %v4627 = vpop.f32.mrb[0].mxu0
      %v4628 = vadd.f32 0.0, %v4627
      %v4629 = vpop.f32.mrb[0].mxu0
      %v4630 = vpop.f32.mrb[0].mxu0
      %v4631 = vadd.f32 0.0, %v4630
      %v4632 = vpop.f32.mrb[0].mxu0
      %4633 = vmatprep.mubr.bf16.mxu0 0
      %4634 = vmatmul.mubr.bf16.gmra.mrb[0].mxu0 %v4562
      %v4635 = vpop.f32.mrb[0].mxu0
      %v4636 = vadd.f32 0.0, %v4635
      %v4637 = vpop.f32.mrb[0].mxu0
      %v4638 = vpop.f32.mrb[0].mxu0
      %v4639 = vadd.f32 0.0, %v4638
      %v4640 = vpop.f32.mrb[0].mxu0
      %4641 = vmatprep.mubr.bf16.mxu0 0
      %4642 = vmatmul.mubr.bf16.gmra.mrb[0].mxu0 %v4563
      %v4643 = vpop.f32.mrb[0].mxu0
      %v4644 = vadd.f32 0.0, %v4643
      %v4645 = vpop.f32.mrb[0].mxu0
      %v4646 = vpop.f32.mrb[0].mxu0
      %v4647 = vadd.f32 0.0, %v4646
      %v4648 = vpop.f32.mrb[0].mxu0
      %4649 = vmatprep.mubr.bf16.mxu0 0
      %4650 = vmatmul.mubr.bf16.gmra.mrb[0].mxu0 %v4564
      %v4651 = vpop.f32.mrb[0].mxu0
      %v4652 = vadd.f32 0.0, %v4651
      %v4653 = vpop.f32.mrb[0].mxu0
      %v4654 = vpop.f32.mrb[0].mxu0
      %v4655 = vadd.f32 0.0, %v4654
      %v4656 = vpop.f32.mrb[0].mxu0
      %4657 = vmatprep.mubr.bf16.mxu0 0
      %4658 = vmatmul.mubr.bf16.gmra.mrb[0].mxu0 %v4565
      %v4659 = vpop.f32.mrb[0].mxu0
      %v4660 = vadd.f32 0.0, %v4659
      %v4661 = vpop.f32.mrb[0].mxu0
      %v4662 = vpop.f32.mrb[0].mxu0
      %v4663 = vadd.f32 0.0, %v4662
      %v4664 = vpop.f32.mrb[0].mxu0
      %4665 = vmatprep.mubr.bf16.mxu0 0
      %4666 = vmatmul.mubr.bf16.gmra.mrb[0].mxu0 %v4566
      %v4667 = vpop.f32.mrb[0].mxu0
      %v4668 = vadd.f32 0.0, %v4667
      %v4669 = vpop.f32.mrb[0].mxu0
      %v4670 = vpop.f32.mrb[0].mxu0
      %v4671 = vadd.f32 0.0, %v4670
      %v4672 = vpop.f32.mrb[0].mxu0
      %4673 = vmatprep.mubr.bf16.mxu0 0
      %4674 = vmatmul.mubr.bf16.gmra.mrb[0].mxu0 %v4567
      %v4675 = vpop.f32.mrb[0].mxu0
      %v4676 = vadd.f32 0.0, %v4675
      %v4677 = vpop.f32.mrb[0].mxu0
      %v4678 = vpop.f32.mrb[0].mxu0
      %v4679 = vadd.f32 0.0, %v4678
      %v4680 = vpop.f32.mrb[0].mxu0
      %4681 = vmatprep.mubr.bf16.mxu0 0
      %4682 = vmatmul.mubr.bf16.gmra.mrb[0].mxu0 %v4568
      %v4683 = vpop.f32.mrb[0].mxu0
      %v4684 = vadd.f32 0.0, %v4683
      %v4685 = vpop.f32.mrb[0].mxu0
      %v4686 = vpop.f32.mrb[0].mxu0
      %v4687 = vadd.f32 0.0, %v4686
      %v4688 = vpop.f32.mrb[0].mxu0
      %4689 = vdwg.mxu0
      %v4690 = vpack.c.bf16 %v4631, %v4628
      %v4691 = vpack.c.bf16 %v4639, %v4636
      %v4692 = vpack.c.bf16 %v4647, %v4644
      %v4693 = vpack.c.bf16 %v4655, %v4652
      %v4694 = vpack.c.bf16 %v4663, %v4660
      %v4695 = vpack.c.bf16 %v4671, %v4668
      %v4696 = vpack.c.bf16 %v4679, %v4676
      %v4697 = vpack.c.bf16 %v4687, %v4684
      %4698 = vrot.lane.b32.xlu0 %v4256, 120
      %v4699 = vpop.permute.xlu0 %4698
      %4700 = vrot.lane.b32.xlu0 %v4257, 120
      %v4701 = vpop.permute.xlu0 %4700
      %4702 = vrot.lane.b32.xlu0 %v4258, 120
      %v4703 = vpop.permute.xlu0 %4702
      %4704 = vrot.lane.b32.xlu0 %v4259, 120
      %v4705 = vpop.permute.xlu0 %4704
      %4706 = vrot.lane.b32.xlu0 %v4260, 120
      %v4707 = vpop.permute.xlu0 %4706
      %4708 = vrot.lane.b32.xlu0 %v4261, 120
      %v4709 = vpop.permute.xlu0 %4708
      %4710 = vrot.lane.b32.xlu0 %v4262, 120
      %v4711 = vpop.permute.xlu0 %4710
      %4712 = vrot.lane.b32.xlu0 %v4263, 120
      %v4713 = vpop.permute.xlu0 %4712
      %4714 = vrot.lane.b32.xlu0 %v4256, 88
      %v4715 = vpop.permute.xlu0 %4714
      %4716 = vrot.lane.b32.xlu0 %v4257, 88
      %v4717 = vpop.permute.xlu0 %4716
      %4718 = vrot.lane.b32.xlu0 %v4258, 88
      %v4719 = vpop.permute.xlu0 %4718
      %4720 = vrot.lane.b32.xlu0 %v4259, 88
      %v4721 = vpop.permute.xlu0 %4720
      %4722 = vrot.lane.b32.xlu0 %v4260, 88
      %v4723 = vpop.permute.xlu0 %4722
      %4724 = vrot.lane.b32.xlu0 %v4261, 88
      %v4725 = vpop.permute.xlu0 %4724
      %4726 = vrot.lane.b32.xlu0 %v4262, 88
      %v4727 = vpop.permute.xlu0 %4726
      %4728 = vrot.lane.b32.xlu0 %v4263, 88
      %v4729 = vpop.permute.xlu0 %4728
      %v4731 = vsel %vm1064, %v4699, 0
      %v4734 = vsel %vm1064, %v4701, 0
      %v4737 = vsel %vm1064, %v4703, 0
      %v4740 = vsel %vm1064, %v4705, 0
      %v4743 = vsel %vm1064, %v4707, 0
      %v4746 = vsel %vm1064, %v4709, 0
      %v4749 = vsel %vm1064, %v4711, 0
      %v4752 = vsel %vm1064, %v4713, 0
      %v4755 = vsel %vm1064, %v4715, 0
      %v4758 = vsel %vm1064, %v4717, 0
      %v4761 = vsel %vm1064, %v4719, 0
      %v4764 = vsel %vm1064, %v4721, 0
      %v4767 = vsel %vm1064, %v4723, 0
      %v4770 = vsel %vm1064, %v4725, 0
      %v4773 = vsel %vm1064, %v4727, 0
      %v4776 = vsel %vm1064, %v4729, 0
      %4778 = vmatprep.subr.bf16.mxu0 0
      %4779 = vmatpush1.bf16.xpose.msra.mxu0 %v4755
      %4780 = vmatprep.subr.bf16.mxu0 0
      %4781 = vmatpush1.bf16.xpose.msra.mxu0 %v4758
      %4782 = vmatprep.subr.bf16.mxu0 0
      %4783 = vmatpush1.bf16.xpose.msra.mxu0 %v4761
      %4784 = vmatprep.subr.bf16.mxu0 0
      %4785 = vmatpush1.bf16.xpose.msra.mxu0 %v4764
      %4786 = vmatprep.subr.bf16.mxu0 0
      %4787 = vmatpush1.bf16.xpose.msra.mxu0 %v4767
      %4788 = vmatprep.subr.bf16.mxu0 0
      %4789 = vmatpush1.bf16.xpose.msra.mxu0 %v4770
      %4790 = vmatprep.subr.bf16.mxu0 0
      %4791 = vmatpush1.bf16.xpose.msra.mxu0 %v4773
      %4792 = vmatprep.subr.bf16.mxu0 0
      %4793 = vmatpush1.bf16.xpose.msra.mxu0 %v4776
      %4794 = vmatprep.subr.bf16.mxu0 0
      %4795 = vmatpush1.bf16.xpose.msra.mxu0 0
      %4796 = vmatprep.subr.bf16.mxu0 0
      %4797 = vmatpush1.bf16.xpose.msra.mxu0 0
      %4798 = vmatprep.subr.bf16.mxu0 0
      %4799 = vmatpush1.bf16.xpose.msra.mxu0 0
      %4800 = vmatprep.subr.bf16.mxu0 0
      %4801 = vmatpush1.bf16.xpose.msra.mxu0 0
      %4802 = vmatprep.subr.bf16.mxu0 0
      %4803 = vmatpush1.bf16.xpose.msra.mxu0 0
      %4804 = vmatprep.subr.bf16.mxu0 0
      %4805 = vmatpush1.bf16.xpose.msra.mxu0 0
      %4806 = vmatprep.subr.bf16.mxu0 0
      %4807 = vmatpush1.bf16.xpose.msra.mxu0 0
      %4808 = vmatprep.subr.bf16.mxu0 0
      %4809 = vmatpush1.bf16.xpose.msra.mxu0 0
      %4810 = vmatprep.mubr.bf16.mxu0 0
      %4811 = vmatmul.mubr.bf16.gmra.mrb[0].mxu0 %v4731
      %v4812 = vpop.f32.mrb[0].mxu0
      %v4813 = vadd.f32 0.0, %v4812
      %v4814 = vpop.f32.mrb[0].mxu0
      %v4815 = vpop.f32.mrb[0].mxu0
      %v4816 = vadd.f32 0.0, %v4815
      %v4817 = vpop.f32.mrb[0].mxu0
      %4818 = vmatprep.mubr.bf16.mxu0 0
      %4819 = vmatmul.mubr.bf16.gmra.mrb[0].mxu0 %v4734
      %v4820 = vpop.f32.mrb[0].mxu0
      %v4821 = vadd.f32 0.0, %v4820
      %v4822 = vpop.f32.mrb[0].mxu0
      %v4823 = vpop.f32.mrb[0].mxu0
      %v4824 = vadd.f32 0.0, %v4823
      %v4825 = vpop.f32.mrb[0].mxu0
      %4826 = vmatprep.mubr.bf16.mxu0 0
      %4827 = vmatmul.mubr.bf16.gmra.mrb[0].mxu0 %v4737
      %v4828 = vpop.f32.mrb[0].mxu0
      %v4829 = vadd.f32 0.0, %v4828
      %v4830 = vpop.f32.mrb[0].mxu0
      %v4831 = vpop.f32.mrb[0].mxu0
      %v4832 = vadd.f32 0.0, %v4831
      %v4833 = vpop.f32.mrb[0].mxu0
      %4834 = vmatprep.mubr.bf16.mxu0 0
      %4835 = vmatmul.mubr.bf16.gmra.mrb[0].mxu0 %v4740
      %v4836 = vpop.f32.mrb[0].mxu0
      %v4837 = vadd.f32 0.0, %v4836
      %v4838 = vpop.f32.mrb[0].mxu0
      %v4839 = vpop.f32.mrb[0].mxu0
      %v4840 = vadd.f32 0.0, %v4839
      %v4841 = vpop.f32.mrb[0].mxu0
      %4842 = vmatprep.mubr.bf16.mxu0 0
      %4843 = vmatmul.mubr.bf16.gmra.mrb[0].mxu0 %v4743
      %v4844 = vpop.f32.mrb[0].mxu0
      %v4845 = vadd.f32 0.0, %v4844
      %v4846 = vpop.f32.mrb[0].mxu0
      %v4847 = vpop.f32.mrb[0].mxu0
      %v4848 = vadd.f32 0.0, %v4847
      %v4849 = vpop.f32.mrb[0].mxu0
      %4850 = vmatprep.mubr.bf16.mxu0 0
      %4851 = vmatmul.mubr.bf16.gmra.mrb[0].mxu0 %v4746
      %v4852 = vpop.f32.mrb[0].mxu0
      %v4853 = vadd.f32 0.0, %v4852
      %v4854 = vpop.f32.mrb[0].mxu0
      %v4855 = vpop.f32.mrb[0].mxu0
      %v4856 = vadd.f32 0.0, %v4855
      %v4857 = vpop.f32.mrb[0].mxu0
      %4858 = vmatprep.mubr.bf16.mxu0 0
      %4859 = vmatmul.mubr.bf16.gmra.mrb[0].mxu0 %v4749
      %v4860 = vpop.f32.mrb[0].mxu0
      %v4861 = vadd.f32 0.0, %v4860
      %v4862 = vpop.f32.mrb[0].mxu0
      %v4863 = vpop.f32.mrb[0].mxu0
      %v4864 = vadd.f32 0.0, %v4863
      %v4865 = vpop.f32.mrb[0].mxu0
      %4866 = vmatprep.mubr.bf16.mxu0 0
      %4867 = vmatmul.mubr.bf16.gmra.mrb[0].mxu0 %v4752
      %v4868 = vpop.f32.mrb[0].mxu0
      %v4869 = vadd.f32 0.0, %v4868
      %v4870 = vpop.f32.mrb[0].mxu0
      %v4871 = vpop.f32.mrb[0].mxu0
      %v4872 = vadd.f32 0.0, %v4871
      %v4873 = vpop.f32.mrb[0].mxu0
      %4874 = vdwg.mxu0
      %v4875 = vmul.f32 %v4813, 0.35355338
      %v4876 = vmul.f32 %v4816, 0.35355338
      %v4877 = vmul.f32 %v4821, 0.35355338
      %v4878 = vmul.f32 %v4824, 0.35355338
      %v4879 = vmul.f32 %v4829, 0.35355338
      %v4880 = vmul.f32 %v4832, 0.35355338
      %v4881 = vmul.f32 %v4837, 0.35355338
      %v4882 = vmul.f32 %v4840, 0.35355338
      %v4883 = vmul.f32 %v4845, 0.35355338
      %v4884 = vmul.f32 %v4848, 0.35355338
      %v4885 = vmul.f32 %v4853, 0.35355338
      %v4886 = vmul.f32 %v4856, 0.35355338
      %v4887 = vmul.f32 %v4861, 0.35355338
      %v4888 = vmul.f32 %v4864, 0.35355338
      %v4889 = vmul.f32 %v4869, 0.35355338
      %v4890 = vmul.f32 %v4872, 0.35355338
      %v4891 = vadd.f32 %v4875, %v1230
      %v4892 = vadd.f32 %v4876, %v1230
      %v4893 = vadd.f32 %v4877, %v1230
      %v4894 = vadd.f32 %v4878, %v1230
      %v4895 = vadd.f32 %v4879, %v1230
      %v4896 = vadd.f32 %v4880, %v1230
      %v4897 = vadd.f32 %v4881, %v1230
      %v4898 = vadd.f32 %v4882, %v1230
      %v4899 = vadd.f32 %v4883, %v1230
      %v4900 = vadd.f32 %v4884, %v1230
      %v4901 = vadd.f32 %v4885, %v1230
      %v4902 = vadd.f32 %v4886, %v1230
      %v4903 = vadd.f32 %v4887, %v1230
      %v4904 = vadd.f32 %v4888, %v1230
      %v4905 = vadd.f32 %v4889, %v1230
      %v4906 = vadd.f32 %v4890, %v1230
      %v4907 = vmul.f32 %v4891, 1.442695
      %v4908 = vpow.pop %v4907
      %v4909 = vmul.f32 %v4892, 1.442695
      %v4910 = vpow.pop %v4909
      %v4911 = vmul.f32 %v4893, 1.442695
      %v4912 = vpow.pop %v4911
      %v4913 = vmul.f32 %v4894, 1.442695
      %v4914 = vpow.pop %v4913
      %v4915 = vmul.f32 %v4895, 1.442695
      %v4916 = vpow.pop %v4915
      %v4917 = vmul.f32 %v4896, 1.442695
      %v4918 = vpow.pop %v4917
      %v4919 = vmul.f32 %v4897, 1.442695
      %v4920 = vpow.pop %v4919
      %v4921 = vmul.f32 %v4898, 1.442695
      %v4922 = vpow.pop %v4921
      %v4923 = vmul.f32 %v4899, 1.442695
      %v4924 = vpow.pop %v4923
      %v4925 = vmul.f32 %v4900, 1.442695
      %v4926 = vpow.pop %v4925
      %v4927 = vmul.f32 %v4901, 1.442695
      %v4928 = vpow.pop %v4927
      %v4929 = vmul.f32 %v4902, 1.442695
      %v4930 = vpow.pop %v4929
      %v4931 = vmul.f32 %v4903, 1.442695
      %v4932 = vpow.pop %v4931
      %v4933 = vmul.f32 %v4904, 1.442695
      %v4934 = vpow.pop %v4933
      %v4935 = vmul.f32 %v4905, 1.442695
      %v4936 = vpow.pop %v4935
      %v4937 = vmul.f32 %v4906, 1.442695
      %v4938 = vpow.pop %v4937
      %4939 = vadd.xlane.f32.xlu0 %v4908
      %v4940 = vpop.xlane.xlu0 %4939
      %4941 = vadd.xlane.f32.xlu0 %v4910
      %v4942 = vpop.xlane.xlu0 %4941
      %4943 = vadd.xlane.f32.xlu0 %v4912
      %v4944 = vpop.xlane.xlu0 %4943
      %4945 = vadd.xlane.f32.xlu0 %v4914
      %v4946 = vpop.xlane.xlu0 %4945
      %4947 = vadd.xlane.f32.xlu0 %v4916
      %v4948 = vpop.xlane.xlu0 %4947
      %4949 = vadd.xlane.f32.xlu0 %v4918
      %v4950 = vpop.xlane.xlu0 %4949
      %4951 = vadd.xlane.f32.xlu0 %v4920
      %v4952 = vpop.xlane.xlu0 %4951
      %4953 = vadd.xlane.f32.xlu0 %v4922
      %v4954 = vpop.xlane.xlu0 %4953
      %4955 = vadd.xlane.f32.xlu0 %v4924
      %v4956 = vpop.xlane.xlu0 %4955
      %4957 = vadd.xlane.f32.xlu0 %v4926
      %v4958 = vpop.xlane.xlu0 %4957
      %4959 = vadd.xlane.f32.xlu0 %v4928
      %v4960 = vpop.xlane.xlu0 %4959
      %4961 = vadd.xlane.f32.xlu0 %v4930
      %v4962 = vpop.xlane.xlu0 %4961
      %4963 = vadd.xlane.f32.xlu0 %v4932
      %v4964 = vpop.xlane.xlu0 %4963
      %4965 = vadd.xlane.f32.xlu0 %v4934
      %v4966 = vpop.xlane.xlu0 %4965
      %4967 = vadd.xlane.f32.xlu0 %v4936
      %v4968 = vpop.xlane.xlu0 %4967
      %4969 = vadd.xlane.f32.xlu0 %v4938
      %v4970 = vpop.xlane.xlu0 %4969
      %v4971 = vrcp.pop %v4940
      %v4972 = vrcp.pop %v4942
      %v4973 = vrcp.pop %v4944
      %v4974 = vrcp.pop %v4946
      %v4975 = vrcp.pop %v4948
      %v4976 = vrcp.pop %v4950
      %v4977 = vrcp.pop %v4952
      %v4978 = vrcp.pop %v4954
      %v4979 = vrcp.pop %v4956
      %v4980 = vrcp.pop %v4958
      %v4981 = vrcp.pop %v4960
      %v4982 = vrcp.pop %v4962
      %v4983 = vrcp.pop %v4964
      %v4984 = vrcp.pop %v4966
      %v4985 = vrcp.pop %v4968
      %v4986 = vrcp.pop %v4970
      %v4987 = vmul.f32 %v4908, %v4971
      %v4988 = vmul.f32 %v4910, %v4972
      %v4989 = vmul.f32 %v4912, %v4973
      %v4990 = vmul.f32 %v4914, %v4974
      %v4991 = vmul.f32 %v4916, %v4975
      %v4992 = vmul.f32 %v4918, %v4976
      %v4993 = vmul.f32 %v4920, %v4977
      %v4994 = vmul.f32 %v4922, %v4978
      %v4995 = vmul.f32 %v4924, %v4979
      %v4996 = vmul.f32 %v4926, %v4980
      %v4997 = vmul.f32 %v4928, %v4981
      %v4998 = vmul.f32 %v4930, %v4982
      %v4999 = vmul.f32 %v4932, %v4983
      %v5000 = vmul.f32 %v4934, %v4984
      %v5001 = vmul.f32 %v4936, %v4985
      %v5002 = vmul.f32 %v4938, %v4986
      %v5003 = vpack.c.bf16 %v4988, %v4987
      %v5004 = vpack.c.bf16 %v4990, %v4989
      %v5005 = vpack.c.bf16 %v4992, %v4991
      %v5006 = vpack.c.bf16 %v4994, %v4993
      %v5007 = vpack.c.bf16 %v4996, %v4995
      %v5008 = vpack.c.bf16 %v4998, %v4997
      %v5009 = vpack.c.bf16 %v5000, %v4999
      %v5010 = vpack.c.bf16 %v5002, %v5001
      %5011 = vrot.lane.b32.xlu0 %v4256, 56
      %v5012 = vpop.permute.xlu0 %5011
      %5013 = vrot.lane.b32.xlu0 %v4257, 56
      %v5014 = vpop.permute.xlu0 %5013
      %5015 = vrot.lane.b32.xlu0 %v4258, 56
      %v5016 = vpop.permute.xlu0 %5015
      %5017 = vrot.lane.b32.xlu0 %v4259, 56
      %v5018 = vpop.permute.xlu0 %5017
      %5019 = vrot.lane.b32.xlu0 %v4260, 56
      %v5020 = vpop.permute.xlu0 %5019
      %5021 = vrot.lane.b32.xlu0 %v4261, 56
      %v5022 = vpop.permute.xlu0 %5021
      %5023 = vrot.lane.b32.xlu0 %v4262, 56
      %v5024 = vpop.permute.xlu0 %5023
      %5025 = vrot.lane.b32.xlu0 %v4263, 56
      %v5026 = vpop.permute.xlu0 %5025
      %5035 = vmatprep.subr.bf16.mxu0 0
      %5036 = vmatpush1.bf16.msra.mxu0 %v5012
      %5037 = vmatprep.subr.bf16.mxu0 0
      %5038 = vmatpush1.bf16.msra.mxu0 %v5014
      %5039 = vmatprep.subr.bf16.mxu0 0
      %5040 = vmatpush1.bf16.msra.mxu0 %v5016
      %5041 = vmatprep.subr.bf16.mxu0 0
      %5042 = vmatpush1.bf16.msra.mxu0 %v5018
      %5043 = vmatprep.subr.bf16.mxu0 0
      %5044 = vmatpush1.bf16.msra.mxu0 %v5020
      %5045 = vmatprep.subr.bf16.mxu0 0
      %5046 = vmatpush1.bf16.msra.mxu0 %v5022
      %5047 = vmatprep.subr.bf16.mxu0 0
      %5048 = vmatpush1.bf16.msra.mxu0 %v5024
      %5049 = vmatprep.subr.bf16.mxu0 0
      %5050 = vmatpush1.bf16.msra.mxu0 %v5026
      %5051 = vmatprep.subr.bf16.mxu0 0
      %5052 = vmatpush1.bf16.msra.mxu0 0
      %5053 = vmatprep.subr.bf16.mxu0 0
      %5054 = vmatpush1.bf16.msra.mxu0 0
      %5055 = vmatprep.subr.bf16.mxu0 0
      %5056 = vmatpush1.bf16.msra.mxu0 0
      %5057 = vmatprep.subr.bf16.mxu0 0
      %5058 = vmatpush1.bf16.msra.mxu0 0
      %5059 = vmatprep.subr.bf16.mxu0 0
      %5060 = vmatpush1.bf16.msra.mxu0 0
      %5061 = vmatprep.subr.bf16.mxu0 0
      %5062 = vmatpush1.bf16.msra.mxu0 0
      %5063 = vmatprep.subr.bf16.mxu0 0
      %5064 = vmatpush1.bf16.msra.mxu0 0
      %5065 = vmatprep.subr.bf16.mxu0 0
      %5066 = vmatpush1.bf16.msra.mxu0 0
      %5067 = vmatprep.mubr.bf16.mxu0 0
      %5068 = vmatmul.mubr.bf16.gmra.mrb[0].mxu0 %v5003
      %v5069 = vpop.f32.mrb[0].mxu0
      %v5070 = vadd.f32 0.0, %v5069
      %v5071 = vpop.f32.mrb[0].mxu0
      %v5072 = vpop.f32.mrb[0].mxu0
      %v5073 = vadd.f32 0.0, %v5072
      %v5074 = vpop.f32.mrb[0].mxu0
      %5075 = vmatprep.mubr.bf16.mxu0 0
      %5076 = vmatmul.mubr.bf16.gmra.mrb[0].mxu0 %v5004
      %v5077 = vpop.f32.mrb[0].mxu0
      %v5078 = vadd.f32 0.0, %v5077
      %v5079 = vpop.f32.mrb[0].mxu0
      %v5080 = vpop.f32.mrb[0].mxu0
      %v5081 = vadd.f32 0.0, %v5080
      %v5082 = vpop.f32.mrb[0].mxu0
      %5083 = vmatprep.mubr.bf16.mxu0 0
      %5084 = vmatmul.mubr.bf16.gmra.mrb[0].mxu0 %v5005
      %v5085 = vpop.f32.mrb[0].mxu0
      %v5086 = vadd.f32 0.0, %v5085
      %v5087 = vpop.f32.mrb[0].mxu0
      %v5088 = vpop.f32.mrb[0].mxu0
      %v5089 = vadd.f32 0.0, %v5088
      %v5090 = vpop.f32.mrb[0].mxu0
      %5091 = vmatprep.mubr.bf16.mxu0 0
      %5092 = vmatmul.mubr.bf16.gmra.mrb[0].mxu0 %v5006
      %v5093 = vpop.f32.mrb[0].mxu0
      %v5094 = vadd.f32 0.0, %v5093
      %v5095 = vpop.f32.mrb[0].mxu0
      %v5096 = vpop.f32.mrb[0].mxu0
      %v5097 = vadd.f32 0.0, %v5096
      %v5098 = vpop.f32.mrb[0].mxu0
      %5099 = vmatprep.mubr.bf16.mxu0 0
      %5100 = vmatmul.mubr.bf16.gmra.mrb[0].mxu0 %v5007
      %v5101 = vpop.f32.mrb[0].mxu0
      %v5102 = vadd.f32 0.0, %v5101
      %v5103 = vpop.f32.mrb[0].mxu0
      %v5104 = vpop.f32.mrb[0].mxu0
      %v5105 = vadd.f32 0.0, %v5104
      %v5106 = vpop.f32.mrb[0].mxu0
      %5107 = vmatprep.mubr.bf16.mxu0 0
      %5108 = vmatmul.mubr.bf16.gmra.mrb[0].mxu0 %v5008
      %v5109 = vpop.f32.mrb[0].mxu0
      %v5110 = vadd.f32 0.0, %v5109
      %v5111 = vpop.f32.mrb[0].mxu0
      %v5112 = vpop.f32.mrb[0].mxu0
      %v5113 = vadd.f32 0.0, %v5112
      %v5114 = vpop.f32.mrb[0].mxu0
      %5115 = vmatprep.mubr.bf16.mxu0 0
      %5116 = vmatmul.mubr.bf16.gmra.mrb[0].mxu0 %v5009
      %v5117 = vpop.f32.mrb[0].mxu0
      %v5118 = vadd.f32 0.0, %v5117
      %v5119 = vpop.f32.mrb[0].mxu0
      %v5120 = vpop.f32.mrb[0].mxu0
      %v5121 = vadd.f32 0.0, %v5120
      %v5122 = vpop.f32.mrb[0].mxu0
      %5123 = vmatprep.mubr.bf16.mxu0 0
      %5124 = vmatmul.mubr.bf16.gmra.mrb[0].mxu0 %v5010
      %v5125 = vpop.f32.mrb[0].mxu0
      %v5126 = vadd.f32 0.0, %v5125
      %v5127 = vpop.f32.mrb[0].mxu0
      %v5128 = vpop.f32.mrb[0].mxu0
      %v5129 = vadd.f32 0.0, %v5128
      %v5130 = vpop.f32.mrb[0].mxu0
      %5131 = vdwg.mxu0
      %v5132 = vpack.c.bf16 %v5073, %v5070
      %v5133 = vpack.c.bf16 %v5081, %v5078
      %v5134 = vpack.c.bf16 %v5089, %v5086
      %v5135 = vpack.c.bf16 %v5097, %v5094
      %v5136 = vpack.c.bf16 %v5105, %v5102
      %v5137 = vpack.c.bf16 %v5113, %v5110
      %v5138 = vpack.c.bf16 %v5121, %v5118
      %v5139 = vpack.c.bf16 %v5129, %v5126
      %5140 = vrot.lane.b32.xlu0 %v4256, 112
      %v5141 = vpop.permute.xlu0 %5140
      %5142 = vrot.lane.b32.xlu0 %v4257, 112
      %v5143 = vpop.permute.xlu0 %5142
      %5144 = vrot.lane.b32.xlu0 %v4258, 112
      %v5145 = vpop.permute.xlu0 %5144
      %5146 = vrot.lane.b32.xlu0 %v4259, 112
      %v5147 = vpop.permute.xlu0 %5146
      %5148 = vrot.lane.b32.xlu0 %v4260, 112
      %v5149 = vpop.permute.xlu0 %5148
      %5150 = vrot.lane.b32.xlu0 %v4261, 112
      %v5151 = vpop.permute.xlu0 %5150
      %5152 = vrot.lane.b32.xlu0 %v4262, 112
      %v5153 = vpop.permute.xlu0 %5152
      %5154 = vrot.lane.b32.xlu0 %v4263, 112
      %v5155 = vpop.permute.xlu0 %5154
      %5156 = vrot.lane.b32.xlu0 %v4256, 80
      %v5157 = vpop.permute.xlu0 %5156
      %5158 = vrot.lane.b32.xlu0 %v4257, 80
      %v5159 = vpop.permute.xlu0 %5158
      %5160 = vrot.lane.b32.xlu0 %v4258, 80
      %v5161 = vpop.permute.xlu0 %5160
      %5162 = vrot.lane.b32.xlu0 %v4259, 80
      %v5163 = vpop.permute.xlu0 %5162
      %5164 = vrot.lane.b32.xlu0 %v4260, 80
      %v5165 = vpop.permute.xlu0 %5164
      %5166 = vrot.lane.b32.xlu0 %v4261, 80
      %v5167 = vpop.permute.xlu0 %5166
      %5168 = vrot.lane.b32.xlu0 %v4262, 80
      %v5169 = vpop.permute.xlu0 %5168
      %5170 = vrot.lane.b32.xlu0 %v4263, 80
      %v5171 = vpop.permute.xlu0 %5170
      %v5173 = vsel %vm1064, %v5141, 0
      %v5176 = vsel %vm1064, %v5143, 0
      %v5179 = vsel %vm1064, %v5145, 0
      %v5182 = vsel %vm1064, %v5147, 0
      %v5185 = vsel %vm1064, %v5149, 0
      %v5188 = vsel %vm1064, %v5151, 0
      %v5191 = vsel %vm1064, %v5153, 0
      %v5194 = vsel %vm1064, %v5155, 0
      %v5197 = vsel %vm1064, %v5157, 0
      %v5200 = vsel %vm1064, %v5159, 0
      %v5203 = vsel %vm1064, %v5161, 0
      %v5206 = vsel %vm1064, %v5163, 0
      %v5209 = vsel %vm1064, %v5165, 0
      %v5212 = vsel %vm1064, %v5167, 0
      %v5215 = vsel %vm1064, %v5169, 0
      %v5218 = vsel %vm1064, %v5171, 0
      %5220 = vmatprep.subr.bf16.mxu0 0
      %5221 = vmatpush1.bf16.xpose.msra.mxu0 %v5197
      %5222 = vmatprep.subr.bf16.mxu0 0
      %5223 = vmatpush1.bf16.xpose.msra.mxu0 %v5200
      %5224 = vmatprep.subr.bf16.mxu0 0
      %5225 = vmatpush1.bf16.xpose.msra.mxu0 %v5203
      %5226 = vmatprep.subr.bf16.mxu0 0
      %5227 = vmatpush1.bf16.xpose.msra.mxu0 %v5206
      %5228 = vmatprep.subr.bf16.mxu0 0
      %5229 = vmatpush1.bf16.xpose.msra.mxu0 %v5209
      %5230 = vmatprep.subr.bf16.mxu0 0
      %5231 = vmatpush1.bf16.xpose.msra.mxu0 %v5212
      %5232 = vmatprep.subr.bf16.mxu0 0
      %5233 = vmatpush1.bf16.xpose.msra.mxu0 %v5215
      %5234 = vmatprep.subr.bf16.mxu0 0
      %5235 = vmatpush1.bf16.xpose.msra.mxu0 %v5218
      %5236 = vmatprep.subr.bf16.mxu0 0
      %5237 = vmatpush1.bf16.xpose.msra.mxu0 0
      %5238 = vmatprep.subr.bf16.mxu0 0
      %5239 = vmatpush1.bf16.xpose.msra.mxu0 0
      %5240 = vmatprep.subr.bf16.mxu0 0
      %5241 = vmatpush1.bf16.xpose.msra.mxu0 0
      %5242 = vmatprep.subr.bf16.mxu0 0
      %5243 = vmatpush1.bf16.xpose.msra.mxu0 0
      %5244 = vmatprep.subr.bf16.mxu0 0
      %5245 = vmatpush1.bf16.xpose.msra.mxu0 0
      %5246 = vmatprep.subr.bf16.mxu0 0
      %5247 = vmatpush1.bf16.xpose.msra.mxu0 0
      %5248 = vmatprep.subr.bf16.mxu0 0
      %5249 = vmatpush1.bf16.xpose.msra.mxu0 0
      %5250 = vmatprep.subr.bf16.mxu0 0
      %5251 = vmatpush1.bf16.xpose.msra.mxu0 0
      %5252 = vmatprep.mubr.bf16.mxu0 0
      %5253 = vmatmul.mubr.bf16.gmra.mrb[0].mxu0 %v5173
      %v5254 = vpop.f32.mrb[0].mxu0
      %v5255 = vadd.f32 0.0, %v5254
      %v5256 = vpop.f32.mrb[0].mxu0
      %v5257 = vpop.f32.mrb[0].mxu0
      %v5258 = vadd.f32 0.0, %v5257
      %v5259 = vpop.f32.mrb[0].mxu0
      %5260 = vmatprep.mubr.bf16.mxu0 0
      %5261 = vmatmul.mubr.bf16.gmra.mrb[0].mxu0 %v5176
      %v5262 = vpop.f32.mrb[0].mxu0
      %v5263 = vadd.f32 0.0, %v5262
      %v5264 = vpop.f32.mrb[0].mxu0
      %v5265 = vpop.f32.mrb[0].mxu0
      %v5266 = vadd.f32 0.0, %v5265
      %v5267 = vpop.f32.mrb[0].mxu0
      %5268 = vmatprep.mubr.bf16.mxu0 0
      %5269 = vmatmul.mubr.bf16.gmra.mrb[0].mxu0 %v5179
      %v5270 = vpop.f32.mrb[0].mxu0
      %v5271 = vadd.f32 0.0, %v5270
      %v5272 = vpop.f32.mrb[0].mxu0
      %v5273 = vpop.f32.mrb[0].mxu0
      %v5274 = vadd.f32 0.0, %v5273
      %v5275 = vpop.f32.mrb[0].mxu0
      %5276 = vmatprep.mubr.bf16.mxu0 0
      %5277 = vmatmul.mubr.bf16.gmra.mrb[0].mxu0 %v5182
      %v5278 = vpop.f32.mrb[0].mxu0
      %v5279 = vadd.f32 0.0, %v5278
      %v5280 = vpop.f32.mrb[0].mxu0
      %v5281 = vpop.f32.mrb[0].mxu0
      %v5282 = vadd.f32 0.0, %v5281
      %v5283 = vpop.f32.mrb[0].mxu0
      %5284 = vmatprep.mubr.bf16.mxu0 0
      %5285 = vmatmul.mubr.bf16.gmra.mrb[0].mxu0 %v5185
      %v5286 = vpop.f32.mrb[0].mxu0
      %v5287 = vadd.f32 0.0, %v5286
      %v5288 = vpop.f32.mrb[0].mxu0
      %v5289 = vpop.f32.mrb[0].mxu0
      %v5290 = vadd.f32 0.0, %v5289
      %v5291 = vpop.f32.mrb[0].mxu0
      %5292 = vmatprep.mubr.bf16.mxu0 0
      %5293 = vmatmul.mubr.bf16.gmra.mrb[0].mxu0 %v5188
      %v5294 = vpop.f32.mrb[0].mxu0
      %v5295 = vadd.f32 0.0, %v5294
      %v5296 = vpop.f32.mrb[0].mxu0
      %v5297 = vpop.f32.mrb[0].mxu0
      %v5298 = vadd.f32 0.0, %v5297
      %v5299 = vpop.f32.mrb[0].mxu0
      %5300 = vmatprep.mubr.bf16.mxu0 0
      %5301 = vmatmul.mubr.bf16.gmra.mrb[0].mxu0 %v5191
      %v5302 = vpop.f32.mrb[0].mxu0
      %v5303 = vadd.f32 0.0, %v5302
      %v5304 = vpop.f32.mrb[0].mxu0
      %v5305 = vpop.f32.mrb[0].mxu0
      %v5306 = vadd.f32 0.0, %v5305
      %v5307 = vpop.f32.mrb[0].mxu0
      %5308 = vmatprep.mubr.bf16.mxu0 0
      %5309 = vmatmul.mubr.bf16.gmra.mrb[0].mxu0 %v5194
      %v5310 = vpop.f32.mrb[0].mxu0
      %v5311 = vadd.f32 0.0, %v5310
      %v5312 = vpop.f32.mrb[0].mxu0
      %v5313 = vpop.f32.mrb[0].mxu0
      %v5314 = vadd.f32 0.0, %v5313
      %v5315 = vpop.f32.mrb[0].mxu0
      %5316 = vdwg.mxu0
      %v5317 = vmul.f32 %v5255, 0.35355338
      %v5318 = vmul.f32 %v5258, 0.35355338
      %v5319 = vmul.f32 %v5263, 0.35355338
      %v5320 = vmul.f32 %v5266, 0.35355338
      %v5321 = vmul.f32 %v5271, 0.35355338
      %v5322 = vmul.f32 %v5274, 0.35355338
      %v5323 = vmul.f32 %v5279, 0.35355338
      %v5324 = vmul.f32 %v5282, 0.35355338
      %v5325 = vmul.f32 %v5287, 0.35355338
      %v5326 = vmul.f32 %v5290, 0.35355338
      %v5327 = vmul.f32 %v5295, 0.35355338
      %v5328 = vmul.f32 %v5298, 0.35355338
      %v5329 = vmul.f32 %v5303, 0.35355338
      %v5330 = vmul.f32 %v5306, 0.35355338
      %v5331 = vmul.f32 %v5311, 0.35355338
      %v5332 = vmul.f32 %v5314, 0.35355338
      %v5333 = vadd.f32 %v5317, %v1230
      %v5334 = vadd.f32 %v5318, %v1230
      %v5335 = vadd.f32 %v5319, %v1230
      %v5336 = vadd.f32 %v5320, %v1230
      %v5337 = vadd.f32 %v5321, %v1230
      %v5338 = vadd.f32 %v5322, %v1230
      %v5339 = vadd.f32 %v5323, %v1230
      %v5340 = vadd.f32 %v5324, %v1230
      %v5341 = vadd.f32 %v5325, %v1230
      %v5342 = vadd.f32 %v5326, %v1230
      %v5343 = vadd.f32 %v5327, %v1230
      %v5344 = vadd.f32 %v5328, %v1230
      %v5345 = vadd.f32 %v5329, %v1230
      %v5346 = vadd.f32 %v5330, %v1230
      %v5347 = vadd.f32 %v5331, %v1230
      %v5348 = vadd.f32 %v5332, %v1230
      %v5349 = vmul.f32 %v5333, 1.442695
      %v5350 = vpow.pop %v5349
      %v5351 = vmul.f32 %v5334, 1.442695
      %v5352 = vpow.pop %v5351
      %v5353 = vmul.f32 %v5335, 1.442695
      %v5354 = vpow.pop %v5353
      %v5355 = vmul.f32 %v5336, 1.442695
      %v5356 = vpow.pop %v5355
      %v5357 = vmul.f32 %v5337, 1.442695
      %v5358 = vpow.pop %v5357
      %v5359 = vmul.f32 %v5338, 1.442695
      %v5360 = vpow.pop %v5359
      %v5361 = vmul.f32 %v5339, 1.442695
      %v5362 = vpow.pop %v5361
      %v5363 = vmul.f32 %v5340, 1.442695
      %v5364 = vpow.pop %v5363
      %v5365 = vmul.f32 %v5341, 1.442695
      %v5366 = vpow.pop %v5365
      %v5367 = vmul.f32 %v5342, 1.442695
      %v5368 = vpow.pop %v5367
      %v5369 = vmul.f32 %v5343, 1.442695
      %v5370 = vpow.pop %v5369
      %v5371 = vmul.f32 %v5344, 1.442695
      %v5372 = vpow.pop %v5371
      %v5373 = vmul.f32 %v5345, 1.442695
      %v5374 = vpow.pop %v5373
      %v5375 = vmul.f32 %v5346, 1.442695
      %v5376 = vpow.pop %v5375
      %v5377 = vmul.f32 %v5347, 1.442695
      %v5378 = vpow.pop %v5377
      %v5379 = vmul.f32 %v5348, 1.442695
      %v5380 = vpow.pop %v5379
      %5381 = vadd.xlane.f32.xlu0 %v5350
      %v5382 = vpop.xlane.xlu0 %5381
      %5383 = vadd.xlane.f32.xlu0 %v5352
      %v5384 = vpop.xlane.xlu0 %5383
      %5385 = vadd.xlane.f32.xlu0 %v5354
      %v5386 = vpop.xlane.xlu0 %5385
      %5387 = vadd.xlane.f32.xlu0 %v5356
      %v5388 = vpop.xlane.xlu0 %5387
      %5389 = vadd.xlane.f32.xlu0 %v5358
      %v5390 = vpop.xlane.xlu0 %5389
      %5391 = vadd.xlane.f32.xlu0 %v5360
      %v5392 = vpop.xlane.xlu0 %5391
      %5393 = vadd.xlane.f32.xlu0 %v5362
      %v5394 = vpop.xlane.xlu0 %5393
      %5395 = vadd.xlane.f32.xlu0 %v5364
      %v5396 = vpop.xlane.xlu0 %5395
      %5397 = vadd.xlane.f32.xlu0 %v5366
      %v5398 = vpop.xlane.xlu0 %5397
      %5399 = vadd.xlane.f32.xlu0 %v5368
      %v5400 = vpop.xlane.xlu0 %5399
      %5401 = vadd.xlane.f32.xlu0 %v5370
      %v5402 = vpop.xlane.xlu0 %5401
      %5403 = vadd.xlane.f32.xlu0 %v5372
      %v5404 = vpop.xlane.xlu0 %5403
      %5405 = vadd.xlane.f32.xlu0 %v5374
      %v5406 = vpop.xlane.xlu0 %5405
      %5407 = vadd.xlane.f32.xlu0 %v5376
      %v5408 = vpop.xlane.xlu0 %5407
      %5409 = vadd.xlane.f32.xlu0 %v5378
      %v5410 = vpop.xlane.xlu0 %5409
      %5411 = vadd.xlane.f32.xlu0 %v5380
      %v5412 = vpop.xlane.xlu0 %5411
      %v5413 = vrcp.pop %v5382
      %v5414 = vrcp.pop %v5384
      %v5415 = vrcp.pop %v5386
      %v5416 = vrcp.pop %v5388
      %v5417 = vrcp.pop %v5390
      %v5418 = vrcp.pop %v5392
      %v5419 = vrcp.pop %v5394
      %v5420 = vrcp.pop %v5396
      %v5421 = vrcp.pop %v5398
      %v5422 = vrcp.pop %v5400
      %v5423 = vrcp.pop %v5402
      %v5424 = vrcp.pop %v5404
      %v5425 = vrcp.pop %v5406
      %v5426 = vrcp.pop %v5408
      %v5427 = vrcp.pop %v5410
      %v5428 = vrcp.pop %v5412
      %v5429 = vmul.f32 %v5350, %v5413
      %v5430 = vmul.f32 %v5352, %v5414
      %v5431 = vmul.f32 %v5354, %v5415
      %v5432 = vmul.f32 %v5356, %v5416
      %v5433 = vmul.f32 %v5358, %v5417
      %v5434 = vmul.f32 %v5360, %v5418
      %v5435 = vmul.f32 %v5362, %v5419
      %v5436 = vmul.f32 %v5364, %v5420
      %v5437 = vmul.f32 %v5366, %v5421
      %v5438 = vmul.f32 %v5368, %v5422
      %v5439 = vmul.f32 %v5370, %v5423
      %v5440 = vmul.f32 %v5372, %v5424
      %v5441 = vmul.f32 %v5374, %v5425
      %v5442 = vmul.f32 %v5376, %v5426
      %v5443 = vmul.f32 %v5378, %v5427
      %v5444 = vmul.f32 %v5380, %v5428
      %v5445 = vpack.c.bf16 %v5430, %v5429
      %v5446 = vpack.c.bf16 %v5432, %v5431
      %v5447 = vpack.c.bf16 %v5434, %v5433
      %v5448 = vpack.c.bf16 %v5436, %v5435
      %v5449 = vpack.c.bf16 %v5438, %v5437
      %v5450 = vpack.c.bf16 %v5440, %v5439
      %v5451 = vpack.c.bf16 %v5442, %v5441
      %v5452 = vpack.c.bf16 %v5444, %v5443
      %5453 = vrot.lane.b32.xlu0 %v4256, 48
      %v5454 = vpop.permute.xlu0 %5453
      %5455 = vrot.lane.b32.xlu0 %v4257, 48
      %v5456 = vpop.permute.xlu0 %5455
      %5457 = vrot.lane.b32.xlu0 %v4258, 48
      %v5458 = vpop.permute.xlu0 %5457
      %5459 = vrot.lane.b32.xlu0 %v4259, 48
      %v5460 = vpop.permute.xlu0 %5459
      %5461 = vrot.lane.b32.xlu0 %v4260, 48
      %v5462 = vpop.permute.xlu0 %5461
      %5463 = vrot.lane.b32.xlu0 %v4261, 48
      %v5464 = vpop.permute.xlu0 %5463
      %5465 = vrot.lane.b32.xlu0 %v4262, 48
      %v5466 = vpop.permute.xlu0 %5465
      %5467 = vrot.lane.b32.xlu0 %v4263, 48
      %v5468 = vpop.permute.xlu0 %5467
      %5477 = vmatprep.subr.bf16.mxu0 0
      %5478 = vmatpush1.bf16.msra.mxu0 %v5454
      %5479 = vmatprep.subr.bf16.mxu0 0
      %5480 = vmatpush1.bf16.msra.mxu0 %v5456
      %5481 = vmatprep.subr.bf16.mxu0 0
      %5482 = vmatpush1.bf16.msra.mxu0 %v5458
      %5483 = vmatprep.subr.bf16.mxu0 0
      %5484 = vmatpush1.bf16.msra.mxu0 %v5460
      %5485 = vmatprep.subr.bf16.mxu0 0
      %5486 = vmatpush1.bf16.msra.mxu0 %v5462
      %5487 = vmatprep.subr.bf16.mxu0 0
      %5488 = vmatpush1.bf16.msra.mxu0 %v5464
      %5489 = vmatprep.subr.bf16.mxu0 0
      %5490 = vmatpush1.bf16.msra.mxu0 %v5466
      %5491 = vmatprep.subr.bf16.mxu0 0
      %5492 = vmatpush1.bf16.msra.mxu0 %v5468
      %5493 = vmatprep.subr.bf16.mxu0 0
      %5494 = vmatpush1.bf16.msra.mxu0 0
      %5495 = vmatprep.subr.bf16.mxu0 0
      %5496 = vmatpush1.bf16.msra.mxu0 0
      %5497 = vmatprep.subr.bf16.mxu0 0
      %5498 = vmatpush1.bf16.msra.mxu0 0
      %5499 = vmatprep.subr.bf16.mxu0 0
      %5500 = vmatpush1.bf16.msra.mxu0 0
      %5501 = vmatprep.subr.bf16.mxu0 0
      %5502 = vmatpush1.bf16.msra.mxu0 0
      %5503 = vmatprep.subr.bf16.mxu0 0
      %5504 = vmatpush1.bf16.msra.mxu0 0
      %5505 = vmatprep.subr.bf16.mxu0 0
      %5506 = vmatpush1.bf16.msra.mxu0 0
      %5507 = vmatprep.subr.bf16.mxu0 0
      %5508 = vmatpush1.bf16.msra.mxu0 0
      %5509 = vmatprep.mubr.bf16.mxu0 0
      %5510 = vmatmul.mubr.bf16.gmra.mrb[0].mxu0 %v5445
      %v5511 = vpop.f32.mrb[0].mxu0
      %v5512 = vadd.f32 0.0, %v5511
      %v5513 = vpop.f32.mrb[0].mxu0
      %v5514 = vpop.f32.mrb[0].mxu0
      %v5515 = vadd.f32 0.0, %v5514
      %v5516 = vpop.f32.mrb[0].mxu0
      %5517 = vmatprep.mubr.bf16.mxu0 0
      %5518 = vmatmul.mubr.bf16.gmra.mrb[0].mxu0 %v5446
      %v5519 = vpop.f32.mrb[0].mxu0
      %v5520 = vadd.f32 0.0, %v5519
      %v5521 = vpop.f32.mrb[0].mxu0
      %v5522 = vpop.f32.mrb[0].mxu0
      %v5523 = vadd.f32 0.0, %v5522
      %v5524 = vpop.f32.mrb[0].mxu0
      %5525 = vmatprep.mubr.bf16.mxu0 0
      %5526 = vmatmul.mubr.bf16.gmra.mrb[0].mxu0 %v5447
      %v5527 = vpop.f32.mrb[0].mxu0
      %v5528 = vadd.f32 0.0, %v5527
      %v5529 = vpop.f32.mrb[0].mxu0
      %v5530 = vpop.f32.mrb[0].mxu0
      %v5531 = vadd.f32 0.0, %v5530
      %v5532 = vpop.f32.mrb[0].mxu0
      %5533 = vmatprep.mubr.bf16.mxu0 0
      %5534 = vmatmul.mubr.bf16.gmra.mrb[0].mxu0 %v5448
      %v5535 = vpop.f32.mrb[0].mxu0
      %v5536 = vadd.f32 0.0, %v5535
      %v5537 = vpop.f32.mrb[0].mxu0
      %v5538 = vpop.f32.mrb[0].mxu0
      %v5539 = vadd.f32 0.0, %v5538
      %v5540 = vpop.f32.mrb[0].mxu0
      %5541 = vmatprep.mubr.bf16.mxu0 0
      %5542 = vmatmul.mubr.bf16.gmra.mrb[0].mxu0 %v5449
      %v5543 = vpop.f32.mrb[0].mxu0
      %v5544 = vadd.f32 0.0, %v5543
      %v5545 = vpop.f32.mrb[0].mxu0
      %v5546 = vpop.f32.mrb[0].mxu0
      %v5547 = vadd.f32 0.0, %v5546
      %v5548 = vpop.f32.mrb[0].mxu0
      %5549 = vmatprep.mubr.bf16.mxu0 0
      %5550 = vmatmul.mubr.bf16.gmra.mrb[0].mxu0 %v5450
      %v5551 = vpop.f32.mrb[0].mxu0
      %v5552 = vadd.f32 0.0, %v5551
      %v5553 = vpop.f32.mrb[0].mxu0
      %v5554 = vpop.f32.mrb[0].mxu0
      %v5555 = vadd.f32 0.0, %v5554
      %v5556 = vpop.f32.mrb[0].mxu0
      %5557 = vmatprep.mubr.bf16.mxu0 0
      %5558 = vmatmul.mubr.bf16.gmra.mrb[0].mxu0 %v5451
      %v5559 = vpop.f32.mrb[0].mxu0
      %v5560 = vadd.f32 0.0, %v5559
      %v5561 = vpop.f32.mrb[0].mxu0
      %v5562 = vpop.f32.mrb[0].mxu0
      %v5563 = vadd.f32 0.0, %v5562
      %v5564 = vpop.f32.mrb[0].mxu0
      %5565 = vmatprep.mubr.bf16.mxu0 0
      %5566 = vmatmul.mubr.bf16.gmra.mrb[0].mxu0 %v5452
      %v5567 = vpop.f32.mrb[0].mxu0
      %v5568 = vadd.f32 0.0, %v5567
      %v5569 = vpop.f32.mrb[0].mxu0
      %v5570 = vpop.f32.mrb[0].mxu0
      %v5571 = vadd.f32 0.0, %v5570
      %v5572 = vpop.f32.mrb[0].mxu0
      %5573 = vdwg.mxu0
      %v5574 = vpack.c.bf16 %v5515, %v5512
      %v5575 = vpack.c.bf16 %v5523, %v5520
      %v5576 = vpack.c.bf16 %v5531, %v5528
      %v5577 = vpack.c.bf16 %v5539, %v5536
      %v5578 = vpack.c.bf16 %v5547, %v5544
      %v5579 = vpack.c.bf16 %v5555, %v5552
      %v5580 = vpack.c.bf16 %v5563, %v5560
      %v5581 = vpack.c.bf16 %v5571, %v5568
      %5582 = vrot.lane.b32.xlu0 %v4256, 104
      %v5583 = vpop.permute.xlu0 %5582
      %5584 = vrot.lane.b32.xlu0 %v4257, 104
      %v5585 = vpop.permute.xlu0 %5584
      %5586 = vrot.lane.b32.xlu0 %v4258, 104
      %v5587 = vpop.permute.xlu0 %5586
      %5588 = vrot.lane.b32.xlu0 %v4259, 104
      %v5589 = vpop.permute.xlu0 %5588
      %5590 = vrot.lane.b32.xlu0 %v4260, 104
      %v5591 = vpop.permute.xlu0 %5590
      %5592 = vrot.lane.b32.xlu0 %v4261, 104
      %v5593 = vpop.permute.xlu0 %5592
      %5594 = vrot.lane.b32.xlu0 %v4262, 104
      %v5595 = vpop.permute.xlu0 %5594
      %5596 = vrot.lane.b32.xlu0 %v4263, 104
      %v5597 = vpop.permute.xlu0 %5596
      %5598 = vrot.lane.b32.xlu0 %v4256, 72
      %v5599 = vpop.permute.xlu0 %5598
      %5600 = vrot.lane.b32.xlu0 %v4257, 72
      %v5601 = vpop.permute.xlu0 %5600
      %5602 = vrot.lane.b32.xlu0 %v4258, 72
      %v5603 = vpop.permute.xlu0 %5602
      %5604 = vrot.lane.b32.xlu0 %v4259, 72
      %v5605 = vpop.permute.xlu0 %5604
      %5606 = vrot.lane.b32.xlu0 %v4260, 72
      %v5607 = vpop.permute.xlu0 %5606
      %5608 = vrot.lane.b32.xlu0 %v4261, 72
      %v5609 = vpop.permute.xlu0 %5608
      %5610 = vrot.lane.b32.xlu0 %v4262, 72
      %v5611 = vpop.permute.xlu0 %5610
      %5612 = vrot.lane.b32.xlu0 %v4263, 72
      %v5613 = vpop.permute.xlu0 %5612
      %v5615 = vsel %vm1064, %v5583, 0
      %v5618 = vsel %vm1064, %v5585, 0
      %v5621 = vsel %vm1064, %v5587, 0
      %v5624 = vsel %vm1064, %v5589, 0
      %v5627 = vsel %vm1064, %v5591, 0
      %v5630 = vsel %vm1064, %v5593, 0
      %v5633 = vsel %vm1064, %v5595, 0
      %v5636 = vsel %vm1064, %v5597, 0
      %v5639 = vsel %vm1064, %v5599, 0
      %v5642 = vsel %vm1064, %v5601, 0
      %v5645 = vsel %vm1064, %v5603, 0
      %v5648 = vsel %vm1064, %v5605, 0
      %v5651 = vsel %vm1064, %v5607, 0
      %v5654 = vsel %vm1064, %v5609, 0
      %v5657 = vsel %vm1064, %v5611, 0
      %v5660 = vsel %vm1064, %v5613, 0
      %5662 = vmatprep.subr.bf16.mxu0 0
      %5663 = vmatpush1.bf16.xpose.msra.mxu0 %v5639
      %5664 = vmatprep.subr.bf16.mxu0 0
      %5665 = vmatpush1.bf16.xpose.msra.mxu0 %v5642
      %5666 = vmatprep.subr.bf16.mxu0 0
      %5667 = vmatpush1.bf16.xpose.msra.mxu0 %v5645
      %5668 = vmatprep.subr.bf16.mxu0 0
      %5669 = vmatpush1.bf16.xpose.msra.mxu0 %v5648
      %5670 = vmatprep.subr.bf16.mxu0 0
      %5671 = vmatpush1.bf16.xpose.msra.mxu0 %v5651
      %5672 = vmatprep.subr.bf16.mxu0 0
      %5673 = vmatpush1.bf16.xpose.msra.mxu0 %v5654
      %5674 = vmatprep.subr.bf16.mxu0 0
      %5675 = vmatpush1.bf16.xpose.msra.mxu0 %v5657
      %5676 = vmatprep.subr.bf16.mxu0 0
      %5677 = vmatpush1.bf16.xpose.msra.mxu0 %v5660
      %5678 = vmatprep.subr.bf16.mxu0 0
      %5679 = vmatpush1.bf16.xpose.msra.mxu0 0
      %5680 = vmatprep.subr.bf16.mxu0 0
      %5681 = vmatpush1.bf16.xpose.msra.mxu0 0
      %5682 = vmatprep.subr.bf16.mxu0 0
      %5683 = vmatpush1.bf16.xpose.msra.mxu0 0
      %5684 = vmatprep.subr.bf16.mxu0 0
      %5685 = vmatpush1.bf16.xpose.msra.mxu0 0
      %5686 = vmatprep.subr.bf16.mxu0 0
      %5687 = vmatpush1.bf16.xpose.msra.mxu0 0
      %5688 = vmatprep.subr.bf16.mxu0 0
      %5689 = vmatpush1.bf16.xpose.msra.mxu0 0
      %5690 = vmatprep.subr.bf16.mxu0 0
      %5691 = vmatpush1.bf16.xpose.msra.mxu0 0
      %5692 = vmatprep.subr.bf16.mxu0 0
      %5693 = vmatpush1.bf16.xpose.msra.mxu0 0
      %5694 = vmatprep.mubr.bf16.mxu0 0
      %5695 = vmatmul.mubr.bf16.gmra.mrb[0].mxu0 %v5615
      %v5696 = vpop.f32.mrb[0].mxu0
      %v5697 = vadd.f32 0.0, %v5696
      %v5698 = vpop.f32.mrb[0].mxu0
      %v5699 = vpop.f32.mrb[0].mxu0
      %v5700 = vadd.f32 0.0, %v5699
      %v5701 = vpop.f32.mrb[0].mxu0
      %5702 = vmatprep.mubr.bf16.mxu0 0
      %5703 = vmatmul.mubr.bf16.gmra.mrb[0].mxu0 %v5618
      %v5704 = vpop.f32.mrb[0].mxu0
      %v5705 = vadd.f32 0.0, %v5704
      %v5706 = vpop.f32.mrb[0].mxu0
      %v5707 = vpop.f32.mrb[0].mxu0
      %v5708 = vadd.f32 0.0, %v5707
      %v5709 = vpop.f32.mrb[0].mxu0
      %5710 = vmatprep.mubr.bf16.mxu0 0
      %5711 = vmatmul.mubr.bf16.gmra.mrb[0].mxu0 %v5621
      %v5712 = vpop.f32.mrb[0].mxu0
      %v5713 = vadd.f32 0.0, %v5712
      %v5714 = vpop.f32.mrb[0].mxu0
      %v5715 = vpop.f32.mrb[0].mxu0
      %v5716 = vadd.f32 0.0, %v5715
      %v5717 = vpop.f32.mrb[0].mxu0
      %5718 = vmatprep.mubr.bf16.mxu0 0
      %5719 = vmatmul.mubr.bf16.gmra.mrb[0].mxu0 %v5624
      %v5720 = vpop.f32.mrb[0].mxu0
      %v5721 = vadd.f32 0.0, %v5720
      %v5722 = vpop.f32.mrb[0].mxu0
      %v5723 = vpop.f32.mrb[0].mxu0
      %v5724 = vadd.f32 0.0, %v5723
      %v5725 = vpop.f32.mrb[0].mxu0
      %5726 = vmatprep.mubr.bf16.mxu0 0
      %5727 = vmatmul.mubr.bf16.gmra.mrb[0].mxu0 %v5627
      %v5728 = vpop.f32.mrb[0].mxu0
      %v5729 = vadd.f32 0.0, %v5728
      %v5730 = vpop.f32.mrb[0].mxu0
      %v5731 = vpop.f32.mrb[0].mxu0
      %v5732 = vadd.f32 0.0, %v5731
      %v5733 = vpop.f32.mrb[0].mxu0
      %5734 = vmatprep.mubr.bf16.mxu0 0
      %5735 = vmatmul.mubr.bf16.gmra.mrb[0].mxu0 %v5630
      %v5736 = vpop.f32.mrb[0].mxu0
      %v5737 = vadd.f32 0.0, %v5736
      %v5738 = vpop.f32.mrb[0].mxu0
      %v5739 = vpop.f32.mrb[0].mxu0
      %v5740 = vadd.f32 0.0, %v5739
      %v5741 = vpop.f32.mrb[0].mxu0
      %5742 = vmatprep.mubr.bf16.mxu0 0
      %5743 = vmatmul.mubr.bf16.gmra.mrb[0].mxu0 %v5633
      %v5744 = vpop.f32.mrb[0].mxu0
      %v5745 = vadd.f32 0.0, %v5744
      %v5746 = vpop.f32.mrb[0].mxu0
      %v5747 = vpop.f32.mrb[0].mxu0
      %v5748 = vadd.f32 0.0, %v5747
      %v5749 = vpop.f32.mrb[0].mxu0
      %5750 = vmatprep.mubr.bf16.mxu0 0
      %5751 = vmatmul.mubr.bf16.gmra.mrb[0].mxu0 %v5636
      %v5752 = vpop.f32.mrb[0].mxu0
      %v5753 = vadd.f32 0.0, %v5752
      %v5754 = vpop.f32.mrb[0].mxu0
      %v5755 = vpop.f32.mrb[0].mxu0
      %v5756 = vadd.f32 0.0, %v5755
      %v5757 = vpop.f32.mrb[0].mxu0
      %5758 = vdwg.mxu0
      %v5759 = vmul.f32 %v5697, 0.35355338
      %v5760 = vmul.f32 %v5700, 0.35355338
      %v5761 = vmul.f32 %v5705, 0.35355338
      %v5762 = vmul.f32 %v5708, 0.35355338
      %v5763 = vmul.f32 %v5713, 0.35355338
      %v5764 = vmul.f32 %v5716, 0.35355338
      %v5765 = vmul.f32 %v5721, 0.35355338
      %v5766 = vmul.f32 %v5724, 0.35355338
      %v5767 = vmul.f32 %v5729, 0.35355338
      %v5768 = vmul.f32 %v5732, 0.35355338
      %v5769 = vmul.f32 %v5737, 0.35355338
      %v5770 = vmul.f32 %v5740, 0.35355338
      %v5771 = vmul.f32 %v5745, 0.35355338
      %v5772 = vmul.f32 %v5748, 0.35355338
      %v5773 = vmul.f32 %v5753, 0.35355338
      %v5774 = vmul.f32 %v5756, 0.35355338
      %v5775 = vadd.f32 %v5759, %v1230
      %v5776 = vadd.f32 %v5760, %v1230
      %v5777 = vadd.f32 %v5761, %v1230
      %v5778 = vadd.f32 %v5762, %v1230
      %v5779 = vadd.f32 %v5763, %v1230
      %v5780 = vadd.f32 %v5764, %v1230
      %v5781 = vadd.f32 %v5765, %v1230
      %v5782 = vadd.f32 %v5766, %v1230
      %v5783 = vadd.f32 %v5767, %v1230
      %v5784 = vadd.f32 %v5768, %v1230
      %v5785 = vadd.f32 %v5769, %v1230
      %v5786 = vadd.f32 %v5770, %v1230
      %v5787 = vadd.f32 %v5771, %v1230
      %v5788 = vadd.f32 %v5772, %v1230
      %v5789 = vadd.f32 %v5773, %v1230
      %v5790 = vadd.f32 %v5774, %v1230
      %v5791 = vmul.f32 %v5775, 1.442695
      %v5792 = vpow.pop %v5791
      %v5793 = vmul.f32 %v5776, 1.442695
      %v5794 = vpow.pop %v5793
      %v5795 = vmul.f32 %v5777, 1.442695
      %v5796 = vpow.pop %v5795
      %v5797 = vmul.f32 %v5778, 1.442695
      %v5798 = vpow.pop %v5797
      %v5799 = vmul.f32 %v5779, 1.442695
      %v5800 = vpow.pop %v5799
      %v5801 = vmul.f32 %v5780, 1.442695
      %v5802 = vpow.pop %v5801
      %v5803 = vmul.f32 %v5781, 1.442695
      %v5804 = vpow.pop %v5803
      %v5805 = vmul.f32 %v5782, 1.442695
      %v5806 = vpow.pop %v5805
      %v5807 = vmul.f32 %v5783, 1.442695
      %v5808 = vpow.pop %v5807
      %v5809 = vmul.f32 %v5784, 1.442695
      %v5810 = vpow.pop %v5809
      %v5811 = vmul.f32 %v5785, 1.442695
      %v5812 = vpow.pop %v5811
      %v5813 = vmul.f32 %v5786, 1.442695
      %v5814 = vpow.pop %v5813
      %v5815 = vmul.f32 %v5787, 1.442695
      %v5816 = vpow.pop %v5815
      %v5817 = vmul.f32 %v5788, 1.442695
      %v5818 = vpow.pop %v5817
      %v5819 = vmul.f32 %v5789, 1.442695
      %v5820 = vpow.pop %v5819
      %v5821 = vmul.f32 %v5790, 1.442695
      %v5822 = vpow.pop %v5821
      %5823 = vadd.xlane.f32.xlu0 %v5792
      %v5824 = vpop.xlane.xlu0 %5823
      %5825 = vadd.xlane.f32.xlu0 %v5794
      %v5826 = vpop.xlane.xlu0 %5825
      %5827 = vadd.xlane.f32.xlu0 %v5796
      %v5828 = vpop.xlane.xlu0 %5827
      %5829 = vadd.xlane.f32.xlu0 %v5798
      %v5830 = vpop.xlane.xlu0 %5829
      %5831 = vadd.xlane.f32.xlu0 %v5800
      %v5832 = vpop.xlane.xlu0 %5831
      %5833 = vadd.xlane.f32.xlu0 %v5802
      %v5834 = vpop.xlane.xlu0 %5833
      %5835 = vadd.xlane.f32.xlu0 %v5804
      %v5836 = vpop.xlane.xlu0 %5835
      %5837 = vadd.xlane.f32.xlu0 %v5806
      %v5838 = vpop.xlane.xlu0 %5837
      %5839 = vadd.xlane.f32.xlu0 %v5808
      %v5840 = vpop.xlane.xlu0 %5839
      %5841 = vadd.xlane.f32.xlu0 %v5810
      %v5842 = vpop.xlane.xlu0 %5841
      %5843 = vadd.xlane.f32.xlu0 %v5812
      %v5844 = vpop.xlane.xlu0 %5843
      %5845 = vadd.xlane.f32.xlu0 %v5814
      %v5846 = vpop.xlane.xlu0 %5845
      %5847 = vadd.xlane.f32.xlu0 %v5816
      %v5848 = vpop.xlane.xlu0 %5847
      %5849 = vadd.xlane.f32.xlu0 %v5818
      %v5850 = vpop.xlane.xlu0 %5849
      %5851 = vadd.xlane.f32.xlu0 %v5820
      %v5852 = vpop.xlane.xlu0 %5851
      %5853 = vadd.xlane.f32.xlu0 %v5822
      %v5854 = vpop.xlane.xlu0 %5853
      %v5855 = vrcp.pop %v5824
      %v5856 = vrcp.pop %v5826
      %v5857 = vrcp.pop %v5828
      %v5858 = vrcp.pop %v5830
      %v5859 = vrcp.pop %v5832
      %v5860 = vrcp.pop %v5834
      %v5861 = vrcp.pop %v5836
      %v5862 = vrcp.pop %v5838
      %v5863 = vrcp.pop %v5840
      %v5864 = vrcp.pop %v5842
      %v5865 = vrcp.pop %v5844
      %v5866 = vrcp.pop %v5846
      %v5867 = vrcp.pop %v5848
      %v5868 = vrcp.pop %v5850
      %v5869 = vrcp.pop %v5852
      %v5870 = vrcp.pop %v5854
      %v5871 = vmul.f32 %v5792, %v5855
      %v5872 = vmul.f32 %v5794, %v5856
      %v5873 = vmul.f32 %v5796, %v5857
      %v5874 = vmul.f32 %v5798, %v5858
      %v5875 = vmul.f32 %v5800, %v5859
      %v5876 = vmul.f32 %v5802, %v5860
      %v5877 = vmul.f32 %v5804, %v5861
      %v5878 = vmul.f32 %v5806, %v5862
      %v5879 = vmul.f32 %v5808, %v5863
      %v5880 = vmul.f32 %v5810, %v5864
      %v5881 = vmul.f32 %v5812, %v5865
      %v5882 = vmul.f32 %v5814, %v5866
      %v5883 = vmul.f32 %v5816, %v5867
      %v5884 = vmul.f32 %v5818, %v5868
      %v5885 = vmul.f32 %v5820, %v5869
      %v5886 = vmul.f32 %v5822, %v5870
      %v5887 = vpack.c.bf16 %v5872, %v5871
      %v5888 = vpack.c.bf16 %v5874, %v5873
      %v5889 = vpack.c.bf16 %v5876, %v5875
      %v5890 = vpack.c.bf16 %v5878, %v5877
      %v5891 = vpack.c.bf16 %v5880, %v5879
      %v5892 = vpack.c.bf16 %v5882, %v5881
      %v5893 = vpack.c.bf16 %v5884, %v5883
      %v5894 = vpack.c.bf16 %v5886, %v5885
      %5895 = vrot.lane.b32.xlu0 %v4256, 40
      %v5896 = vpop.permute.xlu0 %5895
      %5897 = vrot.lane.b32.xlu0 %v4257, 40
      %v5898 = vpop.permute.xlu0 %5897
      %5899 = vrot.lane.b32.xlu0 %v4258, 40
      %v5900 = vpop.permute.xlu0 %5899
      %5901 = vrot.lane.b32.xlu0 %v4259, 40
      %v5902 = vpop.permute.xlu0 %5901
      %5903 = vrot.lane.b32.xlu0 %v4260, 40
      %v5904 = vpop.permute.xlu0 %5903
      %5905 = vrot.lane.b32.xlu0 %v4261, 40
      %v5906 = vpop.permute.xlu0 %5905
      %5907 = vrot.lane.b32.xlu0 %v4262, 40
      %v5908 = vpop.permute.xlu0 %5907
      %5909 = vrot.lane.b32.xlu0 %v4263, 40
      %v5910 = vpop.permute.xlu0 %5909
      %5919 = vmatprep.subr.bf16.mxu0 0
      %5920 = vmatpush1.bf16.msra.mxu0 %v5896
      %5921 = vmatprep.subr.bf16.mxu0 0
      %5922 = vmatpush1.bf16.msra.mxu0 %v5898
      %5923 = vmatprep.subr.bf16.mxu0 0
      %5924 = vmatpush1.bf16.msra.mxu0 %v5900
      %5925 = vmatprep.subr.bf16.mxu0 0
      %5926 = vmatpush1.bf16.msra.mxu0 %v5902
      %5927 = vmatprep.subr.bf16.mxu0 0
      %5928 = vmatpush1.bf16.msra.mxu0 %v5904
      %5929 = vmatprep.subr.bf16.mxu0 0
      %5930 = vmatpush1.bf16.msra.mxu0 %v5906
      %5931 = vmatprep.subr.bf16.mxu0 0
      %5932 = vmatpush1.bf16.msra.mxu0 %v5908
      %5933 = vmatprep.subr.bf16.mxu0 0
      %5934 = vmatpush1.bf16.msra.mxu0 %v5910
      %5935 = vmatprep.subr.bf16.mxu0 0
      %5936 = vmatpush1.bf16.msra.mxu0 0
      %5937 = vmatprep.subr.bf16.mxu0 0
      %5938 = vmatpush1.bf16.msra.mxu0 0
      %5939 = vmatprep.subr.bf16.mxu0 0
      %5940 = vmatpush1.bf16.msra.mxu0 0
      %5941 = vmatprep.subr.bf16.mxu0 0
      %5942 = vmatpush1.bf16.msra.mxu0 0
      %5943 = vmatprep.subr.bf16.mxu0 0
      %5944 = vmatpush1.bf16.msra.mxu0 0
      %5945 = vmatprep.subr.bf16.mxu0 0
      %5946 = vmatpush1.bf16.msra.mxu0 0
      %5947 = vmatprep.subr.bf16.mxu0 0
      %5948 = vmatpush1.bf16.msra.mxu0 0
      %5949 = vmatprep.subr.bf16.mxu0 0
      %5950 = vmatpush1.bf16.msra.mxu0 0
      %5951 = vmatprep.mubr.bf16.mxu0 0
      %5952 = vmatmul.mubr.bf16.gmra.mrb[0].mxu0 %v5887
      %v5953 = vpop.f32.mrb[0].mxu0
      %v5954 = vadd.f32 0.0, %v5953
      %v5955 = vpop.f32.mrb[0].mxu0
      %v5956 = vpop.f32.mrb[0].mxu0
      %v5957 = vadd.f32 0.0, %v5956
      %v5958 = vpop.f32.mrb[0].mxu0
      %5959 = vmatprep.mubr.bf16.mxu0 0
      %5960 = vmatmul.mubr.bf16.gmra.mrb[0].mxu0 %v5888
      %v5961 = vpop.f32.mrb[0].mxu0
      %v5962 = vadd.f32 0.0, %v5961
      %v5963 = vpop.f32.mrb[0].mxu0
      %v5964 = vpop.f32.mrb[0].mxu0
      %v5965 = vadd.f32 0.0, %v5964
      %v5966 = vpop.f32.mrb[0].mxu0
      %5967 = vmatprep.mubr.bf16.mxu0 0
      %5968 = vmatmul.mubr.bf16.gmra.mrb[0].mxu0 %v5889
      %v5969 = vpop.f32.mrb[0].mxu0
      %v5970 = vadd.f32 0.0, %v5969
      %v5971 = vpop.f32.mrb[0].mxu0
      %v5972 = vpop.f32.mrb[0].mxu0
      %v5973 = vadd.f32 0.0, %v5972
      %v5974 = vpop.f32.mrb[0].mxu0
      %5975 = vmatprep.mubr.bf16.mxu0 0
      %5976 = vmatmul.mubr.bf16.gmra.mrb[0].mxu0 %v5890
      %v5977 = vpop.f32.mrb[0].mxu0
      %v5978 = vadd.f32 0.0, %v5977
      %v5979 = vpop.f32.mrb[0].mxu0
      %v5980 = vpop.f32.mrb[0].mxu0
      %v5981 = vadd.f32 0.0, %v5980
      %v5982 = vpop.f32.mrb[0].mxu0
      %5983 = vmatprep.mubr.bf16.mxu0 0
      %5984 = vmatmul.mubr.bf16.gmra.mrb[0].mxu0 %v5891
      %v5985 = vpop.f32.mrb[0].mxu0
      %v5986 = vadd.f32 0.0, %v5985
      %v5987 = vpop.f32.mrb[0].mxu0
      %v5988 = vpop.f32.mrb[0].mxu0
      %v5989 = vadd.f32 0.0, %v5988
      %v5990 = vpop.f32.mrb[0].mxu0
      %5991 = vmatprep.mubr.bf16.mxu0 0
      %5992 = vmatmul.mubr.bf16.gmra.mrb[0].mxu0 %v5892
      %v5993 = vpop.f32.mrb[0].mxu0
      %v5994 = vadd.f32 0.0, %v5993
      %v5995 = vpop.f32.mrb[0].mxu0
      %v5996 = vpop.f32.mrb[0].mxu0
      %v5997 = vadd.f32 0.0, %v5996
      %v5998 = vpop.f32.mrb[0].mxu0
      %5999 = vmatprep.mubr.bf16.mxu0 0
      %6000 = vmatmul.mubr.bf16.gmra.mrb[0].mxu0 %v5893
      %v6001 = vpop.f32.mrb[0].mxu0
      %v6002 = vadd.f32 0.0, %v6001
      %v6003 = vpop.f32.mrb[0].mxu0
      %v6004 = vpop.f32.mrb[0].mxu0
      %v6005 = vadd.f32 0.0, %v6004
      %v6006 = vpop.f32.mrb[0].mxu0
      %6007 = vmatprep.mubr.bf16.mxu0 0
      %6008 = vmatmul.mubr.bf16.gmra.mrb[0].mxu0 %v5894
      %v6009 = vpop.f32.mrb[0].mxu0
      %v6010 = vadd.f32 0.0, %v6009
      %v6011 = vpop.f32.mrb[0].mxu0
      %v6012 = vpop.f32.mrb[0].mxu0
      %v6013 = vadd.f32 0.0, %v6012
      %v6014 = vpop.f32.mrb[0].mxu0
      %6015 = vdwg.mxu0
      %v6016 = vpack.c.bf16 %v5957, %v5954
      %v6017 = vpack.c.bf16 %v5965, %v5962
      %v6018 = vpack.c.bf16 %v5973, %v5970
      %v6019 = vpack.c.bf16 %v5981, %v5978
      %v6020 = vpack.c.bf16 %v5989, %v5986
      %v6021 = vpack.c.bf16 %v5997, %v5994
      %v6022 = vpack.c.bf16 %v6005, %v6002
      %v6023 = vpack.c.bf16 %v6013, %v6010
      %6032 = vrot.lane.b32.xlu0 %v5132, 8
      %v6033 = vpop.permute.xlu0 %6032
      %6034 = vrot.lane.b32.xlu0 %v5133, 8
      %v6035 = vpop.permute.xlu0 %6034
      %6036 = vrot.lane.b32.xlu0 %v5134, 8
      %v6037 = vpop.permute.xlu0 %6036
      %6038 = vrot.lane.b32.xlu0 %v5135, 8
      %v6039 = vpop.permute.xlu0 %6038
      %6040 = vrot.lane.b32.xlu0 %v5136, 8
      %v6041 = vpop.permute.xlu0 %6040
      %6042 = vrot.lane.b32.xlu0 %v5137, 8
      %v6043 = vpop.permute.xlu0 %6042
      %6044 = vrot.lane.b32.xlu0 %v5138, 8
      %v6045 = vpop.permute.xlu0 %6044
      %6046 = vrot.lane.b32.xlu0 %v5139, 8
      %v6047 = vpop.permute.xlu0 %6046
      %6056 = vrot.lane.b32.xlu0 %v5574, 16
      %v6057 = vpop.permute.xlu0 %6056
      %6058 = vrot.lane.b32.xlu0 %v5575, 16
      %v6059 = vpop.permute.xlu0 %6058
      %6060 = vrot.lane.b32.xlu0 %v5576, 16
      %v6061 = vpop.permute.xlu0 %6060
      %6062 = vrot.lane.b32.xlu0 %v5577, 16
      %v6063 = vpop.permute.xlu0 %6062
      %6064 = vrot.lane.b32.xlu0 %v5578, 16
      %v6065 = vpop.permute.xlu0 %6064
      %6066 = vrot.lane.b32.xlu0 %v5579, 16
      %v6067 = vpop.permute.xlu0 %6066
      %6068 = vrot.lane.b32.xlu0 %v5580, 16
      %v6069 = vpop.permute.xlu0 %6068
      %6070 = vrot.lane.b32.xlu0 %v5581, 16
      %v6071 = vpop.permute.xlu0 %6070
      %6080 = vrot.lane.b32.xlu0 %v6016, 24
      %v6081 = vpop.permute.xlu0 %6080
      %6082 = vrot.lane.b32.xlu0 %v6017, 24
      %v6083 = vpop.permute.xlu0 %6082
      %6084 = vrot.lane.b32.xlu0 %v6018, 24
      %v6085 = vpop.permute.xlu0 %6084
      %6086 = vrot.lane.b32.xlu0 %v6019, 24
      %v6087 = vpop.permute.xlu0 %6086
      %6088 = vrot.lane.b32.xlu0 %v6020, 24
      %v6089 = vpop.permute.xlu0 %6088
      %6090 = vrot.lane.b32.xlu0 %v6021, 24
      %v6091 = vpop.permute.xlu0 %6090
      %6092 = vrot.lane.b32.xlu0 %v6022, 24
      %v6093 = vpop.permute.xlu0 %6092
      %6094 = vrot.lane.b32.xlu0 %v6023, 24
      %v6095 = vpop.permute.xlu0 %6094
      %v6098 = vsel %vm1064, %v4690, %v6033
      %v6101 = vsel %vm1064, %v4691, %v6035
      %v6104 = vsel %vm1064, %v4692, %v6037
      %v6107 = vsel %vm1064, %v4693, %v6039
      %v6110 = vsel %vm1064, %v4694, %v6041
      %v6113 = vsel %vm1064, %v4695, %v6043
      %v6116 = vsel %vm1064, %v4696, %v6045
      %v6119 = vsel %vm1064, %v4697, %v6047
      %v6121 = vsel %vm2903, %v6098, %v6057
      %v6123 = vsel %vm2903, %v6101, %v6059
      %v6125 = vsel %vm2903, %v6104, %v6061
      %v6127 = vsel %vm2903, %v6107, %v6063
      %v6129 = vsel %vm2903, %v6110, %v6065
      %v6131 = vsel %vm2903, %v6113, %v6067
      %v6133 = vsel %vm2903, %v6116, %v6069
      %v6135 = vsel %vm2903, %v6119, %v6071
      %v6137 = vsel %vm2920, %v6121, %v6081
      %v6139 = vsel %vm2920, %v6123, %v6083
      %v6141 = vsel %vm2920, %v6125, %v6085
      %v6143 = vsel %vm2920, %v6127, %v6087
      %v6145 = vsel %vm2920, %v6129, %v6089
      %v6147 = vsel %vm2920, %v6131, %v6091
      %v6149 = vsel %vm2920, %v6133, %v6093
      %v6151 = vsel %vm2920, %v6135, %v6095
      %s6152 = scalar_lea.vmem %s6, 16
      %v6153 = vld [vmem:[%s6152] sm:$0xf]
      %v6154 = vld [vmem:[%s6152 + $0x4] sm:$0xf]
      %v6155 = vld [vmem:[%s6152 + $0x8] sm:$0xf]
      %v6156 = vld [vmem:[%s6152 + $0xc] sm:$0xf]
      %s6157 = scalar_lea.vmem %s7, 1
      %v6158 = vld [vmem:[%s6157] sm:$0x1]
      %v6159 = vunpack.c.l.bf16 %v6158
      %v6160 = vlaneseq
      %v6161 = vshrl.u32 %v6160, 7
      %v6162 = vsub.s32 0, %v6161
      %v6163 = vrot.slane %v6159, %v6162
      %v6168 = vunpack.c.l.b16 %v6153
      %v6169 = vunpack.c.l.b16 %v6154
      %v6170 = vunpack.c.l.b16 %v6155
      %v6171 = vunpack.c.l.b16 %v6156
      %v6172 = vpack.c.b16 %v6169, %v6168
      %v6173 = vpack.c.b16 %v6171, %v6170
      %v6176 = vsel %vm629, %v6137, 0
      %v6178 = vsel %vm629, %v6139, 0
      %v6180 = vsel %vm629, %v6141, 0
      %v6182 = vsel %vm629, %v6143, 0
      %v6184 = vsel %vm629, %v6145, 0
      %v6186 = vsel %vm629, %v6147, 0
      %v6188 = vsel %vm629, %v6149, 0
      %v6190 = vsel %vm629, %v6151, 0
      %6192 = vmatprep.subr.bf16.mxu0 0
      %6193 = vmatpush1.bf16.msra.mxu0 %v6172
      %6194 = vmatprep.subr.bf16.mxu0 0
      %6195 = vmatpush1.bf16.msra.mxu0 %v6173
      %6196 = vmatprep.subr.bf16.mxu0 0
      %6197 = vmatpush1.bf16.msra.mxu0 0
      %6198 = vmatprep.subr.bf16.mxu0 0
      %6199 = vmatpush1.bf16.msra.mxu0 0
      %6200 = vmatprep.subr.bf16.mxu0 0
      %6201 = vmatpush1.bf16.msra.mxu0 0
      %6202 = vmatprep.subr.bf16.mxu0 0
      %6203 = vmatpush1.bf16.msra.mxu0 0
      %6204 = vmatprep.subr.bf16.mxu0 0
      %6205 = vmatpush1.bf16.msra.mxu0 0
      %6206 = vmatprep.subr.bf16.mxu0 0
      %6207 = vmatpush1.bf16.msra.mxu0 0
      %6208 = vmatprep.subr.bf16.mxu0 0
      %6209 = vmatpush1.bf16.msra.mxu0 0
      %6210 = vmatprep.subr.bf16.mxu0 0
      %6211 = vmatpush1.bf16.msra.mxu0 0
      %6212 = vmatprep.subr.bf16.mxu0 0
      %6213 = vmatpush1.bf16.msra.mxu0 0
      %6214 = vmatprep.subr.bf16.mxu0 0
      %6215 = vmatpush1.bf16.msra.mxu0 0
      %6216 = vmatprep.subr.bf16.mxu0 0
      %6217 = vmatpush1.bf16.msra.mxu0 0
      %6218 = vmatprep.subr.bf16.mxu0 0
      %6219 = vmatpush1.bf16.msra.mxu0 0
      %6220 = vmatprep.subr.bf16.mxu0 0
      %6221 = vmatpush1.bf16.msra.mxu0 0
      %6222 = vmatprep.subr.bf16.mxu0 0
      %6223 = vmatpush1.bf16.msra.mxu0 0
      %6224 = vmatprep.mubr.bf16.mxu0 0
      %6225 = vmatmul.mubr.bf16.gmra.mrb[0].mxu0 %v6176
      %v6226 = vpop.f32.mrb[0].mxu0
      %v6227 = vadd.f32 %v6163, %v6226
      %v6228 = vpop.f32.mrb[0].mxu0
      %v6229 = vpop.f32.mrb[0].mxu0
      %v6230 = vadd.f32 %v6163, %v6229
      %v6231 = vpop.f32.mrb[0].mxu0
      %6232 = vmatprep.mubr.bf16.mxu0 0
      %6233 = vmatmul.mubr.bf16.gmra.mrb[0].mxu0 %v6178
      %v6234 = vpop.f32.mrb[0].mxu0
      %v6235 = vadd.f32 %v6163, %v6234
      %v6236 = vpop.f32.mrb[0].mxu0
      %v6237 = vpop.f32.mrb[0].mxu0
      %v6238 = vadd.f32 %v6163, %v6237
      %v6239 = vpop.f32.mrb[0].mxu0
      %6240 = vmatprep.mubr.bf16.mxu0 0
      %6241 = vmatmul.mubr.bf16.gmra.mrb[0].mxu0 %v6180
      %v6242 = vpop.f32.mrb[0].mxu0
      %v6243 = vadd.f32 %v6163, %v6242
      %v6244 = vpop.f32.mrb[0].mxu0
      %v6245 = vpop.f32.mrb[0].mxu0
      %v6246 = vadd.f32 %v6163, %v6245
      %v6247 = vpop.f32.mrb[0].mxu0
      %6248 = vmatprep.mubr.bf16.mxu0 0
      %6249 = vmatmul.mubr.bf16.gmra.mrb[0].mxu0 %v6182
      %v6250 = vpop.f32.mrb[0].mxu0
      %v6251 = vadd.f32 %v6163, %v6250
      %v6252 = vpop.f32.mrb[0].mxu0
      %v6253 = vpop.f32.mrb[0].mxu0
      %v6254 = vadd.f32 %v6163, %v6253
      %v6255 = vpop.f32.mrb[0].mxu0
      %6256 = vmatprep.mubr.bf16.mxu0 0
      %6257 = vmatmul.mubr.bf16.gmra.mrb[0].mxu0 %v6184
      %v6258 = vpop.f32.mrb[0].mxu0
      %v6259 = vadd.f32 %v6163, %v6258
      %v6260 = vpop.f32.mrb[0].mxu0
      %v6261 = vpop.f32.mrb[0].mxu0
      %v6262 = vadd.f32 %v6163, %v6261
      %v6263 = vpop.f32.mrb[0].mxu0
      %6264 = vmatprep.mubr.bf16.mxu0 0
      %6265 = vmatmul.mubr.bf16.gmra.mrb[0].mxu0 %v6186
      %v6266 = vpop.f32.mrb[0].mxu0
      %v6267 = vadd.f32 %v6163, %v6266
      %v6268 = vpop.f32.mrb[0].mxu0
      %v6269 = vpop.f32.mrb[0].mxu0
      %v6270 = vadd.f32 %v6163, %v6269
      %v6271 = vpop.f32.mrb[0].mxu0
      %6272 = vmatprep.mubr.bf16.mxu0 0
      %6273 = vmatmul.mubr.bf16.gmra.mrb[0].mxu0 %v6188
      %v6274 = vpop.f32.mrb[0].mxu0
      %v6275 = vadd.f32 %v6163, %v6274
      %v6276 = vpop.f32.mrb[0].mxu0
      %v6277 = vpop.f32.mrb[0].mxu0
      %v6278 = vadd.f32 %v6163, %v6277
      %v6279 = vpop.f32.mrb[0].mxu0
      %6280 = vmatprep.mubr.bf16.mxu0 0
      %6281 = vmatmul.mubr.bf16.gmra.mrb[0].mxu0 %v6190
      %v6282 = vpop.f32.mrb[0].mxu0
      %v6283 = vadd.f32 %v6163, %v6282
      %v6284 = vpop.f32.mrb[0].mxu0
      %v6285 = vpop.f32.mrb[0].mxu0
      %v6286 = vadd.f32 %v6163, %v6285
      %v6287 = vpop.f32.mrb[0].mxu0
      %6288 = vdwg.mxu0
      %v6289 = vunpack.c.l.bf16 %v4103
      %v6290 = vunpack.c.h.bf16 %v4103
      %v6291 = vunpack.c.l.bf16 %v4104
      %v6292 = vunpack.c.h.bf16 %v4104
      %v6293 = vunpack.c.l.bf16 %v4105
      %v6294 = vunpack.c.h.bf16 %v4105
      %v6295 = vunpack.c.l.bf16 %v4106
      %v6296 = vunpack.c.h.bf16 %v4106
      %v6297 = vunpack.c.l.bf16 %v4107
      %v6298 = vunpack.c.h.bf16 %v4107
      %v6299 = vunpack.c.l.bf16 %v4108
      %v6300 = vunpack.c.h.bf16 %v4108
      %v6301 = vunpack.c.l.bf16 %v4109
      %v6302 = vunpack.c.h.bf16 %v4109
      %v6303 = vunpack.c.l.bf16 %v4110
      %v6304 = vunpack.c.h.bf16 %v4110
      %v6305 = vadd.f32 %v6227, %v6289
      %v6306 = vadd.f32 %v6230, %v6290
      %v6307 = vadd.f32 %v6235, %v6291
      %v6308 = vadd.f32 %v6238, %v6292
      %v6309 = vadd.f32 %v6243, %v6293
      %v6310 = vadd.f32 %v6246, %v6294
      %v6311 = vadd.f32 %v6251, %v6295
      %v6312 = vadd.f32 %v6254, %v6296
      %v6313 = vadd.f32 %v6259, %v6297
      %v6314 = vadd.f32 %v6262, %v6298
      %v6315 = vadd.f32 %v6267, %v6299
      %v6316 = vadd.f32 %v6270, %v6300
      %v6317 = vadd.f32 %v6275, %v6301
      %v6318 = vadd.f32 %v6278, %v6302
      %v6319 = vadd.f32 %v6283, %v6303
      %v6320 = vadd.f32 %v6286, %v6304
      %s6321 = scalar_lea.vmem %s8, 1
      %v6322 = vld [vmem:[%s6321] sm:$0x1]
      %s6323 = scalar_lea.vmem %s9, 1
      %v6324 = vld [vmem:[%s6323] sm:$0x1]
      %v6325 = vsel %vm629, %v6305, 0.0
      %6326 = vadd.xlane.f32.xlu0 %v6325
      %v6327 = vpop.xlane.xlu0 %6326
      %v6328 = vsel %vm629, %v6306, 0.0
      %6329 = vadd.xlane.f32.xlu0 %v6328
      %v6330 = vpop.xlane.xlu0 %6329
      %v6331 = vsel %vm629, %v6307, 0.0
      %6332 = vadd.xlane.f32.xlu0 %v6331
      %v6333 = vpop.xlane.xlu0 %6332
      %v6334 = vsel %vm629, %v6308, 0.0
      %6335 = vadd.xlane.f32.xlu0 %v6334
      %v6336 = vpop.xlane.xlu0 %6335
      %v6337 = vsel %vm629, %v6309, 0.0
      %6338 = vadd.xlane.f32.xlu0 %v6337
      %v6339 = vpop.xlane.xlu0 %6338
      %v6340 = vsel %vm629, %v6310, 0.0
      %6341 = vadd.xlane.f32.xlu0 %v6340
      %v6342 = vpop.xlane.xlu0 %6341
      %v6343 = vsel %vm629, %v6311, 0.0
      %6344 = vadd.xlane.f32.xlu0 %v6343
      %v6345 = vpop.xlane.xlu0 %6344
      %v6346 = vsel %vm629, %v6312, 0.0
      %6347 = vadd.xlane.f32.xlu0 %v6346
      %v6348 = vpop.xlane.xlu0 %6347
      %v6349 = vsel %vm629, %v6313, 0.0
      %6350 = vadd.xlane.f32.xlu0 %v6349
      %v6351 = vpop.xlane.xlu0 %6350
      %v6352 = vsel %vm629, %v6314, 0.0
      %6353 = vadd.xlane.f32.xlu0 %v6352
      %v6354 = vpop.xlane.xlu0 %6353
      %v6355 = vsel %vm629, %v6315, 0.0
      %6356 = vadd.xlane.f32.xlu0 %v6355
      %v6357 = vpop.xlane.xlu0 %6356
      %v6358 = vsel %vm629, %v6316, 0.0
      %6359 = vadd.xlane.f32.xlu0 %v6358
      %v6360 = vpop.xlane.xlu0 %6359
      %v6361 = vsel %vm629, %v6317, 0.0
      %6362 = vadd.xlane.f32.xlu0 %v6361
      %v6363 = vpop.xlane.xlu0 %6362
      %v6364 = vsel %vm629, %v6318, 0.0
      %6365 = vadd.xlane.f32.xlu0 %v6364
      %v6366 = vpop.xlane.xlu0 %6365
      %v6367 = vsel %vm629, %v6319, 0.0
      %6368 = vadd.xlane.f32.xlu0 %v6367
      %v6369 = vpop.xlane.xlu0 %6368
      %v6370 = vsel %vm629, %v6320, 0.0
      %6371 = vadd.xlane.f32.xlu0 %v6370
      %v6372 = vpop.xlane.xlu0 %6371
      %v6373 = vmul.f32 %v6327, %v678
      %v6374 = vmul.f32 %v6330, %v678
      %v6375 = vmul.f32 %v6333, %v678
      %v6376 = vmul.f32 %v6336, %v678
      %v6377 = vmul.f32 %v6339, %v678
      %v6378 = vmul.f32 %v6342, %v678
      %v6379 = vmul.f32 %v6345, %v678
      %v6380 = vmul.f32 %v6348, %v678
      %v6381 = vmul.f32 %v6351, %v678
      %v6382 = vmul.f32 %v6354, %v678
      %v6383 = vmul.f32 %v6357, %v678
      %v6384 = vmul.f32 %v6360, %v678
      %v6385 = vmul.f32 %v6363, %v678
      %v6386 = vmul.f32 %v6366, %v678
      %v6387 = vmul.f32 %v6369, %v678
      %v6388 = vmul.f32 %v6372, %v678
      %v6389 = vsub.f32 %v6305, %v6373
      %v6390 = vsub.f32 %v6306, %v6374
      %v6391 = vsub.f32 %v6307, %v6375
      %v6392 = vsub.f32 %v6308, %v6376
      %v6393 = vsub.f32 %v6309, %v6377
      %v6394 = vsub.f32 %v6310, %v6378
      %v6395 = vsub.f32 %v6311, %v6379
      %v6396 = vsub.f32 %v6312, %v6380
      %v6397 = vsub.f32 %v6313, %v6381
      %v6398 = vsub.f32 %v6314, %v6382
      %v6399 = vsub.f32 %v6315, %v6383
      %v6400 = vsub.f32 %v6316, %v6384
      %v6401 = vsub.f32 %v6317, %v6385
      %v6402 = vsub.f32 %v6318, %v6386
      %v6403 = vsub.f32 %v6319, %v6387
      %v6404 = vsub.f32 %v6320, %v6388
      %v6405 = vmul.f32 %v6389, %v6389
      %v6406 = vmul.f32 %v6390, %v6390
      %v6407 = vmul.f32 %v6391, %v6391
      %v6408 = vmul.f32 %v6392, %v6392
      %v6409 = vmul.f32 %v6393, %v6393
      %v6410 = vmul.f32 %v6394, %v6394
      %v6411 = vmul.f32 %v6395, %v6395
      %v6412 = vmul.f32 %v6396, %v6396
      %v6413 = vmul.f32 %v6397, %v6397
      %v6414 = vmul.f32 %v6398, %v6398
      %v6415 = vmul.f32 %v6399, %v6399
      %v6416 = vmul.f32 %v6400, %v6400
      %v6417 = vmul.f32 %v6401, %v6401
      %v6418 = vmul.f32 %v6402, %v6402
      %v6419 = vmul.f32 %v6403, %v6403
      %v6420 = vmul.f32 %v6404, %v6404
      %v6421 = vsel %vm629, %v6405, 0.0
      %6422 = vadd.xlane.f32.xlu0 %v6421
      %v6423 = vpop.xlane.xlu0 %6422
      %v6424 = vsel %vm629, %v6406, 0.0
      %6425 = vadd.xlane.f32.xlu0 %v6424
      %v6426 = vpop.xlane.xlu0 %6425
      %v6427 = vsel %vm629, %v6407, 0.0
      %6428 = vadd.xlane.f32.xlu0 %v6427
      %v6429 = vpop.xlane.xlu0 %6428
      %v6430 = vsel %vm629, %v6408, 0.0
      %6431 = vadd.xlane.f32.xlu0 %v6430
      %v6432 = vpop.xlane.xlu0 %6431
      %v6433 = vsel %vm629, %v6409, 0.0
      %6434 = vadd.xlane.f32.xlu0 %v6433
      %v6435 = vpop.xlane.xlu0 %6434
      %v6436 = vsel %vm629, %v6410, 0.0
      %6437 = vadd.xlane.f32.xlu0 %v6436
      %v6438 = vpop.xlane.xlu0 %6437
      %v6439 = vsel %vm629, %v6411, 0.0
      %6440 = vadd.xlane.f32.xlu0 %v6439
      %v6441 = vpop.xlane.xlu0 %6440
      %v6442 = vsel %vm629, %v6412, 0.0
      %6443 = vadd.xlane.f32.xlu0 %v6442
      %v6444 = vpop.xlane.xlu0 %6443
      %v6445 = vsel %vm629, %v6413, 0.0
      %6446 = vadd.xlane.f32.xlu0 %v6445
      %v6447 = vpop.xlane.xlu0 %6446
      %v6448 = vsel %vm629, %v6414, 0.0
      %6449 = vadd.xlane.f32.xlu0 %v6448
      %v6450 = vpop.xlane.xlu0 %6449
      %v6451 = vsel %vm629, %v6415, 0.0
      %6452 = vadd.xlane.f32.xlu0 %v6451
      %v6453 = vpop.xlane.xlu0 %6452
      %v6454 = vsel %vm629, %v6416, 0.0
      %6455 = vadd.xlane.f32.xlu0 %v6454
      %v6456 = vpop.xlane.xlu0 %6455
      %v6457 = vsel %vm629, %v6417, 0.0
      %6458 = vadd.xlane.f32.xlu0 %v6457
      %v6459 = vpop.xlane.xlu0 %6458
      %v6460 = vsel %vm629, %v6418, 0.0
      %6461 = vadd.xlane.f32.xlu0 %v6460
      %v6462 = vpop.xlane.xlu0 %6461
      %v6463 = vsel %vm629, %v6419, 0.0
      %6464 = vadd.xlane.f32.xlu0 %v6463
      %v6465 = vpop.xlane.xlu0 %6464
      %v6466 = vsel %vm629, %v6420, 0.0
      %6467 = vadd.xlane.f32.xlu0 %v6466
      %v6468 = vpop.xlane.xlu0 %6467
      %v6469 = vmul.f32 %v6423, %v678
      %v6470 = vmul.f32 %v6426, %v678
      %v6471 = vmul.f32 %v6429, %v678
      %v6472 = vmul.f32 %v6432, %v678
      %v6473 = vmul.f32 %v6435, %v678
      %v6474 = vmul.f32 %v6438, %v678
      %v6475 = vmul.f32 %v6441, %v678
      %v6476 = vmul.f32 %v6444, %v678
      %v6477 = vmul.f32 %v6447, %v678
      %v6478 = vmul.f32 %v6450, %v678
      %v6479 = vmul.f32 %v6453, %v678
      %v6480 = vmul.f32 %v6456, %v678
      %v6481 = vmul.f32 %v6459, %v678
      %v6482 = vmul.f32 %v6462, %v678
      %v6483 = vmul.f32 %v6465, %v678
      %v6484 = vmul.f32 %v6468, %v678
      %v6485 = vadd.f32 %v6469, 1e-12
      %v6486 = vadd.f32 %v6470, 1e-12
      %v6487 = vadd.f32 %v6471, 1e-12
      %v6488 = vadd.f32 %v6472, 1e-12
      %v6489 = vadd.f32 %v6473, 1e-12
      %v6490 = vadd.f32 %v6474, 1e-12
      %v6491 = vadd.f32 %v6475, 1e-12
      %v6492 = vadd.f32 %v6476, 1e-12
      %v6493 = vadd.f32 %v6477, 1e-12
      %v6494 = vadd.f32 %v6478, 1e-12
      %v6495 = vadd.f32 %v6479, 1e-12
      %v6496 = vadd.f32 %v6480, 1e-12
      %v6497 = vadd.f32 %v6481, 1e-12
      %v6498 = vadd.f32 %v6482, 1e-12
      %v6499 = vadd.f32 %v6483, 1e-12
      %v6500 = vadd.f32 %v6484, 1e-12
      %v6501 = vrsqrt.pop %v6485
      %v6502 = vrsqrt.pop %v6486
      %v6503 = vrsqrt.pop %v6487
      %v6504 = vrsqrt.pop %v6488
      %v6505 = vrsqrt.pop %v6489
      %v6506 = vrsqrt.pop %v6490
      %v6507 = vrsqrt.pop %v6491
      %v6508 = vrsqrt.pop %v6492
      %v6509 = vrsqrt.pop %v6493
      %v6510 = vrsqrt.pop %v6494
      %v6511 = vrsqrt.pop %v6495
      %v6512 = vrsqrt.pop %v6496
      %v6513 = vrsqrt.pop %v6497
      %v6514 = vrsqrt.pop %v6498
      %v6515 = vrsqrt.pop %v6499
      %v6516 = vrsqrt.pop %v6500
      %v6517 = vmul.f32 %v6389, %v6501
      %v6518 = vmul.f32 %v6390, %v6502
      %v6519 = vmul.f32 %v6391, %v6503
      %v6520 = vmul.f32 %v6392, %v6504
      %v6521 = vmul.f32 %v6393, %v6505
      %v6522 = vmul.f32 %v6394, %v6506
      %v6523 = vmul.f32 %v6395, %v6507
      %v6524 = vmul.f32 %v6396, %v6508
      %v6525 = vmul.f32 %v6397, %v6509
      %v6526 = vmul.f32 %v6398, %v6510
      %v6527 = vmul.f32 %v6399, %v6511
      %v6528 = vmul.f32 %v6400, %v6512
      %v6529 = vmul.f32 %v6401, %v6513
      %v6530 = vmul.f32 %v6402, %v6514
      %v6531 = vmul.f32 %v6403, %v6515
      %v6532 = vmul.f32 %v6404, %v6516
      %v6533 = vunpack.c.l.bf16 %v6322
      %v6534 = vlaneseq
      %v6535 = vshrl.u32 %v6534, 7
      %v6536 = vsub.s32 0, %v6535
      %v6537 = vrot.slane %v6533, %v6536
      %v6538 = vmul.f32 %v6517, %v6537
      %v6539 = vmul.f32 %v6518, %v6537
      %v6540 = vmul.f32 %v6519, %v6537
      %v6541 = vmul.f32 %v6520, %v6537
      %v6542 = vmul.f32 %v6521, %v6537
      %v6543 = vmul.f32 %v6522, %v6537
      %v6544 = vmul.f32 %v6523, %v6537
      %v6545 = vmul.f32 %v6524, %v6537
      %v6546 = vmul.f32 %v6525, %v6537
      %v6547 = vmul.f32 %v6526, %v6537
      %v6548 = vmul.f32 %v6527, %v6537
      %v6549 = vmul.f32 %v6528, %v6537
      %v6550 = vmul.f32 %v6529, %v6537
      %v6551 = vmul.f32 %v6530, %v6537
      %v6552 = vmul.f32 %v6531, %v6537
      %v6553 = vmul.f32 %v6532, %v6537
      %v6554 = vunpack.c.l.bf16 %v6324
      %v6555 = vlaneseq
      %v6556 = vshrl.u32 %v6555, 7
      %v6557 = vsub.s32 0, %v6556
      %v6558 = vrot.slane %v6554, %v6557
      %v6559 = vadd.f32 %v6538, %v6558
      %v6560 = vadd.f32 %v6539, %v6558
      %v6561 = vadd.f32 %v6540, %v6558
      %v6562 = vadd.f32 %v6541, %v6558
      %v6563 = vadd.f32 %v6542, %v6558
      %v6564 = vadd.f32 %v6543, %v6558
      %v6565 = vadd.f32 %v6544, %v6558
      %v6566 = vadd.f32 %v6545, %v6558
      %v6567 = vadd.f32 %v6546, %v6558
      %v6568 = vadd.f32 %v6547, %v6558
      %v6569 = vadd.f32 %v6548, %v6558
      %v6570 = vadd.f32 %v6549, %v6558
      %v6571 = vadd.f32 %v6550, %v6558
      %v6572 = vadd.f32 %v6551, %v6558
      %v6573 = vadd.f32 %v6552, %v6558
      %v6574 = vadd.f32 %v6553, %v6558
      %v6575 = vpack.c.bf16 %v6560, %v6559
      %v6576 = vpack.c.bf16 %v6562, %v6561
      %v6577 = vpack.c.bf16 %v6564, %v6563
      %v6578 = vpack.c.bf16 %v6566, %v6565
      %v6579 = vpack.c.bf16 %v6568, %v6567
      %v6580 = vpack.c.bf16 %v6570, %v6569
      %v6581 = vpack.c.bf16 %v6572, %v6571
      %v6582 = vpack.c.bf16 %v6574, %v6573
      %s6583 = scalar_lea.vmem %s10, 16
      %v6584 = vld [vmem:[%s6583] sm:$0xf]
      %v6585 = vld [vmem:[%s6583 + $0x4] sm:$0xf]
      %v6586 = vld [vmem:[%s6583 + $0x8] sm:$0xf]
      %v6587 = vld [vmem:[%s6583 + $0xc] sm:$0xf]
      %s6588 = scalar_lea.vmem %s11, 1
      %v6589 = vld [vmem:[%s6588] sm:$0x1]
      %v6590 = vunpack.c.l.bf16 %v6589
      %v6591 = vlaneseq
      %v6592 = vshrl.u32 %v6591, 7
      %v6593 = vsub.s32 0, %v6592
      %v6594 = vrot.slane %v6590, %v6593
      %v6599 = vunpack.c.l.b16 %v6584
      %v6600 = vunpack.c.l.b16 %v6585
      %v6601 = vunpack.c.l.b16 %v6586
      %v6602 = vunpack.c.l.b16 %v6587
      %v6603 = vpack.c.b16 %v6600, %v6599
      %v6604 = vpack.c.b16 %v6602, %v6601
      %v6608 = vsel %vm629, %v6575, 0
      %v6611 = vsel %vm629, %v6576, 0
      %v6614 = vsel %vm629, %v6577, 0
      %v6617 = vsel %vm629, %v6578, 0
      %v6620 = vsel %vm629, %v6579, 0
      %v6623 = vsel %vm629, %v6580, 0
      %v6626 = vsel %vm629, %v6581, 0
      %v6629 = vsel %vm629, %v6582, 0
      %6631 = vmatprep.subr.bf16.mxu0 0
      %6632 = vmatpush1.bf16.msra.mxu0 %v6603
      %6633 = vmatprep.subr.bf16.mxu0 0
      %6634 = vmatpush1.bf16.msra.mxu0 %v6604
      %6635 = vmatprep.subr.bf16.mxu0 0
      %6636 = vmatpush1.bf16.msra.mxu0 0
      %6637 = vmatprep.subr.bf16.mxu0 0
      %6638 = vmatpush1.bf16.msra.mxu0 0
      %6639 = vmatprep.subr.bf16.mxu0 0
      %6640 = vmatpush1.bf16.msra.mxu0 0
      %6641 = vmatprep.subr.bf16.mxu0 0
      %6642 = vmatpush1.bf16.msra.mxu0 0
      %6643 = vmatprep.subr.bf16.mxu0 0
      %6644 = vmatpush1.bf16.msra.mxu0 0
      %6645 = vmatprep.subr.bf16.mxu0 0
      %6646 = vmatpush1.bf16.msra.mxu0 0
      %6647 = vmatprep.subr.bf16.mxu0 0
      %6648 = vmatpush1.bf16.msra.mxu0 0
      %6649 = vmatprep.subr.bf16.mxu0 0
      %6650 = vmatpush1.bf16.msra.mxu0 0
      %6651 = vmatprep.subr.bf16.mxu0 0
      %6652 = vmatpush1.bf16.msra.mxu0 0
      %6653 = vmatprep.subr.bf16.mxu0 0
      %6654 = vmatpush1.bf16.msra.mxu0 0
      %6655 = vmatprep.subr.bf16.mxu0 0
      %6656 = vmatpush1.bf16.msra.mxu0 0
      %6657 = vmatprep.subr.bf16.mxu0 0
      %6658 = vmatpush1.bf16.msra.mxu0 0
      %6659 = vmatprep.subr.bf16.mxu0 0
      %6660 = vmatpush1.bf16.msra.mxu0 0
      %6661 = vmatprep.subr.bf16.mxu0 0
      %6662 = vmatpush1.bf16.msra.mxu0 0
      %6663 = vmatprep.mubr.bf16.mxu0 0
      %6664 = vmatmul.mubr.bf16.gmra.mrb[0].mxu0 %v6608
      %v6665 = vpop.f32.mrb[0].mxu0
      %v6666 = vadd.f32 %v6594, %v6665
      %v6667 = vpop.f32.mrb[0].mxu0
      %v6668 = vpop.f32.mrb[0].mxu0
      %v6669 = vadd.f32 %v6594, %v6668
      %v6670 = vpop.f32.mrb[0].mxu0
      %6671 = vmatprep.mubr.bf16.mxu0 0
      %6672 = vmatmul.mubr.bf16.gmra.mrb[0].mxu0 %v6611
      %v6673 = vpop.f32.mrb[0].mxu0
      %v6674 = vadd.f32 %v6594, %v6673
      %v6675 = vpop.f32.mrb[0].mxu0
      %v6676 = vpop.f32.mrb[0].mxu0
      %v6677 = vadd.f32 %v6594, %v6676
      %v6678 = vpop.f32.mrb[0].mxu0
      %6679 = vmatprep.mubr.bf16.mxu0 0
      %6680 = vmatmul.mubr.bf16.gmra.mrb[0].mxu0 %v6614
      %v6681 = vpop.f32.mrb[0].mxu0
      %v6682 = vadd.f32 %v6594, %v6681
      %v6683 = vpop.f32.mrb[0].mxu0
      %v6684 = vpop.f32.mrb[0].mxu0
      %v6685 = vadd.f32 %v6594, %v6684
      %v6686 = vpop.f32.mrb[0].mxu0
      %6687 = vmatprep.mubr.bf16.mxu0 0
      %6688 = vmatmul.mubr.bf16.gmra.mrb[0].mxu0 %v6617
      %v6689 = vpop.f32.mrb[0].mxu0
      %v6690 = vadd.f32 %v6594, %v6689
      %v6691 = vpop.f32.mrb[0].mxu0
      %v6692 = vpop.f32.mrb[0].mxu0
      %v6693 = vadd.f32 %v6594, %v6692
      %v6694 = vpop.f32.mrb[0].mxu0
      %6695 = vmatprep.mubr.bf16.mxu0 0
      %6696 = vmatmul.mubr.bf16.gmra.mrb[0].mxu0 %v6620
      %v6697 = vpop.f32.mrb[0].mxu0
      %v6698 = vadd.f32 %v6594, %v6697
      %v6699 = vpop.f32.mrb[0].mxu0
      %v6700 = vpop.f32.mrb[0].mxu0
      %v6701 = vadd.f32 %v6594, %v6700
      %v6702 = vpop.f32.mrb[0].mxu0
      %6703 = vmatprep.mubr.bf16.mxu0 0
      %6704 = vmatmul.mubr.bf16.gmra.mrb[0].mxu0 %v6623
      %v6705 = vpop.f32.mrb[0].mxu0
      %v6706 = vadd.f32 %v6594, %v6705
      %v6707 = vpop.f32.mrb[0].mxu0
      %v6708 = vpop.f32.mrb[0].mxu0
      %v6709 = vadd.f32 %v6594, %v6708
      %v6710 = vpop.f32.mrb[0].mxu0
      %6711 = vmatprep.mubr.bf16.mxu0 0
      %6712 = vmatmul.mubr.bf16.gmra.mrb[0].mxu0 %v6626
      %v6713 = vpop.f32.mrb[0].mxu0
      %v6714 = vadd.f32 %v6594, %v6713
      %v6715 = vpop.f32.mrb[0].mxu0
      %v6716 = vpop.f32.mrb[0].mxu0
      %v6717 = vadd.f32 %v6594, %v6716
      %v6718 = vpop.f32.mrb[0].mxu0
      %6719 = vmatprep.mubr.bf16.mxu0 0
      %6720 = vmatmul.mubr.bf16.gmra.mrb[0].mxu0 %v6629
      %v6721 = vpop.f32.mrb[0].mxu0
      %v6722 = vadd.f32 %v6594, %v6721
      %v6723 = vpop.f32.mrb[0].mxu0
      %v6724 = vpop.f32.mrb[0].mxu0
      %v6725 = vadd.f32 %v6594, %v6724
      %v6726 = vpop.f32.mrb[0].mxu0
      %6727 = vdwg.mxu0
      %v6728 = vmul.f32 %v6666, %v6666
      %v6729 = vmul.f32 %v6669, %v6669
      %v6730 = vmul.f32 %v6674, %v6674
      %v6731 = vmul.f32 %v6677, %v6677
      %v6732 = vmul.f32 %v6682, %v6682
      %v6733 = vmul.f32 %v6685, %v6685
      %v6734 = vmul.f32 %v6690, %v6690
      %v6735 = vmul.f32 %v6693, %v6693
      %v6736 = vmul.f32 %v6698, %v6698
      %v6737 = vmul.f32 %v6701, %v6701
      %v6738 = vmul.f32 %v6706, %v6706
      %v6739 = vmul.f32 %v6709, %v6709
      %v6740 = vmul.f32 %v6714, %v6714
      %v6741 = vmul.f32 %v6717, %v6717
      %v6742 = vmul.f32 %v6722, %v6722
      %v6743 = vmul.f32 %v6725, %v6725
      %v6744 = vmul.f32 %v6666, %v6728
      %v6745 = vmul.f32 %v6669, %v6729
      %v6746 = vmul.f32 %v6674, %v6730
      %v6747 = vmul.f32 %v6677, %v6731
      %v6748 = vmul.f32 %v6682, %v6732
      %v6749 = vmul.f32 %v6685, %v6733
      %v6750 = vmul.f32 %v6690, %v6734
      %v6751 = vmul.f32 %v6693, %v6735
      %v6752 = vmul.f32 %v6698, %v6736
      %v6753 = vmul.f32 %v6701, %v6737
      %v6754 = vmul.f32 %v6706, %v6738
      %v6755 = vmul.f32 %v6709, %v6739
      %v6756 = vmul.f32 %v6714, %v6740
      %v6757 = vmul.f32 %v6717, %v6741
      %v6758 = vmul.f32 %v6722, %v6742
      %v6759 = vmul.f32 %v6725, %v6743
      %v6760 = vmul.f32 %v6744, 0.044715
      %v6761 = vmul.f32 %v6745, 0.044715
      %v6762 = vmul.f32 %v6746, 0.044715
      %v6763 = vmul.f32 %v6747, 0.044715
      %v6764 = vmul.f32 %v6748, 0.044715
      %v6765 = vmul.f32 %v6749, 0.044715
      %v6766 = vmul.f32 %v6750, 0.044715
      %v6767 = vmul.f32 %v6751, 0.044715
      %v6768 = vmul.f32 %v6752, 0.044715
      %v6769 = vmul.f32 %v6753, 0.044715
      %v6770 = vmul.f32 %v6754, 0.044715
      %v6771 = vmul.f32 %v6755, 0.044715
      %v6772 = vmul.f32 %v6756, 0.044715
      %v6773 = vmul.f32 %v6757, 0.044715
      %v6774 = vmul.f32 %v6758, 0.044715
      %v6775 = vmul.f32 %v6759, 0.044715
      %v6776 = vadd.f32 %v6666, %v6760
      %v6777 = vadd.f32 %v6669, %v6761
      %v6778 = vadd.f32 %v6674, %v6762
      %v6779 = vadd.f32 %v6677, %v6763
      %v6780 = vadd.f32 %v6682, %v6764
      %v6781 = vadd.f32 %v6685, %v6765
      %v6782 = vadd.f32 %v6690, %v6766
      %v6783 = vadd.f32 %v6693, %v6767
      %v6784 = vadd.f32 %v6698, %v6768
      %v6785 = vadd.f32 %v6701, %v6769
      %v6786 = vadd.f32 %v6706, %v6770
      %v6787 = vadd.f32 %v6709, %v6771
      %v6788 = vadd.f32 %v6714, %v6772
      %v6789 = vadd.f32 %v6717, %v6773
      %v6790 = vadd.f32 %v6722, %v6774
      %v6791 = vadd.f32 %v6725, %v6775
      %v6792 = vmul.f32 %v6776, 0.7978846
      %v6793 = vmul.f32 %v6777, 0.7978846
      %v6794 = vmul.f32 %v6778, 0.7978846
      %v6795 = vmul.f32 %v6779, 0.7978846
      %v6796 = vmul.f32 %v6780, 0.7978846
      %v6797 = vmul.f32 %v6781, 0.7978846
      %v6798 = vmul.f32 %v6782, 0.7978846
      %v6799 = vmul.f32 %v6783, 0.7978846
      %v6800 = vmul.f32 %v6784, 0.7978846
      %v6801 = vmul.f32 %v6785, 0.7978846
      %v6802 = vmul.f32 %v6786, 0.7978846
      %v6803 = vmul.f32 %v6787, 0.7978846
      %v6804 = vmul.f32 %v6788, 0.7978846
      %v6805 = vmul.f32 %v6789, 0.7978846
      %v6806 = vmul.f32 %v6790, 0.7978846
      %v6807 = vmul.f32 %v6791, 0.7978846
      %v6808 = vtanh.pop %v6792
      %v6809 = vtanh.pop %v6793
      %v6810 = vtanh.pop %v6794
      %v6811 = vtanh.pop %v6795
      %v6812 = vtanh.pop %v6796
      %v6813 = vtanh.pop %v6797
      %v6814 = vtanh.pop %v6798
      %v6815 = vtanh.pop %v6799
      %v6816 = vtanh.pop %v6800
      %v6817 = vtanh.pop %v6801
      %v6818 = vtanh.pop %v6802
      %v6819 = vtanh.pop %v6803
      %v6820 = vtanh.pop %v6804
      %v6821 = vtanh.pop %v6805
      %v6822 = vtanh.pop %v6806
      %v6823 = vtanh.pop %v6807
      %v6824 = vadd.f32 %v6808, 1.0
      %v6825 = vadd.f32 %v6809, 1.0
      %v6826 = vadd.f32 %v6810, 1.0
      %v6827 = vadd.f32 %v6811, 1.0
      %v6828 = vadd.f32 %v6812, 1.0
      %v6829 = vadd.f32 %v6813, 1.0
      %v6830 = vadd.f32 %v6814, 1.0
      %v6831 = vadd.f32 %v6815, 1.0
      %v6832 = vadd.f32 %v6816, 1.0
      %v6833 = vadd.f32 %v6817, 1.0
      %v6834 = vadd.f32 %v6818, 1.0
      %v6835 = vadd.f32 %v6819, 1.0
      %v6836 = vadd.f32 %v6820, 1.0
      %v6837 = vadd.f32 %v6821, 1.0
      %v6838 = vadd.f32 %v6822, 1.0
      %v6839 = vadd.f32 %v6823, 1.0
      %v6840 = vmul.f32 %v6824, 0.5
      %v6841 = vmul.f32 %v6825, 0.5
      %v6842 = vmul.f32 %v6826, 0.5
      %v6843 = vmul.f32 %v6827, 0.5
      %v6844 = vmul.f32 %v6828, 0.5
      %v6845 = vmul.f32 %v6829, 0.5
      %v6846 = vmul.f32 %v6830, 0.5
      %v6847 = vmul.f32 %v6831, 0.5
      %v6848 = vmul.f32 %v6832, 0.5
      %v6849 = vmul.f32 %v6833, 0.5
      %v6850 = vmul.f32 %v6834, 0.5
      %v6851 = vmul.f32 %v6835, 0.5
      %v6852 = vmul.f32 %v6836, 0.5
      %v6853 = vmul.f32 %v6837, 0.5
      %v6854 = vmul.f32 %v6838, 0.5
      %v6855 = vmul.f32 %v6839, 0.5
      %v6856 = vmul.f32 %v6666, %v6840
      %v6857 = vmul.f32 %v6669, %v6841
      %v6858 = vmul.f32 %v6674, %v6842
      %v6859 = vmul.f32 %v6677, %v6843
      %v6860 = vmul.f32 %v6682, %v6844
      %v6861 = vmul.f32 %v6685, %v6845
      %v6862 = vmul.f32 %v6690, %v6846
      %v6863 = vmul.f32 %v6693, %v6847
      %v6864 = vmul.f32 %v6698, %v6848
      %v6865 = vmul.f32 %v6701, %v6849
      %v6866 = vmul.f32 %v6706, %v6850
      %v6867 = vmul.f32 %v6709, %v6851
      %v6868 = vmul.f32 %v6714, %v6852
      %v6869 = vmul.f32 %v6717, %v6853
      %v6870 = vmul.f32 %v6722, %v6854
      %v6871 = vmul.f32 %v6725, %v6855
      %v6872 = vpack.c.bf16 %v6857, %v6856
      %v6873 = vpack.c.bf16 %v6859, %v6858
      %v6874 = vpack.c.bf16 %v6861, %v6860
      %v6875 = vpack.c.bf16 %v6863, %v6862
      %v6876 = vpack.c.bf16 %v6865, %v6864
      %v6877 = vpack.c.bf16 %v6867, %v6866
      %v6878 = vpack.c.bf16 %v6869, %v6868
      %v6879 = vpack.c.bf16 %v6871, %v6870
      %s6880 = scalar_lea.vmem %s12, 32
      %v6881 = vld [vmem:[%s6880] sm:$0xf]
      %v6882 = vld [vmem:[%s6880 + $0x4] sm:$0xf]
      %v6883 = vld [vmem:[%s6880 + $0x8] sm:$0xf]
      %v6884 = vld [vmem:[%s6880 + $0xc] sm:$0xf]
      %v6885 = vld [vmem:[%s6880 + $0x10] sm:$0xf]
      %v6886 = vld [vmem:[%s6880 + $0x14] sm:$0xf]
      %v6887 = vld [vmem:[%s6880 + $0x18] sm:$0xf]
      %v6888 = vld [vmem:[%s6880 + $0x1c] sm:$0xf]
      %s6889 = scalar_lea.vmem %s13, 1
      %v6890 = vld [vmem:[%s6889] sm:$0x1]
      %v6891 = vunpack.c.l.bf16 %v6890
      %v6892 = vlaneseq
      %v6893 = vshrl.u32 %v6892, 7
      %v6894 = vsub.s32 0, %v6893
      %v6895 = vrot.slane %v6891, %v6894
      %v6904 = vunpack.c.l.b16 %v6881
      %v6905 = vunpack.c.l.b16 %v6882
      %v6906 = vunpack.c.l.b16 %v6883
      %v6907 = vunpack.c.l.b16 %v6884
      %v6908 = vunpack.c.l.b16 %v6885
      %v6909 = vunpack.c.l.b16 %v6886
      %v6910 = vunpack.c.l.b16 %v6887
      %v6911 = vunpack.c.l.b16 %v6888
      %v6912 = vpack.c.b16 %v6905, %v6904
      %v6913 = vpack.c.b16 %v6907, %v6906
      %v6914 = vpack.c.b16 %v6909, %v6908
      %v6915 = vpack.c.b16 %v6911, %v6910
      %v6921 = vsel %vm3697, %v6872, 0
      %v6924 = vsel %vm3697, %v6873, 0
      %v6927 = vsel %vm3697, %v6874, 0
      %v6930 = vsel %vm3697, %v6875, 0
      %v6933 = vsel %vm3697, %v6876, 0
      %v6936 = vsel %vm3697, %v6877, 0
      %v6939 = vsel %vm3697, %v6878, 0
      %v6942 = vsel %vm3697, %v6879, 0
      %6944 = vmatprep.subr.bf16.mxu0 0
      %6945 = vmatpush1.bf16.msra.mxu0 %v6912
      %6946 = vmatprep.subr.bf16.mxu0 0
      %6947 = vmatpush1.bf16.msra.mxu0 %v6913
      %6948 = vmatprep.subr.bf16.mxu0 0
      %6949 = vmatpush1.bf16.msra.mxu0 %v6914
      %6950 = vmatprep.subr.bf16.mxu0 0
      %6951 = vmatpush1.bf16.msra.mxu0 %v6915
      %6952 = vmatprep.subr.bf16.mxu0 0
      %6953 = vmatpush1.bf16.msra.mxu0 0
      %6954 = vmatprep.subr.bf16.mxu0 0
      %6955 = vmatpush1.bf16.msra.mxu0 0
      %6956 = vmatprep.subr.bf16.mxu0 0
      %6957 = vmatpush1.bf16.msra.mxu0 0
      %6958 = vmatprep.subr.bf16.mxu0 0
      %6959 = vmatpush1.bf16.msra.mxu0 0
      %6960 = vmatprep.subr.bf16.mxu0 0
      %6961 = vmatpush1.bf16.msra.mxu0 0
      %6962 = vmatprep.subr.bf16.mxu0 0
      %6963 = vmatpush1.bf16.msra.mxu0 0
      %6964 = vmatprep.subr.bf16.mxu0 0
      %6965 = vmatpush1.bf16.msra.mxu0 0
      %6966 = vmatprep.subr.bf16.mxu0 0
      %6967 = vmatpush1.bf16.msra.mxu0 0
      %6968 = vmatprep.subr.bf16.mxu0 0
      %6969 = vmatpush1.bf16.msra.mxu0 0
      %6970 = vmatprep.subr.bf16.mxu0 0
      %6971 = vmatpush1.bf16.msra.mxu0 0
      %6972 = vmatprep.subr.bf16.mxu0 0
      %6973 = vmatpush1.bf16.msra.mxu0 0
      %6974 = vmatprep.subr.bf16.mxu0 0
      %6975 = vmatpush1.bf16.msra.mxu0 0
      %6976 = vmatprep.mubr.bf16.mxu0 0
      %6977 = vmatmul.mubr.bf16.gmra.mrb[0].mxu0 %v6921
      %v6978 = vpop.f32.mrb[0].mxu0
      %v6979 = vadd.f32 %v6895, %v6978
      %v6980 = vpop.f32.mrb[0].mxu0
      %v6981 = vpop.f32.mrb[0].mxu0
      %v6982 = vadd.f32 %v6895, %v6981
      %v6983 = vpop.f32.mrb[0].mxu0
      %6984 = vmatprep.mubr.bf16.mxu0 0
      %6985 = vmatmul.mubr.bf16.gmra.mrb[0].mxu0 %v6924
      %v6986 = vpop.f32.mrb[0].mxu0
      %v6987 = vadd.f32 %v6895, %v6986
      %v6988 = vpop.f32.mrb[0].mxu0
      %v6989 = vpop.f32.mrb[0].mxu0
      %v6990 = vadd.f32 %v6895, %v6989
      %v6991 = vpop.f32.mrb[0].mxu0
      %6992 = vmatprep.mubr.bf16.mxu0 0
      %6993 = vmatmul.mubr.bf16.gmra.mrb[0].mxu0 %v6927
      %v6994 = vpop.f32.mrb[0].mxu0
      %v6995 = vadd.f32 %v6895, %v6994
      %v6996 = vpop.f32.mrb[0].mxu0
      %v6997 = vpop.f32.mrb[0].mxu0
      %v6998 = vadd.f32 %v6895, %v6997
      %v6999 = vpop.f32.mrb[0].mxu0
      %7000 = vmatprep.mubr.bf16.mxu0 0
      %7001 = vmatmul.mubr.bf16.gmra.mrb[0].mxu0 %v6930
      %v7002 = vpop.f32.mrb[0].mxu0
      %v7003 = vadd.f32 %v6895, %v7002
      %v7004 = vpop.f32.mrb[0].mxu0
      %v7005 = vpop.f32.mrb[0].mxu0
      %v7006 = vadd.f32 %v6895, %v7005
      %v7007 = vpop.f32.mrb[0].mxu0
      %7008 = vmatprep.mubr.bf16.mxu0 0
      %7009 = vmatmul.mubr.bf16.gmra.mrb[0].mxu0 %v6933
      %v7010 = vpop.f32.mrb[0].mxu0
      %v7011 = vadd.f32 %v6895, %v7010
      %v7012 = vpop.f32.mrb[0].mxu0
      %v7013 = vpop.f32.mrb[0].mxu0
      %v7014 = vadd.f32 %v6895, %v7013
      %v7015 = vpop.f32.mrb[0].mxu0
      %7016 = vmatprep.mubr.bf16.mxu0 0
      %7017 = vmatmul.mubr.bf16.gmra.mrb[0].mxu0 %v6936
      %v7018 = vpop.f32.mrb[0].mxu0
      %v7019 = vadd.f32 %v6895, %v7018
      %v7020 = vpop.f32.mrb[0].mxu0
      %v7021 = vpop.f32.mrb[0].mxu0
      %v7022 = vadd.f32 %v6895, %v7021
      %v7023 = vpop.f32.mrb[0].mxu0
      %7024 = vmatprep.mubr.bf16.mxu0 0
      %7025 = vmatmul.mubr.bf16.gmra.mrb[0].mxu0 %v6939
      %v7026 = vpop.f32.mrb[0].mxu0
      %v7027 = vadd.f32 %v6895, %v7026
      %v7028 = vpop.f32.mrb[0].mxu0
      %v7029 = vpop.f32.mrb[0].mxu0
      %v7030 = vadd.f32 %v6895, %v7029
      %v7031 = vpop.f32.mrb[0].mxu0
      %7032 = vmatprep.mubr.bf16.mxu0 0
      %7033 = vmatmul.mubr.bf16.gmra.mrb[0].mxu0 %v6942
      %v7034 = vpop.f32.mrb[0].mxu0
      %v7035 = vadd.f32 %v6895, %v7034
      %v7036 = vpop.f32.mrb[0].mxu0
      %v7037 = vpop.f32.mrb[0].mxu0
      %v7038 = vadd.f32 %v6895, %v7037
      %v7039 = vpop.f32.mrb[0].mxu0
      %7040 = vdwg.mxu0
      %v7041 = vunpack.c.l.bf16 %v6575
      %v7042 = vunpack.c.h.bf16 %v6575
      %v7043 = vunpack.c.l.bf16 %v6576
      %v7044 = vunpack.c.h.bf16 %v6576
      %v7045 = vunpack.c.l.bf16 %v6577
      %v7046 = vunpack.c.h.bf16 %v6577
      %v7047 = vunpack.c.l.bf16 %v6578
      %v7048 = vunpack.c.h.bf16 %v6578
      %v7049 = vunpack.c.l.bf16 %v6579
      %v7050 = vunpack.c.h.bf16 %v6579
      %v7051 = vunpack.c.l.bf16 %v6580
      %v7052 = vunpack.c.h.bf16 %v6580
      %v7053 = vunpack.c.l.bf16 %v6581
      %v7054 = vunpack.c.h.bf16 %v6581
      %v7055 = vunpack.c.l.bf16 %v6582
      %v7056 = vunpack.c.h.bf16 %v6582
      %v7057 = vadd.f32 %v6979, %v7041
      %v7058 = vadd.f32 %v6982, %v7042
      %v7059 = vadd.f32 %v6987, %v7043
      %v7060 = vadd.f32 %v6990, %v7044
      %v7061 = vadd.f32 %v6995, %v7045
      %v7062 = vadd.f32 %v6998, %v7046
      %v7063 = vadd.f32 %v7003, %v7047
      %v7064 = vadd.f32 %v7006, %v7048
      %v7065 = vadd.f32 %v7011, %v7049
      %v7066 = vadd.f32 %v7014, %v7050
      %v7067 = vadd.f32 %v7019, %v7051
      %v7068 = vadd.f32 %v7022, %v7052
      %v7069 = vadd.f32 %v7027, %v7053
      %v7070 = vadd.f32 %v7030, %v7054
      %v7071 = vadd.f32 %v7035, %v7055
      %v7072 = vadd.f32 %v7038, %v7056
      %s7073 = scalar_lea.vmem %s14, 1
      %v7074 = vld [vmem:[%s7073] sm:$0x1]
      %s7075 = scalar_lea.vmem %s15, 1
      %v7076 = vld [vmem:[%s7075] sm:$0x1]
      %v7077 = vsel %vm629, %v7057, 0.0
      %7078 = vadd.xlane.f32.xlu0 %v7077
      %v7079 = vpop.xlane.xlu0 %7078
      %v7080 = vsel %vm629, %v7058, 0.0
      %7081 = vadd.xlane.f32.xlu0 %v7080
      %v7082 = vpop.xlane.xlu0 %7081
      %v7083 = vsel %vm629, %v7059, 0.0
      %7084 = vadd.xlane.f32.xlu0 %v7083
      %v7085 = vpop.xlane.xlu0 %7084
      %v7086 = vsel %vm629, %v7060, 0.0
      %7087 = vadd.xlane.f32.xlu0 %v7086
      %v7088 = vpop.xlane.xlu0 %7087
      %v7089 = vsel %vm629, %v7061, 0.0
      %7090 = vadd.xlane.f32.xlu0 %v7089
      %v7091 = vpop.xlane.xlu0 %7090
      %v7092 = vsel %vm629, %v7062, 0.0
      %7093 = vadd.xlane.f32.xlu0 %v7092
      %v7094 = vpop.xlane.xlu0 %7093
      %v7095 = vsel %vm629, %v7063, 0.0
      %7096 = vadd.xlane.f32.xlu0 %v7095
      %v7097 = vpop.xlane.xlu0 %7096
      %v7098 = vsel %vm629, %v7064, 0.0
      %7099 = vadd.xlane.f32.xlu0 %v7098
      %v7100 = vpop.xlane.xlu0 %7099
      %v7101 = vsel %vm629, %v7065, 0.0
      %7102 = vadd.xlane.f32.xlu0 %v7101
      %v7103 = vpop.xlane.xlu0 %7102
      %v7104 = vsel %vm629, %v7066, 0.0
      %7105 = vadd.xlane.f32.xlu0 %v7104
      %v7106 = vpop.xlane.xlu0 %7105
      %v7107 = vsel %vm629, %v7067, 0.0
      %7108 = vadd.xlane.f32.xlu0 %v7107
      %v7109 = vpop.xlane.xlu0 %7108
      %v7110 = vsel %vm629, %v7068, 0.0
      %7111 = vadd.xlane.f32.xlu0 %v7110
      %v7112 = vpop.xlane.xlu0 %7111
      %v7113 = vsel %vm629, %v7069, 0.0
      %7114 = vadd.xlane.f32.xlu0 %v7113
      %v7115 = vpop.xlane.xlu0 %7114
      %v7116 = vsel %vm629, %v7070, 0.0
      %7117 = vadd.xlane.f32.xlu0 %v7116
      %v7118 = vpop.xlane.xlu0 %7117
      %v7119 = vsel %vm629, %v7071, 0.0
      %7120 = vadd.xlane.f32.xlu0 %v7119
      %v7121 = vpop.xlane.xlu0 %7120
      %v7122 = vsel %vm629, %v7072, 0.0
      %7123 = vadd.xlane.f32.xlu0 %v7122
      %v7124 = vpop.xlane.xlu0 %7123
      %v7125 = vmul.f32 %v7079, %v678
      %v7126 = vmul.f32 %v7082, %v678
      %v7127 = vmul.f32 %v7085, %v678
      %v7128 = vmul.f32 %v7088, %v678
      %v7129 = vmul.f32 %v7091, %v678
      %v7130 = vmul.f32 %v7094, %v678
      %v7131 = vmul.f32 %v7097, %v678
      %v7132 = vmul.f32 %v7100, %v678
      %v7133 = vmul.f32 %v7103, %v678
      %v7134 = vmul.f32 %v7106, %v678
      %v7135 = vmul.f32 %v7109, %v678
      %v7136 = vmul.f32 %v7112, %v678
      %v7137 = vmul.f32 %v7115, %v678
      %v7138 = vmul.f32 %v7118, %v678
      %v7139 = vmul.f32 %v7121, %v678
      %v7140 = vmul.f32 %v7124, %v678
      %v7141 = vsub.f32 %v7057, %v7125
      %v7142 = vsub.f32 %v7058, %v7126
      %v7143 = vsub.f32 %v7059, %v7127
      %v7144 = vsub.f32 %v7060, %v7128
      %v7145 = vsub.f32 %v7061, %v7129
      %v7146 = vsub.f32 %v7062, %v7130
      %v7147 = vsub.f32 %v7063, %v7131
      %v7148 = vsub.f32 %v7064, %v7132
      %v7149 = vsub.f32 %v7065, %v7133
      %v7150 = vsub.f32 %v7066, %v7134
      %v7151 = vsub.f32 %v7067, %v7135
      %v7152 = vsub.f32 %v7068, %v7136
      %v7153 = vsub.f32 %v7069, %v7137
      %v7154 = vsub.f32 %v7070, %v7138
      %v7155 = vsub.f32 %v7071, %v7139
      %v7156 = vsub.f32 %v7072, %v7140
      %v7157 = vmul.f32 %v7141, %v7141
      %v7158 = vmul.f32 %v7142, %v7142
      %v7159 = vmul.f32 %v7143, %v7143
      %v7160 = vmul.f32 %v7144, %v7144
      %v7161 = vmul.f32 %v7145, %v7145
      %v7162 = vmul.f32 %v7146, %v7146
      %v7163 = vmul.f32 %v7147, %v7147
      %v7164 = vmul.f32 %v7148, %v7148
      %v7165 = vmul.f32 %v7149, %v7149
      %v7166 = vmul.f32 %v7150, %v7150
      %v7167 = vmul.f32 %v7151, %v7151
      %v7168 = vmul.f32 %v7152, %v7152
      %v7169 = vmul.f32 %v7153, %v7153
      %v7170 = vmul.f32 %v7154, %v7154
      %v7171 = vmul.f32 %v7155, %v7155
      %v7172 = vmul.f32 %v7156, %v7156
      %v7173 = vsel %vm629, %v7157, 0.0
      %7174 = vadd.xlane.f32.xlu0 %v7173
      %v7175 = vpop.xlane.xlu0 %7174
      %v7176 = vsel %vm629, %v7158, 0.0
      %7177 = vadd.xlane.f32.xlu0 %v7176
      %v7178 = vpop.xlane.xlu0 %7177
      %v7179 = vsel %vm629, %v7159, 0.0
      %7180 = vadd.xlane.f32.xlu0 %v7179
      %v7181 = vpop.xlane.xlu0 %7180
      %v7182 = vsel %vm629, %v7160, 0.0
      %7183 = vadd.xlane.f32.xlu0 %v7182
      %v7184 = vpop.xlane.xlu0 %7183
      %v7185 = vsel %vm629, %v7161, 0.0
      %7186 = vadd.xlane.f32.xlu0 %v7185
      %v7187 = vpop.xlane.xlu0 %7186
      %v7188 = vsel %vm629, %v7162, 0.0
      %7189 = vadd.xlane.f32.xlu0 %v7188
      %v7190 = vpop.xlane.xlu0 %7189
      %v7191 = vsel %vm629, %v7163, 0.0
      %7192 = vadd.xlane.f32.xlu0 %v7191
      %v7193 = vpop.xlane.xlu0 %7192
      %v7194 = vsel %vm629, %v7164, 0.0
      %7195 = vadd.xlane.f32.xlu0 %v7194
      %v7196 = vpop.xlane.xlu0 %7195
      %v7197 = vsel %vm629, %v7165, 0.0
      %7198 = vadd.xlane.f32.xlu0 %v7197
      %v7199 = vpop.xlane.xlu0 %7198
      %v7200 = vsel %vm629, %v7166, 0.0
      %7201 = vadd.xlane.f32.xlu0 %v7200
      %v7202 = vpop.xlane.xlu0 %7201
      %v7203 = vsel %vm629, %v7167, 0.0
      %7204 = vadd.xlane.f32.xlu0 %v7203
      %v7205 = vpop.xlane.xlu0 %7204
      %v7206 = vsel %vm629, %v7168, 0.0
      %7207 = vadd.xlane.f32.xlu0 %v7206
      %v7208 = vpop.xlane.xlu0 %7207
      %v7209 = vsel %vm629, %v7169, 0.0
      %7210 = vadd.xlane.f32.xlu0 %v7209
      %v7211 = vpop.xlane.xlu0 %7210
      %v7212 = vsel %vm629, %v7170, 0.0
      %7213 = vadd.xlane.f32.xlu0 %v7212
      %v7214 = vpop.xlane.xlu0 %7213
      %v7215 = vsel %vm629, %v7171, 0.0
      %7216 = vadd.xlane.f32.xlu0 %v7215
      %v7217 = vpop.xlane.xlu0 %7216
      %v7218 = vsel %vm629, %v7172, 0.0
      %7219 = vadd.xlane.f32.xlu0 %v7218
      %v7220 = vpop.xlane.xlu0 %7219
      %v7221 = vmul.f32 %v7175, %v678
      %v7222 = vmul.f32 %v7178, %v678
      %v7223 = vmul.f32 %v7181, %v678
      %v7224 = vmul.f32 %v7184, %v678
      %v7225 = vmul.f32 %v7187, %v678
      %v7226 = vmul.f32 %v7190, %v678
      %v7227 = vmul.f32 %v7193, %v678
      %v7228 = vmul.f32 %v7196, %v678
      %v7229 = vmul.f32 %v7199, %v678
      %v7230 = vmul.f32 %v7202, %v678
      %v7231 = vmul.f32 %v7205, %v678
      %v7232 = vmul.f32 %v7208, %v678
      %v7233 = vmul.f32 %v7211, %v678
      %v7234 = vmul.f32 %v7214, %v678
      %v7235 = vmul.f32 %v7217, %v678
      %v7236 = vmul.f32 %v7220, %v678
      %v7237 = vadd.f32 %v7221, 1e-12
      %v7238 = vadd.f32 %v7222, 1e-12
      %v7239 = vadd.f32 %v7223, 1e-12
      %v7240 = vadd.f32 %v7224, 1e-12
      %v7241 = vadd.f32 %v7225, 1e-12
      %v7242 = vadd.f32 %v7226, 1e-12
      %v7243 = vadd.f32 %v7227, 1e-12
      %v7244 = vadd.f32 %v7228, 1e-12
      %v7245 = vadd.f32 %v7229, 1e-12
      %v7246 = vadd.f32 %v7230, 1e-12
      %v7247 = vadd.f32 %v7231, 1e-12
      %v7248 = vadd.f32 %v7232, 1e-12
      %v7249 = vadd.f32 %v7233, 1e-12
      %v7250 = vadd.f32 %v7234, 1e-12
      %v7251 = vadd.f32 %v7235, 1e-12
      %v7252 = vadd.f32 %v7236, 1e-12
      %v7253 = vrsqrt.pop %v7237
      %v7254 = vrsqrt.pop %v7238
      %v7255 = vrsqrt.pop %v7239
      %v7256 = vrsqrt.pop %v7240
      %v7257 = vrsqrt.pop %v7241
      %v7258 = vrsqrt.pop %v7242
      %v7259 = vrsqrt.pop %v7243
      %v7260 = vrsqrt.pop %v7244
      %v7261 = vrsqrt.pop %v7245
      %v7262 = vrsqrt.pop %v7246
      %v7263 = vrsqrt.pop %v7247
      %v7264 = vrsqrt.pop %v7248
      %v7265 = vrsqrt.pop %v7249
      %v7266 = vrsqrt.pop %v7250
      %v7267 = vrsqrt.pop %v7251
      %v7268 = vrsqrt.pop %v7252
      %v7269 = vmul.f32 %v7141, %v7253
      %v7270 = vmul.f32 %v7142, %v7254
      %v7271 = vmul.f32 %v7143, %v7255
      %v7272 = vmul.f32 %v7144, %v7256
      %v7273 = vmul.f32 %v7145, %v7257
      %v7274 = vmul.f32 %v7146, %v7258
      %v7275 = vmul.f32 %v7147, %v7259
      %v7276 = vmul.f32 %v7148, %v7260
      %v7277 = vmul.f32 %v7149, %v7261
      %v7278 = vmul.f32 %v7150, %v7262
      %v7279 = vmul.f32 %v7151, %v7263
      %v7280 = vmul.f32 %v7152, %v7264
      %v7281 = vmul.f32 %v7153, %v7265
      %v7282 = vmul.f32 %v7154, %v7266
      %v7283 = vmul.f32 %v7155, %v7267
      %v7284 = vmul.f32 %v7156, %v7268
      %v7285 = vunpack.c.l.bf16 %v7074
      %v7286 = vlaneseq
      %v7287 = vshrl.u32 %v7286, 7
      %v7288 = vsub.s32 0, %v7287
      %v7289 = vrot.slane %v7285, %v7288
      %v7290 = vmul.f32 %v7269, %v7289
      %v7291 = vmul.f32 %v7270, %v7289
      %v7292 = vmul.f32 %v7271, %v7289
      %v7293 = vmul.f32 %v7272, %v7289
      %v7294 = vmul.f32 %v7273, %v7289
      %v7295 = vmul.f32 %v7274, %v7289
      %v7296 = vmul.f32 %v7275, %v7289
      %v7297 = vmul.f32 %v7276, %v7289
      %v7298 = vmul.f32 %v7277, %v7289
      %v7299 = vmul.f32 %v7278, %v7289
      %v7300 = vmul.f32 %v7279, %v7289
      %v7301 = vmul.f32 %v7280, %v7289
      %v7302 = vmul.f32 %v7281, %v7289
      %v7303 = vmul.f32 %v7282, %v7289
      %v7304 = vmul.f32 %v7283, %v7289
      %v7305 = vmul.f32 %v7284, %v7289
      %v7306 = vunpack.c.l.bf16 %v7076
      %v7307 = vlaneseq
      %v7308 = vshrl.u32 %v7307, 7
      %v7309 = vsub.s32 0, %v7308
      %v7310 = vrot.slane %v7306, %v7309
      %v7311 = vadd.f32 %v7290, %v7310
      %v7312 = vadd.f32 %v7291, %v7310
      %v7313 = vadd.f32 %v7292, %v7310
      %v7314 = vadd.f32 %v7293, %v7310
      %v7315 = vadd.f32 %v7294, %v7310
      %v7316 = vadd.f32 %v7295, %v7310
      %v7317 = vadd.f32 %v7296, %v7310
      %v7318 = vadd.f32 %v7297, %v7310
      %v7319 = vadd.f32 %v7298, %v7310
      %v7320 = vadd.f32 %v7299, %v7310
      %v7321 = vadd.f32 %v7300, %v7310
      %v7322 = vadd.f32 %v7301, %v7310
      %v7323 = vadd.f32 %v7302, %v7310
      %v7324 = vadd.f32 %v7303, %v7310
      %v7325 = vadd.f32 %v7304, %v7310
      %v7326 = vadd.f32 %v7305, %v7310
      %v7327 = vpack.c.bf16 %v7312, %v7311
      %v7328 = vpack.c.bf16 %v7314, %v7313
      %v7329 = vpack.c.bf16 %v7316, %v7315
      %v7330 = vpack.c.bf16 %v7318, %v7317
      %v7331 = vpack.c.bf16 %v7320, %v7319
      %v7332 = vpack.c.bf16 %v7322, %v7321
      %v7333 = vpack.c.bf16 %v7324, %v7323
      %v7334 = vpack.c.bf16 %v7326, %v7325
      %v7335 = vunpack.c.l.bf16 %v7327
      %v7336 = vunpack.c.h.bf16 %v7327
      %v7337 = vunpack.c.l.bf16 %v7328
      %v7338 = vunpack.c.h.bf16 %v7328
      %v7339 = vunpack.c.l.bf16 %v7329
      %v7340 = vunpack.c.h.bf16 %v7329
      %v7341 = vunpack.c.l.bf16 %v7330
      %v7342 = vunpack.c.h.bf16 %v7330
      %v7343 = vunpack.c.l.bf16 %v7331
      %v7344 = vunpack.c.h.bf16 %v7331
      %v7345 = vunpack.c.l.bf16 %v7332
      %v7346 = vunpack.c.h.bf16 %v7332
      %v7347 = vunpack.c.l.bf16 %v7333
      %v7348 = vunpack.c.h.bf16 %v7333
      %v7349 = vunpack.c.l.bf16 %v7334
      %v7350 = vunpack.c.h.bf16 %v7334
      %v7351 = vld [vmem:[%s16] sm:$0xff]
      %v7352 = vld [vmem:[%s16 + $0x8] sm:$0xff]
      %v7353 = vld [vmem:[%s16 + $0x10] sm:$0xff]
      %v7354 = vld [vmem:[%s16 + $0x18] sm:$0xff]
      %v7355 = vld [vmem:[%s17] sm:$0x1]
      %v7357 = vlaneseq
      %v7358 = vshrl.u32 %v7357, 7
      %v7359 = vsub.s32 0, %v7358
      %v7360 = vrot.slane %v7355, %v7359
      %v7363 = vsel %vm629, %v7335, 0
      %v7366 = vsel %vm629, %v7336, 0
      %v7369 = vsel %vm629, %v7337, 0
      %v7372 = vsel %vm629, %v7338, 0
      %v7375 = vsel %vm629, %v7339, 0
      %v7378 = vsel %vm629, %v7340, 0
      %v7381 = vsel %vm629, %v7341, 0
      %v7384 = vsel %vm629, %v7342, 0
      %v7387 = vsel %vm629, %v7343, 0
      %v7390 = vsel %vm629, %v7344, 0
      %v7393 = vsel %vm629, %v7345, 0
      %v7396 = vsel %vm629, %v7346, 0
      %v7399 = vsel %vm629, %v7347, 0
      %v7402 = vsel %vm629, %v7348, 0
      %v7405 = vsel %vm629, %v7349, 0
      %v7408 = vsel %vm629, %v7350, 0
      %7410 = vmatprep.subr.mxu0 0.0
      %7411 = vmatpush1.msra.mxu0 %v7351
      %7412 = vmatprep.subr.mxu0 0.0
      %7413 = vmatpush1.msra.mxu0 %v7352
      %7414 = vmatprep.subr.mxu0 0.0
      %7415 = vmatpush1.msra.mxu0 %v7353
      %7416 = vmatprep.subr.mxu0 0.0
      %7417 = vmatpush1.msra.mxu0 %v7354
      %7418 = vmatprep.subr.mxu0 0.0
      %7419 = vmatpush1.msra.mxu0 0.0
      %7420 = vmatprep.subr.mxu0 0.0
      %7421 = vmatpush1.msra.mxu0 0.0
      %7422 = vmatprep.subr.mxu0 0.0
      %7423 = vmatpush1.msra.mxu0 0.0
      %7424 = vmatprep.subr.mxu0 0.0
      %7425 = vmatpush1.msra.mxu0 0.0
      %7426 = vmatprep.subr.mxu0 0.0
      %7427 = vmatpush1.msra.mxu0 0.0
      %7428 = vmatprep.subr.mxu0 0.0
      %7429 = vmatpush1.msra.mxu0 0.0
      %7430 = vmatprep.subr.mxu0 0.0
      %7431 = vmatpush1.msra.mxu0 0.0
      %7432 = vmatprep.subr.mxu0 0.0
      %7433 = vmatpush1.msra.mxu0 0.0
      %7434 = vmatprep.subr.mxu0 0.0
      %7435 = vmatpush1.msra.mxu0 0.0
      %7436 = vmatprep.subr.mxu0 0.0
      %7437 = vmatpush1.msra.mxu0 0.0
      %7438 = vmatprep.subr.mxu0 0.0
      %7439 = vmatpush1.msra.mxu0 0.0
      %7440 = vmatprep.subr.mxu0 0.0
      %7441 = vmatpush1.msra.mxu0 0.0
      %7442 = vmatprep.subr.mxu0 0.0
      %7443 = vmatpush1.msra.mxu0 0.0
      %7444 = vmatprep.subr.mxu0 0.0
      %7445 = vmatpush1.msra.mxu0 0.0
      %7446 = vmatprep.subr.mxu0 0.0
      %7447 = vmatpush1.msra.mxu0 0.0
      %7448 = vmatprep.subr.mxu0 0.0
      %7449 = vmatpush1.msra.mxu0 0.0
      %7450 = vmatprep.subr.mxu0 0.0
      %7451 = vmatpush1.msra.mxu0 0.0
      %7452 = vmatprep.subr.mxu0 0.0
      %7453 = vmatpush1.msra.mxu0 0.0
      %7454 = vmatprep.subr.mxu0 0.0
      %7455 = vmatpush1.msra.mxu0 0.0
      %7456 = vmatprep.subr.mxu0 0.0
      %7457 = vmatpush1.msra.mxu0 0.0
      %7458 = vmatprep.subr.mxu0 0.0
      %7459 = vmatpush1.msra.mxu0 0.0
      %7460 = vmatprep.subr.mxu0 0.0
      %7461 = vmatpush1.msra.mxu0 0.0
      %7462 = vmatprep.subr.mxu0 0.0
      %7463 = vmatpush1.msra.mxu0 0.0
      %7464 = vmatprep.subr.mxu0 0.0
      %7465 = vmatpush1.msra.mxu0 0.0
      %7466 = vmatprep.subr.mxu0 0.0
      %7467 = vmatpush1.msra.mxu0 0.0
      %7468 = vmatprep.subr.mxu0 0.0
      %7469 = vmatpush1.msra.mxu0 0.0
      %7470 = vmatprep.subr.mxu0 0.0
      %7471 = vmatpush1.msra.mxu0 0.0
      %7472 = vmatprep.subr.mxu0 0.0
      %7473 = vmatpush1.msra.mxu0 0.0
      %7474 = vmatprep.mubr.f32.mxu0 0.0
      %7475 = vmatmul.mubr.f32.gmra.mrb[0].mxu0 %v7363
      %v7476 = vpop.f32.mrb[0].mxu0
      %v7477 = vadd.f32 %v7360, %v7476
      %v7478 = vpop.f32.mrb[0].mxu0
      %7479 = vmatprep.mubr.f32.mxu0 0.0
      %7480 = vmatmul.mubr.f32.gmra.mrb[0].mxu0 %v7366
      %v7481 = vpop.f32.mrb[0].mxu0
      %v7482 = vadd.f32 %v7360, %v7481
      %v7483 = vpop.f32.mrb[0].mxu0
      %7484 = vmatprep.mubr.f32.mxu0 0.0
      %7485 = vmatmul.mubr.f32.gmra.mrb[0].mxu0 %v7369
      %v7486 = vpop.f32.mrb[0].mxu0
      %v7487 = vadd.f32 %v7360, %v7486
      %v7488 = vpop.f32.mrb[0].mxu0
      %7489 = vmatprep.mubr.f32.mxu0 0.0
      %7490 = vmatmul.mubr.f32.gmra.mrb[0].mxu0 %v7372
      %v7491 = vpop.f32.mrb[0].mxu0
      %v7492 = vadd.f32 %v7360, %v7491
      %v7493 = vpop.f32.mrb[0].mxu0
      %7494 = vmatprep.mubr.f32.mxu0 0.0
      %7495 = vmatmul.mubr.f32.gmra.mrb[0].mxu0 %v7375
      %v7496 = vpop.f32.mrb[0].mxu0
      %v7497 = vadd.f32 %v7360, %v7496
      %v7498 = vpop.f32.mrb[0].mxu0
      %7499 = vmatprep.mubr.f32.mxu0 0.0
      %7500 = vmatmul.mubr.f32.gmra.mrb[0].mxu0 %v7378
      %v7501 = vpop.f32.mrb[0].mxu0
      %v7502 = vadd.f32 %v7360, %v7501
      %v7503 = vpop.f32.mrb[0].mxu0
      %7504 = vmatprep.mubr.f32.mxu0 0.0
      %7505 = vmatmul.mubr.f32.gmra.mrb[0].mxu0 %v7381
      %v7506 = vpop.f32.mrb[0].mxu0
      %v7507 = vadd.f32 %v7360, %v7506
      %v7508 = vpop.f32.mrb[0].mxu0
      %7509 = vmatprep.mubr.f32.mxu0 0.0
      %7510 = vmatmul.mubr.f32.gmra.mrb[0].mxu0 %v7384
      %v7511 = vpop.f32.mrb[0].mxu0
      %v7512 = vadd.f32 %v7360, %v7511
      %v7513 = vpop.f32.mrb[0].mxu0
      %7514 = vmatprep.mubr.f32.mxu0 0.0
      %7515 = vmatmul.mubr.f32.gmra.mrb[0].mxu0 %v7387
      %v7516 = vpop.f32.mrb[0].mxu0
      %v7517 = vadd.f32 %v7360, %v7516
      %v7518 = vpop.f32.mrb[0].mxu0
      %7519 = vmatprep.mubr.f32.mxu0 0.0
      %7520 = vmatmul.mubr.f32.gmra.mrb[0].mxu0 %v7390
      %v7521 = vpop.f32.mrb[0].mxu0
      %v7522 = vadd.f32 %v7360, %v7521
      %v7523 = vpop.f32.mrb[0].mxu0
      %7524 = vmatprep.mubr.f32.mxu0 0.0
      %7525 = vmatmul.mubr.f32.gmra.mrb[0].mxu0 %v7393
      %v7526 = vpop.f32.mrb[0].mxu0
      %v7527 = vadd.f32 %v7360, %v7526
      %v7528 = vpop.f32.mrb[0].mxu0
      %7529 = vmatprep.mubr.f32.mxu0 0.0
      %7530 = vmatmul.mubr.f32.gmra.mrb[0].mxu0 %v7396
      %v7531 = vpop.f32.mrb[0].mxu0
      %v7532 = vadd.f32 %v7360, %v7531
      %v7533 = vpop.f32.mrb[0].mxu0
      %7534 = vmatprep.mubr.f32.mxu0 0.0
      %7535 = vmatmul.mubr.f32.gmra.mrb[0].mxu0 %v7399
      %v7536 = vpop.f32.mrb[0].mxu0
      %v7537 = vadd.f32 %v7360, %v7536
      %v7538 = vpop.f32.mrb[0].mxu0
      %7539 = vmatprep.mubr.f32.mxu0 0.0
      %7540 = vmatmul.mubr.f32.gmra.mrb[0].mxu0 %v7402
      %v7541 = vpop.f32.mrb[0].mxu0
      %v7542 = vadd.f32 %v7360, %v7541
      %v7543 = vpop.f32.mrb[0].mxu0
      %7544 = vmatprep.mubr.f32.mxu0 0.0
      %7545 = vmatmul.mubr.f32.gmra.mrb[0].mxu0 %v7405
      %v7546 = vpop.f32.mrb[0].mxu0
      %v7547 = vadd.f32 %v7360, %v7546
      %v7548 = vpop.f32.mrb[0].mxu0
      %7549 = vmatprep.mubr.f32.mxu0 0.0
      %7550 = vmatmul.mubr.f32.gmra.mrb[0].mxu0 %v7408
      %v7551 = vpop.f32.mrb[0].mxu0
      %v7552 = vadd.f32 %v7360, %v7551
      %v7553 = vpop.f32.mrb[0].mxu0
      %7554 = vdwg.mxu0
      %v7555 = vxor.u32 %v7477, 2147483648
      %v7556 = vxor.u32 %v7482, 2147483648
      %v7557 = vxor.u32 %v7487, 2147483648
      %v7558 = vxor.u32 %v7492, 2147483648
      %v7559 = vxor.u32 %v7497, 2147483648
      %v7560 = vxor.u32 %v7502, 2147483648
      %v7561 = vxor.u32 %v7507, 2147483648
      %v7562 = vxor.u32 %v7512, 2147483648
      %v7563 = vxor.u32 %v7517, 2147483648
      %v7564 = vxor.u32 %v7522, 2147483648
      %v7565 = vxor.u32 %v7527, 2147483648
      %v7566 = vxor.u32 %v7532, 2147483648
      %v7567 = vxor.u32 %v7537, 2147483648
      %v7568 = vxor.u32 %v7542, 2147483648
      %v7569 = vxor.u32 %v7547, 2147483648
      %v7570 = vxor.u32 %v7552, 2147483648
      %v7571 = vmul.f32 %v7555, 1.442695
      %v7572 = vpow.pop %v7571
      %v7573 = vmul.f32 %v7556, 1.442695
      %v7574 = vpow.pop %v7573
      %v7575 = vmul.f32 %v7557, 1.442695
      %v7576 = vpow.pop %v7575
      %v7577 = vmul.f32 %v7558, 1.442695
      %v7578 = vpow.pop %v7577
      %v7579 = vmul.f32 %v7559, 1.442695
      %v7580 = vpow.pop %v7579
      %v7581 = vmul.f32 %v7560, 1.442695
      %v7582 = vpow.pop %v7581
      %v7583 = vmul.f32 %v7561, 1.442695
      %v7584 = vpow.pop %v7583
      %v7585 = vmul.f32 %v7562, 1.442695
      %v7586 = vpow.pop %v7585
      %v7587 = vmul.f32 %v7563, 1.442695
      %v7588 = vpow.pop %v7587
      %v7589 = vmul.f32 %v7564, 1.442695
      %v7590 = vpow.pop %v7589
      %v7591 = vmul.f32 %v7565, 1.442695
      %v7592 = vpow.pop %v7591
      %v7593 = vmul.f32 %v7566, 1.442695
      %v7594 = vpow.pop %v7593
      %v7595 = vmul.f32 %v7567, 1.442695
      %v7596 = vpow.pop %v7595
      %v7597 = vmul.f32 %v7568, 1.442695
      %v7598 = vpow.pop %v7597
      %v7599 = vmul.f32 %v7569, 1.442695
      %v7600 = vpow.pop %v7599
      %v7601 = vmul.f32 %v7570, 1.442695
      %v7602 = vpow.pop %v7601
      %v7603 = vadd.f32 %v7572, 1.0
      %v7604 = vadd.f32 %v7574, 1.0
      %v7605 = vadd.f32 %v7576, 1.0
      %v7606 = vadd.f32 %v7578, 1.0
      %v7607 = vadd.f32 %v7580, 1.0
      %v7608 = vadd.f32 %v7582, 1.0
      %v7609 = vadd.f32 %v7584, 1.0
      %v7610 = vadd.f32 %v7586, 1.0
      %v7611 = vadd.f32 %v7588, 1.0
      %v7612 = vadd.f32 %v7590, 1.0
      %v7613 = vadd.f32 %v7592, 1.0
      %v7614 = vadd.f32 %v7594, 1.0
      %v7615 = vadd.f32 %v7596, 1.0
      %v7616 = vadd.f32 %v7598, 1.0
      %v7617 = vadd.f32 %v7600, 1.0
      %v7618 = vadd.f32 %v7602, 1.0
      %v7619 = vrcp.pop %v7603
      %v7620 = vmul.f32 1.0, %v7619
      %v7621 = vrcp.pop %v7604
      %v7622 = vmul.f32 1.0, %v7621
      %v7623 = vrcp.pop %v7605
      %v7624 = vmul.f32 1.0, %v7623
      %v7625 = vrcp.pop %v7606
      %v7626 = vmul.f32 1.0, %v7625
      %v7627 = vrcp.pop %v7607
      %v7628 = vmul.f32 1.0, %v7627
      %v7629 = vrcp.pop %v7608
      %v7630 = vmul.f32 1.0, %v7629
      %v7631 = vrcp.pop %v7609
      %v7632 = vmul.f32 1.0, %v7631
      %v7633 = vrcp.pop %v7610
      %v7634 = vmul.f32 1.0, %v7633
      %v7635 = vrcp.pop %v7611
      %v7636 = vmul.f32 1.0, %v7635
      %v7637 = vrcp.pop %v7612
      %v7638 = vmul.f32 1.0, %v7637
      %v7639 = vrcp.pop %v7613
      %v7640 = vmul.f32 1.0, %v7639
      %v7641 = vrcp.pop %v7614
      %v7642 = vmul.f32 1.0, %v7641
      %v7643 = vrcp.pop %v7615
      %v7644 = vmul.f32 1.0, %v7643
      %v7645 = vrcp.pop %v7616
      %v7646 = vmul.f32 1.0, %v7645
      %v7647 = vrcp.pop %v7617
      %v7648 = vmul.f32 1.0, %v7647
      %v7649 = vrcp.pop %v7618
      %v7650 = vmul.f32 1.0, %v7649
      %7651 = vst [vmem:[%s591] sm:$0xff] %v7620
      %7652 = vst [vmem:[%s591 + $0x8] sm:$0xff] %v7622
      %7653 = vst [vmem:[%s591 + $0x10] sm:$0xff] %v7624
      %7654 = vst [vmem:[%s591 + $0x18] sm:$0xff] %v7626
      %7655 = vst [vmem:[%s591 + $0x20] sm:$0xff] %v7628
      %7656 = vst [vmem:[%s591 + $0x28] sm:$0xff] %v7630
      %7657 = vst [vmem:[%s591 + $0x30] sm:$0xff] %v7632
      %7658 = vst [vmem:[%s591 + $0x38] sm:$0xff] %v7634
      %7659 = vst [vmem:[%s591 + $0x40] sm:$0xff] %v7636
      %7660 = vst [vmem:[%s591 + $0x48] sm:$0xff] %v7638
      %7661 = vst [vmem:[%s591 + $0x50] sm:$0xff] %v7640
      %7662 = vst [vmem:[%s591 + $0x58] sm:$0xff] %v7642
      %7663 = vst [vmem:[%s591 + $0x60] sm:$0xff] %v7644
      %7664 = vst [vmem:[%s591 + $0x68] sm:$0xff] %v7646
      %7665 = vst [vmem:[%s591 + $0x70] sm:$0xff] %v7648
      %7666 = vst [vmem:[%s591 + $0x78] sm:$0xff] %v7650
      %s7667 = smul.u32 16, %s29
      %p7668 = scmp.lt.s32.totalorder %s7667, 31
      %s7669 = scalar_select %p7668, %s7667, 31
      %s7670 = smul.addr %s7669, 8
      %s7671 = scalar_lea.vmem %s18, %s7670
      // Predicated region
      $region93: #{_bert_and_tag.1} parent=91 // pred_check
        %p7672 = pneg %p435
      $region94: #{_bert_and_tag.1} parent=91 // pred_check_branch
        %7674 = sbr.rel (%p7672) target = $region96
      $region95: #{_bert_and_tag.1} parent=91 // pred_region
        %s7675 = smul.u32 16, %s29
      $region96: #{_bert_and_tag.1} parent=91 // pred_fallthru
        _
    $region92: #{_bert_and_tag.1} parent=5 // pred_fallthru
      _
    %p7676 = scmp.le.s32.totalorder 2, %s24
    // Predicated region
    $region97: #{_bert_and_tag.1} parent=5 // pred_check
      %p7677 = pneg %p7676
    $region98: #{_bert_and_tag.1} parent=5 // pred_check_branch
      %7679 = sbr.rel (%p7677) target = $region100
    $region99: #{_bert_and_tag.1} parent=5 // pred_region
      %s7680 = ssub.s32 %s24, 2
      // Predicated region
      $region101: #{_bert_and_tag.1} parent=99 // pred_check
        %p7681 = pneg %p441
      $region102: #{_bert_and_tag.1} parent=99 // pred_check_branch
        %7683 = sbr.rel (%p7681) target = $region104
      $region103: #{_bert_and_tag.1} parent=99 // pred_region
        %s7684 = smul.u32 16, %s30
        %p7685 = scmp.lt.s32.totalorder %s7684, 31
        %s7686 = scalar_select %p7685, %s7684, 31
        %s7687 = smul.addr %s7686, 8
        %s7688 = scalar_lea.vmem %s18, %s7687
      $region104: #{_bert_and_tag.1} parent=99 // pred_fallthru
        _
    $region100: #{_bert_and_tag.1} parent=5 // pred_fallthru
      _
  $region6: #{_bert_and_tag.1} parent=0 // loop_footer
    %s28 = sadd.s32 1, %s24
  $region7: #{_bert_and_tag.1} parent=0 // loop_footer_branch
    %23 = sbr.rel target = $region3
  $region8: #{_bert_and_tag.1} parent=0 // loop_exit
    _

</llo_original>
